<compile_context>
chip_gen: v5e
topology: v5e:2x2
jax: 0.10.0
libtpu: 0.0.40
codegen_flags: <defaults>
</compile_context>

<pallas_src>
import functools

import jax
import jax.numpy as jnp
from jax import lax
from jax.experimental import pallas as pl
from jax.experimental.pallas import tpu as pltpu

# MXU operand dtype (accumulation is always f32).  Set to jnp.float32 for bit-closer
# parity with the f32 PyTorch module (review correctness note).
_MXU_DTYPE = jnp.bfloat16
# Inter-kernel activation dtype.  f32 for exactness / compile-safety; jnp.bfloat16
# halves inter-kernel HBM traffic (biggest relative win on v5e).
_IO_DTYPE = jnp.float32

_PARALLEL_1D = pltpu.CompilerParams(dimension_semantics=("parallel",))


# ----------------------------- Pallas kernels -------------------------------

def _attention_front_kernel(xcp_ref, xfp_ref, wqks_ref, wv_ref, rdn_ref,
                            gq_ref, bq_ref, gk_ref, bk_ref,
                            attn_ref, res_ref,
                            *, ha, wa, hf, wf, heads, dim_head, inner, scale, eps):
    """Fused q/k/skip + v projections, /2 bilinear of v, per-head LN, cross-attention.

    xcp_ref : (1, ha+2, wa+2, dim_c)  zero-padded coarse input (one batch element)
    xfp_ref : (1, hf+2, wf+2, dim)    zero-padded fine input
    wqks_ref: (9*dim_c, 2*inner+dim)  [q | k | skip] effective (dw*pw) weights
    wv_ref  : (9*dim, inner)          v effective weight
    rdn_ref : (ha*wa, hf*wf)          bilinear align_corners /2 downsample matrix
    gq/bq/gk/bk: (heads, dim_head)    per-head LayerNorm params
    attn_ref: (1, ha*wa, inner)       attention output (head-contiguous channels)
    res_ref : (1, ha*wa, dim)         skip branch at coarse resolution
    """
    nc = ha * wa
    nf = hf * wf
    dim_c = xcp_ref.shape[-1]
    dim_f = xfp_ref.shape[-1]

    # --- fused q/k/skip projection: one in-VMEM im2col + ONE MXU dot (K = 9*dim_c) ---
    cols_c = jnp.concatenate(
        [xcp_ref[0, dy:dy + ha, dx:dx + wa, :] for dy in range(3) for dx in range(3)],
        axis=-1).reshape(nc, 9 * dim_c)
    qks = jnp.dot(cols_c.astype(_MXU_DTYPE), wqks_ref[...].astype(_MXU_DTYPE),
                  preferred_element_type=jnp.float32)           # (nc, 2*inner+dim)
    q_all = qks[:, :inner]
    k_all = qks[:, inner:2 * inner]
    res_c = qks[:, 2 * inner:]

    # --- v projection at fine resolution + matrix-folded bilinear /2 downsample ---
    cols_f = jnp.concatenate(
        [xfp_ref[0, dy:dy + hf, dx:dx + wf, :] for dy in range(3) for dx in range(3)],
        axis=-1).reshape(nf, 9 * dim_f)
    v_fine = jnp.dot(cols_f.astype(_MXU_DTYPE), wv_ref[...].astype(_MXU_DTYPE),
                     preferred_element_type=jnp.float32)        # (nf, inner)
    v_all = jnp.dot(rdn_ref[...].astype(_MXU_DTYPE), v_fine.astype(_MXU_DTYPE),
                    preferred_element_type=jnp.float32)         # (nc, inner)

    def ln(x, g, b):
        mu = jnp.mean(x, axis=-1, keepdims=True)
        var = jnp.mean((x - mu) ** 2, axis=-1, keepdims=True)
        return (x - mu) * lax.rsqrt(var + eps) * g + b

    outs = []
    for h in range(heads):                      # small compile-time constant
        lo = h * dim_head
        hi = lo + dim_head
        q = ln(q_all[:, lo:hi], gq_ref[h], bq_ref[h])
        k = ln(k_all[:, lo:hi], gk_ref[h], bk_ref[h])
        v = v_all[:, lo:hi]
        # contract over dim_head directly — no in-kernel k transpose
        s = lax.dot_general(q.astype(_MXU_DTYPE), k.astype(_MXU_DTYPE),
                            (((1,), (1,)), ((), ())),
                            preferred_element_type=jnp.float32) * scale
        s = s - jnp.max(s, axis=-1, keepdims=True)
        p = jnp.exp(s)
        p = p * pl.reciprocal(jnp.sum(p, axis=-1, keepdims=True), approx=True)
        outs.append(jnp.dot(p.astype(_MXU_DTYPE), v.astype(_MXU_DTYPE),
                            preferred_element_type=jnp.float32))
    # TODO(synk): for production N = h*w, tile KV with online softmax (flash-style).
    attn_ref[0] = jnp.concatenate(outs, axis=-1).astype(attn_ref.dtype)
    res_ref[0] = res_c.astype(res_ref.dtype)


def _outproj_cat_ln_kernel(ap_ref, res_ref, wout_ref, rup_ref, g_ref, beta_ref,
                           cat_ref, *, ha, wa, eps):
    """Fused out-projection + x2 bilinear upsample of (out, res) + concat + LayerNorm2d.

    ap_ref : (1, ha+2, wa+2, inner)  zero-padded attention output
    res_ref: (1, ha*wa, dim)         skip branch at coarse resolution
    wout_ref: (9*inner, dim)         out-proj effective (dw*pw) weight
    rup_ref : (hf*wf, ha*wa)         bilinear align_corners x2 upsample matrix
    g_ref/beta_ref: (1, 2*dim)       LayerNorm2d affine params
    cat_ref: (1, hf*wf, 2*dim)
    """
    inner = ap_ref.shape[-1]
    nc = ha * wa
    cols = jnp.concatenate(
        [ap_ref[0, dy:dy + ha, dx:dx + wa, :] for dy in range(3) for dx in range(3)],
        axis=-1).reshape(nc, 9 * inner)
    out_c = jnp.dot(cols.astype(_MXU_DTYPE), wout_ref[...].astype(_MXU_DTYPE),
                    preferred_element_type=jnp.float32)          # (nc, dim)
    rup = rup_ref[...].astype(_MXU_DTYPE)
    out_f = jnp.dot(rup, out_c.astype(_MXU_DTYPE), preferred_element_type=jnp.float32)
    res_f = jnp.dot(rup, res_ref[0].astype(_MXU_DTYPE), preferred_element_type=jnp.float32)

    x = jnp.concatenate([out_f, res_f], axis=-1)                 # (nf, 2*dim), f32
    mu = jnp.mean(x, axis=-1, keepdims=True)
    var = jnp.mean((x - mu) ** 2, axis=-1, keepdims=True)
    y = (x - mu) * lax.rsqrt(var + eps)
    cat_ref[0] = (y * g_ref[...] + beta_ref[...]).astype(cat_ref.dtype)


def _double_conv_kernel(xp_ref, w1_ref, b1_ref, w2_ref, b2_ref, o_ref, h1p_ref,
                        *, H, W):
    """Fused DoubleConv: conv3x3+bias+ReLU twice; h1 zero-padded in VMEM scratch.

    xp_ref : (1, H+2, W+2, Cin)  zero-padded input
    w1_ref : (9*Cin, Cmid); b1_ref: (1, Cmid)
    w2_ref : (9*Cmid, Cout); b2_ref: (1, Cout)
    o_ref  : (1, Cout, H*W)   channels-first, lane-dense, NCHW-ready
    h1p_ref: VMEM scratch (H+2, W+2, Cmid) — in-VMEM zero-pad of h1 (no HBM roundtrip)
    """
    cin = xp_ref.shape[-1]
    cmid = w1_ref.shape[-1]
    n = H * W

    cols1 = jnp.concatenate(
        [xp_ref[0, dy:dy + H, dx:dx + W, :] for dy in range(3) for dx in range(3)],
        axis=-1).reshape(n, 9 * cin)
    h1 = jnp.dot(cols1.astype(_MXU_DTYPE), w1_ref[...].astype(_MXU_DTYPE),
                 preferred_element_type=jnp.float32) + b1_ref[...]
    h1 = jnp.maximum(h1, 0.0)

    # zero-pad h1 inside VMEM (interior slice store into the scratch ref)
    h1p_ref[...] = jnp.zeros_like(h1p_ref)
    h1p_ref[1:H + 1, 1:W + 1, :] = h1.reshape(H, W, cmid).astype(h1p_ref.dtype)

    cols2 = jnp.concatenate(
        [h1p_ref[dy:dy + H, dx:dx + W, :] for dy in range(3) for dx in range(3)],
        axis=-1).reshape(n, 9 * cmid)
    h2 = jnp.dot(cols2.astype(_MXU_DTYPE), w2_ref[...].astype(_MXU_DTYPE),
                 preferred_element_type=jnp.float32) + b2_ref[...]
    h2 = jnp.maximum(h2, 0.0)                                    # (n, Cout)

    o_ref[0] = h2.T.astype(o_ref.dtype)                          # (Cout, n) lane-dense


# ----------------------------- pallas_call wrappers --------------------------

def attention_front(xc_pad, xf_pad, w_qks, w_v, r_down, gq, bq, gk, bk,
                    *, ha, wa, hf, wf, heads, dim_head, dim, inner, scale, eps=1e-6):
    B = xc_pad.shape[0]
    dim_c = xc_pad.shape[-1]
    nc = ha * wa

    def full(shape):
        return pl.BlockSpec(shape, lambda b, _n=len(shape): (0,) * _n)

    kern = functools.partial(_attention_front_kernel, ha=ha, wa=wa, hf=hf, wf=wf,
                             heads=heads, dim_head=dim_head, inner=inner,
                             scale=scale, eps=eps)
    return pl.pallas_call(
        kern,
        out_shape=(jax.ShapeDtypeStruct((B, nc, inner), _IO_DTYPE),
                   jax.ShapeDtypeStruct((B, nc, dim), _IO_DTYPE)),
        grid=(B,),
        in_specs=[pl.BlockSpec((1, ha + 2, wa + 2, dim_c), lambda b: (b, 0, 0, 0)),
                  pl.BlockSpec((1, hf + 2, wf + 2, dim), lambda b: (b, 0, 0, 0)),
                  full(w_qks.shape), full(w_v.shape), full(r_down.shape),
                  full(gq.shape), full(bq.shape), full(gk.shape), full(bk.shape)],
        out_specs=(pl.BlockSpec((1, nc, inner), lambda b: (b, 0, 0)),
                   pl.BlockSpec((1, nc, dim), lambda b: (b, 0, 0))),
        compiler_params=_PARALLEL_1D,
    )(xc_pad, xf_pad, w_qks, w_v, r_down, gq, bq, gk, bk)


def outproj_cat_layernorm(attn_pad, res, w_out, r_up, gamma, beta,
                          *, ha, wa, hf, wf, eps=1e-6):
    B = attn_pad.shape[0]
    inner = attn_pad.shape[-1]
    dim = res.shape[-1]
    nc, nf = ha * wa, hf * wf
    kern = functools.partial(_outproj_cat_ln_kernel, ha=ha, wa=wa, eps=eps)
    return pl.pallas_call(
        kern,
        out_shape=jax.ShapeDtypeStruct((B, nf, 2 * dim), _IO_DTYPE),
        grid=(B,),
        in_specs=[pl.BlockSpec((1, ha + 2, wa + 2, inner), lambda b: (b, 0, 0, 0)),
                  pl.BlockSpec((1, nc, dim), lambda b: (b, 0, 0)),
                  pl.BlockSpec((9 * inner, dim), lambda b: (0, 0)),
                  pl.BlockSpec((nf, nc), lambda b: (0, 0)),
                  pl.BlockSpec((1, 2 * dim), lambda b: (0, 0)),
                  pl.BlockSpec((1, 2 * dim), lambda b: (0, 0))],
        out_specs=pl.BlockSpec((1, nf, 2 * dim), lambda b: (b, 0, 0)),
        compiler_params=_PARALLEL_1D,
    )(attn_pad, res, w_out, r_up, gamma.reshape(1, 2 * dim), beta.reshape(1, 2 * dim))


def double_conv(cat_pad, w1, b1, w2, b2, *, hf, wf):
    B = cat_pad.shape[0]
    cin = cat_pad.shape[-1]
    cmid = w1.shape[-1]
    cout = w2.shape[-1]
    nf = hf * wf
    kern = functools.partial(_double_conv_kernel, H=hf, W=wf)
    return pl.pallas_call(
        kern,
        out_shape=jax.ShapeDtypeStruct((B, cout, nf), jnp.float32),
        grid=(B,),
        in_specs=[pl.BlockSpec((1, hf + 2, wf + 2, cin), lambda b: (b, 0, 0, 0)),
                  pl.BlockSpec((9 * cin, cmid), lambda b: (0, 0)),
                  pl.BlockSpec((1, cmid), lambda b: (0, 0)),
                  pl.BlockSpec((9 * cmid, cout), lambda b: (0, 0)),
                  pl.BlockSpec((1, cout), lambda b: (0, 0))],
        out_specs=pl.BlockSpec((1, cout, nf), lambda b: (b, 0, 0)),
        scratch_shapes=[pltpu.VMEM((hf + 2, wf + 2, cmid), jnp.float32)],
        compiler_params=_PARALLEL_1D,
    )(cat_pad, w1, b1.reshape(1, cmid), w2, b2.reshape(1, cout))


# ------------------------------- JAX glue ------------------------------------

def euclidean_position(h, w):
    gx = jnp.linspace(0.0, 1.0, h)
    gy = jnp.linspace(0.0, 1.0, w)
    mx, my = jnp.meshgrid(gx, gy, indexing='ij')
    return jnp.stack([mx, my], axis=-1).reshape(h * w, 2)   # (h*w, 2): ch0=x, ch1=y


def _interp_matrix_1d(n_out, n_in, dtype=jnp.float32):
    """1-D bilinear weights matching F.interpolate(align_corners=True)."""
    pos = jnp.linspace(0.0, n_in - 1.0, n_out)
    i0 = jnp.floor(pos).astype(jnp.int32)
    i1 = jnp.minimum(i0 + 1, n_in - 1)
    w = (pos - i0.astype(jnp.float32))[:, None]
    return ((1.0 - w) * jax.nn.one_hot(i0, n_in, dtype=dtype)
            + w * jax.nn.one_hot(i1, n_in, dtype=dtype))


def _resize_matrix(out_hw, in_hw):
    """Dense (out_h*out_w, in_h*in_w) bilinear align_corners map (row-major flatten)."""
    my = _interp_matrix_1d(out_hw[0], in_hw[0])
    mx = _interp_matrix_1d(out_hw[1], in_hw[1])
    # TODO(synk): at production resolutions keep (my, mx) separable (two small matmuls)
    # instead of the dense Kronecker product.
    return jnp.kron(my, mx)


def _ds_effective(w_dw, w_pw):
    """Fold depthwise taps into the pointwise weight: (9,C) x (C,Cout) -> (9*C, Cout)."""
    C, Cout = w_pw.shape
    return (w_dw[:, :, None] * w_pw[None, :, :]).reshape(9 * C, Cout)


# --------------------------- parameters (synthetic) ---------------------------

def _head_perm(heads, dim_head):
    # new channel j = h*dim_head + d holds the torch channel d*heads + h
    return jnp.asarray([d * heads + h for h in range(heads) for d in range(dim_head)],
                       dtype=jnp.int32)


def init_params(key, nc_coarse, nc_fine, heads):
    dim, dim_c = nc_fine, nc_coarse
    dim_head = nc_coarse // 2
    inner = dim_head * heads
    keys = iter(jax.random.split(key, 24))

    def torch_conv_w(cout, cin, k):
        return 0.1 * jax.random.normal(next(keys), (cout, cin, k, k), jnp.float32)

    def dw_w(c):                      # torch (C,1,3,3) -> (9, C), tap = ky*3+kx
        w = 0.1 * jax.random.normal(next(keys), (c, 1, 3, 3), jnp.float32)
        return jnp.transpose(w[:, 0], (1, 2, 0)).reshape(9, c)

    def pw_w(cin, cout):              # torch (Cout,Cin,1,1) -> (Cin, Cout)
        return torch_conv_w(cout, cin, 1)[:, :, 0, 0].T

    def full_w(cin, cout):            # torch (Cout,Cin,3,3) -> (9*Cin, Cout), (ky,kx,cin)
        return jnp.transpose(torch_conv_w(cout, cin, 3), (2, 3, 1, 0)).reshape(9 * cin, cout)

    p = {}
    # EuclideanPositionEncoding: 1x1 conv (2 -> C) with bias
    p['pe_f_w'] = pw_w(2, dim)
    p['pe_f_b'] = 0.1 * jax.random.normal(next(keys), (dim,), jnp.float32)
    p['pe_c_w'] = pw_w(2, dim_c)
    p['pe_c_b'] = 0.1 * jax.random.normal(next(keys), (dim_c,), jnp.float32)
    # q/k/v/out/skip depthwise-separable projections (bias=False)
    p['q_dw'], p['q_pw'] = dw_w(dim_c), pw_w(dim_c, inner)
    p['k_dw'], p['k_pw'] = dw_w(dim_c), pw_w(dim_c, inner)
    p['v_dw'], p['v_pw'] = dw_w(dim), pw_w(dim, inner)
    p['out_dw'], p['out_pw'] = dw_w(inner), pw_w(inner, dim)
    p['skip_dw'], p['skip_pw'] = dw_w(dim_c), pw_w(dim_c, dim)
    # per-head LayerNorm(dim_head) — PyTorch default init (ones / zeros)
    p['ln_q_g'] = jnp.ones((heads, dim_head), jnp.float32)
    p['ln_q_b'] = jnp.zeros((heads, dim_head), jnp.float32)
    p['ln_k_g'] = jnp.ones((heads, dim_head), jnp.float32)
    p['ln_k_b'] = jnp.zeros((heads, dim_head), jnp.float32)
    # LayerNorm2d(2*dim)
    p['no_g'] = jnp.ones((2 * dim,), jnp.float32)
    p['no_b'] = jnp.zeros((2 * dim,), jnp.float32)
    # DoubleConv(nc_coarse -> nc_fine), batch_norm=False: conv3x3+ReLU x 2 (bias=True)
    p['dc1_w'] = full_w(nc_coarse, nc_fine)
    p['dc1_b'] = 0.1 * jax.random.normal(next(keys), (nc_fine,), jnp.float32)
    p['dc2_w'] = full_w(nc_fine, nc_fine)
    p['dc2_b'] = 0.1 * jax.random.normal(next(keys), (nc_fine,), jnp.float32)

    # Compile-time head-layout permutation: torch's rearrange uses channel = d*heads+h;
    # the attention kernel wants head-contiguous channels (h*dim_head + d).  Permuting
    # the projection weights here (apply the same mapping when importing real torch
    # weights) removes all runtime head split/merge transposes.
    perm = _head_perm(heads, dim_head)
    p['q_pw'] = p['q_pw'][:, perm]
    p['k_pw'] = p['k_pw'][:, perm]
    p['v_pw'] = p['v_pw'][:, perm]
    p['out_dw'] = p['out_dw'][:, perm]
    p['out_pw'] = p['out_pw'][perm, :]
    return p


# ------------------------------ UpBlock forward -------------------------------

def upblock_forward(params, xf_nchw, xc_nchw, heads=4):
    # xf: fine grid (B, nc_fine, hf, wf); xc: coarse grid (B, nc_coarse, ha, wa)
    xf = jnp.transpose(xf_nchw, (0, 2, 3, 1)).astype(jnp.float32)   # NHWC
    xc = jnp.transpose(xc_nchw, (0, 2, 3, 1)).astype(jnp.float32)
    B, hf, wf, dim = xf.shape
    _, ha, wa, dim_c = xc.shape
    dim_head = dim_c // 2
    inner = dim_head * heads

    # --- Euclidean positional encodings (tiny K=2 1x1 conv; XLA fuses into the
    #     NHWC transpose/add that already materialises the activations) ---
    pe_f = euclidean_position(hf, wf) @ params['pe_f_w'] + params['pe_f_b']
    xf = xf + pe_f.reshape(1, hf, wf, dim)
    pe_c = euclidean_position(ha, wa) @ params['pe_c_w'] + params['pe_c_b']
    xc = xc + pe_c.reshape(1, ha, wa, dim_c)

    # depthwise 3x3 folded into the pointwise matmul; q/k/skip share one dot (Cout-concat)
    w_q = _ds_effective(params['q_dw'], params['q_pw'])
    w_k = _ds_effective(params['k_dw'], params['k_pw'])
    w_skip = _ds_effective(params['skip_dw'], params['skip_pw'])
    w_qks = jnp.concatenate([w_q, w_k, w_skip], axis=1)        # (9*dim_c, 2*inner+dim)
    w_v = _ds_effective(params['v_dw'], params['v_pw'])        # (9*dim, inner)
    w_out = _ds_effective(params['out_dw'], params['out_pw'])  # (9*inner, dim)

    # bilinear (align_corners=True) resizes folded into kernels as matrices
    r_down = _resize_matrix((ha, wa), (hf, wf))                # (Nc, Nf): f2c for v
    r_up = _resize_matrix((hf, wf), (ha, wa))                  # (Nf, Nc): c2f for out/res

    xc_pad = jnp.pad(xc, ((0, 0), (1, 1), (1, 1), (0, 0)))
    xf_pad = jnp.pad(xf, ((0, 0), (1, 1), (1, 1), (0, 0)))

    # --- fused projections + downsample + per-head LN + attention (1 call) ---
    attn, res = attention_front(xc_pad, xf_pad, w_qks, w_v, r_down,
                                params['ln_q_g'], params['ln_q_b'],
                                params['ln_k_g'], params['ln_k_b'],
                                ha=ha, wa=wa, hf=hf, wf=wf,
                                heads=heads, dim_head=dim_head, dim=dim, inner=inner,
                                scale=dim_head ** -0.5)

    # --- fused out-proj + x2 upsample of out/res + concat + LayerNorm2d (1 call) ---
    attn_pad = jnp.pad(attn.reshape(B, ha, wa, inner), ((0, 0), (1, 1), (1, 1), (0, 0)))
    cat = outproj_cat_layernorm(attn_pad, res, w_out, r_up,
                                params['no_g'], params['no_b'],
                                ha=ha, wa=wa, hf=hf, wf=wf)

    # --- fused DoubleConv (conv3x3+ReLU x2, h1 padded in VMEM) (1 call) ---
    cat_pad = jnp.pad(cat.reshape(B, hf, wf, 2 * dim).astype(jnp.float32),
                      ((0, 0), (1, 1), (1, 1), (0, 0)))
    out = double_conv(cat_pad, params['dc1_w'], params['dc1_b'],
                      params['dc2_w'], params['dc2_b'], hf=hf, wf=wf)  # (B, C, Nf)

    return out.reshape(B, dim, hf, wf)                         # already NCHW-ordered


# ----------------------------------- main -------------------------------------

if __name__ == "__main__":
    nc_fine, nc_coarse, heads = 4, 8, 4                        # nc_coarse = 2*nc_fine
    B, hf, wf = 2, 16, 16
    ha, wa = hf // 2, wf // 2

    key = jax.random.PRNGKey(0)
    kp, kf, kc = jax.random.split(key, 3)
    params = init_params(kp, nc_coarse, nc_fine, heads)
    xf = jax.random.normal(kf, (B, nc_fine, hf, wf), jnp.float32)
    xc = jax.random.normal(kc, (B, nc_coarse, ha, wa), jnp.float32)

    fwd = jax.jit(functools.partial(upblock_forward, heads=heads))
    out = jax.block_until_ready(fwd(params, xf, xc))
    assert out.shape == (B, nc_fine, hf, wf), out.shape
    assert bool(jnp.all(jnp.isfinite(out)))
    print("KERNEL_OK")
</pallas_src>

<mosaic_0001>
module attributes {stable_mosaic.version = 11 : i64} {
  func.func @_attention_front_kernel(%arg0: i32, %arg1: memref<1x10x10x8xf32, #tpu.memory_space<vmem>>, %arg2: memref<1x18x18x4xf32, #tpu.memory_space<vmem>>, %arg3: memref<72x36xf32, #tpu.memory_space<vmem>>, %arg4: memref<36x16xf32, #tpu.memory_space<vmem>>, %arg5: memref<64x256xf32, #tpu.memory_space<vmem>>, %arg6: memref<4x4xf32, #tpu.memory_space<vmem>>, %arg7: memref<4x4xf32, #tpu.memory_space<vmem>>, %arg8: memref<4x4xf32, #tpu.memory_space<vmem>>, %arg9: memref<4x4xf32, #tpu.memory_space<vmem>>, %arg10: memref<1x64x16xf32, #tpu.memory_space<vmem>>, %arg11: memref<1x64x4xf32, #tpu.memory_space<vmem>>) attributes {dimension_semantics = [#tpu.dimension_semantics<parallel>], iteration_bounds = array<i64: 2>, scalar_prefetch = 0 : i64, scratch_operands = 0 : i64, tpu.core_type = #tpu.core_type<tc>, window_params = [{transform_indices = @transform_0, window_bounds = array<i64: 1, 10, 10, 8>}, {transform_indices = @transform_1, window_bounds = array<i64: 1, 18, 18, 4>}, {pipeline_mode = #tpu.pipeline_mode<synchronous>, transform_indices = @transform_2, window_bounds = array<i64: 72, 36>}, {pipeline_mode = #tpu.pipeline_mode<synchronous>, transform_indices = @transform_3, window_bounds = array<i64: 36, 16>}, {pipeline_mode = #tpu.pipeline_mode<synchronous>, transform_indices = @transform_4, window_bounds = array<i64: 64, 256>}, {pipeline_mode = #tpu.pipeline_mode<synchronous>, transform_indices = @transform_5, window_bounds = array<i64: 4, 4>}, {pipeline_mode = #tpu.pipeline_mode<synchronous>, transform_indices = @transform_6, window_bounds = array<i64: 4, 4>}, {pipeline_mode = #tpu.pipeline_mode<synchronous>, transform_indices = @transform_7, window_bounds = array<i64: 4, 4>}, {pipeline_mode = #tpu.pipeline_mode<synchronous>, transform_indices = @transform_8, window_bounds = array<i64: 4, 4>}, {transform_indices = @transform_9, window_bounds = array<i64: 1, 64, 16>}, {transform_indices = @transform_10, window_bounds = array<i64: 1, 64, 4>}]} {
    %c0 = arith.constant 0 : index
    %c0_0 = arith.constant 0 : index
    %c0_1 = arith.constant 0 : index
    %c0_2 = arith.constant 0 : index
    %0 = vector.load %arg1[%c0, %c0_0, %c0_1, %c0_2] : memref<1x10x10x8xf32, #tpu.memory_space<vmem>>, vector<1x8x8x8xf32>
    %1 = vector.shape_cast %0 : vector<1x8x8x8xf32> to vector<8x8x8xf32>
    %c0_3 = arith.constant 0 : index
    %c0_4 = arith.constant 0 : index
    %c1 = arith.constant 1 : index
    %c0_5 = arith.constant 0 : index
    %2 = vector.load %arg1[%c0_3, %c0_4, %c1, %c0_5] : memref<1x10x10x8xf32, #tpu.memory_space<vmem>>, vector<1x8x8x8xf32>
    %3 = vector.shape_cast %2 : vector<1x8x8x8xf32> to vector<8x8x8xf32>
    %c0_6 = arith.constant 0 : index
    %c0_7 = arith.constant 0 : index
    %c2 = arith.constant 2 : index
    %c0_8 = arith.constant 0 : index
    %4 = vector.load %arg1[%c0_6, %c0_7, %c2, %c0_8] : memref<1x10x10x8xf32, #tpu.memory_space<vmem>>, vector<1x8x8x8xf32>
    %5 = vector.shape_cast %4 : vector<1x8x8x8xf32> to vector<8x8x8xf32>
    %c0_9 = arith.constant 0 : index
    %c1_10 = arith.constant 1 : index
    %c0_11 = arith.constant 0 : index
    %c0_12 = arith.constant 0 : index
    %6 = vector.load %arg1[%c0_9, %c1_10, %c0_11, %c0_12] : memref<1x10x10x8xf32, #tpu.memory_space<vmem>>, vector<1x8x8x8xf32>
    %7 = vector.shape_cast %6 : vector<1x8x8x8xf32> to vector<8x8x8xf32>
    %c0_13 = arith.constant 0 : index
    %c1_14 = arith.constant 1 : index
    %c1_15 = arith.constant 1 : index
    %c0_16 = arith.constant 0 : index
    %8 = vector.load %arg1[%c0_13, %c1_14, %c1_15, %c0_16] : memref<1x10x10x8xf32, #tpu.memory_space<vmem>>, vector<1x8x8x8xf32>
    %9 = vector.shape_cast %8 : vector<1x8x8x8xf32> to vector<8x8x8xf32>
    %c0_17 = arith.constant 0 : index
    %c1_18 = arith.constant 1 : index
    %c2_19 = arith.constant 2 : index
    %c0_20 = arith.constant 0 : index
    %10 = vector.load %arg1[%c0_17, %c1_18, %c2_19, %c0_20] : memref<1x10x10x8xf32, #tpu.memory_space<vmem>>, vector<1x8x8x8xf32>
    %11 = vector.shape_cast %10 : vector<1x8x8x8xf32> to vector<8x8x8xf32>
    %c0_21 = arith.constant 0 : index
    %c2_22 = arith.constant 2 : index
    %c0_23 = arith.constant 0 : index
    %c0_24 = arith.constant 0 : index
    %12 = vector.load %arg1[%c0_21, %c2_22, %c0_23, %c0_24] : memref<1x10x10x8xf32, #tpu.memory_space<vmem>>, vector<1x8x8x8xf32>
    %13 = vector.shape_cast %12 : vector<1x8x8x8xf32> to vector<8x8x8xf32>
    %c0_25 = arith.constant 0 : index
    %c2_26 = arith.constant 2 : index
    %c1_27 = arith.constant 1 : index
    %c0_28 = arith.constant 0 : index
    %14 = vector.load %arg1[%c0_25, %c2_26, %c1_27, %c0_28] : memref<1x10x10x8xf32, #tpu.memory_space<vmem>>, vector<1x8x8x8xf32>
    %15 = vector.shape_cast %14 : vector<1x8x8x8xf32> to vector<8x8x8xf32>
    %c0_29 = arith.constant 0 : index
    %c2_30 = arith.constant 2 : index
    %c2_31 = arith.constant 2 : index
    %c0_32 = arith.constant 0 : index
    %16 = vector.load %arg1[%c0_29, %c2_30, %c2_31, %c0_32] : memref<1x10x10x8xf32, #tpu.memory_space<vmem>>, vector<1x8x8x8xf32>
    %17 = vector.shape_cast %16 : vector<1x8x8x8xf32> to vector<8x8x8xf32>
    %18 = tpu.concatenate %1, %3, %5, %7, %9, %11, %13, %15, %17 in 2 : vector<8x8x8xf32>, vector<8x8x8xf32>, vector<8x8x8xf32>, vector<8x8x8xf32>, vector<8x8x8xf32>, vector<8x8x8xf32>, vector<8x8x8xf32>, vector<8x8x8xf32>, vector<8x8x8xf32> -> vector<8x8x72xf32>
    %19 = vector.shape_cast %18 : vector<8x8x72xf32> to vector<64x72xf32>
    %20 = arith.truncf %19 : vector<64x72xf32> to vector<64x72xbf16>
    %c0_33 = arith.constant 0 : index
    %c0_34 = arith.constant 0 : index
    %21 = vector.load %arg3[%c0_33, %c0_34] : memref<72x36xf32, #tpu.memory_space<vmem>>, vector<72x36xf32>
    %22 = arith.truncf %21 : vector<72x36xf32> to vector<72x36xbf16>
    %cst = arith.constant dense<0.000000e+00> : vector<64x36xf32>
    %23 = tpu.matmul %20, %22, %cst {dimension_numbers = #tpu.dot_dimension_numbers<[1], [0], [0], [1], [0, 0, 1, 1], [], []>} : vector<64x72xbf16>, vector<72x36xbf16>, vector<64x36xf32> -> vector<64x36xf32>
    %24 = vector.extract_strided_slice %23 {offsets = [0, 0], sizes = [64, 16], strides = [1, 1]} : vector<64x36xf32> to vector<64x16xf32>
    %25 = vector.extract_strided_slice %23 {offsets = [0, 16], sizes = [64, 16], strides = [1, 1]} : vector<64x36xf32> to vector<64x16xf32>
    %26 = vector.extract_strided_slice %23 {offsets = [0, 32], sizes = [64, 4], strides = [1, 1]} : vector<64x36xf32> to vector<64x4xf32>
    %c0_35 = arith.constant 0 : index
    %c0_36 = arith.constant 0 : index
    %c0_37 = arith.constant 0 : index
    %c0_38 = arith.constant 0 : index
    %27 = vector.load %arg2[%c0_35, %c0_36, %c0_37, %c0_38] : memref<1x18x18x4xf32, #tpu.memory_space<vmem>>, vector<1x16x16x4xf32>
    %28 = vector.shape_cast %27 : vector<1x16x16x4xf32> to vector<16x16x4xf32>
    %c0_39 = arith.constant 0 : index
    %c0_40 = arith.constant 0 : index
    %c1_41 = arith.constant 1 : index
    %c0_42 = arith.constant 0 : index
    %29 = vector.load %arg2[%c0_39, %c0_40, %c1_41, %c0_42] : memref<1x18x18x4xf32, #tpu.memory_space<vmem>>, vector<1x16x16x4xf32>
    %30 = vector.shape_cast %29 : vector<1x16x16x4xf32> to vector<16x16x4xf32>
    %c0_43 = arith.constant 0 : index
    %c0_44 = arith.constant 0 : index
    %c2_45 = arith.constant 2 : index
    %c0_46 = arith.constant 0 : index
    %31 = vector.load %arg2[%c0_43, %c0_44, %c2_45, %c0_46] : memref<1x18x18x4xf32, #tpu.memory_space<vmem>>, vector<1x16x16x4xf32>
    %32 = vector.shape_cast %31 : vector<1x16x16x4xf32> to vector<16x16x4xf32>
    %c0_47 = arith.constant 0 : index
    %c1_48 = arith.constant 1 : index
    %c0_49 = arith.constant 0 : index
    %c0_50 = arith.constant 0 : index
    %33 = vector.load %arg2[%c0_47, %c1_48, %c0_49, %c0_50] : memref<1x18x18x4xf32, #tpu.memory_space<vmem>>, vector<1x16x16x4xf32>
    %34 = vector.shape_cast %33 : vector<1x16x16x4xf32> to vector<16x16x4xf32>
    %c0_51 = arith.constant 0 : index
    %c1_52 = arith.constant 1 : index
    %c1_53 = arith.constant 1 : index
    %c0_54 = arith.constant 0 : index
    %35 = vector.load %arg2[%c0_51, %c1_52, %c1_53, %c0_54] : memref<1x18x18x4xf32, #tpu.memory_space<vmem>>, vector<1x16x16x4xf32>
    %36 = vector.shape_cast %35 : vector<1x16x16x4xf32> to vector<16x16x4xf32>
    %c0_55 = arith.constant 0 : index
    %c1_56 = arith.constant 1 : index
    %c2_57 = arith.constant 2 : index
    %c0_58 = arith.constant 0 : index
    %37 = vector.load %arg2[%c0_55, %c1_56, %c2_57, %c0_58] : memref<1x18x18x4xf32, #tpu.memory_space<vmem>>, vector<1x16x16x4xf32>
    %38 = vector.shape_cast %37 : vector<1x16x16x4xf32> to vector<16x16x4xf32>
    %c0_59 = arith.constant 0 : index
    %c2_60 = arith.constant 2 : index
    %c0_61 = arith.constant 0 : index
    %c0_62 = arith.constant 0 : index
    %39 = vector.load %arg2[%c0_59, %c2_60, %c0_61, %c0_62] : memref<1x18x18x4xf32, #tpu.memory_space<vmem>>, vector<1x16x16x4xf32>
    %40 = vector.shape_cast %39 : vector<1x16x16x4xf32> to vector<16x16x4xf32>
    %c0_63 = arith.constant 0 : index
    %c2_64 = arith.constant 2 : index
    %c1_65 = arith.constant 1 : index
    %c0_66 = arith.constant 0 : index
    %41 = vector.load %arg2[%c0_63, %c2_64, %c1_65, %c0_66] : memref<1x18x18x4xf32, #tpu.memory_space<vmem>>, vector<1x16x16x4xf32>
    %42 = vector.shape_cast %41 : vector<1x16x16x4xf32> to vector<16x16x4xf32>
    %c0_67 = arith.constant 0 : index
    %c2_68 = arith.constant 2 : index
    %c2_69 = arith.constant 2 : index
    %c0_70 = arith.constant 0 : index
    %43 = vector.load %arg2[%c0_67, %c2_68, %c2_69, %c0_70] : memref<1x18x18x4xf32, #tpu.memory_space<vmem>>, vector<1x16x16x4xf32>
    %44 = vector.shape_cast %43 : vector<1x16x16x4xf32> to vector<16x16x4xf32>
    %45 = tpu.concatenate %28, %30, %32, %34, %36, %38, %40, %42, %44 in 2 : vector<16x16x4xf32>, vector<16x16x4xf32>, vector<16x16x4xf32>, vector<16x16x4xf32>, vector<16x16x4xf32>, vector<16x16x4xf32>, vector<16x16x4xf32>, vector<16x16x4xf32>, vector<16x16x4xf32> -> vector<16x16x36xf32>
    %46 = vector.shape_cast %45 : vector<16x16x36xf32> to vector<256x36xf32>
    %47 = arith.truncf %46 : vector<256x36xf32> to vector<256x36xbf16>
    %c0_71 = arith.constant 0 : index
    %c0_72 = arith.constant 0 : index
    %48 = vector.load %arg4[%c0_71, %c0_72] : memref<36x16xf32, #tpu.memory_space<vmem>>, vector<36x16xf32>
    %49 = arith.truncf %48 : vector<36x16xf32> to vector<36x16xbf16>
    %cst_73 = arith.constant dense<0.000000e+00> : vector<256x16xf32>
    %50 = tpu.matmul %47, %49, %cst_73 {dimension_numbers = #tpu.dot_dimension_numbers<[1], [0], [0], [1], [0, 0, 1, 1], [], []>} : vector<256x36xbf16>, vector<36x16xbf16>, vector<256x16xf32> -> vector<256x16xf32>
    %c0_74 = arith.constant 0 : index
    %c0_75 = arith.constant 0 : index
    %51 = vector.load %arg5[%c0_74, %c0_75] : memref<64x256xf32, #tpu.memory_space<vmem>>, vector<64x256xf32>
    %52 = arith.truncf %51 : vector<64x256xf32> to vector<64x256xbf16>
    %53 = arith.truncf %50 : vector<256x16xf32> to vector<256x16xbf16>
    %cst_76 = arith.constant dense<0.000000e+00> : vector<64x16xf32>
    %54 = tpu.matmul %52, %53, %cst_76 {dimension_numbers = #tpu.dot_dimension_numbers<[1], [0], [0], [1], [0, 0, 1, 1], [], []>} : vector<64x256xbf16>, vector<256x16xbf16>, vector<64x16xf32> -> vector<64x16xf32>
    %55 = vector.extract_strided_slice %24 {offsets = [0, 0], sizes = [64, 4], strides = [1, 1]} : vector<64x16xf32> to vector<64x4xf32>
    %c0_77 = arith.constant 0 : index
    %c0_78 = arith.constant 0 : index
    %56 = vector.load %arg6[%c0_77, %c0_78] : memref<4x4xf32, #tpu.memory_space<vmem>>, vector<1x4xf32>
    %57 = vector.shape_cast %56 : vector<1x4xf32> to vector<4xf32>
    %c0_79 = arith.constant 0 : index
    %c0_80 = arith.constant 0 : index
    %58 = vector.load %arg7[%c0_79, %c0_80] : memref<4x4xf32, #tpu.memory_space<vmem>>, vector<1x4xf32>
    %59 = vector.shape_cast %58 : vector<1x4xf32> to vector<4xf32>
    %cst_81 = arith.constant dense<0.000000e+00> : vector<64xf32>
    %60 = vector.multi_reduction <add>, %55, %cst_81 [1] : vector<64x4xf32> to vector<64xf32>
    %61 = vector.shape_cast %60 : vector<64xf32> to vector<64x1xf32>
    %cst_82 = arith.constant 4.000000e+00 : f32
    %62 = vector.broadcast %cst_82 : f32 to vector<64x1xf32>
    %63 = arith.divf %61, %62 : vector<64x1xf32>
    %64 = vector.broadcast %63 : vector<64x1xf32> to vector<64x4xf32>
    %65 = arith.subf %55, %64 : vector<64x4xf32>
    %66 = arith.mulf %65, %65 : vector<64x4xf32>
    %cst_83 = arith.constant dense<0.000000e+00> : vector<64xf32>
    %67 = vector.multi_reduction <add>, %66, %cst_83 [1] : vector<64x4xf32> to vector<64xf32>
    %68 = vector.shape_cast %67 : vector<64xf32> to vector<64x1xf32>
    %cst_84 = arith.constant 4.000000e+00 : f32
    %69 = vector.broadcast %cst_84 : f32 to vector<64x1xf32>
    %70 = arith.divf %68, %69 : vector<64x1xf32>
    %71 = vector.broadcast %63 : vector<64x1xf32> to vector<64x4xf32>
    %72 = arith.subf %55, %71 : vector<64x4xf32>
    %cst_85 = arith.constant 9.99999997E-7 : f32
    %73 = vector.broadcast %cst_85 : f32 to vector<64x1xf32>
    %74 = arith.addf %70, %73 : vector<64x1xf32>
    %75 = math.rsqrt %74 : vector<64x1xf32>
    %76 = vector.broadcast %75 : vector<64x1xf32> to vector<64x4xf32>
    %77 = arith.mulf %72, %76 : vector<64x4xf32>
    %78 = vector.shape_cast %57 : vector<4xf32> to vector<1x4xf32>
    %79 = vector.broadcast %78 : vector<1x4xf32> to vector<64x4xf32>
    %80 = arith.mulf %77, %79 : vector<64x4xf32>
    %81 = vector.shape_cast %59 : vector<4xf32> to vector<1x4xf32>
    %82 = vector.broadcast %81 : vector<1x4xf32> to vector<64x4xf32>
    %83 = arith.addf %80, %82 : vector<64x4xf32>
    %84 = vector.extract_strided_slice %25 {offsets = [0, 0], sizes = [64, 4], strides = [1, 1]} : vector<64x16xf32> to vector<64x4xf32>
    %c0_86 = arith.constant 0 : index
    %c0_87 = arith.constant 0 : index
    %85 = vector.load %arg8[%c0_86, %c0_87] : memref<4x4xf32, #tpu.memory_space<vmem>>, vector<1x4xf32>
    %86 = vector.shape_cast %85 : vector<1x4xf32> to vector<4xf32>
    %c0_88 = arith.constant 0 : index
    %c0_89 = arith.constant 0 : index
    %87 = vector.load %arg9[%c0_88, %c0_89] : memref<4x4xf32, #tpu.memory_space<vmem>>, vector<1x4xf32>
    %88 = vector.shape_cast %87 : vector<1x4xf32> to vector<4xf32>
    %cst_90 = arith.constant dense<0.000000e+00> : vector<64xf32>
    %89 = vector.multi_reduction <add>, %84, %cst_90 [1] : vector<64x4xf32> to vector<64xf32>
    %90 = vector.shape_cast %89 : vector<64xf32> to vector<64x1xf32>
    %cst_91 = arith.constant 4.000000e+00 : f32
    %91 = vector.broadcast %cst_91 : f32 to vector<64x1xf32>
    %92 = arith.divf %90, %91 : vector<64x1xf32>
    %93 = vector.broadcast %92 : vector<64x1xf32> to vector<64x4xf32>
    %94 = arith.subf %84, %93 : vector<64x4xf32>
    %95 = arith.mulf %94, %94 : vector<64x4xf32>
    %cst_92 = arith.constant dense<0.000000e+00> : vector<64xf32>
    %96 = vector.multi_reduction <add>, %95, %cst_92 [1] : vector<64x4xf32> to vector<64xf32>
    %97 = vector.shape_cast %96 : vector<64xf32> to vector<64x1xf32>
    %cst_93 = arith.constant 4.000000e+00 : f32
    %98 = vector.broadcast %cst_93 : f32 to vector<64x1xf32>
    %99 = arith.divf %97, %98 : vector<64x1xf32>
    %100 = vector.broadcast %92 : vector<64x1xf32> to vector<64x4xf32>
    %101 = arith.subf %84, %100 : vector<64x4xf32>
    %cst_94 = arith.constant 9.99999997E-7 : f32
    %102 = vector.broadcast %cst_94 : f32 to vector<64x1xf32>
    %103 = arith.addf %99, %102 : vector<64x1xf32>
    %104 = math.rsqrt %103 : vector<64x1xf32>
    %105 = vector.broadcast %104 : vector<64x1xf32> to vector<64x4xf32>
    %106 = arith.mulf %101, %105 : vector<64x4xf32>
    %107 = vector.shape_cast %86 : vector<4xf32> to vector<1x4xf32>
    %108 = vector.broadcast %107 : vector<1x4xf32> to vector<64x4xf32>
    %109 = arith.mulf %106, %108 : vector<64x4xf32>
    %110 = vector.shape_cast %88 : vector<4xf32> to vector<1x4xf32>
    %111 = vector.broadcast %110 : vector<1x4xf32> to vector<64x4xf32>
    %112 = arith.addf %109, %111 : vector<64x4xf32>
    %113 = vector.extract_strided_slice %54 {offsets = [0, 0], sizes = [64, 4], strides = [1, 1]} : vector<64x16xf32> to vector<64x4xf32>
    %114 = arith.truncf %83 : vector<64x4xf32> to vector<64x4xbf16>
    %115 = arith.truncf %112 : vector<64x4xf32> to vector<64x4xbf16>
    %cst_95 = arith.constant dense<0.000000e+00> : vector<64x64xf32>
    %116 = tpu.matmul %114, %115, %cst_95 {dimension_numbers = #tpu.dot_dimension_numbers<[1], [1], [0], [0], [0, 0, 1, 0], [], []>} : vector<64x4xbf16>, vector<64x4xbf16>, vector<64x64xf32> -> vector<64x64xf32>
    %cst_96 = arith.constant 5.000000e-01 : f32
    %117 = vector.broadcast %cst_96 : f32 to vector<64x64xf32>
    %118 = arith.mulf %116, %117 : vector<64x64xf32>
    %cst_97 = arith.constant dense<0xFF800000> : vector<64xf32>
    %119 = vector.multi_reduction <maximumf>, %118, %cst_97 [1] : vector<64x64xf32> to vector<64xf32>
    %120 = vector.shape_cast %119 : vector<64xf32> to vector<64x1xf32>
    %121 = vector.broadcast %120 : vector<64x1xf32> to vector<64x64xf32>
    %122 = arith.subf %118, %121 : vector<64x64xf32>
    %123 = math.exp %122 : vector<64x64xf32>
    %cst_98 = arith.constant dense<0.000000e+00> : vector<64xf32>
    %124 = vector.multi_reduction <add>, %123, %cst_98 [1] : vector<64x64xf32> to vector<64xf32>
    %125 = vector.shape_cast %124 : vector<64xf32> to vector<64x1xf32>
    %126 = tpu.reciprocal %125 {approx = true} : vector<64x1xf32> -> vector<64x1xf32>
    %127 = vector.broadcast %126 : vector<64x1xf32> to vector<64x64xf32>
    %128 = arith.mulf %123, %127 : vector<64x64xf32>
    %129 = arith.truncf %128 : vector<64x64xf32> to vector<64x64xbf16>
    %130 = arith.truncf %113 : vector<64x4xf32> to vector<64x4xbf16>
    %cst_99 = arith.constant dense<0.000000e+00> : vector<64x4xf32>
    %131 = tpu.matmul %129, %130, %cst_99 {dimension_numbers = #tpu.dot_dimension_numbers<[1], [0], [0], [1], [0, 0, 1, 1], [], []>} : vector<64x64xbf16>, vector<64x4xbf16>, vector<64x4xf32> -> vector<64x4xf32>
    %132 = vector.extract_strided_slice %24 {offsets = [0, 4], sizes = [64, 4], strides = [1, 1]} : vector<64x16xf32> to vector<64x4xf32>
    %c1_100 = arith.constant 1 : index
    %c0_101 = arith.constant 0 : index
    %133 = vector.load %arg6[%c1_100, %c0_101] : memref<4x4xf32, #tpu.memory_space<vmem>>, vector<1x4xf32>
    %134 = vector.shape_cast %133 : vector<1x4xf32> to vector<4xf32>
    %c1_102 = arith.constant 1 : index
    %c0_103 = arith.constant 0 : index
    %135 = vector.load %arg7[%c1_102, %c0_103] : memref<4x4xf32, #tpu.memory_space<vmem>>, vector<1x4xf32>
    %136 = vector.shape_cast %135 : vector<1x4xf32> to vector<4xf32>
    %cst_104 = arith.constant dense<0.000000e+00> : vector<64xf32>
    %137 = vector.multi_reduction <add>, %132, %cst_104 [1] : vector<64x4xf32> to vector<64xf32>
    %138 = vector.shape_cast %137 : vector<64xf32> to vector<64x1xf32>
    %cst_105 = arith.constant 4.000000e+00 : f32
    %139 = vector.broadcast %cst_105 : f32 to vector<64x1xf32>
    %140 = arith.divf %138, %139 : vector<64x1xf32>
    %141 = vector.broadcast %140 : vector<64x1xf32> to vector<64x4xf32>
    %142 = arith.subf %132, %141 : vector<64x4xf32>
    %143 = arith.mulf %142, %142 : vector<64x4xf32>
    %cst_106 = arith.constant dense<0.000000e+00> : vector<64xf32>
    %144 = vector.multi_reduction <add>, %143, %cst_106 [1] : vector<64x4xf32> to vector<64xf32>
    %145 = vector.shape_cast %144 : vector<64xf32> to vector<64x1xf32>
    %cst_107 = arith.constant 4.000000e+00 : f32
    %146 = vector.broadcast %cst_107 : f32 to vector<64x1xf32>
    %147 = arith.divf %145, %146 : vector<64x1xf32>
    %148 = vector.broadcast %140 : vector<64x1xf32> to vector<64x4xf32>
    %149 = arith.subf %132, %148 : vector<64x4xf32>
    %cst_108 = arith.constant 9.99999997E-7 : f32
    %150 = vector.broadcast %cst_108 : f32 to vector<64x1xf32>
    %151 = arith.addf %147, %150 : vector<64x1xf32>
    %152 = math.rsqrt %151 : vector<64x1xf32>
    %153 = vector.broadcast %152 : vector<64x1xf32> to vector<64x4xf32>
    %154 = arith.mulf %149, %153 : vector<64x4xf32>
    %155 = vector.shape_cast %134 : vector<4xf32> to vector<1x4xf32>
    %156 = vector.broadcast %155 : vector<1x4xf32> to vector<64x4xf32>
    %157 = arith.mulf %154, %156 : vector<64x4xf32>
    %158 = vector.shape_cast %136 : vector<4xf32> to vector<1x4xf32>
    %159 = vector.broadcast %158 : vector<1x4xf32> to vector<64x4xf32>
    %160 = arith.addf %157, %159 : vector<64x4xf32>
    %161 = vector.extract_strided_slice %25 {offsets = [0, 4], sizes = [64, 4], strides = [1, 1]} : vector<64x16xf32> to vector<64x4xf32>
    %c1_109 = arith.constant 1 : index
    %c0_110 = arith.constant 0 : index
    %162 = vector.load %arg8[%c1_109, %c0_110] : memref<4x4xf32, #tpu.memory_space<vmem>>, vector<1x4xf32>
    %163 = vector.shape_cast %162 : vector<1x4xf32> to vector<4xf32>
    %c1_111 = arith.constant 1 : index
    %c0_112 = arith.constant 0 : index
    %164 = vector.load %arg9[%c1_111, %c0_112] : memref<4x4xf32, #tpu.memory_space<vmem>>, vector<1x4xf32>
    %165 = vector.shape_cast %164 : vector<1x4xf32> to vector<4xf32>
    %cst_113 = arith.constant dense<0.000000e+00> : vector<64xf32>
    %166 = vector.multi_reduction <add>, %161, %cst_113 [1] : vector<64x4xf32> to vector<64xf32>
    %167 = vector.shape_cast %166 : vector<64xf32> to vector<64x1xf32>
    %cst_114 = arith.constant 4.000000e+00 : f32
    %168 = vector.broadcast %cst_114 : f32 to vector<64x1xf32>
    %169 = arith.divf %167, %168 : vector<64x1xf32>
    %170 = vector.broadcast %169 : vector<64x1xf32> to vector<64x4xf32>
    %171 = arith.subf %161, %170 : vector<64x4xf32>
    %172 = arith.mulf %171, %171 : vector<64x4xf32>
    %cst_115 = arith.constant dense<0.000000e+00> : vector<64xf32>
    %173 = vector.multi_reduction <add>, %172, %cst_115 [1] : vector<64x4xf32> to vector<64xf32>
    %174 = vector.shape_cast %173 : vector<64xf32> to vector<64x1xf32>
    %cst_116 = arith.constant 4.000000e+00 : f32
    %175 = vector.broadcast %cst_116 : f32 to vector<64x1xf32>
    %176 = arith.divf %174, %175 : vector<64x1xf32>
    %177 = vector.broadcast %169 : vector<64x1xf32> to vector<64x4xf32>
    %178 = arith.subf %161, %177 : vector<64x4xf32>
    %cst_117 = arith.constant 9.99999997E-7 : f32
    %179 = vector.broadcast %cst_117 : f32 to vector<64x1xf32>
    %180 = arith.addf %176, %179 : vector<64x1xf32>
    %181 = math.rsqrt %180 : vector<64x1xf32>
    %182 = vector.broadcast %181 : vector<64x1xf32> to vector<64x4xf32>
    %183 = arith.mulf %178, %182 : vector<64x4xf32>
    %184 = vector.shape_cast %163 : vector<4xf32> to vector<1x4xf32>
    %185 = vector.broadcast %184 : vector<1x4xf32> to vector<64x4xf32>
    %186 = arith.mulf %183, %185 : vector<64x4xf32>
    %187 = vector.shape_cast %165 : vector<4xf32> to vector<1x4xf32>
    %188 = vector.broadcast %187 : vector<1x4xf32> to vector<64x4xf32>
    %189 = arith.addf %186, %188 : vector<64x4xf32>
    %190 = vector.extract_strided_slice %54 {offsets = [0, 4], sizes = [64, 4], strides = [1, 1]} : vector<64x16xf32> to vector<64x4xf32>
    %191 = arith.truncf %160 : vector<64x4xf32> to vector<64x4xbf16>
    %192 = arith.truncf %189 : vector<64x4xf32> to vector<64x4xbf16>
    %cst_118 = arith.constant dense<0.000000e+00> : vector<64x64xf32>
    %193 = tpu.matmul %191, %192, %cst_118 {dimension_numbers = #tpu.dot_dimension_numbers<[1], [1], [0], [0], [0, 0, 1, 0], [], []>} : vector<64x4xbf16>, vector<64x4xbf16>, vector<64x64xf32> -> vector<64x64xf32>
    %cst_119 = arith.constant 5.000000e-01 : f32
    %194 = vector.broadcast %cst_119 : f32 to vector<64x64xf32>
    %195 = arith.mulf %193, %194 : vector<64x64xf32>
    %cst_120 = arith.constant dense<0xFF800000> : vector<64xf32>
    %196 = vector.multi_reduction <maximumf>, %195, %cst_120 [1] : vector<64x64xf32> to vector<64xf32>
    %197 = vector.shape_cast %196 : vector<64xf32> to vector<64x1xf32>
    %198 = vector.broadcast %197 : vector<64x1xf32> to vector<64x64xf32>
    %199 = arith.subf %195, %198 : vector<64x64xf32>
    %200 = math.exp %199 : vector<64x64xf32>
    %cst_121 = arith.constant dense<0.000000e+00> : vector<64xf32>
    %201 = vector.multi_reduction <add>, %200, %cst_121 [1] : vector<64x64xf32> to vector<64xf32>
    %202 = vector.shape_cast %201 : vector<64xf32> to vector<64x1xf32>
    %203 = tpu.reciprocal %202 {approx = true} : vector<64x1xf32> -> vector<64x1xf32>
    %204 = vector.broadcast %203 : vector<64x1xf32> to vector<64x64xf32>
    %205 = arith.mulf %200, %204 : vector<64x64xf32>
    %206 = arith.truncf %205 : vector<64x64xf32> to vector<64x64xbf16>
    %207 = arith.truncf %190 : vector<64x4xf32> to vector<64x4xbf16>
    %cst_122 = arith.constant dense<0.000000e+00> : vector<64x4xf32>
    %208 = tpu.matmul %206, %207, %cst_122 {dimension_numbers = #tpu.dot_dimension_numbers<[1], [0], [0], [1], [0, 0, 1, 1], [], []>} : vector<64x64xbf16>, vector<64x4xbf16>, vector<64x4xf32> -> vector<64x4xf32>
    %209 = vector.extract_strided_slice %24 {offsets = [0, 8], sizes = [64, 4], strides = [1, 1]} : vector<64x16xf32> to vector<64x4xf32>
    %c2_123 = arith.constant 2 : index
    %c0_124 = arith.constant 0 : index
    %210 = vector.load %arg6[%c2_123, %c0_124] : memref<4x4xf32, #tpu.memory_space<vmem>>, vector<1x4xf32>
    %211 = vector.shape_cast %210 : vector<1x4xf32> to vector<4xf32>
    %c2_125 = arith.constant 2 : index
    %c0_126 = arith.constant 0 : index
    %212 = vector.load %arg7[%c2_125, %c0_126] : memref<4x4xf32, #tpu.memory_space<vmem>>, vector<1x4xf32>
    %213 = vector.shape_cast %212 : vector<1x4xf32> to vector<4xf32>
    %cst_127 = arith.constant dense<0.000000e+00> : vector<64xf32>
    %214 = vector.multi_reduction <add>, %209, %cst_127 [1] : vector<64x4xf32> to vector<64xf32>
    %215 = vector.shape_cast %214 : vector<64xf32> to vector<64x1xf32>
    %cst_128 = arith.constant 4.000000e+00 : f32
    %216 = vector.broadcast %cst_128 : f32 to vector<64x1xf32>
    %217 = arith.divf %215, %216 : vector<64x1xf32>
    %218 = vector.broadcast %217 : vector<64x1xf32> to vector<64x4xf32>
    %219 = arith.subf %209, %218 : vector<64x4xf32>
    %220 = arith.mulf %219, %219 : vector<64x4xf32>
    %cst_129 = arith.constant dense<0.000000e+00> : vector<64xf32>
    %221 = vector.multi_reduction <add>, %220, %cst_129 [1] : vector<64x4xf32> to vector<64xf32>
    %222 = vector.shape_cast %221 : vector<64xf32> to vector<64x1xf32>
    %cst_130 = arith.constant 4.000000e+00 : f32
    %223 = vector.broadcast %cst_130 : f32 to vector<64x1xf32>
    %224 = arith.divf %222, %223 : vector<64x1xf32>
    %225 = vector.broadcast %217 : vector<64x1xf32> to vector<64x4xf32>
    %226 = arith.subf %209, %225 : vector<64x4xf32>
    %cst_131 = arith.constant 9.99999997E-7 : f32
    %227 = vector.broadcast %cst_131 : f32 to vector<64x1xf32>
    %228 = arith.addf %224, %227 : vector<64x1xf32>
    %229 = math.rsqrt %228 : vector<64x1xf32>
    %230 = vector.broadcast %229 : vector<64x1xf32> to vector<64x4xf32>
    %231 = arith.mulf %226, %230 : vector<64x4xf32>
    %232 = vector.shape_cast %211 : vector<4xf32> to vector<1x4xf32>
    %233 = vector.broadcast %232 : vector<1x4xf32> to vector<64x4xf32>
    %234 = arith.mulf %231, %233 : vector<64x4xf32>
    %235 = vector.shape_cast %213 : vector<4xf32> to vector<1x4xf32>
    %236 = vector.broadcast %235 : vector<1x4xf32> to vector<64x4xf32>
    %237 = arith.addf %234, %236 : vector<64x4xf32>
    %238 = vector.extract_strided_slice %25 {offsets = [0, 8], sizes = [64, 4], strides = [1, 1]} : vector<64x16xf32> to vector<64x4xf32>
    %c2_132 = arith.constant 2 : index
    %c0_133 = arith.constant 0 : index
    %239 = vector.load %arg8[%c2_132, %c0_133] : memref<4x4xf32, #tpu.memory_space<vmem>>, vector<1x4xf32>
    %240 = vector.shape_cast %239 : vector<1x4xf32> to vector<4xf32>
    %c2_134 = arith.constant 2 : index
    %c0_135 = arith.constant 0 : index
    %241 = vector.load %arg9[%c2_134, %c0_135] : memref<4x4xf32, #tpu.memory_space<vmem>>, vector<1x4xf32>
    %242 = vector.shape_cast %241 : vector<1x4xf32> to vector<4xf32>
    %cst_136 = arith.constant dense<0.000000e+00> : vector<64xf32>
    %243 = vector.multi_reduction <add>, %238, %cst_136 [1] : vector<64x4xf32> to vector<64xf32>
    %244 = vector.shape_cast %243 : vector<64xf32> to vector<64x1xf32>
    %cst_137 = arith.constant 4.000000e+00 : f32
    %245 = vector.broadcast %cst_137 : f32 to vector<64x1xf32>
    %246 = arith.divf %244, %245 : vector<64x1xf32>
    %247 = vector.broadcast %246 : vector<64x1xf32> to vector<64x4xf32>
    %248 = arith.subf %238, %247 : vector<64x4xf32>
    %249 = arith.mulf %248, %248 : vector<64x4xf32>
    %cst_138 = arith.constant dense<0.000000e+00> : vector<64xf32>
    %250 = vector.multi_reduction <add>, %249, %cst_138 [1] : vector<64x4xf32> to vector<64xf32>
    %251 = vector.shape_cast %250 : vector<64xf32> to vector<64x1xf32>
    %cst_139 = arith.constant 4.000000e+00 : f32
    %252 = vector.broadcast %cst_139 : f32 to vector<64x1xf32>
    %253 = arith.divf %251, %252 : vector<64x1xf32>
    %254 = vector.broadcast %246 : vector<64x1xf32> to vector<64x4xf32>
    %255 = arith.subf %238, %254 : vector<64x4xf32>
    %cst_140 = arith.constant 9.99999997E-7 : f32
    %256 = vector.broadcast %cst_140 : f32 to vector<64x1xf32>
    %257 = arith.addf %253, %256 : vector<64x1xf32>
    %258 = math.rsqrt %257 : vector<64x1xf32>
    %259 = vector.broadcast %258 : vector<64x1xf32> to vector<64x4xf32>
    %260 = arith.mulf %255, %259 : vector<64x4xf32>
    %261 = vector.shape_cast %240 : vector<4xf32> to vector<1x4xf32>
    %262 = vector.broadcast %261 : vector<1x4xf32> to vector<64x4xf32>
    %263 = arith.mulf %260, %262 : vector<64x4xf32>
    %264 = vector.shape_cast %242 : vector<4xf32> to vector<1x4xf32>
    %265 = vector.broadcast %264 : vector<1x4xf32> to vector<64x4xf32>
    %266 = arith.addf %263, %265 : vector<64x4xf32>
    %267 = vector.extract_strided_slice %54 {offsets = [0, 8], sizes = [64, 4], strides = [1, 1]} : vector<64x16xf32> to vector<64x4xf32>
    %268 = arith.truncf %237 : vector<64x4xf32> to vector<64x4xbf16>
    %269 = arith.truncf %266 : vector<64x4xf32> to vector<64x4xbf16>
    %cst_141 = arith.constant dense<0.000000e+00> : vector<64x64xf32>
    %270 = tpu.matmul %268, %269, %cst_141 {dimension_numbers = #tpu.dot_dimension_numbers<[1], [1], [0], [0], [0, 0, 1, 0], [], []>} : vector<64x4xbf16>, vector<64x4xbf16>, vector<64x64xf32> -> vector<64x64xf32>
    %cst_142 = arith.constant 5.000000e-01 : f32
    %271 = vector.broadcast %cst_142 : f32 to vector<64x64xf32>
    %272 = arith.mulf %270, %271 : vector<64x64xf32>
    %cst_143 = arith.constant dense<0xFF800000> : vector<64xf32>
    %273 = vector.multi_reduction <maximumf>, %272, %cst_143 [1] : vector<64x64xf32> to vector<64xf32>
    %274 = vector.shape_cast %273 : vector<64xf32> to vector<64x1xf32>
    %275 = vector.broadcast %274 : vector<64x1xf32> to vector<64x64xf32>
    %276 = arith.subf %272, %275 : vector<64x64xf32>
    %277 = math.exp %276 : vector<64x64xf32>
    %cst_144 = arith.constant dense<0.000000e+00> : vector<64xf32>
    %278 = vector.multi_reduction <add>, %277, %cst_144 [1] : vector<64x64xf32> to vector<64xf32>
    %279 = vector.shape_cast %278 : vector<64xf32> to vector<64x1xf32>
    %280 = tpu.reciprocal %279 {approx = true} : vector<64x1xf32> -> vector<64x1xf32>
    %281 = vector.broadcast %280 : vector<64x1xf32> to vector<64x64xf32>
    %282 = arith.mulf %277, %281 : vector<64x64xf32>
    %283 = arith.truncf %282 : vector<64x64xf32> to vector<64x64xbf16>
    %284 = arith.truncf %267 : vector<64x4xf32> to vector<64x4xbf16>
    %cst_145 = arith.constant dense<0.000000e+00> : vector<64x4xf32>
    %285 = tpu.matmul %283, %284, %cst_145 {dimension_numbers = #tpu.dot_dimension_numbers<[1], [0], [0], [1], [0, 0, 1, 1], [], []>} : vector<64x64xbf16>, vector<64x4xbf16>, vector<64x4xf32> -> vector<64x4xf32>
    %286 = vector.extract_strided_slice %24 {offsets = [0, 12], sizes = [64, 4], strides = [1, 1]} : vector<64x16xf32> to vector<64x4xf32>
    %c3 = arith.constant 3 : index
    %c0_146 = arith.constant 0 : index
    %287 = vector.load %arg6[%c3, %c0_146] : memref<4x4xf32, #tpu.memory_space<vmem>>, vector<1x4xf32>
    %288 = vector.shape_cast %287 : vector<1x4xf32> to vector<4xf32>
    %c3_147 = arith.constant 3 : index
    %c0_148 = arith.constant 0 : index
    %289 = vector.load %arg7[%c3_147, %c0_148] : memref<4x4xf32, #tpu.memory_space<vmem>>, vector<1x4xf32>
    %290 = vector.shape_cast %289 : vector<1x4xf32> to vector<4xf32>
    %cst_149 = arith.constant dense<0.000000e+00> : vector<64xf32>
    %291 = vector.multi_reduction <add>, %286, %cst_149 [1] : vector<64x4xf32> to vector<64xf32>
    %292 = vector.shape_cast %291 : vector<64xf32> to vector<64x1xf32>
    %cst_150 = arith.constant 4.000000e+00 : f32
    %293 = vector.broadcast %cst_150 : f32 to vector<64x1xf32>
    %294 = arith.divf %292, %293 : vector<64x1xf32>
    %295 = vector.broadcast %294 : vector<64x1xf32> to vector<64x4xf32>
    %296 = arith.subf %286, %295 : vector<64x4xf32>
    %297 = arith.mulf %296, %296 : vector<64x4xf32>
    %cst_151 = arith.constant dense<0.000000e+00> : vector<64xf32>
    %298 = vector.multi_reduction <add>, %297, %cst_151 [1] : vector<64x4xf32> to vector<64xf32>
    %299 = vector.shape_cast %298 : vector<64xf32> to vector<64x1xf32>
    %cst_152 = arith.constant 4.000000e+00 : f32
    %300 = vector.broadcast %cst_152 : f32 to vector<64x1xf32>
    %301 = arith.divf %299, %300 : vector<64x1xf32>
    %302 = vector.broadcast %294 : vector<64x1xf32> to vector<64x4xf32>
    %303 = arith.subf %286, %302 : vector<64x4xf32>
    %cst_153 = arith.constant 9.99999997E-7 : f32
    %304 = vector.broadcast %cst_153 : f32 to vector<64x1xf32>
    %305 = arith.addf %301, %304 : vector<64x1xf32>
    %306 = math.rsqrt %305 : vector<64x1xf32>
    %307 = vector.broadcast %306 : vector<64x1xf32> to vector<64x4xf32>
    %308 = arith.mulf %303, %307 : vector<64x4xf32>
    %309 = vector.shape_cast %288 : vector<4xf32> to vector<1x4xf32>
    %310 = vector.broadcast %309 : vector<1x4xf32> to vector<64x4xf32>
    %311 = arith.mulf %308, %310 : vector<64x4xf32>
    %312 = vector.shape_cast %290 : vector<4xf32> to vector<1x4xf32>
    %313 = vector.broadcast %312 : vector<1x4xf32> to vector<64x4xf32>
    %314 = arith.addf %311, %313 : vector<64x4xf32>
    %315 = vector.extract_strided_slice %25 {offsets = [0, 12], sizes = [64, 4], strides = [1, 1]} : vector<64x16xf32> to vector<64x4xf32>
    %c3_154 = arith.constant 3 : index
    %c0_155 = arith.constant 0 : index
    %316 = vector.load %arg8[%c3_154, %c0_155] : memref<4x4xf32, #tpu.memory_space<vmem>>, vector<1x4xf32>
    %317 = vector.shape_cast %316 : vector<1x4xf32> to vector<4xf32>
    %c3_156 = arith.constant 3 : index
    %c0_157 = arith.constant 0 : index
    %318 = vector.load %arg9[%c3_156, %c0_157] : memref<4x4xf32, #tpu.memory_space<vmem>>, vector<1x4xf32>
    %319 = vector.shape_cast %318 : vector<1x4xf32> to vector<4xf32>
    %cst_158 = arith.constant dense<0.000000e+00> : vector<64xf32>
    %320 = vector.multi_reduction <add>, %315, %cst_158 [1] : vector<64x4xf32> to vector<64xf32>
    %321 = vector.shape_cast %320 : vector<64xf32> to vector<64x1xf32>
    %cst_159 = arith.constant 4.000000e+00 : f32
    %322 = vector.broadcast %cst_159 : f32 to vector<64x1xf32>
    %323 = arith.divf %321, %322 : vector<64x1xf32>
    %324 = vector.broadcast %323 : vector<64x1xf32> to vector<64x4xf32>
    %325 = arith.subf %315, %324 : vector<64x4xf32>
    %326 = arith.mulf %325, %325 : vector<64x4xf32>
    %cst_160 = arith.constant dense<0.000000e+00> : vector<64xf32>
    %327 = vector.multi_reduction <add>, %326, %cst_160 [1] : vector<64x4xf32> to vector<64xf32>
    %328 = vector.shape_cast %327 : vector<64xf32> to vector<64x1xf32>
    %cst_161 = arith.constant 4.000000e+00 : f32
    %329 = vector.broadcast %cst_161 : f32 to vector<64x1xf32>
    %330 = arith.divf %328, %329 : vector<64x1xf32>
    %331 = vector.broadcast %323 : vector<64x1xf32> to vector<64x4xf32>
    %332 = arith.subf %315, %331 : vector<64x4xf32>
    %cst_162 = arith.constant 9.99999997E-7 : f32
    %333 = vector.broadcast %cst_162 : f32 to vector<64x1xf32>
    %334 = arith.addf %330, %333 : vector<64x1xf32>
    %335 = math.rsqrt %334 : vector<64x1xf32>
    %336 = vector.broadcast %335 : vector<64x1xf32> to vector<64x4xf32>
    %337 = arith.mulf %332, %336 : vector<64x4xf32>
    %338 = vector.shape_cast %317 : vector<4xf32> to vector<1x4xf32>
    %339 = vector.broadcast %338 : vector<1x4xf32> to vector<64x4xf32>
    %340 = arith.mulf %337, %339 : vector<64x4xf32>
    %341 = vector.shape_cast %319 : vector<4xf32> to vector<1x4xf32>
    %342 = vector.broadcast %341 : vector<1x4xf32> to vector<64x4xf32>
    %343 = arith.addf %340, %342 : vector<64x4xf32>
    %344 = vector.extract_strided_slice %54 {offsets = [0, 12], sizes = [64, 4], strides = [1, 1]} : vector<64x16xf32> to vector<64x4xf32>
    %345 = arith.truncf %314 : vector<64x4xf32> to vector<64x4xbf16>
    %346 = arith.truncf %343 : vector<64x4xf32> to vector<64x4xbf16>
    %cst_163 = arith.constant dense<0.000000e+00> : vector<64x64xf32>
    %347 = tpu.matmul %345, %346, %cst_163 {dimension_numbers = #tpu.dot_dimension_numbers<[1], [1], [0], [0], [0, 0, 1, 0], [], []>} : vector<64x4xbf16>, vector<64x4xbf16>, vector<64x64xf32> -> vector<64x64xf32>
    %cst_164 = arith.constant 5.000000e-01 : f32
    %348 = vector.broadcast %cst_164 : f32 to vector<64x64xf32>
    %349 = arith.mulf %347, %348 : vector<64x64xf32>
    %cst_165 = arith.constant dense<0xFF800000> : vector<64xf32>
    %350 = vector.multi_reduction <maximumf>, %349, %cst_165 [1] : vector<64x64xf32> to vector<64xf32>
    %351 = vector.shape_cast %350 : vector<64xf32> to vector<64x1xf32>
    %352 = vector.broadcast %351 : vector<64x1xf32> to vector<64x64xf32>
    %353 = arith.subf %349, %352 : vector<64x64xf32>
    %354 = math.exp %353 : vector<64x64xf32>
    %cst_166 = arith.constant dense<0.000000e+00> : vector<64xf32>
    %355 = vector.multi_reduction <add>, %354, %cst_166 [1] : vector<64x64xf32> to vector<64xf32>
    %356 = vector.shape_cast %355 : vector<64xf32> to vector<64x1xf32>
    %357 = tpu.reciprocal %356 {approx = true} : vector<64x1xf32> -> vector<64x1xf32>
    %358 = vector.broadcast %357 : vector<64x1xf32> to vector<64x64xf32>
    %359 = arith.mulf %354, %358 : vector<64x64xf32>
    %360 = arith.truncf %359 : vector<64x64xf32> to vector<64x64xbf16>
    %361 = arith.truncf %344 : vector<64x4xf32> to vector<64x4xbf16>
    %cst_167 = arith.constant dense<0.000000e+00> : vector<64x4xf32>
    %362 = tpu.matmul %360, %361, %cst_167 {dimension_numbers = #tpu.dot_dimension_numbers<[1], [0], [0], [1], [0, 0, 1, 1], [], []>} : vector<64x64xbf16>, vector<64x4xbf16>, vector<64x4xf32> -> vector<64x4xf32>
    %363 = tpu.concatenate %131, %208, %285, %362 in 1 : vector<64x4xf32>, vector<64x4xf32>, vector<64x4xf32>, vector<64x4xf32> -> vector<64x16xf32>
    %c0_168 = arith.constant 0 : index
    %c0_169 = arith.constant 0 : index
    %c0_170 = arith.constant 0 : index
    %364 = vector.load %arg10[%c0_168, %c0_169, %c0_170] : memref<1x64x16xf32, #tpu.memory_space<vmem>>, vector<1x64x16xf32>
    %365 = vector.shape_cast %364 : vector<1x64x16xf32> to vector<64x16xf32>
    %366 = vector.shape_cast %363 : vector<64x16xf32> to vector<1x64x16xf32>
    tpu.vector_store %arg10[%c0_168, %c0_169, %c0_170], %366 {strides = array<i32>} : memref<1x64x16xf32, #tpu.memory_space<vmem>>, vector<1x64x16xf32>,
    %c0_171 = arith.constant 0 : index
    %c0_172 = arith.constant 0 : index
    %c0_173 = arith.constant 0 : index
    %367 = vector.load %arg11[%c0_171, %c0_172, %c0_173] : memref<1x64x4xf32, #tpu.memory_space<vmem>>, vector<1x64x4xf32>
    %368 = vector.shape_cast %367 : vector<1x64x4xf32> to vector<64x4xf32>
    %369 = vector.shape_cast %26 : vector<64x4xf32> to vector<1x64x4xf32>
    tpu.vector_store %arg11[%c0_171, %c0_172, %c0_173], %369 {strides = array<i32>} : memref<1x64x4xf32, #tpu.memory_space<vmem>>, vector<1x64x4xf32>,
    return
  }
  func.func @transform_0(%arg0: i32) -> (i32, i32, i32, i32) {
    %c0_i32 = arith.constant 0 : i32
    %c0_i32_0 = arith.constant 0 : i32
    %c0_i32_1 = arith.constant 0 : i32
    %c0_i32_2 = arith.constant 0 : i32
    return %arg0, %c0_i32, %c0_i32_0, %c0_i32_1 : i32, i32, i32, i32
  }
  func.func @transform_1(%arg0: i32) -> (i32, i32, i32, i32) {
    %c0_i32 = arith.constant 0 : i32
    %c0_i32_0 = arith.constant 0 : i32
    %c0_i32_1 = arith.constant 0 : i32
    %c0_i32_2 = arith.constant 0 : i32
    return %arg0, %c0_i32, %c0_i32_0, %c0_i32_1 : i32, i32, i32, i32
  }
  func.func @transform_2(%arg0: i32) -> (i32, i32) {
    %c0_i32 = arith.constant 0 : i32
    %c0_i32_0 = arith.constant 0 : i32
    %c0_i32_1 = arith.constant 0 : i32
    return %c0_i32, %c0_i32_0 : i32, i32
  }
  func.func @transform_3(%arg0: i32) -> (i32, i32) {
    %c0_i32 = arith.constant 0 : i32
    %c0_i32_0 = arith.constant 0 : i32
    %c0_i32_1 = arith.constant 0 : i32
    return %c0_i32, %c0_i32_0 : i32, i32
  }
  func.func @transform_4(%arg0: i32) -> (i32, i32) {
    %c0_i32 = arith.constant 0 : i32
    %c0_i32_0 = arith.constant 0 : i32
    %c0_i32_1 = arith.constant 0 : i32
    return %c0_i32, %c0_i32_0 : i32, i32
  }
  func.func @transform_5(%arg0: i32) -> (i32, i32) {
    %c0_i32 = arith.constant 0 : i32
    %c0_i32_0 = arith.constant 0 : i32
    %c0_i32_1 = arith.constant 0 : i32
    return %c0_i32, %c0_i32_0 : i32, i32
  }
  func.func @transform_6(%arg0: i32) -> (i32, i32) {
    %c0_i32 = arith.constant 0 : i32
    %c0_i32_0 = arith.constant 0 : i32
    %c0_i32_1 = arith.constant 0 : i32
    return %c0_i32, %c0_i32_0 : i32, i32
  }
  func.func @transform_7(%arg0: i32) -> (i32, i32) {
    %c0_i32 = arith.constant 0 : i32
    %c0_i32_0 = arith.constant 0 : i32
    %c0_i32_1 = arith.constant 0 : i32
    return %c0_i32, %c0_i32_0 : i32, i32
  }
  func.func @transform_8(%arg0: i32) -> (i32, i32) {
    %c0_i32 = arith.constant 0 : i32
    %c0_i32_0 = arith.constant 0 : i32
    %c0_i32_1 = arith.constant 0 : i32
    return %c0_i32, %c0_i32_0 : i32, i32
  }
  func.func @transform_9(%arg0: i32) -> (i32, i32, i32) {
    %c0_i32 = arith.constant 0 : i32
    %c0_i32_0 = arith.constant 0 : i32
    %c0_i32_1 = arith.constant 0 : i32
    return %arg0, %c0_i32, %c0_i32_0 : i32, i32, i32
  }
  func.func @transform_10(%arg0: i32) -> (i32, i32, i32) {
    %c0_i32 = arith.constant 0 : i32
    %c0_i32_0 = arith.constant 0 : i32
    %c0_i32_1 = arith.constant 0 : i32
    return %arg0, %c0_i32, %c0_i32_0 : i32, i32, i32
  }
}

module attributes {stable_mosaic.version = 11 : i64} {
  func.func @_outproj_cat_ln_kernel(%arg0: i32, %arg1: memref<1x10x10x16xf32, #tpu.memory_space<vmem>>, %arg2: memref<1x64x4xf32, #tpu.memory_space<vmem>>, %arg3: memref<144x4xf32, #tpu.memory_space<vmem>>, %arg4: memref<256x64xf32, #tpu.memory_space<vmem>>, %arg5: memref<1x8xf32, #tpu.memory_space<vmem>>, %arg6: memref<1x8xf32, #tpu.memory_space<vmem>>, %arg7: memref<1x256x8xf32, #tpu.memory_space<vmem>>) attributes {dimension_semantics = [#tpu.dimension_semantics<parallel>], iteration_bounds = array<i64: 2>, scalar_prefetch = 0 : i64, scratch_operands = 0 : i64, tpu.core_type = #tpu.core_type<tc>, window_params = [{transform_indices = @transform_0, window_bounds = array<i64: 1, 10, 10, 16>}, {transform_indices = @transform_1, window_bounds = array<i64: 1, 64, 4>}, {pipeline_mode = #tpu.pipeline_mode<synchronous>, transform_indices = @transform_2, window_bounds = array<i64: 144, 4>}, {pipeline_mode = #tpu.pipeline_mode<synchronous>, transform_indices = @transform_3, window_bounds = array<i64: 256, 64>}, {pipeline_mode = #tpu.pipeline_mode<synchronous>, transform_indices = @transform_4, window_bounds = array<i64: 1, 8>}, {pipeline_mode = #tpu.pipeline_mode<synchronous>, transform_indices = @transform_5, window_bounds = array<i64: 1, 8>}, {transform_indices = @transform_6, window_bounds = array<i64: 1, 256, 8>}]} {
    %c0 = arith.constant 0 : index
    %c0_0 = arith.constant 0 : index
    %c0_1 = arith.constant 0 : index
    %c0_2 = arith.constant 0 : index
    %0 = vector.load %arg1[%c0, %c0_0, %c0_1, %c0_2] : memref<1x10x10x16xf32, #tpu.memory_space<vmem>>, vector<1x8x8x16xf32>
    %1 = vector.shape_cast %0 : vector<1x8x8x16xf32> to vector<8x8x16xf32>
    %c0_3 = arith.constant 0 : index
    %c0_4 = arith.constant 0 : index
    %c1 = arith.constant 1 : index
    %c0_5 = arith.constant 0 : index
    %2 = vector.load %arg1[%c0_3, %c0_4, %c1, %c0_5] : memref<1x10x10x16xf32, #tpu.memory_space<vmem>>, vector<1x8x8x16xf32>
    %3 = vector.shape_cast %2 : vector<1x8x8x16xf32> to vector<8x8x16xf32>
    %c0_6 = arith.constant 0 : index
    %c0_7 = arith.constant 0 : index
    %c2 = arith.constant 2 : index
    %c0_8 = arith.constant 0 : index
    %4 = vector.load %arg1[%c0_6, %c0_7, %c2, %c0_8] : memref<1x10x10x16xf32, #tpu.memory_space<vmem>>, vector<1x8x8x16xf32>
    %5 = vector.shape_cast %4 : vector<1x8x8x16xf32> to vector<8x8x16xf32>
    %c0_9 = arith.constant 0 : index
    %c1_10 = arith.constant 1 : index
    %c0_11 = arith.constant 0 : index
    %c0_12 = arith.constant 0 : index
    %6 = vector.load %arg1[%c0_9, %c1_10, %c0_11, %c0_12] : memref<1x10x10x16xf32, #tpu.memory_space<vmem>>, vector<1x8x8x16xf32>
    %7 = vector.shape_cast %6 : vector<1x8x8x16xf32> to vector<8x8x16xf32>
    %c0_13 = arith.constant 0 : index
    %c1_14 = arith.constant 1 : index
    %c1_15 = arith.constant 1 : index
    %c0_16 = arith.constant 0 : index
    %8 = vector.load %arg1[%c0_13, %c1_14, %c1_15, %c0_16] : memref<1x10x10x16xf32, #tpu.memory_space<vmem>>, vector<1x8x8x16xf32>
    %9 = vector.shape_cast %8 : vector<1x8x8x16xf32> to vector<8x8x16xf32>
    %c0_17 = arith.constant 0 : index
    %c1_18 = arith.constant 1 : index
    %c2_19 = arith.constant 2 : index
    %c0_20 = arith.constant 0 : index
    %10 = vector.load %arg1[%c0_17, %c1_18, %c2_19, %c0_20] : memref<1x10x10x16xf32, #tpu.memory_space<vmem>>, vector<1x8x8x16xf32>
    %11 = vector.shape_cast %10 : vector<1x8x8x16xf32> to vector<8x8x16xf32>
    %c0_21 = arith.constant 0 : index
    %c2_22 = arith.constant 2 : index
    %c0_23 = arith.constant 0 : index
    %c0_24 = arith.constant 0 : index
    %12 = vector.load %arg1[%c0_21, %c2_22, %c0_23, %c0_24] : memref<1x10x10x16xf32, #tpu.memory_space<vmem>>, vector<1x8x8x16xf32>
    %13 = vector.shape_cast %12 : vector<1x8x8x16xf32> to vector<8x8x16xf32>
    %c0_25 = arith.constant 0 : index
    %c2_26 = arith.constant 2 : index
    %c1_27 = arith.constant 1 : index
    %c0_28 = arith.constant 0 : index
    %14 = vector.load %arg1[%c0_25, %c2_26, %c1_27, %c0_28] : memref<1x10x10x16xf32, #tpu.memory_space<vmem>>, vector<1x8x8x16xf32>
    %15 = vector.shape_cast %14 : vector<1x8x8x16xf32> to vector<8x8x16xf32>
    %c0_29 = arith.constant 0 : index
    %c2_30 = arith.constant 2 : index
    %c2_31 = arith.constant 2 : index
    %c0_32 = arith.constant 0 : index
    %16 = vector.load %arg1[%c0_29, %c2_30, %c2_31, %c0_32] : memref<1x10x10x16xf32, #tpu.memory_space<vmem>>, vector<1x8x8x16xf32>
    %17 = vector.shape_cast %16 : vector<1x8x8x16xf32> to vector<8x8x16xf32>
    %18 = tpu.concatenate %1, %3, %5, %7, %9, %11, %13, %15, %17 in 2 : vector<8x8x16xf32>, vector<8x8x16xf32>, vector<8x8x16xf32>, vector<8x8x16xf32>, vector<8x8x16xf32>, vector<8x8x16xf32>, vector<8x8x16xf32>, vector<8x8x16xf32>, vector<8x8x16xf32> -> vector<8x8x144xf32>
    %19 = vector.shape_cast %18 : vector<8x8x144xf32> to vector<64x144xf32>
    %20 = arith.truncf %19 : vector<64x144xf32> to vector<64x144xbf16>
    %c0_33 = arith.constant 0 : index
    %c0_34 = arith.constant 0 : index
    %21 = vector.load %arg3[%c0_33, %c0_34] : memref<144x4xf32, #tpu.memory_space<vmem>>, vector<144x4xf32>
    %22 = arith.truncf %21 : vector<144x4xf32> to vector<144x4xbf16>
    %cst = arith.constant dense<0.000000e+00> : vector<64x4xf32>
    %23 = tpu.matmul %20, %22, %cst {dimension_numbers = #tpu.dot_dimension_numbers<[1], [0], [0], [1], [0, 0, 1, 1], [], []>} : vector<64x144xbf16>, vector<144x4xbf16>, vector<64x4xf32> -> vector<64x4xf32>
    %c0_35 = arith.constant 0 : index
    %c0_36 = arith.constant 0 : index
    %24 = vector.load %arg4[%c0_35, %c0_36] : memref<256x64xf32, #tpu.memory_space<vmem>>, vector<256x64xf32>
    %25 = arith.truncf %24 : vector<256x64xf32> to vector<256x64xbf16>
    %26 = arith.truncf %23 : vector<64x4xf32> to vector<64x4xbf16>
    %cst_37 = arith.constant dense<0.000000e+00> : vector<256x4xf32>
    %27 = tpu.matmul %25, %26, %cst_37 {dimension_numbers = #tpu.dot_dimension_numbers<[1], [0], [0], [1], [0, 0, 1, 1], [], []>} : vector<256x64xbf16>, vector<64x4xbf16>, vector<256x4xf32> -> vector<256x4xf32>
    %c0_38 = arith.constant 0 : index
    %c0_39 = arith.constant 0 : index
    %c0_40 = arith.constant 0 : index
    %28 = vector.load %arg2[%c0_38, %c0_39, %c0_40] : memref<1x64x4xf32, #tpu.memory_space<vmem>>, vector<1x64x4xf32>
    %29 = vector.shape_cast %28 : vector<1x64x4xf32> to vector<64x4xf32>
    %30 = arith.truncf %29 : vector<64x4xf32> to vector<64x4xbf16>
    %cst_41 = arith.constant dense<0.000000e+00> : vector<256x4xf32>
    %31 = tpu.matmul %25, %30, %cst_41 {dimension_numbers = #tpu.dot_dimension_numbers<[1], [0], [0], [1], [0, 0, 1, 1], [], []>} : vector<256x64xbf16>, vector<64x4xbf16>, vector<256x4xf32> -> vector<256x4xf32>
    %32 = tpu.concatenate %27, %31 in 1 : vector<256x4xf32>, vector<256x4xf32> -> vector<256x8xf32>
    %cst_42 = arith.constant dense<0.000000e+00> : vector<256xf32>
    %33 = vector.multi_reduction <add>, %32, %cst_42 [1] : vector<256x8xf32> to vector<256xf32>
    %34 = vector.shape_cast %33 : vector<256xf32> to vector<256x1xf32>
    %cst_43 = arith.constant 8.000000e+00 : f32
    %35 = vector.broadcast %cst_43 : f32 to vector<256x1xf32>
    %36 = arith.divf %34, %35 : vector<256x1xf32>
    %37 = vector.broadcast %36 : vector<256x1xf32> to vector<256x8xf32>
    %38 = arith.subf %32, %37 : vector<256x8xf32>
    %39 = arith.mulf %38, %38 : vector<256x8xf32>
    %cst_44 = arith.constant dense<0.000000e+00> : vector<256xf32>
    %40 = vector.multi_reduction <add>, %39, %cst_44 [1] : vector<256x8xf32> to vector<256xf32>
    %41 = vector.shape_cast %40 : vector<256xf32> to vector<256x1xf32>
    %cst_45 = arith.constant 8.000000e+00 : f32
    %42 = vector.broadcast %cst_45 : f32 to vector<256x1xf32>
    %43 = arith.divf %41, %42 : vector<256x1xf32>
    %44 = vector.broadcast %36 : vector<256x1xf32> to vector<256x8xf32>
    %45 = arith.subf %32, %44 : vector<256x8xf32>
    %cst_46 = arith.constant 9.99999997E-7 : f32
    %46 = vector.broadcast %cst_46 : f32 to vector<256x1xf32>
    %47 = arith.addf %43, %46 : vector<256x1xf32>
    %48 = math.rsqrt %47 : vector<256x1xf32>
    %49 = vector.broadcast %48 : vector<256x1xf32> to vector<256x8xf32>
    %50 = arith.mulf %45, %49 : vector<256x8xf32>
    %c0_47 = arith.constant 0 : index
    %c0_48 = arith.constant 0 : index
    %51 = vector.load %arg5[%c0_47, %c0_48] : memref<1x8xf32, #tpu.memory_space<vmem>>, vector<1x8xf32>
    %52 = vector.broadcast %51 : vector<1x8xf32> to vector<256x8xf32>
    %53 = arith.mulf %50, %52 : vector<256x8xf32>
    %c0_49 = arith.constant 0 : index
    %c0_50 = arith.constant 0 : index
    %54 = vector.load %arg6[%c0_49, %c0_50] : memref<1x8xf32, #tpu.memory_space<vmem>>, vector<1x8xf32>
    %55 = vector.broadcast %54 : vector<1x8xf32> to vector<256x8xf32>
    %56 = arith.addf %53, %55 : vector<256x8xf32>
    %c0_51 = arith.constant 0 : index
    %c0_52 = arith.constant 0 : index
    %c0_53 = arith.constant 0 : index
    %57 = vector.load %arg7[%c0_51, %c0_52, %c0_53] : memref<1x256x8xf32, #tpu.memory_space<vmem>>, vector<1x256x8xf32>
    %58 = vector.shape_cast %57 : vector<1x256x8xf32> to vector<256x8xf32>
    %59 = vector.shape_cast %56 : vector<256x8xf32> to vector<1x256x8xf32>
    tpu.vector_store %arg7[%c0_51, %c0_52, %c0_53], %59 {strides = array<i32>} : memref<1x256x8xf32, #tpu.memory_space<vmem>>, vector<1x256x8xf32>,
    return
  }
  func.func @transform_0(%arg0: i32) -> (i32, i32, i32, i32) {
    %c0_i32 = arith.constant 0 : i32
    %c0_i32_0 = arith.constant 0 : i32
    %c0_i32_1 = arith.constant 0 : i32
    %c0_i32_2 = arith.constant 0 : i32
    return %arg0, %c0_i32, %c0_i32_0, %c0_i32_1 : i32, i32, i32, i32
  }
  func.func @transform_1(%arg0: i32) -> (i32, i32, i32) {
    %c0_i32 = arith.constant 0 : i32
    %c0_i32_0 = arith.constant 0 : i32
    %c0_i32_1 = arith.constant 0 : i32
    return %arg0, %c0_i32, %c0_i32_0 : i32, i32, i32
  }
  func.func @transform_2(%arg0: i32) -> (i32, i32) {
    %c0_i32 = arith.constant 0 : i32
    %c0_i32_0 = arith.constant 0 : i32
    %c0_i32_1 = arith.constant 0 : i32
    return %c0_i32, %c0_i32_0 : i32, i32
  }
  func.func @transform_3(%arg0: i32) -> (i32, i32) {
    %c0_i32 = arith.constant 0 : i32
    %c0_i32_0 = arith.constant 0 : i32
    %c0_i32_1 = arith.constant 0 : i32
    return %c0_i32, %c0_i32_0 : i32, i32
  }
  func.func @transform_4(%arg0: i32) -> (i32, i32) {
    %c0_i32 = arith.constant 0 : i32
    %c0_i32_0 = arith.constant 0 : i32
    %c0_i32_1 = arith.constant 0 : i32
    return %c0_i32, %c0_i32_0 : i32, i32
  }
  func.func @transform_5(%arg0: i32) -> (i32, i32) {
    %c0_i32 = arith.constant 0 : i32
    %c0_i32_0 = arith.constant 0 : i32
    %c0_i32_1 = arith.constant 0 : i32
    return %c0_i32, %c0_i32_0 : i32, i32
  }
  func.func @transform_6(%arg0: i32) -> (i32, i32, i32) {
    %c0_i32 = arith.constant 0 : i32
    %c0_i32_0 = arith.constant 0 : i32
    %c0_i32_1 = arith.constant 0 : i32
    return %arg0, %c0_i32, %c0_i32_0 : i32, i32, i32
  }
}

module attributes {stable_mosaic.version = 11 : i64} {
  func.func @_double_conv_kernel(%arg0: i32, %arg1: memref<1x18x18x8xf32, #tpu.memory_space<vmem>>, %arg2: memref<72x4xf32, #tpu.memory_space<vmem>>, %arg3: memref<1x4xf32, #tpu.memory_space<vmem>>, %arg4: memref<36x4xf32, #tpu.memory_space<vmem>>, %arg5: memref<1x4xf32, #tpu.memory_space<vmem>>, %arg6: memref<1x4x256xf32, #tpu.memory_space<vmem>>, %arg7: memref<18x18x4xf32, #tpu.memory_space<vmem>>) attributes {dimension_semantics = [#tpu.dimension_semantics<parallel>], iteration_bounds = array<i64: 2>, scalar_prefetch = 0 : i64, scratch_operands = 1 : i64, tpu.core_type = #tpu.core_type<tc>, window_params = [{transform_indices = @transform_0, window_bounds = array<i64: 1, 18, 18, 8>}, {pipeline_mode = #tpu.pipeline_mode<synchronous>, transform_indices = @transform_1, window_bounds = array<i64: 72, 4>}, {pipeline_mode = #tpu.pipeline_mode<synchronous>, transform_indices = @transform_2, window_bounds = array<i64: 1, 4>}, {pipeline_mode = #tpu.pipeline_mode<synchronous>, transform_indices = @transform_3, window_bounds = array<i64: 36, 4>}, {pipeline_mode = #tpu.pipeline_mode<synchronous>, transform_indices = @transform_4, window_bounds = array<i64: 1, 4>}, {transform_indices = @transform_5, window_bounds = array<i64: 1, 4, 256>}]} {
    %c0 = arith.constant 0 : index
    %c0_0 = arith.constant 0 : index
    %c0_1 = arith.constant 0 : index
    %c0_2 = arith.constant 0 : index
    %0 = vector.load %arg1[%c0, %c0_0, %c0_1, %c0_2] : memref<1x18x18x8xf32, #tpu.memory_space<vmem>>, vector<1x16x16x8xf32>
    %1 = vector.shape_cast %0 : vector<1x16x16x8xf32> to vector<16x16x8xf32>
    %c0_3 = arith.constant 0 : index
    %c0_4 = arith.constant 0 : index
    %c1 = arith.constant 1 : index
    %c0_5 = arith.constant 0 : index
    %2 = vector.load %arg1[%c0_3, %c0_4, %c1, %c0_5] : memref<1x18x18x8xf32, #tpu.memory_space<vmem>>, vector<1x16x16x8xf32>
    %3 = vector.shape_cast %2 : vector<1x16x16x8xf32> to vector<16x16x8xf32>
    %c0_6 = arith.constant 0 : index
    %c0_7 = arith.constant 0 : index
    %c2 = arith.constant 2 : index
    %c0_8 = arith.constant 0 : index
    %4 = vector.load %arg1[%c0_6, %c0_7, %c2, %c0_8] : memref<1x18x18x8xf32, #tpu.memory_space<vmem>>, vector<1x16x16x8xf32>
    %5 = vector.shape_cast %4 : vector<1x16x16x8xf32> to vector<16x16x8xf32>
    %c0_9 = arith.constant 0 : index
    %c1_10 = arith.constant 1 : index
    %c0_11 = arith.constant 0 : index
    %c0_12 = arith.constant 0 : index
    %6 = vector.load %arg1[%c0_9, %c1_10, %c0_11, %c0_12] : memref<1x18x18x8xf32, #tpu.memory_space<vmem>>, vector<1x16x16x8xf32>
    %7 = vector.shape_cast %6 : vector<1x16x16x8xf32> to vector<16x16x8xf32>
    %c0_13 = arith.constant 0 : index
    %c1_14 = arith.constant 1 : index
    %c1_15 = arith.constant 1 : index
    %c0_16 = arith.constant 0 : index
    %8 = vector.load %arg1[%c0_13, %c1_14, %c1_15, %c0_16] : memref<1x18x18x8xf32, #tpu.memory_space<vmem>>, vector<1x16x16x8xf32>
    %9 = vector.shape_cast %8 : vector<1x16x16x8xf32> to vector<16x16x8xf32>
    %c0_17 = arith.constant 0 : index
    %c1_18 = arith.constant 1 : index
    %c2_19 = arith.constant 2 : index
    %c0_20 = arith.constant 0 : index
    %10 = vector.load %arg1[%c0_17, %c1_18, %c2_19, %c0_20] : memref<1x18x18x8xf32, #tpu.memory_space<vmem>>, vector<1x16x16x8xf32>
    %11 = vector.shape_cast %10 : vector<1x16x16x8xf32> to vector<16x16x8xf32>
    %c0_21 = arith.constant 0 : index
    %c2_22 = arith.constant 2 : index
    %c0_23 = arith.constant 0 : index
    %c0_24 = arith.constant 0 : index
    %12 = vector.load %arg1[%c0_21, %c2_22, %c0_23, %c0_24] : memref<1x18x18x8xf32, #tpu.memory_space<vmem>>, vector<1x16x16x8xf32>
    %13 = vector.shape_cast %12 : vector<1x16x16x8xf32> to vector<16x16x8xf32>
    %c0_25 = arith.constant 0 : index
    %c2_26 = arith.constant 2 : index
    %c1_27 = arith.constant 1 : index
    %c0_28 = arith.constant 0 : index
    %14 = vector.load %arg1[%c0_25, %c2_26, %c1_27, %c0_28] : memref<1x18x18x8xf32, #tpu.memory_space<vmem>>, vector<1x16x16x8xf32>
    %15 = vector.shape_cast %14 : vector<1x16x16x8xf32> to vector<16x16x8xf32>
    %c0_29 = arith.constant 0 : index
    %c2_30 = arith.constant 2 : index
    %c2_31 = arith.constant 2 : index
    %c0_32 = arith.constant 0 : index
    %16 = vector.load %arg1[%c0_29, %c2_30, %c2_31, %c0_32] : memref<1x18x18x8xf32, #tpu.memory_space<vmem>>, vector<1x16x16x8xf32>
    %17 = vector.shape_cast %16 : vector<1x16x16x8xf32> to vector<16x16x8xf32>
    %18 = tpu.concatenate %1, %3, %5, %7, %9, %11, %13, %15, %17 in 2 : vector<16x16x8xf32>, vector<16x16x8xf32>, vector<16x16x8xf32>, vector<16x16x8xf32>, vector<16x16x8xf32>, vector<16x16x8xf32>, vector<16x16x8xf32>, vector<16x16x8xf32>, vector<16x16x8xf32> -> vector<16x16x72xf32>
    %19 = vector.shape_cast %18 : vector<16x16x72xf32> to vector<256x72xf32>
    %20 = arith.truncf %19 : vector<256x72xf32> to vector<256x72xbf16>
    %c0_33 = arith.constant 0 : index
    %c0_34 = arith.constant 0 : index
    %21 = vector.load %arg2[%c0_33, %c0_34] : memref<72x4xf32, #tpu.memory_space<vmem>>, vector<72x4xf32>
    %22 = arith.truncf %21 : vector<72x4xf32> to vector<72x4xbf16>
    %cst = arith.constant dense<0.000000e+00> : vector<256x4xf32>
    %23 = tpu.matmul %20, %22, %cst {dimension_numbers = #tpu.dot_dimension_numbers<[1], [0], [0], [1], [0, 0, 1, 1], [], []>} : vector<256x72xbf16>, vector<72x4xbf16>, vector<256x4xf32> -> vector<256x4xf32>
    %c0_35 = arith.constant 0 : index
    %c0_36 = arith.constant 0 : index
    %24 = vector.load %arg3[%c0_35, %c0_36] : memref<1x4xf32, #tpu.memory_space<vmem>>, vector<1x4xf32>
    %25 = vector.broadcast %24 : vector<1x4xf32> to vector<256x4xf32>
    %26 = arith.addf %23, %25 : vector<256x4xf32>
    %cst_37 = arith.constant 0.000000e+00 : f32
    %27 = vector.broadcast %cst_37 : f32 to vector<256x4xf32>
    %28 = arith.maximumf %26, %27 : vector<256x4xf32>
    %cst_38 = arith.constant 0.000000e+00 : f32
    %29 = vector.broadcast %cst_38 : f32 to vector<18x18x4xf32>
    %c0_39 = arith.constant 0 : index
    %c0_40 = arith.constant 0 : index
    %c0_41 = arith.constant 0 : index
    %30 = vector.load %arg7[%c0_39, %c0_40, %c0_41] : memref<18x18x4xf32, #tpu.memory_space<vmem>>, vector<18x18x4xf32>
    tpu.vector_store %arg7[%c0_39, %c0_40, %c0_41], %29 {strides = array<i32>} : memref<18x18x4xf32, #tpu.memory_space<vmem>>, vector<18x18x4xf32>,
    %31 = vector.shape_cast %28 : vector<256x4xf32> to vector<16x16x4xf32>
    %c1_42 = arith.constant 1 : index
    %c1_43 = arith.constant 1 : index
    %c0_44 = arith.constant 0 : index
    %32 = vector.load %arg7[%c1_42, %c1_43, %c0_44] : memref<18x18x4xf32, #tpu.memory_space<vmem>>, vector<16x16x4xf32>
    tpu.vector_store %arg7[%c1_42, %c1_43, %c0_44], %31 {strides = array<i32>} : memref<18x18x4xf32, #tpu.memory_space<vmem>>, vector<16x16x4xf32>,
    %c0_45 = arith.constant 0 : index
    %c0_46 = arith.constant 0 : index
    %c0_47 = arith.constant 0 : index
    %33 = vector.load %arg7[%c0_45, %c0_46, %c0_47] : memref<18x18x4xf32, #tpu.memory_space<vmem>>, vector<16x16x4xf32>
    %c0_48 = arith.constant 0 : index
    %c1_49 = arith.constant 1 : index
    %c0_50 = arith.constant 0 : index
    %34 = vector.load %arg7[%c0_48, %c1_49, %c0_50] : memref<18x18x4xf32, #tpu.memory_space<vmem>>, vector<16x16x4xf32>
    %c0_51 = arith.constant 0 : index
    %c2_52 = arith.constant 2 : index
    %c0_53 = arith.constant 0 : index
    %35 = vector.load %arg7[%c0_51, %c2_52, %c0_53] : memref<18x18x4xf32, #tpu.memory_space<vmem>>, vector<16x16x4xf32>
    %c1_54 = arith.constant 1 : index
    %c0_55 = arith.constant 0 : index
    %c0_56 = arith.constant 0 : index
    %36 = vector.load %arg7[%c1_54, %c0_55, %c0_56] : memref<18x18x4xf32, #tpu.memory_space<vmem>>, vector<16x16x4xf32>
    %c1_57 = arith.constant 1 : index
    %c1_58 = arith.constant 1 : index
    %c0_59 = arith.constant 0 : index
    %37 = vector.load %arg7[%c1_57, %c1_58, %c0_59] : memref<18x18x4xf32, #tpu.memory_space<vmem>>, vector<16x16x4xf32>
    %c1_60 = arith.constant 1 : index
    %c2_61 = arith.constant 2 : index
    %c0_62 = arith.constant 0 : index
    %38 = vector.load %arg7[%c1_60, %c2_61, %c0_62] : memref<18x18x4xf32, #tpu.memory_space<vmem>>, vector<16x16x4xf32>
    %c2_63 = arith.constant 2 : index
    %c0_64 = arith.constant 0 : index
    %c0_65 = arith.constant 0 : index
    %39 = vector.load %arg7[%c2_63, %c0_64, %c0_65] : memref<18x18x4xf32, #tpu.memory_space<vmem>>, vector<16x16x4xf32>
    %c2_66 = arith.constant 2 : index
    %c1_67 = arith.constant 1 : index
    %c0_68 = arith.constant 0 : index
    %40 = vector.load %arg7[%c2_66, %c1_67, %c0_68] : memref<18x18x4xf32, #tpu.memory_space<vmem>>, vector<16x16x4xf32>
    %c2_69 = arith.constant 2 : index
    %c2_70 = arith.constant 2 : index
    %c0_71 = arith.constant 0 : index
    %41 = vector.load %arg7[%c2_69, %c2_70, %c0_71] : memref<18x18x4xf32, #tpu.memory_space<vmem>>, vector<16x16x4xf32>
    %42 = tpu.concatenate %33, %34, %35, %36, %37, %38, %39, %40, %41 in 2 : vector<16x16x4xf32>, vector<16x16x4xf32>, vector<16x16x4xf32>, vector<16x16x4xf32>, vector<16x16x4xf32>, vector<16x16x4xf32>, vector<16x16x4xf32>, vector<16x16x4xf32>, vector<16x16x4xf32> -> vector<16x16x36xf32>
    %43 = vector.shape_cast %42 : vector<16x16x36xf32> to vector<256x36xf32>
    %44 = arith.truncf %43 : vector<256x36xf32> to vector<256x36xbf16>
    %c0_72 = arith.constant 0 : index
    %c0_73 = arith.constant 0 : index
    %45 = vector.load %arg4[%c0_72, %c0_73] : memref<36x4xf32, #tpu.memory_space<vmem>>, vector<36x4xf32>
    %46 = arith.truncf %45 : vector<36x4xf32> to vector<36x4xbf16>
    %cst_74 = arith.constant dense<0.000000e+00> : vector<256x4xf32>
    %47 = tpu.matmul %44, %46, %cst_74 {dimension_numbers = #tpu.dot_dimension_numbers<[1], [0], [0], [1], [0, 0, 1, 1], [], []>} : vector<256x36xbf16>, vector<36x4xbf16>, vector<256x4xf32> -> vector<256x4xf32>
    %c0_75 = arith.constant 0 : index
    %c0_76 = arith.constant 0 : index
    %48 = vector.load %arg5[%c0_75, %c0_76] : memref<1x4xf32, #tpu.memory_space<vmem>>, vector<1x4xf32>
    %49 = vector.broadcast %48 : vector<1x4xf32> to vector<256x4xf32>
    %50 = arith.addf %47, %49 : vector<256x4xf32>
    %cst_77 = arith.constant 0.000000e+00 : f32
    %51 = vector.broadcast %cst_77 : f32 to vector<256x4xf32>
    %52 = arith.maximumf %50, %51 : vector<256x4xf32>
    %53 = tpu.transpose %52, [1, 0] : vector<256x4xf32> -> vector<4x256xf32>
    %c0_78 = arith.constant 0 : index
    %c0_79 = arith.constant 0 : index
    %c0_80 = arith.constant 0 : index
    %54 = vector.load %arg6[%c0_78, %c0_79, %c0_80] : memref<1x4x256xf32, #tpu.memory_space<vmem>>, vector<1x4x256xf32>
    %55 = vector.shape_cast %54 : vector<1x4x256xf32> to vector<4x256xf32>
    %56 = vector.shape_cast %53 : vector<4x256xf32> to vector<1x4x256xf32>
    tpu.vector_store %arg6[%c0_78, %c0_79, %c0_80], %56 {strides = array<i32>} : memref<1x4x256xf32, #tpu.memory_space<vmem>>, vector<1x4x256xf32>,
    return
  }
  func.func @transform_0(%arg0: i32) -> (i32, i32, i32, i32) {
    %c0_i32 = arith.constant 0 : i32
    %c0_i32_0 = arith.constant 0 : i32
    %c0_i32_1 = arith.constant 0 : i32
    %c0_i32_2 = arith.constant 0 : i32
    return %arg0, %c0_i32, %c0_i32_0, %c0_i32_1 : i32, i32, i32, i32
  }
  func.func @transform_1(%arg0: i32) -> (i32, i32) {
    %c0_i32 = arith.constant 0 : i32
    %c0_i32_0 = arith.constant 0 : i32
    %c0_i32_1 = arith.constant 0 : i32
    return %c0_i32, %c0_i32_0 : i32, i32
  }
  func.func @transform_2(%arg0: i32) -> (i32, i32) {
    %c0_i32 = arith.constant 0 : i32
    %c0_i32_0 = arith.constant 0 : i32
    %c0_i32_1 = arith.constant 0 : i32
    return %c0_i32, %c0_i32_0 : i32, i32
  }
  func.func @transform_3(%arg0: i32) -> (i32, i32) {
    %c0_i32 = arith.constant 0 : i32
    %c0_i32_0 = arith.constant 0 : i32
    %c0_i32_1 = arith.constant 0 : i32
    return %c0_i32, %c0_i32_0 : i32, i32
  }
  func.func @transform_4(%arg0: i32) -> (i32, i32) {
    %c0_i32 = arith.constant 0 : i32
    %c0_i32_0 = arith.constant 0 : i32
    %c0_i32_1 = arith.constant 0 : i32
    return %c0_i32, %c0_i32_0 : i32, i32
  }
  func.func @transform_5(%arg0: i32) -> (i32, i32, i32) {
    %c0_i32 = arith.constant 0 : i32
    %c0_i32_0 = arith.constant 0 : i32
    %c0_i32_1 = arith.constant 0 : i32
    return %arg0, %c0_i32, %c0_i32_0 : i32, i32, i32
  }
}

</mosaic_0001>

<llo_original>
// kernel: upblock_forward.4
$region0: #{upblock_forward.4}
  #allocation0 [shape = 'u32[]', space=smem, size = 0x4, offset = 0x4, fixed_abs, tag = 'smem constant byte address 0x4 - core index']
  #allocation1 [shape = 'u32[72,128]{1,0:T(1,128)}', space=vmem, size = 0x9000, scoped, tag = 'internal scratch']
  %s0 = inlined_call_operand.vmem [shape: f32[2,10,10,16], index: 0, kind: input, shape index: {}]
  %s1 = inlined_call_operand.vmem [shape: f32[2,64,4], index: 1, kind: input, shape index: {}]
  %s2 = inlined_call_operand.vmem [shape: f32[144,4], index: 2, kind: input, shape index: {}]
  %s3 = inlined_call_operand.vmem [shape: f32[256,64], index: 3, kind: input, shape index: {}]
  %s4 = inlined_call_operand.vmem [shape: f32[1,8], index: 4, kind: input, shape index: {}]
  %s5 = inlined_call_operand.vmem [shape: f32[1,8], index: 5, kind: input, shape index: {}]
  %s6 = inlined_call_operand.vmem [shape: f32[2,256,8], index: 6, kind: output, shape index: {}]
  %s7 = sld [smem:[#allocation0]]
  $region57: #{upblock_forward.4} parent=0
    _
  %s9 = ssub.s32 1, %s7
  %s10 = scalar_select 0, %s9, %s7
  loop: start=0, step=1, limit=4
  $region2: #{upblock_forward.4} parent=0 // loop_pre_header
    _
  $region3: #{upblock_forward.4} parent=0 // loop_header
    %s12 = sphi 0, %s16
    %p13 = scmp.ge.s32.totalorder %s12, 4
    %s22 = sphi 0, %s24
    %s25 = sphi 0, %s22
    %s26 = sphi 0, %s25
    %s42 = sphi 0, %s26
    %s48 = sphi 0, %s50
    %s51 = sphi 0, %s48
    %s52 = sphi 0, %s51
    %s68 = sphi 0, %s52
    %s72 = sphi 0, %s72
    %s74 = sphi 0, %s72
    %s75 = sphi 0, %s74
    %s89 = sphi 0, %s75
    %s93 = sphi 0, %s93
    %s95 = sphi 0, %s93
    %s96 = sphi 0, %s95
    %s110 = sphi 0, %s96
    %s114 = sphi 0, %s114
    %s116 = sphi 0, %s114
    %s117 = sphi 0, %s116
    %s131 = sphi 0, %s117
    %s135 = sphi 0, %s135
    %s137 = sphi 0, %s135
    %s138 = sphi 0, %s137
    %s152 = sphi 0, %s138
    %s158 = sphi 0, %s160
    %s161 = sphi 0, %s158
    %s162 = sphi 0, %s161
    %s178 = sphi 0, %s162
  $region4: #{upblock_forward.4} parent=0 // loop_header_branch
    %15 = sbr.rel (%p13) target = $region8
  $region5: #{upblock_forward.4} parent=0 // loop_body
    %s17 = ssub.s32 %s12, 1
    %s18 = ssub.s32 %s12, 2
    %s19 = sadd.s32 %s12, 1
    %s20 = ssub.s32 %s12, %s19
    %p21 = scmp.eq.s32.totalorder %s20, 0
    %s23 = sadd.s32 %s22, 1
    %s24 = scalar_select %p21, %s22, %s23
    %p27 = pneg %p21
    %p28 = scmp.eq.s32.totalorder %s12, 1
    %p29 = por %p27, %p28
    %p30 = scmp.ne.s32.totalorder %s22, %s25
    %p31 = scmp.eq.s32.totalorder %s12, 0
    %p32 = por %p30, %p31
    %p33 = scmp.ne.s32.totalorder %s22, %s25
    %p34 = scmp.eq.s32.totalorder %s17, 1
    %p35 = por %p33, %p34
    %p36 = scmp.ne.s32.totalorder %s25, %s26
    %p37 = scmp.eq.s32.totalorder %s17, 0
    %p38 = por %p36, %p37
    %p39 = scmp.ne.s32.totalorder %s25, %s26
    %p40 = scmp.eq.s32.totalorder %s18, 1
    %p41 = por %p39, %p40
    %p43 = scmp.ne.s32.totalorder %s26, %s42
    %p44 = scmp.eq.s32.totalorder %s18, 0
    %p45 = por %p43, %p44
    %s46 = ssub.s32 %s12, %s19
    %p47 = scmp.eq.s32.totalorder %s46, 0
    %s49 = sadd.s32 %s48, 1
    %s50 = scalar_select %p47, %s48, %s49
    %p53 = pneg %p47
    %p54 = scmp.eq.s32.totalorder %s12, 1
    %p55 = por %p53, %p54
    %p56 = scmp.ne.s32.totalorder %s48, %s51
    %p57 = scmp.eq.s32.totalorder %s12, 0
    %p58 = por %p56, %p57
    %p59 = scmp.ne.s32.totalorder %s48, %s51
    %p60 = scmp.eq.s32.totalorder %s17, 1
    %p61 = por %p59, %p60
    %p62 = scmp.ne.s32.totalorder %s51, %s52
    %p63 = scmp.eq.s32.totalorder %s17, 0
    %p64 = por %p62, %p63
    %p65 = scmp.ne.s32.totalorder %s51, %s52
    %p66 = scmp.eq.s32.totalorder %s18, 1
    %p67 = por %p65, %p66
    %p69 = scmp.ne.s32.totalorder %s52, %s68
    %p70 = scmp.eq.s32.totalorder %s18, 0
    %p71 = por %p69, %p70
    %s73 = sadd.s32 %s72, 1
    %p76 = scmp.eq.s32.totalorder %s12, 1
    %p77 = scmp.ne.s32.totalorder %s72, %s74
    %p78 = scmp.eq.s32.totalorder %s12, 0
    %p79 = por %p77, %p78
    %p80 = scmp.ne.s32.totalorder %s72, %s74
    %p81 = scmp.eq.s32.totalorder %s17, 1
    %p82 = por %p80, %p81
    %p83 = scmp.ne.s32.totalorder %s74, %s75
    %p84 = scmp.eq.s32.totalorder %s17, 0
    %p85 = por %p83, %p84
    %p86 = scmp.ne.s32.totalorder %s74, %s75
    %p87 = scmp.eq.s32.totalorder %s18, 1
    %p88 = por %p86, %p87
    %p90 = scmp.ne.s32.totalorder %s75, %s89
    %p91 = scmp.eq.s32.totalorder %s18, 0
    %p92 = por %p90, %p91
    %s94 = sadd.s32 %s93, 1
    %p97 = scmp.eq.s32.totalorder %s12, 1
    %p98 = scmp.ne.s32.totalorder %s93, %s95
    %p99 = scmp.eq.s32.totalorder %s12, 0
    %p100 = por %p98, %p99
    %p101 = scmp.ne.s32.totalorder %s93, %s95
    %p102 = scmp.eq.s32.totalorder %s17, 1
    %p103 = por %p101, %p102
    %p104 = scmp.ne.s32.totalorder %s95, %s96
    %p105 = scmp.eq.s32.totalorder %s17, 0
    %p106 = por %p104, %p105
    %p107 = scmp.ne.s32.totalorder %s95, %s96
    %p108 = scmp.eq.s32.totalorder %s18, 1
    %p109 = por %p107, %p108
    %p111 = scmp.ne.s32.totalorder %s96, %s110
    %p112 = scmp.eq.s32.totalorder %s18, 0
    %p113 = por %p111, %p112
    %s115 = sadd.s32 %s114, 1
    %p118 = scmp.eq.s32.totalorder %s12, 1
    %p119 = scmp.ne.s32.totalorder %s114, %s116
    %p120 = scmp.eq.s32.totalorder %s12, 0
    %p121 = por %p119, %p120
    %p122 = scmp.ne.s32.totalorder %s114, %s116
    %p123 = scmp.eq.s32.totalorder %s17, 1
    %p124 = por %p122, %p123
    %p125 = scmp.ne.s32.totalorder %s116, %s117
    %p126 = scmp.eq.s32.totalorder %s17, 0
    %p127 = por %p125, %p126
    %p128 = scmp.ne.s32.totalorder %s116, %s117
    %p129 = scmp.eq.s32.totalorder %s18, 1
    %p130 = por %p128, %p129
    %p132 = scmp.ne.s32.totalorder %s117, %s131
    %p133 = scmp.eq.s32.totalorder %s18, 0
    %p134 = por %p132, %p133
    %s136 = sadd.s32 %s135, 1
    %p139 = scmp.eq.s32.totalorder %s12, 1
    %p140 = scmp.ne.s32.totalorder %s135, %s137
    %p141 = scmp.eq.s32.totalorder %s12, 0
    %p142 = por %p140, %p141
    %p143 = scmp.ne.s32.totalorder %s135, %s137
    %p144 = scmp.eq.s32.totalorder %s17, 1
    %p145 = por %p143, %p144
    %p146 = scmp.ne.s32.totalorder %s137, %s138
    %p147 = scmp.eq.s32.totalorder %s17, 0
    %p148 = por %p146, %p147
    %p149 = scmp.ne.s32.totalorder %s137, %s138
    %p150 = scmp.eq.s32.totalorder %s18, 1
    %p151 = por %p149, %p150
    %p153 = scmp.ne.s32.totalorder %s138, %s152
    %p154 = scmp.eq.s32.totalorder %s18, 0
    %p155 = por %p153, %p154
    %s156 = ssub.s32 %s12, %s19
    %p157 = scmp.eq.s32.totalorder %s156, 0
    %s159 = sadd.s32 %s158, 1
    %s160 = scalar_select %p157, %s158, %s159
    %p163 = pneg %p157
    %p164 = scmp.eq.s32.totalorder %s12, 1
    %p165 = por %p163, %p164
    %p166 = scmp.ne.s32.totalorder %s158, %s161
    %p167 = scmp.eq.s32.totalorder %s12, 0
    %p168 = por %p166, %p167
    %p169 = scmp.ne.s32.totalorder %s158, %s161
    %p170 = scmp.eq.s32.totalorder %s17, 1
    %p171 = por %p169, %p170
    %p172 = scmp.ne.s32.totalorder %s161, %s162
    %p173 = scmp.eq.s32.totalorder %s17, 0
    %p174 = por %p172, %p173
    %p175 = scmp.ne.s32.totalorder %s161, %s162
    %p176 = scmp.eq.s32.totalorder %s18, 1
    %p177 = por %p175, %p176
    %p179 = scmp.ne.s32.totalorder %s162, %s178
    %p180 = scmp.eq.s32.totalorder %s18, 0
    %p181 = por %p179, %p180
    %p182 = scmp.le.s32.totalorder 1, %s12
    %p183 = scmp.lt.s32.totalorder %s12, 3
    %p184 = pnand %p182, %p183
    %p185 = pneg %p184
    // Predicated region
    $region9: #{upblock_forward.4} parent=5 // pred_check
      _
    $region10: #{upblock_forward.4} parent=5 // pred_check_branch
      %187 = sbr.rel (%p184) target = $region12
    $region11: #{upblock_forward.4} parent=5 // pred_region
      %s188 = ssub.s32 %s12, 1
      // Predicated region
      $region13: #{upblock_forward.4} parent=11 // pred_check
        %p189 = pneg %p85
      $region14: #{upblock_forward.4} parent=11 // pred_check_branch
        %191 = sbr.rel (%p189) target = $region16
      $region15: #{upblock_forward.4} parent=11 // pred_region
        _
      $region16: #{upblock_forward.4} parent=11 // pred_fallthru
        _
      // Predicated region
      $region17: #{upblock_forward.4} parent=11 // pred_check
        %p192 = pneg %p106
      $region18: #{upblock_forward.4} parent=11 // pred_check_branch
        %194 = sbr.rel (%p192) target = $region20
      $region19: #{upblock_forward.4} parent=11 // pred_region
        _
      $region20: #{upblock_forward.4} parent=11 // pred_fallthru
        _
      // Predicated region
      $region21: #{upblock_forward.4} parent=11 // pred_check
        %p195 = pneg %p127
      $region22: #{upblock_forward.4} parent=11 // pred_check_branch
        %197 = sbr.rel (%p195) target = $region24
      $region23: #{upblock_forward.4} parent=11 // pred_region
        _
      $region24: #{upblock_forward.4} parent=11 // pred_fallthru
        _
      // Predicated region
      $region25: #{upblock_forward.4} parent=11 // pred_check
        %p198 = pneg %p148
      $region26: #{upblock_forward.4} parent=11 // pred_check_branch
        %200 = sbr.rel (%p198) target = $region28
      $region27: #{upblock_forward.4} parent=11 // pred_region
        _
      $region28: #{upblock_forward.4} parent=11 // pred_fallthru
        _
    $region12: #{upblock_forward.4} parent=5 // pred_fallthru
      _
    %p201 = scmp.lt.s32.totalorder %s12, 2
    // Predicated region
    $region29: #{upblock_forward.4} parent=5 // pred_check
      %p202 = pneg %p201
    $region30: #{upblock_forward.4} parent=5 // pred_check_branch
      %204 = sbr.rel (%p202) target = $region32
    $region31: #{upblock_forward.4} parent=5 // pred_region
      // Predicated region
      $region33: #{upblock_forward.4} parent=31 // pred_check
        %p205 = pneg %p32
      $region34: #{upblock_forward.4} parent=31 // pred_check_branch
        %207 = sbr.rel (%p205) target = $region36
      $region35: #{upblock_forward.4} parent=31 // pred_region
        %p208 = scmp.lt.s32.totalorder %s12, 1
        %s209 = scalar_select %p208, %s12, 1
        %s210 = smul.addr %s209, 20
        %s211 = smul.addr %s210, 8
        %s212 = scalar_lea.vmem %s0, %s211
      $region36: #{upblock_forward.4} parent=31 // pred_fallthru
        _
      // Predicated region
      $region37: #{upblock_forward.4} parent=31 // pred_check
        %p213 = pneg %p58
      $region38: #{upblock_forward.4} parent=31 // pred_check_branch
        %215 = sbr.rel (%p213) target = $region40
      $region39: #{upblock_forward.4} parent=31 // pred_region
        %p216 = scmp.lt.s32.totalorder %s12, 1
        %s217 = scalar_select %p216, %s12, 1
        %s218 = smul.addr %s217, 8
        %s219 = smul.addr %s218, 8
        %s220 = scalar_lea.vmem %s1, %s219
      $region40: #{upblock_forward.4} parent=31 // pred_fallthru
        _
    $region32: #{upblock_forward.4} parent=5 // pred_fallthru
      _
    %p221 = scmp.le.s32.totalorder 1, %s12
    %p222 = scmp.lt.s32.totalorder %s12, 3
    %p223 = pnand %p221, %p222
    %p224 = pneg %p223
    // Predicated region
    $region41: #{upblock_forward.4} parent=5 // pred_check
      _
    $region42: #{upblock_forward.4} parent=5 // pred_check_branch
      %226 = sbr.rel (%p223) target = $region44
    $region43: #{upblock_forward.4} parent=5 // pred_region
      %s227 = ssub.s32 %s12, 1
      %p228 = scmp.lt.s32.totalorder %s17, 1
      %s229 = scalar_select %p228, %s17, 1
      %s230 = smul.addr %s229, 20
      %s231 = smul.addr %s230, 8
      %s232 = scalar_lea.vmem %s0, %s231
      %p233 = pneg %p38
      %p234 = pneg %p35
      %p235 = scmp.lt.s32.totalorder %s17, 1
      %s236 = scalar_select %p235, %s17, 1
      %s237 = smul.addr %s236, 8
      %s238 = smul.addr %s237, 8
      %s239 = scalar_lea.vmem %s1, %s238
      %p240 = pneg %p64
      %p241 = pneg %p61
      %p242 = pneg %p85
      %p243 = pneg %p82
      %p244 = pneg %p106
      %p245 = pneg %p103
      %p246 = pneg %p127
      %p247 = pneg %p124
      %p248 = pneg %p148
      %p249 = pneg %p145
      %p250 = pneg %p174
      %p251 = pneg %p171
      %p252 = scmp.lt.s32.totalorder %s17, 1
      %s253 = scalar_select %p252, %s17, 1
      %s254 = smul.addr %s253, 32
      %s255 = smul.addr %s254, 8
      %s256 = scalar_lea.vmem %s6, %s255
      %p257 = scmp.lt.s32.totalorder %s17, 1
      %s258 = scalar_select %p257, %s17, 1
      %s259 = smul.addr %s258, 20
      %s260 = smul.addr %s259, 8
      %s261 = scalar_lea.vmem %s0, %s260
      %p262 = scmp.lt.s32.totalorder %s17, 1
      %s263 = scalar_select %p262, %s17, 1
      %s264 = smul.addr %s263, 8
      %s265 = smul.addr %s264, 8
      %s266 = scalar_lea.vmem %s1, %s265
      %p267 = scmp.lt.s32.totalorder %s17, 1
      %s268 = scalar_select %p267, %s17, 1
      %s269 = smul.addr %s268, 32
      %s270 = smul.addr %s269, 8
      %s271 = scalar_lea.vmem %s6, %s270
      %v273 = vld [vmem:[%s261] sm:$0xff]
      %v274 = vld [vmem:[%s261 + $0x10] sm:$0xff]
      %v275 = vld [vmem:[%s261 + $0x20] sm:$0xff]
      %v276 = vld [vmem:[%s261 + $0x30] sm:$0xff]
      %v277 = vld [vmem:[%s261 + $0x40] sm:$0xff]
      %v278 = vld [vmem:[%s261 + $0x50] sm:$0xff]
      %v279 = vld [vmem:[%s261 + $0x60] sm:$0xff]
      %v280 = vld [vmem:[%s261 + $0x70] sm:$0xff]
      %v281 = vld [vmem:[%s261 + $0x1] sm:$0xff]
      %v282 = vld [vmem:[%s261 + $0x11] sm:$0xff]
      %v283 = vld [vmem:[%s261 + $0x21] sm:$0xff]
      %v284 = vld [vmem:[%s261 + $0x31] sm:$0xff]
      %v285 = vld [vmem:[%s261 + $0x41] sm:$0xff]
      %v286 = vld [vmem:[%s261 + $0x51] sm:$0xff]
      %v287 = vld [vmem:[%s261 + $0x61] sm:$0xff]
      %v288 = vld [vmem:[%s261 + $0x71] sm:$0xff]
      %v289 = vld [vmem:[%s261 + $0x2] sm:$0xff]
      %v290 = vld [vmem:[%s261 + $0x12] sm:$0xff]
      %v291 = vld [vmem:[%s261 + $0x22] sm:$0xff]
      %v292 = vld [vmem:[%s261 + $0x32] sm:$0xff]
      %v293 = vld [vmem:[%s261 + $0x42] sm:$0xff]
      %v294 = vld [vmem:[%s261 + $0x52] sm:$0xff]
      %v295 = vld [vmem:[%s261 + $0x62] sm:$0xff]
      %v296 = vld [vmem:[%s261 + $0x72] sm:$0xff]
      %s297 = scalar_lea.vmem %s261, 16
      %v298 = vld [vmem:[%s297] sm:$0xff]
      %v299 = vld [vmem:[%s297 + $0x10] sm:$0xff]
      %v300 = vld [vmem:[%s297 + $0x20] sm:$0xff]
      %v301 = vld [vmem:[%s297 + $0x30] sm:$0xff]
      %v302 = vld [vmem:[%s297 + $0x40] sm:$0xff]
      %v303 = vld [vmem:[%s297 + $0x50] sm:$0xff]
      %v304 = vld [vmem:[%s297 + $0x60] sm:$0xff]
      %v305 = vld [vmem:[%s297 + $0x70] sm:$0xff]
      %v306 = vld [vmem:[%s297 + $0x1] sm:$0xff]
      %v307 = vld [vmem:[%s297 + $0x11] sm:$0xff]
      %v308 = vld [vmem:[%s297 + $0x21] sm:$0xff]
      %v309 = vld [vmem:[%s297 + $0x31] sm:$0xff]
      %v310 = vld [vmem:[%s297 + $0x41] sm:$0xff]
      %v311 = vld [vmem:[%s297 + $0x51] sm:$0xff]
      %v312 = vld [vmem:[%s297 + $0x61] sm:$0xff]
      %v313 = vld [vmem:[%s297 + $0x71] sm:$0xff]
      %v314 = vld [vmem:[%s297 + $0x2] sm:$0xff]
      %v315 = vld [vmem:[%s297 + $0x12] sm:$0xff]
      %v316 = vld [vmem:[%s297 + $0x22] sm:$0xff]
      %v317 = vld [vmem:[%s297 + $0x32] sm:$0xff]
      %v318 = vld [vmem:[%s297 + $0x42] sm:$0xff]
      %v319 = vld [vmem:[%s297 + $0x52] sm:$0xff]
      %v320 = vld [vmem:[%s297 + $0x62] sm:$0xff]
      %v321 = vld [vmem:[%s297 + $0x72] sm:$0xff]
      %s322 = scalar_lea.vmem %s261, 32
      %v323 = vld [vmem:[%s322] sm:$0xff]
      %v324 = vld [vmem:[%s322 + $0x10] sm:$0xff]
      %v325 = vld [vmem:[%s322 + $0x20] sm:$0xff]
      %v326 = vld [vmem:[%s322 + $0x30] sm:$0xff]
      %v327 = vld [vmem:[%s322 + $0x40] sm:$0xff]
      %v328 = vld [vmem:[%s322 + $0x50] sm:$0xff]
      %v329 = vld [vmem:[%s322 + $0x60] sm:$0xff]
      %v330 = vld [vmem:[%s322 + $0x70] sm:$0xff]
      %v331 = vld [vmem:[%s322 + $0x1] sm:$0xff]
      %v332 = vld [vmem:[%s322 + $0x11] sm:$0xff]
      %v333 = vld [vmem:[%s322 + $0x21] sm:$0xff]
      %v334 = vld [vmem:[%s322 + $0x31] sm:$0xff]
      %v335 = vld [vmem:[%s322 + $0x41] sm:$0xff]
      %v336 = vld [vmem:[%s322 + $0x51] sm:$0xff]
      %v337 = vld [vmem:[%s322 + $0x61] sm:$0xff]
      %v338 = vld [vmem:[%s322 + $0x71] sm:$0xff]
      %v339 = vld [vmem:[%s322 + $0x2] sm:$0xff]
      %v340 = vld [vmem:[%s322 + $0x12] sm:$0xff]
      %v341 = vld [vmem:[%s322 + $0x22] sm:$0xff]
      %v342 = vld [vmem:[%s322 + $0x32] sm:$0xff]
      %v343 = vld [vmem:[%s322 + $0x42] sm:$0xff]
      %v344 = vld [vmem:[%s322 + $0x52] sm:$0xff]
      %v345 = vld [vmem:[%s322 + $0x62] sm:$0xff]
      %v346 = vld [vmem:[%s322 + $0x72] sm:$0xff]
      %355 = vrot.lane.b32.xlu0 %v281, 16
      %v356 = vpop.permute.xlu0 %355
      %357 = vrot.lane.b32.xlu0 %v282, 16
      %v358 = vpop.permute.xlu0 %357
      %359 = vrot.lane.b32.xlu0 %v283, 16
      %v360 = vpop.permute.xlu0 %359
      %361 = vrot.lane.b32.xlu0 %v284, 16
      %v362 = vpop.permute.xlu0 %361
      %363 = vrot.lane.b32.xlu0 %v285, 16
      %v364 = vpop.permute.xlu0 %363
      %365 = vrot.lane.b32.xlu0 %v286, 16
      %v366 = vpop.permute.xlu0 %365
      %367 = vrot.lane.b32.xlu0 %v287, 16
      %v368 = vpop.permute.xlu0 %367
      %369 = vrot.lane.b32.xlu0 %v288, 16
      %v370 = vpop.permute.xlu0 %369
      %387 = vrot.lane.b32.xlu0 %v289, 32
      %v388 = vpop.permute.xlu0 %387
      %389 = vrot.lane.b32.xlu0 %v290, 32
      %v390 = vpop.permute.xlu0 %389
      %391 = vrot.lane.b32.xlu0 %v291, 32
      %v392 = vpop.permute.xlu0 %391
      %393 = vrot.lane.b32.xlu0 %v292, 32
      %v394 = vpop.permute.xlu0 %393
      %395 = vrot.lane.b32.xlu0 %v293, 32
      %v396 = vpop.permute.xlu0 %395
      %397 = vrot.lane.b32.xlu0 %v294, 32
      %v398 = vpop.permute.xlu0 %397
      %399 = vrot.lane.b32.xlu0 %v295, 32
      %v400 = vpop.permute.xlu0 %399
      %401 = vrot.lane.b32.xlu0 %v296, 32
      %v402 = vpop.permute.xlu0 %401
      %419 = vrot.lane.b32.xlu0 %v298, 48
      %v420 = vpop.permute.xlu0 %419
      %421 = vrot.lane.b32.xlu0 %v299, 48
      %v422 = vpop.permute.xlu0 %421
      %423 = vrot.lane.b32.xlu0 %v300, 48
      %v424 = vpop.permute.xlu0 %423
      %425 = vrot.lane.b32.xlu0 %v301, 48
      %v426 = vpop.permute.xlu0 %425
      %427 = vrot.lane.b32.xlu0 %v302, 48
      %v428 = vpop.permute.xlu0 %427
      %429 = vrot.lane.b32.xlu0 %v303, 48
      %v430 = vpop.permute.xlu0 %429
      %431 = vrot.lane.b32.xlu0 %v304, 48
      %v432 = vpop.permute.xlu0 %431
      %433 = vrot.lane.b32.xlu0 %v305, 48
      %v434 = vpop.permute.xlu0 %433
      %451 = vrot.lane.b32.xlu0 %v306, 64
      %v452 = vpop.permute.xlu0 %451
      %453 = vrot.lane.b32.xlu0 %v307, 64
      %v454 = vpop.permute.xlu0 %453
      %455 = vrot.lane.b32.xlu0 %v308, 64
      %v456 = vpop.permute.xlu0 %455
      %457 = vrot.lane.b32.xlu0 %v309, 64
      %v458 = vpop.permute.xlu0 %457
      %459 = vrot.lane.b32.xlu0 %v310, 64
      %v460 = vpop.permute.xlu0 %459
      %461 = vrot.lane.b32.xlu0 %v311, 64
      %v462 = vpop.permute.xlu0 %461
      %463 = vrot.lane.b32.xlu0 %v312, 64
      %v464 = vpop.permute.xlu0 %463
      %465 = vrot.lane.b32.xlu0 %v313, 64
      %v466 = vpop.permute.xlu0 %465
      %483 = vrot.lane.b32.xlu0 %v314, 80
      %v484 = vpop.permute.xlu0 %483
      %485 = vrot.lane.b32.xlu0 %v315, 80
      %v486 = vpop.permute.xlu0 %485
      %487 = vrot.lane.b32.xlu0 %v316, 80
      %v488 = vpop.permute.xlu0 %487
      %489 = vrot.lane.b32.xlu0 %v317, 80
      %v490 = vpop.permute.xlu0 %489
      %491 = vrot.lane.b32.xlu0 %v318, 80
      %v492 = vpop.permute.xlu0 %491
      %493 = vrot.lane.b32.xlu0 %v319, 80
      %v494 = vpop.permute.xlu0 %493
      %495 = vrot.lane.b32.xlu0 %v320, 80
      %v496 = vpop.permute.xlu0 %495
      %497 = vrot.lane.b32.xlu0 %v321, 80
      %v498 = vpop.permute.xlu0 %497
      %515 = vrot.lane.b32.xlu0 %v323, 96
      %v516 = vpop.permute.xlu0 %515
      %517 = vrot.lane.b32.xlu0 %v324, 96
      %v518 = vpop.permute.xlu0 %517
      %519 = vrot.lane.b32.xlu0 %v325, 96
      %v520 = vpop.permute.xlu0 %519
      %521 = vrot.lane.b32.xlu0 %v326, 96
      %v522 = vpop.permute.xlu0 %521
      %523 = vrot.lane.b32.xlu0 %v327, 96
      %v524 = vpop.permute.xlu0 %523
      %525 = vrot.lane.b32.xlu0 %v328, 96
      %v526 = vpop.permute.xlu0 %525
      %527 = vrot.lane.b32.xlu0 %v329, 96
      %v528 = vpop.permute.xlu0 %527
      %529 = vrot.lane.b32.xlu0 %v330, 96
      %v530 = vpop.permute.xlu0 %529
      %547 = vrot.lane.b32.xlu0 %v331, 112
      %v548 = vpop.permute.xlu0 %547
      %549 = vrot.lane.b32.xlu0 %v332, 112
      %v550 = vpop.permute.xlu0 %549
      %551 = vrot.lane.b32.xlu0 %v333, 112
      %v552 = vpop.permute.xlu0 %551
      %553 = vrot.lane.b32.xlu0 %v334, 112
      %v554 = vpop.permute.xlu0 %553
      %555 = vrot.lane.b32.xlu0 %v335, 112
      %v556 = vpop.permute.xlu0 %555
      %557 = vrot.lane.b32.xlu0 %v336, 112
      %v558 = vpop.permute.xlu0 %557
      %559 = vrot.lane.b32.xlu0 %v337, 112
      %v560 = vpop.permute.xlu0 %559
      %561 = vrot.lane.b32.xlu0 %v338, 112
      %v562 = vpop.permute.xlu0 %561
      %vm571 = vcmask 130048
      %v572 = vsel %vm571, %v273, %v356
      %v573 = vsel %vm571, %v274, %v358
      %v574 = vsel %vm571, %v275, %v360
      %v575 = vsel %vm571, %v276, %v362
      %v576 = vsel %vm571, %v277, %v364
      %v577 = vsel %vm571, %v278, %v366
      %v578 = vsel %vm571, %v279, %v368
      %v579 = vsel %vm571, %v280, %v370
      %vm580 = vcmask 261120
      %v581 = vsel %vm580, %v572, %v388
      %v582 = vsel %vm580, %v573, %v390
      %v583 = vsel %vm580, %v574, %v392
      %v584 = vsel %vm580, %v575, %v394
      %v585 = vsel %vm580, %v576, %v396
      %v586 = vsel %vm580, %v577, %v398
      %v587 = vsel %vm580, %v578, %v400
      %v588 = vsel %vm580, %v579, %v402
      %vm589 = vcmask 392192
      %v590 = vsel %vm589, %v581, %v420
      %v591 = vsel %vm589, %v582, %v422
      %v592 = vsel %vm589, %v583, %v424
      %v593 = vsel %vm589, %v584, %v426
      %v594 = vsel %vm589, %v585, %v428
      %v595 = vsel %vm589, %v586, %v430
      %v596 = vsel %vm589, %v587, %v432
      %v597 = vsel %vm589, %v588, %v434
      %vm598 = vcmask 523264
      %v599 = vsel %vm598, %v590, %v452
      %v600 = vsel %vm598, %v591, %v454
      %v601 = vsel %vm598, %v592, %v456
      %v602 = vsel %vm598, %v593, %v458
      %v603 = vsel %vm598, %v594, %v460
      %v604 = vsel %vm598, %v595, %v462
      %v605 = vsel %vm598, %v596, %v464
      %v606 = vsel %vm598, %v597, %v466
      %vm607 = vcmask 654336
      %v608 = vsel %vm607, %v599, %v484
      %v609 = vsel %vm607, %v600, %v486
      %v610 = vsel %vm607, %v601, %v488
      %v611 = vsel %vm607, %v602, %v490
      %v612 = vsel %vm607, %v603, %v492
      %v613 = vsel %vm607, %v604, %v494
      %v614 = vsel %vm607, %v605, %v496
      %v615 = vsel %vm607, %v606, %v498
      %vm616 = vcmask 785408
      %v617 = vsel %vm616, %v608, %v516
      %v618 = vsel %vm616, %v609, %v518
      %v619 = vsel %vm616, %v610, %v520
      %v620 = vsel %vm616, %v611, %v522
      %v621 = vsel %vm616, %v612, %v524
      %v622 = vsel %vm616, %v613, %v526
      %v623 = vsel %vm616, %v614, %v528
      %v624 = vsel %vm616, %v615, %v530
      %vm625 = vcmask 916480
      %v626 = vsel %vm625, %v617, %v548
      %v627 = vsel %vm625, %v618, %v550
      %v628 = vsel %vm625, %v619, %v552
      %v629 = vsel %vm625, %v620, %v554
      %v630 = vsel %vm625, %v621, %v556
      %v631 = vsel %vm625, %v622, %v558
      %v632 = vsel %vm625, %v623, %v560
      %v633 = vsel %vm625, %v624, %v562
      %v634 = vpack.c.bf16 %v627, %v626
      %v635 = vpack.c.bf16 %v340, %v339
      %v636 = vpack.c.bf16 %v629, %v628
      %v637 = vpack.c.bf16 %v342, %v341
      %v638 = vpack.c.bf16 %v631, %v630
      %v639 = vpack.c.bf16 %v344, %v343
      %v640 = vpack.c.bf16 %v633, %v632
      %v641 = vpack.c.bf16 %v346, %v345
      %v642 = vld [vmem:[%s2] sm:$0xff]
      %v643 = vld [vmem:[%s2 + $0x8] sm:$0xff]
      %v644 = vld [vmem:[%s2 + $0x10] sm:$0xff]
      %v645 = vld [vmem:[%s2 + $0x18] sm:$0xff]
      %v646 = vld [vmem:[%s2 + $0x20] sm:$0xff]
      %v647 = vld [vmem:[%s2 + $0x28] sm:$0xff]
      %v648 = vld [vmem:[%s2 + $0x30] sm:$0xff]
      %v649 = vld [vmem:[%s2 + $0x38] sm:$0xff]
      %v650 = vld [vmem:[%s2 + $0x40] sm:$0xff]
      %v651 = vld [vmem:[%s2 + $0x48] sm:$0xff]
      %v652 = vld [vmem:[%s2 + $0x50] sm:$0xff]
      %v653 = vld [vmem:[%s2 + $0x58] sm:$0xff]
      %v654 = vld [vmem:[%s2 + $0x60] sm:$0xff]
      %v655 = vld [vmem:[%s2 + $0x68] sm:$0xff]
      %v656 = vld [vmem:[%s2 + $0x70] sm:$0xff]
      %v657 = vld [vmem:[%s2 + $0x78] sm:$0xff]
      %v658 = vld [vmem:[%s2 + $0x80] sm:$0xff]
      %v659 = vld [vmem:[%s2 + $0x88] sm:$0xff]
      %v660 = vpack.c.bf16 %v643, %v642
      %v661 = vpack.c.bf16 %v645, %v644
      %v662 = vpack.c.bf16 %v647, %v646
      %v663 = vpack.c.bf16 %v649, %v648
      %v664 = vpack.c.bf16 %v651, %v650
      %v665 = vpack.c.bf16 %v653, %v652
      %v666 = vpack.c.bf16 %v655, %v654
      %v667 = vpack.c.bf16 %v657, %v656
      %v668 = vpack.c.bf16 %v659, %v658
      %v670 = vsel %vm571, %v635, 0
      %v673 = vsel %vm571, %v637, 0
      %v676 = vsel %vm571, %v639, 0
      %v679 = vsel %vm571, %v641, 0
      %681 = vmatpush.bf16.msra.mxu0 %v667
      %682 = vmatpush.bf16.msra.mxu0 %v666
      %683 = vmatpush.bf16.msra.mxu0 %v665
      %684 = vmatpush.bf16.msra.mxu0 %v664
      %685 = vmatpush.bf16.msra.mxu0 %v663
      %686 = vmatpush.bf16.msra.mxu0 %v662
      %687 = vmatpush.bf16.msra.mxu0 %v661
      %688 = vmatpush.bf16.msra.mxu0 %v660
      %689 = vmatmul.bf16.gmra.mxu0 %v634
      %v690 = vpop.f32.mrf.mxu0
      %v691 = vadd.f32 0.0, %v690
      %v692 = vpop.f32.mrf.mxu0
      %v693 = vadd.f32 0.0, %v692
      %694 = vmatmul.bf16.gmra.mxu0 %v636
      %v695 = vpop.f32.mrf.mxu0
      %v696 = vadd.f32 0.0, %v695
      %v697 = vpop.f32.mrf.mxu0
      %v698 = vadd.f32 0.0, %v697
      %699 = vmatmul.bf16.gmra.mxu0 %v638
      %v700 = vpop.f32.mrf.mxu0
      %v701 = vadd.f32 0.0, %v700
      %v702 = vpop.f32.mrf.mxu0
      %v703 = vadd.f32 0.0, %v702
      %704 = vmatmul.bf16.gmra.mxu0 %v640
      %v705 = vpop.f32.mrf.mxu0
      %v706 = vadd.f32 0.0, %v705
      %v707 = vpop.f32.mrf.mxu0
      %v708 = vadd.f32 0.0, %v707
      %709 = vdwg.mxu0
      %710 = vmatpush.bf16.msra.mxu0 0
      %711 = vmatpush.bf16.msra.mxu0 0
      %712 = vmatpush.bf16.msra.mxu0 0
      %713 = vmatpush.bf16.msra.mxu0 0
      %714 = vmatpush.bf16.msra.mxu0 0
      %715 = vmatpush.bf16.msra.mxu0 0
      %716 = vmatpush.bf16.msra.mxu0 0
      %717 = vmatpush.bf16.msra.mxu0 %v668
      %718 = vmatmul.bf16.gmra.mxu0 %v670
      %v719 = vpop.f32.mrf.mxu0
      %v720 = vadd.f32 %v691, %v719
      %v721 = vpop.f32.mrf.mxu0
      %v722 = vadd.f32 %v693, %v721
      %723 = vmatmul.bf16.gmra.mxu0 %v673
      %v724 = vpop.f32.mrf.mxu0
      %v725 = vadd.f32 %v696, %v724
      %v726 = vpop.f32.mrf.mxu0
      %v727 = vadd.f32 %v698, %v726
      %728 = vmatmul.bf16.gmra.mxu0 %v676
      %v729 = vpop.f32.mrf.mxu0
      %v730 = vadd.f32 %v701, %v729
      %v731 = vpop.f32.mrf.mxu0
      %v732 = vadd.f32 %v703, %v731
      %733 = vmatmul.bf16.gmra.mxu0 %v679
      %v734 = vpop.f32.mrf.mxu0
      %v735 = vadd.f32 %v706, %v734
      %v736 = vpop.f32.mrf.mxu0
      %v737 = vadd.f32 %v708, %v736
      %738 = vdwg.mxu0
      %v739 = vld [vmem:[%s3] sm:$0xff]
      %v740 = vld [vmem:[%s3 + $0x8] sm:$0xff]
      %v741 = vld [vmem:[%s3 + $0x10] sm:$0xff]
      %v742 = vld [vmem:[%s3 + $0x18] sm:$0xff]
      %v743 = vld [vmem:[%s3 + $0x20] sm:$0xff]
      %v744 = vld [vmem:[%s3 + $0x28] sm:$0xff]
      %v745 = vld [vmem:[%s3 + $0x30] sm:$0xff]
      %v746 = vld [vmem:[%s3 + $0x38] sm:$0xff]
      %v747 = vld [vmem:[%s3 + $0x40] sm:$0xff]
      %v748 = vld [vmem:[%s3 + $0x48] sm:$0xff]
      %v749 = vld [vmem:[%s3 + $0x50] sm:$0xff]
      %v750 = vld [vmem:[%s3 + $0x58] sm:$0xff]
      %v751 = vld [vmem:[%s3 + $0x60] sm:$0xff]
      %v752 = vld [vmem:[%s3 + $0x68] sm:$0xff]
      %v753 = vld [vmem:[%s3 + $0x70] sm:$0xff]
      %v754 = vld [vmem:[%s3 + $0x78] sm:$0xff]
      %v755 = vld [vmem:[%s3 + $0x80] sm:$0xff]
      %v756 = vld [vmem:[%s3 + $0x88] sm:$0xff]
      %v757 = vld [vmem:[%s3 + $0x90] sm:$0xff]
      %v758 = vld [vmem:[%s3 + $0x98] sm:$0xff]
      %v759 = vld [vmem:[%s3 + $0xa0] sm:$0xff]
      %v760 = vld [vmem:[%s3 + $0xa8] sm:$0xff]
      %v761 = vld [vmem:[%s3 + $0xb0] sm:$0xff]
      %v762 = vld [vmem:[%s3 + $0xb8] sm:$0xff]
      %v763 = vld [vmem:[%s3 + $0xc0] sm:$0xff]
      %v764 = vld [vmem:[%s3 + $0xc8] sm:$0xff]
      %v765 = vld [vmem:[%s3 + $0xd0] sm:$0xff]
      %v766 = vld [vmem:[%s3 + $0xd8] sm:$0xff]
      %v767 = vld [vmem:[%s3 + $0xe0] sm:$0xff]
      %v768 = vld [vmem:[%s3 + $0xe8] sm:$0xff]
      %v769 = vld [vmem:[%s3 + $0xf0] sm:$0xff]
      %v770 = vld [vmem:[%s3 + $0xf8] sm:$0xff]
      %v771 = vpack.c.bf16 %v740, %v739
      %v772 = vpack.c.bf16 %v742, %v741
      %v773 = vpack.c.bf16 %v744, %v743
      %v774 = vpack.c.bf16 %v746, %v745
      %v775 = vpack.c.bf16 %v748, %v747
      %v776 = vpack.c.bf16 %v750, %v749
      %v777 = vpack.c.bf16 %v752, %v751
      %v778 = vpack.c.bf16 %v754, %v753
      %v779 = vpack.c.bf16 %v756, %v755
      %v780 = vpack.c.bf16 %v758, %v757
      %v781 = vpack.c.bf16 %v760, %v759
      %v782 = vpack.c.bf16 %v762, %v761
      %v783 = vpack.c.bf16 %v764, %v763
      %v784 = vpack.c.bf16 %v766, %v765
      %v785 = vpack.c.bf16 %v768, %v767
      %v786 = vpack.c.bf16 %v770, %v769
      %v787 = vpack.c.bf16 %v722, %v720
      %v788 = vpack.c.bf16 %v727, %v725
      %v789 = vpack.c.bf16 %v732, %v730
      %v790 = vpack.c.bf16 %v737, %v735
      %v792 = vsel %vm598, %v771, 0
      %v795 = vsel %vm598, %v772, 0
      %v798 = vsel %vm598, %v773, 0
      %v801 = vsel %vm598, %v774, 0
      %v804 = vsel %vm598, %v775, 0
      %v807 = vsel %vm598, %v776, 0
      %v810 = vsel %vm598, %v777, 0
      %v813 = vsel %vm598, %v778, 0
      %v816 = vsel %vm598, %v779, 0
      %v819 = vsel %vm598, %v780, 0
      %v822 = vsel %vm598, %v781, 0
      %v825 = vsel %vm598, %v782, 0
      %v828 = vsel %vm598, %v783, 0
      %v831 = vsel %vm598, %v784, 0
      %v834 = vsel %vm598, %v785, 0
      %v837 = vsel %vm598, %v786, 0
      %839 = vmatpush.bf16.msra.mxu0 0
      %840 = vmatpush.bf16.msra.mxu0 0
      %841 = vmatpush.bf16.msra.mxu0 0
      %842 = vmatpush.bf16.msra.mxu0 0
      %843 = vmatpush.bf16.msra.mxu0 %v790
      %844 = vmatpush.bf16.msra.mxu0 %v789
      %845 = vmatpush.bf16.msra.mxu0 %v788
      %846 = vmatpush.bf16.msra.mxu0 %v787
      %847 = vmatmul.bf16.gmra.mxu0 %v792
      %v848 = vpop.f32.mrf.mxu0
      %v849 = vadd.f32 0.0, %v848
      %v850 = vpop.f32.mrf.mxu0
      %v851 = vadd.f32 0.0, %v850
      %852 = vmatmul.bf16.gmra.mxu0 %v795
      %v853 = vpop.f32.mrf.mxu0
      %v854 = vadd.f32 0.0, %v853
      %v855 = vpop.f32.mrf.mxu0
      %v856 = vadd.f32 0.0, %v855
      %857 = vmatmul.bf16.gmra.mxu0 %v798
      %v858 = vpop.f32.mrf.mxu0
      %v859 = vadd.f32 0.0, %v858
      %v860 = vpop.f32.mrf.mxu0
      %v861 = vadd.f32 0.0, %v860
      %862 = vmatmul.bf16.gmra.mxu0 %v801
      %v863 = vpop.f32.mrf.mxu0
      %v864 = vadd.f32 0.0, %v863
      %v865 = vpop.f32.mrf.mxu0
      %v866 = vadd.f32 0.0, %v865
      %867 = vmatmul.bf16.gmra.mxu0 %v804
      %v868 = vpop.f32.mrf.mxu0
      %v869 = vadd.f32 0.0, %v868
      %v870 = vpop.f32.mrf.mxu0
      %v871 = vadd.f32 0.0, %v870
      %872 = vmatmul.bf16.gmra.mxu0 %v807
      %v873 = vpop.f32.mrf.mxu0
      %v874 = vadd.f32 0.0, %v873
      %v875 = vpop.f32.mrf.mxu0
      %v876 = vadd.f32 0.0, %v875
      %877 = vmatmul.bf16.gmra.mxu0 %v810
      %v878 = vpop.f32.mrf.mxu0
      %v879 = vadd.f32 0.0, %v878
      %v880 = vpop.f32.mrf.mxu0
      %v881 = vadd.f32 0.0, %v880
      %882 = vmatmul.bf16.gmra.mxu0 %v813
      %v883 = vpop.f32.mrf.mxu0
      %v884 = vadd.f32 0.0, %v883
      %v885 = vpop.f32.mrf.mxu0
      %v886 = vadd.f32 0.0, %v885
      %887 = vmatmul.bf16.gmra.mxu0 %v816
      %v888 = vpop.f32.mrf.mxu0
      %v889 = vadd.f32 0.0, %v888
      %v890 = vpop.f32.mrf.mxu0
      %v891 = vadd.f32 0.0, %v890
      %892 = vmatmul.bf16.gmra.mxu0 %v819
      %v893 = vpop.f32.mrf.mxu0
      %v894 = vadd.f32 0.0, %v893
      %v895 = vpop.f32.mrf.mxu0
      %v896 = vadd.f32 0.0, %v895
      %897 = vmatmul.bf16.gmra.mxu0 %v822
      %v898 = vpop.f32.mrf.mxu0
      %v899 = vadd.f32 0.0, %v898
      %v900 = vpop.f32.mrf.mxu0
      %v901 = vadd.f32 0.0, %v900
      %902 = vmatmul.bf16.gmra.mxu0 %v825
      %v903 = vpop.f32.mrf.mxu0
      %v904 = vadd.f32 0.0, %v903
      %v905 = vpop.f32.mrf.mxu0
      %v906 = vadd.f32 0.0, %v905
      %907 = vmatmul.bf16.gmra.mxu0 %v828
      %v908 = vpop.f32.mrf.mxu0
      %v909 = vadd.f32 0.0, %v908
      %v910 = vpop.f32.mrf.mxu0
      %v911 = vadd.f32 0.0, %v910
      %912 = vmatmul.bf16.gmra.mxu0 %v831
      %v913 = vpop.f32.mrf.mxu0
      %v914 = vadd.f32 0.0, %v913
      %v915 = vpop.f32.mrf.mxu0
      %v916 = vadd.f32 0.0, %v915
      %917 = vmatmul.bf16.gmra.mxu0 %v834
      %v918 = vpop.f32.mrf.mxu0
      %v919 = vadd.f32 0.0, %v918
      %v920 = vpop.f32.mrf.mxu0
      %v921 = vadd.f32 0.0, %v920
      %922 = vmatmul.bf16.gmra.mxu0 %v837
      %v923 = vpop.f32.mrf.mxu0
      %v924 = vadd.f32 0.0, %v923
      %v925 = vpop.f32.mrf.mxu0
      %v926 = vadd.f32 0.0, %v925
      %927 = vdwg.mxu0
      %v928 = vld [vmem:[%s266] sm:$0xff]
      %v929 = vld [vmem:[%s266 + $0x8] sm:$0xff]
      %v930 = vld [vmem:[%s266 + $0x10] sm:$0xff]
      %v931 = vld [vmem:[%s266 + $0x18] sm:$0xff]
      %v932 = vld [vmem:[%s266 + $0x20] sm:$0xff]
      %v933 = vld [vmem:[%s266 + $0x28] sm:$0xff]
      %v934 = vld [vmem:[%s266 + $0x30] sm:$0xff]
      %v935 = vld [vmem:[%s266 + $0x38] sm:$0xff]
      %v936 = vpack.c.bf16 %v929, %v928
      %v937 = vpack.c.bf16 %v931, %v930
      %v938 = vpack.c.bf16 %v933, %v932
      %v939 = vpack.c.bf16 %v935, %v934
      %940 = vmatpush.bf16.msra.mxu0 0
      %941 = vmatpush.bf16.msra.mxu0 0
      %942 = vmatpush.bf16.msra.mxu0 0
      %943 = vmatpush.bf16.msra.mxu0 0
      %944 = vmatpush.bf16.msra.mxu0 %v939
      %945 = vmatpush.bf16.msra.mxu0 %v938
      %946 = vmatpush.bf16.msra.mxu0 %v937
      %947 = vmatpush.bf16.msra.mxu0 %v936
      %948 = vmatmul.bf16.gmra.mxu0 %v792
      %v949 = vpop.f32.mrf.mxu0
      %v950 = vadd.f32 0.0, %v949
      %v951 = vpop.f32.mrf.mxu0
      %v952 = vadd.f32 0.0, %v951
      %953 = vmatmul.bf16.gmra.mxu0 %v795
      %v954 = vpop.f32.mrf.mxu0
      %v955 = vadd.f32 0.0, %v954
      %v956 = vpop.f32.mrf.mxu0
      %v957 = vadd.f32 0.0, %v956
      %958 = vmatmul.bf16.gmra.mxu0 %v798
      %v959 = vpop.f32.mrf.mxu0
      %v960 = vadd.f32 0.0, %v959
      %v961 = vpop.f32.mrf.mxu0
      %v962 = vadd.f32 0.0, %v961
      %963 = vmatmul.bf16.gmra.mxu0 %v801
      %v964 = vpop.f32.mrf.mxu0
      %v965 = vadd.f32 0.0, %v964
      %v966 = vpop.f32.mrf.mxu0
      %v967 = vadd.f32 0.0, %v966
      %968 = vmatmul.bf16.gmra.mxu0 %v804
      %v969 = vpop.f32.mrf.mxu0
      %v970 = vadd.f32 0.0, %v969
      %v971 = vpop.f32.mrf.mxu0
      %v972 = vadd.f32 0.0, %v971
      %973 = vmatmul.bf16.gmra.mxu0 %v807
      %v974 = vpop.f32.mrf.mxu0
      %v975 = vadd.f32 0.0, %v974
      %v976 = vpop.f32.mrf.mxu0
      %v977 = vadd.f32 0.0, %v976
      %978 = vmatmul.bf16.gmra.mxu0 %v810
      %v979 = vpop.f32.mrf.mxu0
      %v980 = vadd.f32 0.0, %v979
      %v981 = vpop.f32.mrf.mxu0
      %v982 = vadd.f32 0.0, %v981
      %983 = vmatmul.bf16.gmra.mxu0 %v813
      %v984 = vpop.f32.mrf.mxu0
      %v985 = vadd.f32 0.0, %v984
      %v986 = vpop.f32.mrf.mxu0
      %v987 = vadd.f32 0.0, %v986
      %988 = vmatmul.bf16.gmra.mxu0 %v816
      %v989 = vpop.f32.mrf.mxu0
      %v990 = vadd.f32 0.0, %v989
      %v991 = vpop.f32.mrf.mxu0
      %v992 = vadd.f32 0.0, %v991
      %993 = vmatmul.bf16.gmra.mxu0 %v819
      %v994 = vpop.f32.mrf.mxu0
      %v995 = vadd.f32 0.0, %v994
      %v996 = vpop.f32.mrf.mxu0
      %v997 = vadd.f32 0.0, %v996
      %998 = vmatmul.bf16.gmra.mxu0 %v822
      %v999 = vpop.f32.mrf.mxu0
      %v1000 = vadd.f32 0.0, %v999
      %v1001 = vpop.f32.mrf.mxu0
      %v1002 = vadd.f32 0.0, %v1001
      %1003 = vmatmul.bf16.gmra.mxu0 %v825
      %v1004 = vpop.f32.mrf.mxu0
      %v1005 = vadd.f32 0.0, %v1004
      %v1006 = vpop.f32.mrf.mxu0
      %v1007 = vadd.f32 0.0, %v1006
      %1008 = vmatmul.bf16.gmra.mxu0 %v828
      %v1009 = vpop.f32.mrf.mxu0
      %v1010 = vadd.f32 0.0, %v1009
      %v1011 = vpop.f32.mrf.mxu0
      %v1012 = vadd.f32 0.0, %v1011
      %1013 = vmatmul.bf16.gmra.mxu0 %v831
      %v1014 = vpop.f32.mrf.mxu0
      %v1015 = vadd.f32 0.0, %v1014
      %v1016 = vpop.f32.mrf.mxu0
      %v1017 = vadd.f32 0.0, %v1016
      %1018 = vmatmul.bf16.gmra.mxu0 %v834
      %v1019 = vpop.f32.mrf.mxu0
      %v1020 = vadd.f32 0.0, %v1019
      %v1021 = vpop.f32.mrf.mxu0
      %v1022 = vadd.f32 0.0, %v1021
      %1023 = vmatmul.bf16.gmra.mxu0 %v837
      %v1024 = vpop.f32.mrf.mxu0
      %v1025 = vadd.f32 0.0, %v1024
      %v1026 = vpop.f32.mrf.mxu0
      %v1027 = vadd.f32 0.0, %v1026
      %1028 = vdwg.mxu0
      %1061 = vrot.lane.b32.xlu0 %v950, 4
      %v1062 = vpop.permute.xlu0 %1061
      %1063 = vrot.lane.b32.xlu0 %v952, 4
      %v1064 = vpop.permute.xlu0 %1063
      %1065 = vrot.lane.b32.xlu0 %v955, 4
      %v1066 = vpop.permute.xlu0 %1065
      %1067 = vrot.lane.b32.xlu0 %v957, 4
      %v1068 = vpop.permute.xlu0 %1067
      %1069 = vrot.lane.b32.xlu0 %v960, 4
      %v1070 = vpop.permute.xlu0 %1069
      %1071 = vrot.lane.b32.xlu0 %v962, 4
      %v1072 = vpop.permute.xlu0 %1071
      %1073 = vrot.lane.b32.xlu0 %v965, 4
      %v1074 = vpop.permute.xlu0 %1073
      %1075 = vrot.lane.b32.xlu0 %v967, 4
      %v1076 = vpop.permute.xlu0 %1075
      %1077 = vrot.lane.b32.xlu0 %v970, 4
      %v1078 = vpop.permute.xlu0 %1077
      %1079 = vrot.lane.b32.xlu0 %v972, 4
      %v1080 = vpop.permute.xlu0 %1079
      %1081 = vrot.lane.b32.xlu0 %v975, 4
      %v1082 = vpop.permute.xlu0 %1081
      %1083 = vrot.lane.b32.xlu0 %v977, 4
      %v1084 = vpop.permute.xlu0 %1083
      %1085 = vrot.lane.b32.xlu0 %v980, 4
      %v1086 = vpop.permute.xlu0 %1085
      %1087 = vrot.lane.b32.xlu0 %v982, 4
      %v1088 = vpop.permute.xlu0 %1087
      %1089 = vrot.lane.b32.xlu0 %v985, 4
      %v1090 = vpop.permute.xlu0 %1089
      %1091 = vrot.lane.b32.xlu0 %v987, 4
      %v1092 = vpop.permute.xlu0 %1091
      %1093 = vrot.lane.b32.xlu0 %v990, 4
      %v1094 = vpop.permute.xlu0 %1093
      %1095 = vrot.lane.b32.xlu0 %v992, 4
      %v1096 = vpop.permute.xlu0 %1095
      %1097 = vrot.lane.b32.xlu0 %v995, 4
      %v1098 = vpop.permute.xlu0 %1097
      %1099 = vrot.lane.b32.xlu0 %v997, 4
      %v1100 = vpop.permute.xlu0 %1099
      %1101 = vrot.lane.b32.xlu0 %v1000, 4
      %v1102 = vpop.permute.xlu0 %1101
      %1103 = vrot.lane.b32.xlu0 %v1002, 4
      %v1104 = vpop.permute.xlu0 %1103
      %1105 = vrot.lane.b32.xlu0 %v1005, 4
      %v1106 = vpop.permute.xlu0 %1105
      %1107 = vrot.lane.b32.xlu0 %v1007, 4
      %v1108 = vpop.permute.xlu0 %1107
      %1109 = vrot.lane.b32.xlu0 %v1010, 4
      %v1110 = vpop.permute.xlu0 %1109
      %1111 = vrot.lane.b32.xlu0 %v1012, 4
      %v1112 = vpop.permute.xlu0 %1111
      %1113 = vrot.lane.b32.xlu0 %v1015, 4
      %v1114 = vpop.permute.xlu0 %1113
      %1115 = vrot.lane.b32.xlu0 %v1017, 4
      %v1116 = vpop.permute.xlu0 %1115
      %1117 = vrot.lane.b32.xlu0 %v1020, 4
      %v1118 = vpop.permute.xlu0 %1117
      %1119 = vrot.lane.b32.xlu0 %v1022, 4
      %v1120 = vpop.permute.xlu0 %1119
      %1121 = vrot.lane.b32.xlu0 %v1025, 4
      %v1122 = vpop.permute.xlu0 %1121
      %1123 = vrot.lane.b32.xlu0 %v1027, 4
      %v1124 = vpop.permute.xlu0 %1123
      %vm1157 = vcmask 31744
      %v1158 = vsel %vm1157, %v849, %v1062
      %v1159 = vsel %vm1157, %v851, %v1064
      %v1160 = vsel %vm1157, %v854, %v1066
      %v1161 = vsel %vm1157, %v856, %v1068
      %v1162 = vsel %vm1157, %v859, %v1070
      %v1163 = vsel %vm1157, %v861, %v1072
      %v1164 = vsel %vm1157, %v864, %v1074
      %v1165 = vsel %vm1157, %v866, %v1076
      %v1166 = vsel %vm1157, %v869, %v1078
      %v1167 = vsel %vm1157, %v871, %v1080
      %v1168 = vsel %vm1157, %v874, %v1082
      %v1169 = vsel %vm1157, %v876, %v1084
      %v1170 = vsel %vm1157, %v879, %v1086
      %v1171 = vsel %vm1157, %v881, %v1088
      %v1172 = vsel %vm1157, %v884, %v1090
      %v1173 = vsel %vm1157, %v886, %v1092
      %v1174 = vsel %vm1157, %v889, %v1094
      %v1175 = vsel %vm1157, %v891, %v1096
      %v1176 = vsel %vm1157, %v894, %v1098
      %v1177 = vsel %vm1157, %v896, %v1100
      %v1178 = vsel %vm1157, %v899, %v1102
      %v1179 = vsel %vm1157, %v901, %v1104
      %v1180 = vsel %vm1157, %v904, %v1106
      %v1181 = vsel %vm1157, %v906, %v1108
      %v1182 = vsel %vm1157, %v909, %v1110
      %v1183 = vsel %vm1157, %v911, %v1112
      %v1184 = vsel %vm1157, %v914, %v1114
      %v1185 = vsel %vm1157, %v916, %v1116
      %v1186 = vsel %vm1157, %v919, %v1118
      %v1187 = vsel %vm1157, %v921, %v1120
      %v1188 = vsel %vm1157, %v924, %v1122
      %v1189 = vsel %vm1157, %v926, %v1124
      %vm1190 = vcmask 64512
      %v1191 = vsel %vm1190, %v1158, 0.0
      %1192 = vadd.xlane.f32.xlu0 %v1191
      %v1193 = vpop.xlane.xlu0 %1192
      %v1194 = vsel %vm1190, %v1159, 0.0
      %1195 = vadd.xlane.f32.xlu0 %v1194
      %v1196 = vpop.xlane.xlu0 %1195
      %v1197 = vsel %vm1190, %v1160, 0.0
      %1198 = vadd.xlane.f32.xlu0 %v1197
      %v1199 = vpop.xlane.xlu0 %1198
      %v1200 = vsel %vm1190, %v1161, 0.0
      %1201 = vadd.xlane.f32.xlu0 %v1200
      %v1202 = vpop.xlane.xlu0 %1201
      %v1203 = vsel %vm1190, %v1162, 0.0
      %1204 = vadd.xlane.f32.xlu0 %v1203
      %v1205 = vpop.xlane.xlu0 %1204
      %v1206 = vsel %vm1190, %v1163, 0.0
      %1207 = vadd.xlane.f32.xlu0 %v1206
      %v1208 = vpop.xlane.xlu0 %1207
      %v1209 = vsel %vm1190, %v1164, 0.0
      %1210 = vadd.xlane.f32.xlu0 %v1209
      %v1211 = vpop.xlane.xlu0 %1210
      %v1212 = vsel %vm1190, %v1165, 0.0
      %1213 = vadd.xlane.f32.xlu0 %v1212
      %v1214 = vpop.xlane.xlu0 %1213
      %v1215 = vsel %vm1190, %v1166, 0.0
      %1216 = vadd.xlane.f32.xlu0 %v1215
      %v1217 = vpop.xlane.xlu0 %1216
      %v1218 = vsel %vm1190, %v1167, 0.0
      %1219 = vadd.xlane.f32.xlu0 %v1218
      %v1220 = vpop.xlane.xlu0 %1219
      %v1221 = vsel %vm1190, %v1168, 0.0
      %1222 = vadd.xlane.f32.xlu0 %v1221
      %v1223 = vpop.xlane.xlu0 %1222
      %v1224 = vsel %vm1190, %v1169, 0.0
      %1225 = vadd.xlane.f32.xlu0 %v1224
      %v1226 = vpop.xlane.xlu0 %1225
      %v1227 = vsel %vm1190, %v1170, 0.0
      %1228 = vadd.xlane.f32.xlu0 %v1227
      %v1229 = vpop.xlane.xlu0 %1228
      %v1230 = vsel %vm1190, %v1171, 0.0
      %1231 = vadd.xlane.f32.xlu0 %v1230
      %v1232 = vpop.xlane.xlu0 %1231
      %v1233 = vsel %vm1190, %v1172, 0.0
      %1234 = vadd.xlane.f32.xlu0 %v1233
      %v1235 = vpop.xlane.xlu0 %1234
      %v1236 = vsel %vm1190, %v1173, 0.0
      %1237 = vadd.xlane.f32.xlu0 %v1236
      %v1238 = vpop.xlane.xlu0 %1237
      %v1239 = vsel %vm1190, %v1174, 0.0
      %1240 = vadd.xlane.f32.xlu0 %v1239
      %v1241 = vpop.xlane.xlu0 %1240
      %v1242 = vsel %vm1190, %v1175, 0.0
      %1243 = vadd.xlane.f32.xlu0 %v1242
      %v1244 = vpop.xlane.xlu0 %1243
      %v1245 = vsel %vm1190, %v1176, 0.0
      %1246 = vadd.xlane.f32.xlu0 %v1245
      %v1247 = vpop.xlane.xlu0 %1246
      %v1248 = vsel %vm1190, %v1177, 0.0
      %1249 = vadd.xlane.f32.xlu0 %v1248
      %v1250 = vpop.xlane.xlu0 %1249
      %v1251 = vsel %vm1190, %v1178, 0.0
      %1252 = vadd.xlane.f32.xlu0 %v1251
      %v1253 = vpop.xlane.xlu0 %1252
      %v1254 = vsel %vm1190, %v1179, 0.0
      %1255 = vadd.xlane.f32.xlu0 %v1254
      %v1256 = vpop.xlane.xlu0 %1255
      %v1257 = vsel %vm1190, %v1180, 0.0
      %1258 = vadd.xlane.f32.xlu0 %v1257
      %v1259 = vpop.xlane.xlu0 %1258
      %v1260 = vsel %vm1190, %v1181, 0.0
      %1261 = vadd.xlane.f32.xlu0 %v1260
      %v1262 = vpop.xlane.xlu0 %1261
      %v1263 = vsel %vm1190, %v1182, 0.0
      %1264 = vadd.xlane.f32.xlu0 %v1263
      %v1265 = vpop.xlane.xlu0 %1264
      %v1266 = vsel %vm1190, %v1183, 0.0
      %1267 = vadd.xlane.f32.xlu0 %v1266
      %v1268 = vpop.xlane.xlu0 %1267
      %v1269 = vsel %vm1190, %v1184, 0.0
      %1270 = vadd.xlane.f32.xlu0 %v1269
      %v1271 = vpop.xlane.xlu0 %1270
      %v1272 = vsel %vm1190, %v1185, 0.0
      %1273 = vadd.xlane.f32.xlu0 %v1272
      %v1274 = vpop.xlane.xlu0 %1273
      %v1275 = vsel %vm1190, %v1186, 0.0
      %1276 = vadd.xlane.f32.xlu0 %v1275
      %v1277 = vpop.xlane.xlu0 %1276
      %v1278 = vsel %vm1190, %v1187, 0.0
      %1279 = vadd.xlane.f32.xlu0 %v1278
      %v1280 = vpop.xlane.xlu0 %1279
      %v1281 = vsel %vm1190, %v1188, 0.0
      %1282 = vadd.xlane.f32.xlu0 %v1281
      %v1283 = vpop.xlane.xlu0 %1282
      %v1284 = vsel %vm1190, %v1189, 0.0
      %1285 = vadd.xlane.f32.xlu0 %v1284
      %v1286 = vpop.xlane.xlu0 %1285
      %v1287 = vrcp.pop 8.0
      %v1288 = vmul.f32 8.0, %v1287
      %v1289 = vsub.f32 1.0, %v1288
      %v1290 = vmul.f32 %v1287, %v1289
      %v1291 = vadd.f32 %v1287, %v1290
      %vm1292 = vweird.f32 %v1287
      %v1293 = vsel %vm1292, %v1287, %v1291
      %v1294 = vmul.f32 %v1193, %v1293
      %v1295 = vmul.f32 %v1196, %v1293
      %v1296 = vmul.f32 %v1199, %v1293
      %v1297 = vmul.f32 %v1202, %v1293
      %v1298 = vmul.f32 %v1205, %v1293
      %v1299 = vmul.f32 %v1208, %v1293
      %v1300 = vmul.f32 %v1211, %v1293
      %v1301 = vmul.f32 %v1214, %v1293
      %v1302 = vmul.f32 %v1217, %v1293
      %v1303 = vmul.f32 %v1220, %v1293
      %v1304 = vmul.f32 %v1223, %v1293
      %v1305 = vmul.f32 %v1226, %v1293
      %v1306 = vmul.f32 %v1229, %v1293
      %v1307 = vmul.f32 %v1232, %v1293
      %v1308 = vmul.f32 %v1235, %v1293
      %v1309 = vmul.f32 %v1238, %v1293
      %v1310 = vmul.f32 %v1241, %v1293
      %v1311 = vmul.f32 %v1244, %v1293
      %v1312 = vmul.f32 %v1247, %v1293
      %v1313 = vmul.f32 %v1250, %v1293
      %v1314 = vmul.f32 %v1253, %v1293
      %v1315 = vmul.f32 %v1256, %v1293
      %v1316 = vmul.f32 %v1259, %v1293
      %v1317 = vmul.f32 %v1262, %v1293
      %v1318 = vmul.f32 %v1265, %v1293
      %v1319 = vmul.f32 %v1268, %v1293
      %v1320 = vmul.f32 %v1271, %v1293
      %v1321 = vmul.f32 %v1274, %v1293
      %v1322 = vmul.f32 %v1277, %v1293
      %v1323 = vmul.f32 %v1280, %v1293
      %v1324 = vmul.f32 %v1283, %v1293
      %v1325 = vmul.f32 %v1286, %v1293
      %v1326 = vsub.f32 %v1158, %v1294
      %v1327 = vsub.f32 %v1159, %v1295
      %v1328 = vsub.f32 %v1160, %v1296
      %v1329 = vsub.f32 %v1161, %v1297
      %v1330 = vsub.f32 %v1162, %v1298
      %v1331 = vsub.f32 %v1163, %v1299
      %v1332 = vsub.f32 %v1164, %v1300
      %v1333 = vsub.f32 %v1165, %v1301
      %v1334 = vsub.f32 %v1166, %v1302
      %v1335 = vsub.f32 %v1167, %v1303
      %v1336 = vsub.f32 %v1168, %v1304
      %v1337 = vsub.f32 %v1169, %v1305
      %v1338 = vsub.f32 %v1170, %v1306
      %v1339 = vsub.f32 %v1171, %v1307
      %v1340 = vsub.f32 %v1172, %v1308
      %v1341 = vsub.f32 %v1173, %v1309
      %v1342 = vsub.f32 %v1174, %v1310
      %v1343 = vsub.f32 %v1175, %v1311
      %v1344 = vsub.f32 %v1176, %v1312
      %v1345 = vsub.f32 %v1177, %v1313
      %v1346 = vsub.f32 %v1178, %v1314
      %v1347 = vsub.f32 %v1179, %v1315
      %v1348 = vsub.f32 %v1180, %v1316
      %v1349 = vsub.f32 %v1181, %v1317
      %v1350 = vsub.f32 %v1182, %v1318
      %v1351 = vsub.f32 %v1183, %v1319
      %v1352 = vsub.f32 %v1184, %v1320
      %v1353 = vsub.f32 %v1185, %v1321
      %v1354 = vsub.f32 %v1186, %v1322
      %v1355 = vsub.f32 %v1187, %v1323
      %v1356 = vsub.f32 %v1188, %v1324
      %v1357 = vsub.f32 %v1189, %v1325
      %v1358 = vmul.f32 %v1326, %v1326
      %v1359 = vmul.f32 %v1327, %v1327
      %v1360 = vmul.f32 %v1328, %v1328
      %v1361 = vmul.f32 %v1329, %v1329
      %v1362 = vmul.f32 %v1330, %v1330
      %v1363 = vmul.f32 %v1331, %v1331
      %v1364 = vmul.f32 %v1332, %v1332
      %v1365 = vmul.f32 %v1333, %v1333
      %v1366 = vmul.f32 %v1334, %v1334
      %v1367 = vmul.f32 %v1335, %v1335
      %v1368 = vmul.f32 %v1336, %v1336
      %v1369 = vmul.f32 %v1337, %v1337
      %v1370 = vmul.f32 %v1338, %v1338
      %v1371 = vmul.f32 %v1339, %v1339
      %v1372 = vmul.f32 %v1340, %v1340
      %v1373 = vmul.f32 %v1341, %v1341
      %v1374 = vmul.f32 %v1342, %v1342
      %v1375 = vmul.f32 %v1343, %v1343
      %v1376 = vmul.f32 %v1344, %v1344
      %v1377 = vmul.f32 %v1345, %v1345
      %v1378 = vmul.f32 %v1346, %v1346
      %v1379 = vmul.f32 %v1347, %v1347
      %v1380 = vmul.f32 %v1348, %v1348
      %v1381 = vmul.f32 %v1349, %v1349
      %v1382 = vmul.f32 %v1350, %v1350
      %v1383 = vmul.f32 %v1351, %v1351
      %v1384 = vmul.f32 %v1352, %v1352
      %v1385 = vmul.f32 %v1353, %v1353
      %v1386 = vmul.f32 %v1354, %v1354
      %v1387 = vmul.f32 %v1355, %v1355
      %v1388 = vmul.f32 %v1356, %v1356
      %v1389 = vmul.f32 %v1357, %v1357
      %v1390 = vsel %vm1190, %v1358, 0.0
      %1391 = vadd.xlane.f32.xlu0 %v1390
      %v1392 = vpop.xlane.xlu0 %1391
      %v1393 = vsel %vm1190, %v1359, 0.0
      %1394 = vadd.xlane.f32.xlu0 %v1393
      %v1395 = vpop.xlane.xlu0 %1394
      %v1396 = vsel %vm1190, %v1360, 0.0
      %1397 = vadd.xlane.f32.xlu0 %v1396
      %v1398 = vpop.xlane.xlu0 %1397
      %v1399 = vsel %vm1190, %v1361, 0.0
      %1400 = vadd.xlane.f32.xlu0 %v1399
      %v1401 = vpop.xlane.xlu0 %1400
      %v1402 = vsel %vm1190, %v1362, 0.0
      %1403 = vadd.xlane.f32.xlu0 %v1402
      %v1404 = vpop.xlane.xlu0 %1403
      %v1405 = vsel %vm1190, %v1363, 0.0
      %1406 = vadd.xlane.f32.xlu0 %v1405
      %v1407 = vpop.xlane.xlu0 %1406
      %v1408 = vsel %vm1190, %v1364, 0.0
      %1409 = vadd.xlane.f32.xlu0 %v1408
      %v1410 = vpop.xlane.xlu0 %1409
      %v1411 = vsel %vm1190, %v1365, 0.0
      %1412 = vadd.xlane.f32.xlu0 %v1411
      %v1413 = vpop.xlane.xlu0 %1412
      %v1414 = vsel %vm1190, %v1366, 0.0
      %1415 = vadd.xlane.f32.xlu0 %v1414
      %v1416 = vpop.xlane.xlu0 %1415
      %v1417 = vsel %vm1190, %v1367, 0.0
      %1418 = vadd.xlane.f32.xlu0 %v1417
      %v1419 = vpop.xlane.xlu0 %1418
      %v1420 = vsel %vm1190, %v1368, 0.0
      %1421 = vadd.xlane.f32.xlu0 %v1420
      %v1422 = vpop.xlane.xlu0 %1421
      %v1423 = vsel %vm1190, %v1369, 0.0
      %1424 = vadd.xlane.f32.xlu0 %v1423
      %v1425 = vpop.xlane.xlu0 %1424
      %v1426 = vsel %vm1190, %v1370, 0.0
      %1427 = vadd.xlane.f32.xlu0 %v1426
      %v1428 = vpop.xlane.xlu0 %1427
      %v1429 = vsel %vm1190, %v1371, 0.0
      %1430 = vadd.xlane.f32.xlu0 %v1429
      %v1431 = vpop.xlane.xlu0 %1430
      %v1432 = vsel %vm1190, %v1372, 0.0
      %1433 = vadd.xlane.f32.xlu0 %v1432
      %v1434 = vpop.xlane.xlu0 %1433
      %v1435 = vsel %vm1190, %v1373, 0.0
      %1436 = vadd.xlane.f32.xlu0 %v1435
      %v1437 = vpop.xlane.xlu0 %1436
      %v1438 = vsel %vm1190, %v1374, 0.0
      %1439 = vadd.xlane.f32.xlu0 %v1438
      %v1440 = vpop.xlane.xlu0 %1439
      %v1441 = vsel %vm1190, %v1375, 0.0
      %1442 = vadd.xlane.f32.xlu0 %v1441
      %v1443 = vpop.xlane.xlu0 %1442
      %v1444 = vsel %vm1190, %v1376, 0.0
      %1445 = vadd.xlane.f32.xlu0 %v1444
      %v1446 = vpop.xlane.xlu0 %1445
      %v1447 = vsel %vm1190, %v1377, 0.0
      %1448 = vadd.xlane.f32.xlu0 %v1447
      %v1449 = vpop.xlane.xlu0 %1448
      %v1450 = vsel %vm1190, %v1378, 0.0
      %1451 = vadd.xlane.f32.xlu0 %v1450
      %v1452 = vpop.xlane.xlu0 %1451
      %v1453 = vsel %vm1190, %v1379, 0.0
      %1454 = vadd.xlane.f32.xlu0 %v1453
      %v1455 = vpop.xlane.xlu0 %1454
      %v1456 = vsel %vm1190, %v1380, 0.0
      %1457 = vadd.xlane.f32.xlu0 %v1456
      %v1458 = vpop.xlane.xlu0 %1457
      %v1459 = vsel %vm1190, %v1381, 0.0
      %1460 = vadd.xlane.f32.xlu0 %v1459
      %v1461 = vpop.xlane.xlu0 %1460
      %v1462 = vsel %vm1190, %v1382, 0.0
      %1463 = vadd.xlane.f32.xlu0 %v1462
      %v1464 = vpop.xlane.xlu0 %1463
      %v1465 = vsel %vm1190, %v1383, 0.0
      %1466 = vadd.xlane.f32.xlu0 %v1465
      %v1467 = vpop.xlane.xlu0 %1466
      %v1468 = vsel %vm1190, %v1384, 0.0
      %1469 = vadd.xlane.f32.xlu0 %v1468
      %v1470 = vpop.xlane.xlu0 %1469
      %v1471 = vsel %vm1190, %v1385, 0.0
      %1472 = vadd.xlane.f32.xlu0 %v1471
      %v1473 = vpop.xlane.xlu0 %1472
      %v1474 = vsel %vm1190, %v1386, 0.0
      %1475 = vadd.xlane.f32.xlu0 %v1474
      %v1476 = vpop.xlane.xlu0 %1475
      %v1477 = vsel %vm1190, %v1387, 0.0
      %1478 = vadd.xlane.f32.xlu0 %v1477
      %v1479 = vpop.xlane.xlu0 %1478
      %v1480 = vsel %vm1190, %v1388, 0.0
      %1481 = vadd.xlane.f32.xlu0 %v1480
      %v1482 = vpop.xlane.xlu0 %1481
      %v1483 = vsel %vm1190, %v1389, 0.0
      %1484 = vadd.xlane.f32.xlu0 %v1483
      %v1485 = vpop.xlane.xlu0 %1484
      %v1486 = vmul.f32 %v1392, %v1293
      %v1487 = vmul.f32 %v1395, %v1293
      %v1488 = vmul.f32 %v1398, %v1293
      %v1489 = vmul.f32 %v1401, %v1293
      %v1490 = vmul.f32 %v1404, %v1293
      %v1491 = vmul.f32 %v1407, %v1293
      %v1492 = vmul.f32 %v1410, %v1293
      %v1493 = vmul.f32 %v1413, %v1293
      %v1494 = vmul.f32 %v1416, %v1293
      %v1495 = vmul.f32 %v1419, %v1293
      %v1496 = vmul.f32 %v1422, %v1293
      %v1497 = vmul.f32 %v1425, %v1293
      %v1498 = vmul.f32 %v1428, %v1293
      %v1499 = vmul.f32 %v1431, %v1293
      %v1500 = vmul.f32 %v1434, %v1293
      %v1501 = vmul.f32 %v1437, %v1293
      %v1502 = vmul.f32 %v1440, %v1293
      %v1503 = vmul.f32 %v1443, %v1293
      %v1504 = vmul.f32 %v1446, %v1293
      %v1505 = vmul.f32 %v1449, %v1293
      %v1506 = vmul.f32 %v1452, %v1293
      %v1507 = vmul.f32 %v1455, %v1293
      %v1508 = vmul.f32 %v1458, %v1293
      %v1509 = vmul.f32 %v1461, %v1293
      %v1510 = vmul.f32 %v1464, %v1293
      %v1511 = vmul.f32 %v1467, %v1293
      %v1512 = vmul.f32 %v1470, %v1293
      %v1513 = vmul.f32 %v1473, %v1293
      %v1514 = vmul.f32 %v1476, %v1293
      %v1515 = vmul.f32 %v1479, %v1293
      %v1516 = vmul.f32 %v1482, %v1293
      %v1517 = vmul.f32 %v1485, %v1293
      %v1518 = vadd.f32 %v1486, 1e-06
      %v1519 = vadd.f32 %v1487, 1e-06
      %v1520 = vadd.f32 %v1488, 1e-06
      %v1521 = vadd.f32 %v1489, 1e-06
      %v1522 = vadd.f32 %v1490, 1e-06
      %v1523 = vadd.f32 %v1491, 1e-06
      %v1524 = vadd.f32 %v1492, 1e-06
      %v1525 = vadd.f32 %v1493, 1e-06
      %v1526 = vadd.f32 %v1494, 1e-06
      %v1527 = vadd.f32 %v1495, 1e-06
      %v1528 = vadd.f32 %v1496, 1e-06
      %v1529 = vadd.f32 %v1497, 1e-06
      %v1530 = vadd.f32 %v1498, 1e-06
      %v1531 = vadd.f32 %v1499, 1e-06
      %v1532 = vadd.f32 %v1500, 1e-06
      %v1533 = vadd.f32 %v1501, 1e-06
      %v1534 = vadd.f32 %v1502, 1e-06
      %v1535 = vadd.f32 %v1503, 1e-06
      %v1536 = vadd.f32 %v1504, 1e-06
      %v1537 = vadd.f32 %v1505, 1e-06
      %v1538 = vadd.f32 %v1506, 1e-06
      %v1539 = vadd.f32 %v1507, 1e-06
      %v1540 = vadd.f32 %v1508, 1e-06
      %v1541 = vadd.f32 %v1509, 1e-06
      %v1542 = vadd.f32 %v1510, 1e-06
      %v1543 = vadd.f32 %v1511, 1e-06
      %v1544 = vadd.f32 %v1512, 1e-06
      %v1545 = vadd.f32 %v1513, 1e-06
      %v1546 = vadd.f32 %v1514, 1e-06
      %v1547 = vadd.f32 %v1515, 1e-06
      %v1548 = vadd.f32 %v1516, 1e-06
      %v1549 = vadd.f32 %v1517, 1e-06
      %v1550 = vrsqrt.pop %v1518
      %v1551 = vmul.f32 %v1550, %v1518
      %v1552 = vmul.f32 %v1551, %v1550
      %v1553 = vmul.f32 0.5, %v1552
      %v1554 = vsub.f32 1.5, %v1553
      %v1555 = vmul.f32 %v1550, %v1554
      %vm1556 = vweird.f32 %v1518
      %vm1557 = vweird.f32 %v1550
      %vm1558 = vmor %vm1556, %vm1557
      %v1559 = vsel %vm1558, %v1550, %v1555
      %v1560 = vrsqrt.pop %v1519
      %v1561 = vmul.f32 %v1560, %v1519
      %v1562 = vmul.f32 %v1561, %v1560
      %v1563 = vmul.f32 0.5, %v1562
      %v1564 = vsub.f32 1.5, %v1563
      %v1565 = vmul.f32 %v1560, %v1564
      %vm1566 = vweird.f32 %v1519
      %vm1567 = vweird.f32 %v1560
      %vm1568 = vmor %vm1566, %vm1567
      %v1569 = vsel %vm1568, %v1560, %v1565
      %v1570 = vrsqrt.pop %v1520
      %v1571 = vmul.f32 %v1570, %v1520
      %v1572 = vmul.f32 %v1571, %v1570
      %v1573 = vmul.f32 0.5, %v1572
      %v1574 = vsub.f32 1.5, %v1573
      %v1575 = vmul.f32 %v1570, %v1574
      %vm1576 = vweird.f32 %v1520
      %vm1577 = vweird.f32 %v1570
      %vm1578 = vmor %vm1576, %vm1577
      %v1579 = vsel %vm1578, %v1570, %v1575
      %v1580 = vrsqrt.pop %v1521
      %v1581 = vmul.f32 %v1580, %v1521
      %v1582 = vmul.f32 %v1581, %v1580
      %v1583 = vmul.f32 0.5, %v1582
      %v1584 = vsub.f32 1.5, %v1583
      %v1585 = vmul.f32 %v1580, %v1584
      %vm1586 = vweird.f32 %v1521
      %vm1587 = vweird.f32 %v1580
      %vm1588 = vmor %vm1586, %vm1587
      %v1589 = vsel %vm1588, %v1580, %v1585
      %v1590 = vrsqrt.pop %v1522
      %v1591 = vmul.f32 %v1590, %v1522
      %v1592 = vmul.f32 %v1591, %v1590
      %v1593 = vmul.f32 0.5, %v1592
      %v1594 = vsub.f32 1.5, %v1593
      %v1595 = vmul.f32 %v1590, %v1594
      %vm1596 = vweird.f32 %v1522
      %vm1597 = vweird.f32 %v1590
      %vm1598 = vmor %vm1596, %vm1597
      %v1599 = vsel %vm1598, %v1590, %v1595
      %v1600 = vrsqrt.pop %v1523
      %v1601 = vmul.f32 %v1600, %v1523
      %v1602 = vmul.f32 %v1601, %v1600
      %v1603 = vmul.f32 0.5, %v1602
      %v1604 = vsub.f32 1.5, %v1603
      %v1605 = vmul.f32 %v1600, %v1604
      %vm1606 = vweird.f32 %v1523
      %vm1607 = vweird.f32 %v1600
      %vm1608 = vmor %vm1606, %vm1607
      %v1609 = vsel %vm1608, %v1600, %v1605
      %v1610 = vrsqrt.pop %v1524
      %v1611 = vmul.f32 %v1610, %v1524
      %v1612 = vmul.f32 %v1611, %v1610
      %v1613 = vmul.f32 0.5, %v1612
      %v1614 = vsub.f32 1.5, %v1613
      %v1615 = vmul.f32 %v1610, %v1614
      %vm1616 = vweird.f32 %v1524
      %vm1617 = vweird.f32 %v1610
      %vm1618 = vmor %vm1616, %vm1617
      %v1619 = vsel %vm1618, %v1610, %v1615
      %v1620 = vrsqrt.pop %v1525
      %v1621 = vmul.f32 %v1620, %v1525
      %v1622 = vmul.f32 %v1621, %v1620
      %v1623 = vmul.f32 0.5, %v1622
      %v1624 = vsub.f32 1.5, %v1623
      %v1625 = vmul.f32 %v1620, %v1624
      %vm1626 = vweird.f32 %v1525
      %vm1627 = vweird.f32 %v1620
      %vm1628 = vmor %vm1626, %vm1627
      %v1629 = vsel %vm1628, %v1620, %v1625
      %v1630 = vrsqrt.pop %v1526
      %v1631 = vmul.f32 %v1630, %v1526
      %v1632 = vmul.f32 %v1631, %v1630
      %v1633 = vmul.f32 0.5, %v1632
      %v1634 = vsub.f32 1.5, %v1633
      %v1635 = vmul.f32 %v1630, %v1634
      %vm1636 = vweird.f32 %v1526
      %vm1637 = vweird.f32 %v1630
      %vm1638 = vmor %vm1636, %vm1637
      %v1639 = vsel %vm1638, %v1630, %v1635
      %v1640 = vrsqrt.pop %v1527
      %v1641 = vmul.f32 %v1640, %v1527
      %v1642 = vmul.f32 %v1641, %v1640
      %v1643 = vmul.f32 0.5, %v1642
      %v1644 = vsub.f32 1.5, %v1643
      %v1645 = vmul.f32 %v1640, %v1644
      %vm1646 = vweird.f32 %v1527
      %vm1647 = vweird.f32 %v1640
      %vm1648 = vmor %vm1646, %vm1647
      %v1649 = vsel %vm1648, %v1640, %v1645
      %v1650 = vrsqrt.pop %v1528
      %v1651 = vmul.f32 %v1650, %v1528
      %v1652 = vmul.f32 %v1651, %v1650
      %v1653 = vmul.f32 0.5, %v1652
      %v1654 = vsub.f32 1.5, %v1653
      %v1655 = vmul.f32 %v1650, %v1654
      %vm1656 = vweird.f32 %v1528
      %vm1657 = vweird.f32 %v1650
      %vm1658 = vmor %vm1656, %vm1657
      %v1659 = vsel %vm1658, %v1650, %v1655
      %v1660 = vrsqrt.pop %v1529
      %v1661 = vmul.f32 %v1660, %v1529
      %v1662 = vmul.f32 %v1661, %v1660
      %v1663 = vmul.f32 0.5, %v1662
      %v1664 = vsub.f32 1.5, %v1663
      %v1665 = vmul.f32 %v1660, %v1664
      %vm1666 = vweird.f32 %v1529
      %vm1667 = vweird.f32 %v1660
      %vm1668 = vmor %vm1666, %vm1667
      %v1669 = vsel %vm1668, %v1660, %v1665
      %v1670 = vrsqrt.pop %v1530
      %v1671 = vmul.f32 %v1670, %v1530
      %v1672 = vmul.f32 %v1671, %v1670
      %v1673 = vmul.f32 0.5, %v1672
      %v1674 = vsub.f32 1.5, %v1673
      %v1675 = vmul.f32 %v1670, %v1674
      %vm1676 = vweird.f32 %v1530
      %vm1677 = vweird.f32 %v1670
      %vm1678 = vmor %vm1676, %vm1677
      %v1679 = vsel %vm1678, %v1670, %v1675
      %v1680 = vrsqrt.pop %v1531
      %v1681 = vmul.f32 %v1680, %v1531
      %v1682 = vmul.f32 %v1681, %v1680
      %v1683 = vmul.f32 0.5, %v1682
      %v1684 = vsub.f32 1.5, %v1683
      %v1685 = vmul.f32 %v1680, %v1684
      %vm1686 = vweird.f32 %v1531
      %vm1687 = vweird.f32 %v1680
      %vm1688 = vmor %vm1686, %vm1687
      %v1689 = vsel %vm1688, %v1680, %v1685
      %v1690 = vrsqrt.pop %v1532
      %v1691 = vmul.f32 %v1690, %v1532
      %v1692 = vmul.f32 %v1691, %v1690
      %v1693 = vmul.f32 0.5, %v1692
      %v1694 = vsub.f32 1.5, %v1693
      %v1695 = vmul.f32 %v1690, %v1694
      %vm1696 = vweird.f32 %v1532
      %vm1697 = vweird.f32 %v1690
      %vm1698 = vmor %vm1696, %vm1697
      %v1699 = vsel %vm1698, %v1690, %v1695
      %v1700 = vrsqrt.pop %v1533
      %v1701 = vmul.f32 %v1700, %v1533
      %v1702 = vmul.f32 %v1701, %v1700
      %v1703 = vmul.f32 0.5, %v1702
      %v1704 = vsub.f32 1.5, %v1703
      %v1705 = vmul.f32 %v1700, %v1704
      %vm1706 = vweird.f32 %v1533
      %vm1707 = vweird.f32 %v1700
      %vm1708 = vmor %vm1706, %vm1707
      %v1709 = vsel %vm1708, %v1700, %v1705
      %v1710 = vrsqrt.pop %v1534
      %v1711 = vmul.f32 %v1710, %v1534
      %v1712 = vmul.f32 %v1711, %v1710
      %v1713 = vmul.f32 0.5, %v1712
      %v1714 = vsub.f32 1.5, %v1713
      %v1715 = vmul.f32 %v1710, %v1714
      %vm1716 = vweird.f32 %v1534
      %vm1717 = vweird.f32 %v1710
      %vm1718 = vmor %vm1716, %vm1717
      %v1719 = vsel %vm1718, %v1710, %v1715
      %v1720 = vrsqrt.pop %v1535
      %v1721 = vmul.f32 %v1720, %v1535
      %v1722 = vmul.f32 %v1721, %v1720
      %v1723 = vmul.f32 0.5, %v1722
      %v1724 = vsub.f32 1.5, %v1723
      %v1725 = vmul.f32 %v1720, %v1724
      %vm1726 = vweird.f32 %v1535
      %vm1727 = vweird.f32 %v1720
      %vm1728 = vmor %vm1726, %vm1727
      %v1729 = vsel %vm1728, %v1720, %v1725
      %v1730 = vrsqrt.pop %v1536
      %v1731 = vmul.f32 %v1730, %v1536
      %v1732 = vmul.f32 %v1731, %v1730
      %v1733 = vmul.f32 0.5, %v1732
      %v1734 = vsub.f32 1.5, %v1733
      %v1735 = vmul.f32 %v1730, %v1734
      %vm1736 = vweird.f32 %v1536
      %vm1737 = vweird.f32 %v1730
      %vm1738 = vmor %vm1736, %vm1737
      %v1739 = vsel %vm1738, %v1730, %v1735
      %v1740 = vrsqrt.pop %v1537
      %v1741 = vmul.f32 %v1740, %v1537
      %v1742 = vmul.f32 %v1741, %v1740
      %v1743 = vmul.f32 0.5, %v1742
      %v1744 = vsub.f32 1.5, %v1743
      %v1745 = vmul.f32 %v1740, %v1744
      %vm1746 = vweird.f32 %v1537
      %vm1747 = vweird.f32 %v1740
      %vm1748 = vmor %vm1746, %vm1747
      %v1749 = vsel %vm1748, %v1740, %v1745
      %v1750 = vrsqrt.pop %v1538
      %v1751 = vmul.f32 %v1750, %v1538
      %v1752 = vmul.f32 %v1751, %v1750
      %v1753 = vmul.f32 0.5, %v1752
      %v1754 = vsub.f32 1.5, %v1753
      %v1755 = vmul.f32 %v1750, %v1754
      %vm1756 = vweird.f32 %v1538
      %vm1757 = vweird.f32 %v1750
      %vm1758 = vmor %vm1756, %vm1757
      %v1759 = vsel %vm1758, %v1750, %v1755
      %v1760 = vrsqrt.pop %v1539
      %v1761 = vmul.f32 %v1760, %v1539
      %v1762 = vmul.f32 %v1761, %v1760
      %v1763 = vmul.f32 0.5, %v1762
      %v1764 = vsub.f32 1.5, %v1763
      %v1765 = vmul.f32 %v1760, %v1764
      %vm1766 = vweird.f32 %v1539
      %vm1767 = vweird.f32 %v1760
      %vm1768 = vmor %vm1766, %vm1767
      %v1769 = vsel %vm1768, %v1760, %v1765
      %v1770 = vrsqrt.pop %v1540
      %v1771 = vmul.f32 %v1770, %v1540
      %v1772 = vmul.f32 %v1771, %v1770
      %v1773 = vmul.f32 0.5, %v1772
      %v1774 = vsub.f32 1.5, %v1773
      %v1775 = vmul.f32 %v1770, %v1774
      %vm1776 = vweird.f32 %v1540
      %vm1777 = vweird.f32 %v1770
      %vm1778 = vmor %vm1776, %vm1777
      %v1779 = vsel %vm1778, %v1770, %v1775
      %v1780 = vrsqrt.pop %v1541
      %v1781 = vmul.f32 %v1780, %v1541
      %v1782 = vmul.f32 %v1781, %v1780
      %v1783 = vmul.f32 0.5, %v1782
      %v1784 = vsub.f32 1.5, %v1783
      %v1785 = vmul.f32 %v1780, %v1784
      %vm1786 = vweird.f32 %v1541
      %vm1787 = vweird.f32 %v1780
      %vm1788 = vmor %vm1786, %vm1787
      %v1789 = vsel %vm1788, %v1780, %v1785
      %v1790 = vrsqrt.pop %v1542
      %v1791 = vmul.f32 %v1790, %v1542
      %v1792 = vmul.f32 %v1791, %v1790
      %v1793 = vmul.f32 0.5, %v1792
      %v1794 = vsub.f32 1.5, %v1793
      %v1795 = vmul.f32 %v1790, %v1794
      %vm1796 = vweird.f32 %v1542
      %vm1797 = vweird.f32 %v1790
      %vm1798 = vmor %vm1796, %vm1797
      %v1799 = vsel %vm1798, %v1790, %v1795
      %v1800 = vrsqrt.pop %v1543
      %v1801 = vmul.f32 %v1800, %v1543
      %v1802 = vmul.f32 %v1801, %v1800
      %v1803 = vmul.f32 0.5, %v1802
      %v1804 = vsub.f32 1.5, %v1803
      %v1805 = vmul.f32 %v1800, %v1804
      %vm1806 = vweird.f32 %v1543
      %vm1807 = vweird.f32 %v1800
      %vm1808 = vmor %vm1806, %vm1807
      %v1809 = vsel %vm1808, %v1800, %v1805
      %v1810 = vrsqrt.pop %v1544
      %v1811 = vmul.f32 %v1810, %v1544
      %v1812 = vmul.f32 %v1811, %v1810
      %v1813 = vmul.f32 0.5, %v1812
      %v1814 = vsub.f32 1.5, %v1813
      %v1815 = vmul.f32 %v1810, %v1814
      %vm1816 = vweird.f32 %v1544
      %vm1817 = vweird.f32 %v1810
      %vm1818 = vmor %vm1816, %vm1817
      %v1819 = vsel %vm1818, %v1810, %v1815
      %v1820 = vrsqrt.pop %v1545
      %v1821 = vmul.f32 %v1820, %v1545
      %v1822 = vmul.f32 %v1821, %v1820
      %v1823 = vmul.f32 0.5, %v1822
      %v1824 = vsub.f32 1.5, %v1823
      %v1825 = vmul.f32 %v1820, %v1824
      %vm1826 = vweird.f32 %v1545
      %vm1827 = vweird.f32 %v1820
      %vm1828 = vmor %vm1826, %vm1827
      %v1829 = vsel %vm1828, %v1820, %v1825
      %v1830 = vrsqrt.pop %v1546
      %v1831 = vmul.f32 %v1830, %v1546
      %v1832 = vmul.f32 %v1831, %v1830
      %v1833 = vmul.f32 0.5, %v1832
      %v1834 = vsub.f32 1.5, %v1833
      %v1835 = vmul.f32 %v1830, %v1834
      %vm1836 = vweird.f32 %v1546
      %vm1837 = vweird.f32 %v1830
      %vm1838 = vmor %vm1836, %vm1837
      %v1839 = vsel %vm1838, %v1830, %v1835
      %v1840 = vrsqrt.pop %v1547
      %v1841 = vmul.f32 %v1840, %v1547
      %v1842 = vmul.f32 %v1841, %v1840
      %v1843 = vmul.f32 0.5, %v1842
      %v1844 = vsub.f32 1.5, %v1843
      %v1845 = vmul.f32 %v1840, %v1844
      %vm1846 = vweird.f32 %v1547
      %vm1847 = vweird.f32 %v1840
      %vm1848 = vmor %vm1846, %vm1847
      %v1849 = vsel %vm1848, %v1840, %v1845
      %v1850 = vrsqrt.pop %v1548
      %v1851 = vmul.f32 %v1850, %v1548
      %v1852 = vmul.f32 %v1851, %v1850
      %v1853 = vmul.f32 0.5, %v1852
      %v1854 = vsub.f32 1.5, %v1853
      %v1855 = vmul.f32 %v1850, %v1854
      %vm1856 = vweird.f32 %v1548
      %vm1857 = vweird.f32 %v1850
      %vm1858 = vmor %vm1856, %vm1857
      %v1859 = vsel %vm1858, %v1850, %v1855
      %v1860 = vrsqrt.pop %v1549
      %v1861 = vmul.f32 %v1860, %v1549
      %v1862 = vmul.f32 %v1861, %v1860
      %v1863 = vmul.f32 0.5, %v1862
      %v1864 = vsub.f32 1.5, %v1863
      %v1865 = vmul.f32 %v1860, %v1864
      %vm1866 = vweird.f32 %v1549
      %vm1867 = vweird.f32 %v1860
      %vm1868 = vmor %vm1866, %vm1867
      %v1869 = vsel %vm1868, %v1860, %v1865
      %v1870 = vmul.f32 %v1326, %v1559
      %v1871 = vmul.f32 %v1327, %v1569
      %v1872 = vmul.f32 %v1328, %v1579
      %v1873 = vmul.f32 %v1329, %v1589
      %v1874 = vmul.f32 %v1330, %v1599
      %v1875 = vmul.f32 %v1331, %v1609
      %v1876 = vmul.f32 %v1332, %v1619
      %v1877 = vmul.f32 %v1333, %v1629
      %v1878 = vmul.f32 %v1334, %v1639
      %v1879 = vmul.f32 %v1335, %v1649
      %v1880 = vmul.f32 %v1336, %v1659
      %v1881 = vmul.f32 %v1337, %v1669
      %v1882 = vmul.f32 %v1338, %v1679
      %v1883 = vmul.f32 %v1339, %v1689
      %v1884 = vmul.f32 %v1340, %v1699
      %v1885 = vmul.f32 %v1341, %v1709
      %v1886 = vmul.f32 %v1342, %v1719
      %v1887 = vmul.f32 %v1343, %v1729
      %v1888 = vmul.f32 %v1344, %v1739
      %v1889 = vmul.f32 %v1345, %v1749
      %v1890 = vmul.f32 %v1346, %v1759
      %v1891 = vmul.f32 %v1347, %v1769
      %v1892 = vmul.f32 %v1348, %v1779
      %v1893 = vmul.f32 %v1349, %v1789
      %v1894 = vmul.f32 %v1350, %v1799
      %v1895 = vmul.f32 %v1351, %v1809
      %v1896 = vmul.f32 %v1352, %v1819
      %v1897 = vmul.f32 %v1353, %v1829
      %v1898 = vmul.f32 %v1354, %v1839
      %v1899 = vmul.f32 %v1355, %v1849
      %v1900 = vmul.f32 %v1356, %v1859
      %v1901 = vmul.f32 %v1357, %v1869
      %v1902 = vld [vmem:[%s4] sm:$0x1]
      %v1904 = vperm.slane %v1902, 0
      %v1906 = vmul.f32 %v1870, %v1904
      %v1907 = vmul.f32 %v1871, %v1904
      %v1908 = vmul.f32 %v1872, %v1904
      %v1909 = vmul.f32 %v1873, %v1904
      %v1910 = vmul.f32 %v1874, %v1904
      %v1911 = vmul.f32 %v1875, %v1904
      %v1912 = vmul.f32 %v1876, %v1904
      %v1913 = vmul.f32 %v1877, %v1904
      %v1914 = vmul.f32 %v1878, %v1904
      %v1915 = vmul.f32 %v1879, %v1904
      %v1916 = vmul.f32 %v1880, %v1904
      %v1917 = vmul.f32 %v1881, %v1904
      %v1918 = vmul.f32 %v1882, %v1904
      %v1919 = vmul.f32 %v1883, %v1904
      %v1920 = vmul.f32 %v1884, %v1904
      %v1921 = vmul.f32 %v1885, %v1904
      %v1922 = vmul.f32 %v1886, %v1904
      %v1923 = vmul.f32 %v1887, %v1904
      %v1924 = vmul.f32 %v1888, %v1904
      %v1925 = vmul.f32 %v1889, %v1904
      %v1926 = vmul.f32 %v1890, %v1904
      %v1927 = vmul.f32 %v1891, %v1904
      %v1928 = vmul.f32 %v1892, %v1904
      %v1929 = vmul.f32 %v1893, %v1904
      %v1930 = vmul.f32 %v1894, %v1904
      %v1931 = vmul.f32 %v1895, %v1904
      %v1932 = vmul.f32 %v1896, %v1904
      %v1933 = vmul.f32 %v1897, %v1904
      %v1934 = vmul.f32 %v1898, %v1904
      %v1935 = vmul.f32 %v1899, %v1904
      %v1936 = vmul.f32 %v1900, %v1904
      %v1937 = vmul.f32 %v1901, %v1904
      %v1938 = vld [vmem:[%s5] sm:$0x1]
      %v1940 = vperm.slane %v1938, 0
      %v1942 = vadd.f32 %v1906, %v1940
      %v1943 = vadd.f32 %v1907, %v1940
      %v1944 = vadd.f32 %v1908, %v1940
      %v1945 = vadd.f32 %v1909, %v1940
      %v1946 = vadd.f32 %v1910, %v1940
      %v1947 = vadd.f32 %v1911, %v1940
      %v1948 = vadd.f32 %v1912, %v1940
      %v1949 = vadd.f32 %v1913, %v1940
      %v1950 = vadd.f32 %v1914, %v1940
      %v1951 = vadd.f32 %v1915, %v1940
      %v1952 = vadd.f32 %v1916, %v1940
      %v1953 = vadd.f32 %v1917, %v1940
      %v1954 = vadd.f32 %v1918, %v1940
      %v1955 = vadd.f32 %v1919, %v1940
      %v1956 = vadd.f32 %v1920, %v1940
      %v1957 = vadd.f32 %v1921, %v1940
      %v1958 = vadd.f32 %v1922, %v1940
      %v1959 = vadd.f32 %v1923, %v1940
      %v1960 = vadd.f32 %v1924, %v1940
      %v1961 = vadd.f32 %v1925, %v1940
      %v1962 = vadd.f32 %v1926, %v1940
      %v1963 = vadd.f32 %v1927, %v1940
      %v1964 = vadd.f32 %v1928, %v1940
      %v1965 = vadd.f32 %v1929, %v1940
      %v1966 = vadd.f32 %v1930, %v1940
      %v1967 = vadd.f32 %v1931, %v1940
      %v1968 = vadd.f32 %v1932, %v1940
      %v1969 = vadd.f32 %v1933, %v1940
      %v1970 = vadd.f32 %v1934, %v1940
      %v1971 = vadd.f32 %v1935, %v1940
      %v1972 = vadd.f32 %v1936, %v1940
      %v1973 = vadd.f32 %v1937, %v1940
      %1974 = vst.msk [vmem:[%s271] sm:$0xff] %vm1190, %v1942
      %1975 = vst.msk [vmem:[%s271 + $0x8] sm:$0xff] %vm1190, %v1943
      %1976 = vst.msk [vmem:[%s271 + $0x10] sm:$0xff] %vm1190, %v1944
      %1977 = vst.msk [vmem:[%s271 + $0x18] sm:$0xff] %vm1190, %v1945
      %1978 = vst.msk [vmem:[%s271 + $0x20] sm:$0xff] %vm1190, %v1946
      %1979 = vst.msk [vmem:[%s271 + $0x28] sm:$0xff] %vm1190, %v1947
      %1980 = vst.msk [vmem:[%s271 + $0x30] sm:$0xff] %vm1190, %v1948
      %1981 = vst.msk [vmem:[%s271 + $0x38] sm:$0xff] %vm1190, %v1949
      %1982 = vst.msk [vmem:[%s271 + $0x40] sm:$0xff] %vm1190, %v1950
      %1983 = vst.msk [vmem:[%s271 + $0x48] sm:$0xff] %vm1190, %v1951
      %1984 = vst.msk [vmem:[%s271 + $0x50] sm:$0xff] %vm1190, %v1952
      %1985 = vst.msk [vmem:[%s271 + $0x58] sm:$0xff] %vm1190, %v1953
      %1986 = vst.msk [vmem:[%s271 + $0x60] sm:$0xff] %vm1190, %v1954
      %1987 = vst.msk [vmem:[%s271 + $0x68] sm:$0xff] %vm1190, %v1955
      %1988 = vst.msk [vmem:[%s271 + $0x70] sm:$0xff] %vm1190, %v1956
      %1989 = vst.msk [vmem:[%s271 + $0x78] sm:$0xff] %vm1190, %v1957
      %1990 = vst.msk [vmem:[%s271 + $0x80] sm:$0xff] %vm1190, %v1958
      %1991 = vst.msk [vmem:[%s271 + $0x88] sm:$0xff] %vm1190, %v1959
      %1992 = vst.msk [vmem:[%s271 + $0x90] sm:$0xff] %vm1190, %v1960
      %1993 = vst.msk [vmem:[%s271 + $0x98] sm:$0xff] %vm1190, %v1961
      %1994 = vst.msk [vmem:[%s271 + $0xa0] sm:$0xff] %vm1190, %v1962
      %1995 = vst.msk [vmem:[%s271 + $0xa8] sm:$0xff] %vm1190, %v1963
      %1996 = vst.msk [vmem:[%s271 + $0xb0] sm:$0xff] %vm1190, %v1964
      %1997 = vst.msk [vmem:[%s271 + $0xb8] sm:$0xff] %vm1190, %v1965
      %1998 = vst.msk [vmem:[%s271 + $0xc0] sm:$0xff] %vm1190, %v1966
      %1999 = vst.msk [vmem:[%s271 + $0xc8] sm:$0xff] %vm1190, %v1967
      %2000 = vst.msk [vmem:[%s271 + $0xd0] sm:$0xff] %vm1190, %v1968
      %2001 = vst.msk [vmem:[%s271 + $0xd8] sm:$0xff] %vm1190, %v1969
      %2002 = vst.msk [vmem:[%s271 + $0xe0] sm:$0xff] %vm1190, %v1970
      %2003 = vst.msk [vmem:[%s271 + $0xe8] sm:$0xff] %vm1190, %v1971
      %2004 = vst.msk [vmem:[%s271 + $0xf0] sm:$0xff] %vm1190, %v1972
      %2005 = vst.msk [vmem:[%s271 + $0xf8] sm:$0xff] %vm1190, %v1973
      %p2006 = scmp.lt.s32.totalorder %s17, 1
      %s2007 = scalar_select %p2006, %s17, 1
      %s2008 = smul.addr %s2007, 32
      %s2009 = smul.addr %s2008, 8
      %s2010 = scalar_lea.vmem %s6, %s2009
      // Predicated region
      $region45: #{upblock_forward.4} parent=43 // pred_check
        %p2011 = pneg %p171
      $region46: #{upblock_forward.4} parent=43 // pred_check_branch
        %2013 = sbr.rel (%p2011) target = $region48
      $region47: #{upblock_forward.4} parent=43 // pred_region
        _
      $region48: #{upblock_forward.4} parent=43 // pred_fallthru
        _
    $region44: #{upblock_forward.4} parent=5 // pred_fallthru
      _
    %p2014 = scmp.le.s32.totalorder 2, %s12
    // Predicated region
    $region49: #{upblock_forward.4} parent=5 // pred_check
      %p2015 = pneg %p2014
    $region50: #{upblock_forward.4} parent=5 // pred_check_branch
      %2017 = sbr.rel (%p2015) target = $region52
    $region51: #{upblock_forward.4} parent=5 // pred_region
      %s2018 = ssub.s32 %s12, 2
      // Predicated region
      $region53: #{upblock_forward.4} parent=51 // pred_check
        %p2019 = pneg %p177
      $region54: #{upblock_forward.4} parent=51 // pred_check_branch
        %2021 = sbr.rel (%p2019) target = $region56
      $region55: #{upblock_forward.4} parent=51 // pred_region
        %p2022 = scmp.lt.s32.totalorder %s18, 1
        %s2023 = scalar_select %p2022, %s18, 1
        %s2024 = smul.addr %s2023, 32
        %s2025 = smul.addr %s2024, 8
        %s2026 = scalar_lea.vmem %s6, %s2025
      $region56: #{upblock_forward.4} parent=51 // pred_fallthru
        _
    $region52: #{upblock_forward.4} parent=5 // pred_fallthru
      _
  $region6: #{upblock_forward.4} parent=0 // loop_footer
    %s16 = sadd.s32 1, %s12
  $region7: #{upblock_forward.4} parent=0 // loop_footer_branch
    %11 = sbr.rel target = $region3
  $region8: #{upblock_forward.4} parent=0 // loop_exit
    _

// kernel: upblock_forward.3
$region0: #{upblock_forward.3}
  #allocation0 [shape = 'u32[]', space=smem, size = 0x4, offset = 0x4, fixed_abs, tag = 'smem constant byte address 0x4 - core index']
  #allocation1 [shape = 'u32[72,128]{1,0:T(1,128)}', space=vmem, size = 0x9000, scoped, tag = 'internal scratch']
  %s0 = inlined_call_operand.vmem [shape: f32[2,10,10,8], index: 0, kind: input, shape index: {}]
  %s1 = inlined_call_operand.vmem [shape: f32[2,18,18,4], index: 1, kind: input, shape index: {}]
  %s2 = inlined_call_operand.vmem [shape: f32[72,36], index: 2, kind: input, shape index: {}]
  %s3 = inlined_call_operand.vmem [shape: f32[36,16], index: 3, kind: input, shape index: {}]
  %s4 = inlined_call_operand.vmem [shape: f32[64,256], index: 4, kind: input, shape index: {}]
  %s5 = inlined_call_operand.vmem [shape: f32[4,4], index: 5, kind: input, shape index: {}]
  %s6 = inlined_call_operand.vmem [shape: f32[4,4], index: 6, kind: input, shape index: {}]
  %s7 = inlined_call_operand.vmem [shape: f32[4,4], index: 7, kind: input, shape index: {}]
  %s8 = inlined_call_operand.vmem [shape: f32[4,4], index: 8, kind: input, shape index: {}]
  %s9 = inlined_call_operand.vmem [shape: f32[2,64,16], index: 9, kind: output, shape index: {0}]
  %s10 = inlined_call_operand.vmem [shape: f32[2,64,4], index: 10, kind: output, shape index: {1}]
  %11 = xla_tuple %s9, %s10
  %s12 = sld [smem:[#allocation0]]
  $region77: #{upblock_forward.3} parent=0
    _
  %s14 = ssub.s32 1, %s12
  %s15 = scalar_select 0, %s14, %s12
  loop: start=0, step=1, limit=4
  $region2: #{upblock_forward.3} parent=0 // loop_pre_header
    _
  $region3: #{upblock_forward.3} parent=0 // loop_header
    %s17 = sphi 0, %s21
    %p18 = scmp.ge.s32.totalorder %s17, 4
    %s27 = sphi 0, %s29
    %s30 = sphi 0, %s27
    %s31 = sphi 0, %s30
    %s47 = sphi 0, %s31
    %s53 = sphi 0, %s55
    %s56 = sphi 0, %s53
    %s57 = sphi 0, %s56
    %s73 = sphi 0, %s57
    %s77 = sphi 0, %s77
    %s79 = sphi 0, %s77
    %s80 = sphi 0, %s79
    %s94 = sphi 0, %s80
    %s98 = sphi 0, %s98
    %s100 = sphi 0, %s98
    %s101 = sphi 0, %s100
    %s115 = sphi 0, %s101
    %s119 = sphi 0, %s119
    %s121 = sphi 0, %s119
    %s122 = sphi 0, %s121
    %s136 = sphi 0, %s122
    %s140 = sphi 0, %s140
    %s142 = sphi 0, %s140
    %s143 = sphi 0, %s142
    %s157 = sphi 0, %s143
    %s161 = sphi 0, %s161
    %s163 = sphi 0, %s161
    %s164 = sphi 0, %s163
    %s178 = sphi 0, %s164
    %s182 = sphi 0, %s182
    %s184 = sphi 0, %s182
    %s185 = sphi 0, %s184
    %s199 = sphi 0, %s185
    %s203 = sphi 0, %s203
    %s205 = sphi 0, %s203
    %s206 = sphi 0, %s205
    %s220 = sphi 0, %s206
    %s226 = sphi 0, %s228
    %s229 = sphi 0, %s226
    %s230 = sphi 0, %s229
    %s246 = sphi 0, %s230
    %s252 = sphi 0, %s254
    %s255 = sphi 0, %s252
    %s256 = sphi 0, %s255
    %s272 = sphi 0, %s256
  $region4: #{upblock_forward.3} parent=0 // loop_header_branch
    %20 = sbr.rel (%p18) target = $region8
  $region5: #{upblock_forward.3} parent=0 // loop_body
    %s22 = ssub.s32 %s17, 1
    %s23 = ssub.s32 %s17, 2
    %s24 = sadd.s32 %s17, 1
    %s25 = ssub.s32 %s17, %s24
    %p26 = scmp.eq.s32.totalorder %s25, 0
    %s28 = sadd.s32 %s27, 1
    %s29 = scalar_select %p26, %s27, %s28
    %p32 = pneg %p26
    %p33 = scmp.eq.s32.totalorder %s17, 1
    %p34 = por %p32, %p33
    %p35 = scmp.ne.s32.totalorder %s27, %s30
    %p36 = scmp.eq.s32.totalorder %s17, 0
    %p37 = por %p35, %p36
    %p38 = scmp.ne.s32.totalorder %s27, %s30
    %p39 = scmp.eq.s32.totalorder %s22, 1
    %p40 = por %p38, %p39
    %p41 = scmp.ne.s32.totalorder %s30, %s31
    %p42 = scmp.eq.s32.totalorder %s22, 0
    %p43 = por %p41, %p42
    %p44 = scmp.ne.s32.totalorder %s30, %s31
    %p45 = scmp.eq.s32.totalorder %s23, 1
    %p46 = por %p44, %p45
    %p48 = scmp.ne.s32.totalorder %s31, %s47
    %p49 = scmp.eq.s32.totalorder %s23, 0
    %p50 = por %p48, %p49
    %s51 = ssub.s32 %s17, %s24
    %p52 = scmp.eq.s32.totalorder %s51, 0
    %s54 = sadd.s32 %s53, 1
    %s55 = scalar_select %p52, %s53, %s54
    %p58 = pneg %p52
    %p59 = scmp.eq.s32.totalorder %s17, 1
    %p60 = por %p58, %p59
    %p61 = scmp.ne.s32.totalorder %s53, %s56
    %p62 = scmp.eq.s32.totalorder %s17, 0
    %p63 = por %p61, %p62
    %p64 = scmp.ne.s32.totalorder %s53, %s56
    %p65 = scmp.eq.s32.totalorder %s22, 1
    %p66 = por %p64, %p65
    %p67 = scmp.ne.s32.totalorder %s56, %s57
    %p68 = scmp.eq.s32.totalorder %s22, 0
    %p69 = por %p67, %p68
    %p70 = scmp.ne.s32.totalorder %s56, %s57
    %p71 = scmp.eq.s32.totalorder %s23, 1
    %p72 = por %p70, %p71
    %p74 = scmp.ne.s32.totalorder %s57, %s73
    %p75 = scmp.eq.s32.totalorder %s23, 0
    %p76 = por %p74, %p75
    %s78 = sadd.s32 %s77, 1
    %p81 = scmp.eq.s32.totalorder %s17, 1
    %p82 = scmp.ne.s32.totalorder %s77, %s79
    %p83 = scmp.eq.s32.totalorder %s17, 0
    %p84 = por %p82, %p83
    %p85 = scmp.ne.s32.totalorder %s77, %s79
    %p86 = scmp.eq.s32.totalorder %s22, 1
    %p87 = por %p85, %p86
    %p88 = scmp.ne.s32.totalorder %s79, %s80
    %p89 = scmp.eq.s32.totalorder %s22, 0
    %p90 = por %p88, %p89
    %p91 = scmp.ne.s32.totalorder %s79, %s80
    %p92 = scmp.eq.s32.totalorder %s23, 1
    %p93 = por %p91, %p92
    %p95 = scmp.ne.s32.totalorder %s80, %s94
    %p96 = scmp.eq.s32.totalorder %s23, 0
    %p97 = por %p95, %p96
    %s99 = sadd.s32 %s98, 1
    %p102 = scmp.eq.s32.totalorder %s17, 1
    %p103 = scmp.ne.s32.totalorder %s98, %s100
    %p104 = scmp.eq.s32.totalorder %s17, 0
    %p105 = por %p103, %p104
    %p106 = scmp.ne.s32.totalorder %s98, %s100
    %p107 = scmp.eq.s32.totalorder %s22, 1
    %p108 = por %p106, %p107
    %p109 = scmp.ne.s32.totalorder %s100, %s101
    %p110 = scmp.eq.s32.totalorder %s22, 0
    %p111 = por %p109, %p110
    %p112 = scmp.ne.s32.totalorder %s100, %s101
    %p113 = scmp.eq.s32.totalorder %s23, 1
    %p114 = por %p112, %p113
    %p116 = scmp.ne.s32.totalorder %s101, %s115
    %p117 = scmp.eq.s32.totalorder %s23, 0
    %p118 = por %p116, %p117
    %s120 = sadd.s32 %s119, 1
    %p123 = scmp.eq.s32.totalorder %s17, 1
    %p124 = scmp.ne.s32.totalorder %s119, %s121
    %p125 = scmp.eq.s32.totalorder %s17, 0
    %p126 = por %p124, %p125
    %p127 = scmp.ne.s32.totalorder %s119, %s121
    %p128 = scmp.eq.s32.totalorder %s22, 1
    %p129 = por %p127, %p128
    %p130 = scmp.ne.s32.totalorder %s121, %s122
    %p131 = scmp.eq.s32.totalorder %s22, 0
    %p132 = por %p130, %p131
    %p133 = scmp.ne.s32.totalorder %s121, %s122
    %p134 = scmp.eq.s32.totalorder %s23, 1
    %p135 = por %p133, %p134
    %p137 = scmp.ne.s32.totalorder %s122, %s136
    %p138 = scmp.eq.s32.totalorder %s23, 0
    %p139 = por %p137, %p138
    %s141 = sadd.s32 %s140, 1
    %p144 = scmp.eq.s32.totalorder %s17, 1
    %p145 = scmp.ne.s32.totalorder %s140, %s142
    %p146 = scmp.eq.s32.totalorder %s17, 0
    %p147 = por %p145, %p146
    %p148 = scmp.ne.s32.totalorder %s140, %s142
    %p149 = scmp.eq.s32.totalorder %s22, 1
    %p150 = por %p148, %p149
    %p151 = scmp.ne.s32.totalorder %s142, %s143
    %p152 = scmp.eq.s32.totalorder %s22, 0
    %p153 = por %p151, %p152
    %p154 = scmp.ne.s32.totalorder %s142, %s143
    %p155 = scmp.eq.s32.totalorder %s23, 1
    %p156 = por %p154, %p155
    %p158 = scmp.ne.s32.totalorder %s143, %s157
    %p159 = scmp.eq.s32.totalorder %s23, 0
    %p160 = por %p158, %p159
    %s162 = sadd.s32 %s161, 1
    %p165 = scmp.eq.s32.totalorder %s17, 1
    %p166 = scmp.ne.s32.totalorder %s161, %s163
    %p167 = scmp.eq.s32.totalorder %s17, 0
    %p168 = por %p166, %p167
    %p169 = scmp.ne.s32.totalorder %s161, %s163
    %p170 = scmp.eq.s32.totalorder %s22, 1
    %p171 = por %p169, %p170
    %p172 = scmp.ne.s32.totalorder %s163, %s164
    %p173 = scmp.eq.s32.totalorder %s22, 0
    %p174 = por %p172, %p173
    %p175 = scmp.ne.s32.totalorder %s163, %s164
    %p176 = scmp.eq.s32.totalorder %s23, 1
    %p177 = por %p175, %p176
    %p179 = scmp.ne.s32.totalorder %s164, %s178
    %p180 = scmp.eq.s32.totalorder %s23, 0
    %p181 = por %p179, %p180
    %s183 = sadd.s32 %s182, 1
    %p186 = scmp.eq.s32.totalorder %s17, 1
    %p187 = scmp.ne.s32.totalorder %s182, %s184
    %p188 = scmp.eq.s32.totalorder %s17, 0
    %p189 = por %p187, %p188
    %p190 = scmp.ne.s32.totalorder %s182, %s184
    %p191 = scmp.eq.s32.totalorder %s22, 1
    %p192 = por %p190, %p191
    %p193 = scmp.ne.s32.totalorder %s184, %s185
    %p194 = scmp.eq.s32.totalorder %s22, 0
    %p195 = por %p193, %p194
    %p196 = scmp.ne.s32.totalorder %s184, %s185
    %p197 = scmp.eq.s32.totalorder %s23, 1
    %p198 = por %p196, %p197
    %p200 = scmp.ne.s32.totalorder %s185, %s199
    %p201 = scmp.eq.s32.totalorder %s23, 0
    %p202 = por %p200, %p201
    %s204 = sadd.s32 %s203, 1
    %p207 = scmp.eq.s32.totalorder %s17, 1
    %p208 = scmp.ne.s32.totalorder %s203, %s205
    %p209 = scmp.eq.s32.totalorder %s17, 0
    %p210 = por %p208, %p209
    %p211 = scmp.ne.s32.totalorder %s203, %s205
    %p212 = scmp.eq.s32.totalorder %s22, 1
    %p213 = por %p211, %p212
    %p214 = scmp.ne.s32.totalorder %s205, %s206
    %p215 = scmp.eq.s32.totalorder %s22, 0
    %p216 = por %p214, %p215
    %p217 = scmp.ne.s32.totalorder %s205, %s206
    %p218 = scmp.eq.s32.totalorder %s23, 1
    %p219 = por %p217, %p218
    %p221 = scmp.ne.s32.totalorder %s206, %s220
    %p222 = scmp.eq.s32.totalorder %s23, 0
    %p223 = por %p221, %p222
    %s224 = ssub.s32 %s17, %s24
    %p225 = scmp.eq.s32.totalorder %s224, 0
    %s227 = sadd.s32 %s226, 1
    %s228 = scalar_select %p225, %s226, %s227
    %p231 = pneg %p225
    %p232 = scmp.eq.s32.totalorder %s17, 1
    %p233 = por %p231, %p232
    %p234 = scmp.ne.s32.totalorder %s226, %s229
    %p235 = scmp.eq.s32.totalorder %s17, 0
    %p236 = por %p234, %p235
    %p237 = scmp.ne.s32.totalorder %s226, %s229
    %p238 = scmp.eq.s32.totalorder %s22, 1
    %p239 = por %p237, %p238
    %p240 = scmp.ne.s32.totalorder %s229, %s230
    %p241 = scmp.eq.s32.totalorder %s22, 0
    %p242 = por %p240, %p241
    %p243 = scmp.ne.s32.totalorder %s229, %s230
    %p244 = scmp.eq.s32.totalorder %s23, 1
    %p245 = por %p243, %p244
    %p247 = scmp.ne.s32.totalorder %s230, %s246
    %p248 = scmp.eq.s32.totalorder %s23, 0
    %p249 = por %p247, %p248
    %s250 = ssub.s32 %s17, %s24
    %p251 = scmp.eq.s32.totalorder %s250, 0
    %s253 = sadd.s32 %s252, 1
    %s254 = scalar_select %p251, %s252, %s253
    %p257 = pneg %p251
    %p258 = scmp.eq.s32.totalorder %s17, 1
    %p259 = por %p257, %p258
    %p260 = scmp.ne.s32.totalorder %s252, %s255
    %p261 = scmp.eq.s32.totalorder %s17, 0
    %p262 = por %p260, %p261
    %p263 = scmp.ne.s32.totalorder %s252, %s255
    %p264 = scmp.eq.s32.totalorder %s22, 1
    %p265 = por %p263, %p264
    %p266 = scmp.ne.s32.totalorder %s255, %s256
    %p267 = scmp.eq.s32.totalorder %s22, 0
    %p268 = por %p266, %p267
    %p269 = scmp.ne.s32.totalorder %s255, %s256
    %p270 = scmp.eq.s32.totalorder %s23, 1
    %p271 = por %p269, %p270
    %p273 = scmp.ne.s32.totalorder %s256, %s272
    %p274 = scmp.eq.s32.totalorder %s23, 0
    %p275 = por %p273, %p274
    %p276 = scmp.le.s32.totalorder 1, %s17
    %p277 = scmp.lt.s32.totalorder %s17, 3
    %p278 = pnand %p276, %p277
    %p279 = pneg %p278
    // Predicated region
    $region9: #{upblock_forward.3} parent=5 // pred_check
      _
    $region10: #{upblock_forward.3} parent=5 // pred_check_branch
      %281 = sbr.rel (%p278) target = $region12
    $region11: #{upblock_forward.3} parent=5 // pred_region
      %s282 = ssub.s32 %s17, 1
      // Predicated region
      $region13: #{upblock_forward.3} parent=11 // pred_check
        %p283 = pneg %p90
      $region14: #{upblock_forward.3} parent=11 // pred_check_branch
        %285 = sbr.rel (%p283) target = $region16
      $region15: #{upblock_forward.3} parent=11 // pred_region
        _
      $region16: #{upblock_forward.3} parent=11 // pred_fallthru
        _
      // Predicated region
      $region17: #{upblock_forward.3} parent=11 // pred_check
        %p286 = pneg %p111
      $region18: #{upblock_forward.3} parent=11 // pred_check_branch
        %288 = sbr.rel (%p286) target = $region20
      $region19: #{upblock_forward.3} parent=11 // pred_region
        _
      $region20: #{upblock_forward.3} parent=11 // pred_fallthru
        _
      // Predicated region
      $region21: #{upblock_forward.3} parent=11 // pred_check
        %p289 = pneg %p132
      $region22: #{upblock_forward.3} parent=11 // pred_check_branch
        %291 = sbr.rel (%p289) target = $region24
      $region23: #{upblock_forward.3} parent=11 // pred_region
        _
      $region24: #{upblock_forward.3} parent=11 // pred_fallthru
        _
      // Predicated region
      $region25: #{upblock_forward.3} parent=11 // pred_check
        %p292 = pneg %p153
      $region26: #{upblock_forward.3} parent=11 // pred_check_branch
        %294 = sbr.rel (%p292) target = $region28
      $region27: #{upblock_forward.3} parent=11 // pred_region
        _
      $region28: #{upblock_forward.3} parent=11 // pred_fallthru
        _
      // Predicated region
      $region29: #{upblock_forward.3} parent=11 // pred_check
        %p295 = pneg %p174
      $region30: #{upblock_forward.3} parent=11 // pred_check_branch
        %297 = sbr.rel (%p295) target = $region32
      $region31: #{upblock_forward.3} parent=11 // pred_region
        _
      $region32: #{upblock_forward.3} parent=11 // pred_fallthru
        _
      // Predicated region
      $region33: #{upblock_forward.3} parent=11 // pred_check
        %p298 = pneg %p195
      $region34: #{upblock_forward.3} parent=11 // pred_check_branch
        %300 = sbr.rel (%p298) target = $region36
      $region35: #{upblock_forward.3} parent=11 // pred_region
        _
      $region36: #{upblock_forward.3} parent=11 // pred_fallthru
        _
      // Predicated region
      $region37: #{upblock_forward.3} parent=11 // pred_check
        %p301 = pneg %p216
      $region38: #{upblock_forward.3} parent=11 // pred_check_branch
        %303 = sbr.rel (%p301) target = $region40
      $region39: #{upblock_forward.3} parent=11 // pred_region
        _
      $region40: #{upblock_forward.3} parent=11 // pred_fallthru
        _
    $region12: #{upblock_forward.3} parent=5 // pred_fallthru
      _
    %p304 = scmp.lt.s32.totalorder %s17, 2
    // Predicated region
    $region41: #{upblock_forward.3} parent=5 // pred_check
      %p305 = pneg %p304
    $region42: #{upblock_forward.3} parent=5 // pred_check_branch
      %307 = sbr.rel (%p305) target = $region44
    $region43: #{upblock_forward.3} parent=5 // pred_region
      // Predicated region
      $region45: #{upblock_forward.3} parent=43 // pred_check
        %p308 = pneg %p37
      $region46: #{upblock_forward.3} parent=43 // pred_check_branch
        %310 = sbr.rel (%p308) target = $region48
      $region47: #{upblock_forward.3} parent=43 // pred_region
        %p311 = scmp.lt.s32.totalorder %s17, 1
        %s312 = scalar_select %p311, %s17, 1
        %s313 = smul.addr %s312, 20
        %s314 = smul.addr %s313, 8
        %s315 = scalar_lea.vmem %s0, %s314
      $region48: #{upblock_forward.3} parent=43 // pred_fallthru
        _
      // Predicated region
      $region49: #{upblock_forward.3} parent=43 // pred_check
        %p316 = pneg %p63
      $region50: #{upblock_forward.3} parent=43 // pred_check_branch
        %318 = sbr.rel (%p316) target = $region52
      $region51: #{upblock_forward.3} parent=43 // pred_region
        %p319 = scmp.lt.s32.totalorder %s17, 1
        %s320 = scalar_select %p319, %s17, 1
        %s321 = smul.addr %s320, 54
        %s322 = smul.addr %s321, 8
        %s323 = scalar_lea.vmem %s1, %s322
      $region52: #{upblock_forward.3} parent=43 // pred_fallthru
        _
    $region44: #{upblock_forward.3} parent=5 // pred_fallthru
      _
    %p324 = scmp.le.s32.totalorder 1, %s17
    %p325 = scmp.lt.s32.totalorder %s17, 3
    %p326 = pnand %p324, %p325
    %p327 = pneg %p326
    // Predicated region
    $region53: #{upblock_forward.3} parent=5 // pred_check
      _
    $region54: #{upblock_forward.3} parent=5 // pred_check_branch
      %329 = sbr.rel (%p326) target = $region56
    $region55: #{upblock_forward.3} parent=5 // pred_region
      %s330 = ssub.s32 %s17, 1
      %p331 = scmp.lt.s32.totalorder %s22, 1
      %s332 = scalar_select %p331, %s22, 1
      %s333 = smul.addr %s332, 20
      %s334 = smul.addr %s333, 8
      %s335 = scalar_lea.vmem %s0, %s334
      %p336 = pneg %p43
      %p337 = pneg %p40
      %p338 = scmp.lt.s32.totalorder %s22, 1
      %s339 = scalar_select %p338, %s22, 1
      %s340 = smul.addr %s339, 54
      %s341 = smul.addr %s340, 8
      %s342 = scalar_lea.vmem %s1, %s341
      %p343 = pneg %p69
      %p344 = pneg %p66
      %p345 = pneg %p90
      %p346 = pneg %p87
      %p347 = pneg %p111
      %p348 = pneg %p108
      %p349 = pneg %p132
      %p350 = pneg %p129
      %p351 = pneg %p153
      %p352 = pneg %p150
      %p353 = pneg %p174
      %p354 = pneg %p171
      %p355 = pneg %p195
      %p356 = pneg %p192
      %p357 = pneg %p216
      %p358 = pneg %p213
      %p359 = pneg %p242
      %p360 = pneg %p239
      %p361 = scmp.lt.s32.totalorder %s22, 1
      %s362 = scalar_select %p361, %s22, 1
      %s363 = smul.addr %s362, 8
      %s364 = smul.addr %s363, 8
      %s365 = scalar_lea.vmem %s9, %s364
      %p366 = pneg %p268
      %p367 = pneg %p265
      %p368 = scmp.lt.s32.totalorder %s22, 1
      %s369 = scalar_select %p368, %s22, 1
      %s370 = smul.addr %s369, 8
      %s371 = smul.addr %s370, 8
      %s372 = scalar_lea.vmem %s10, %s371
      %p373 = scmp.lt.s32.totalorder %s22, 1
      %s374 = scalar_select %p373, %s22, 1
      %s375 = smul.addr %s374, 20
      %s376 = smul.addr %s375, 8
      %s377 = scalar_lea.vmem %s0, %s376
      %p378 = scmp.lt.s32.totalorder %s22, 1
      %s379 = scalar_select %p378, %s22, 1
      %s380 = smul.addr %s379, 54
      %s381 = smul.addr %s380, 8
      %s382 = scalar_lea.vmem %s1, %s381
      %p383 = scmp.lt.s32.totalorder %s22, 1
      %s384 = scalar_select %p383, %s22, 1
      %s385 = smul.addr %s384, 8
      %s386 = smul.addr %s385, 8
      %s387 = scalar_lea.vmem %s9, %s386
      %p388 = scmp.lt.s32.totalorder %s22, 1
      %s389 = scalar_select %p388, %s22, 1
      %s390 = smul.addr %s389, 8
      %s391 = smul.addr %s390, 8
      %s392 = scalar_lea.vmem %s10, %s391
      %v394 = vld [vmem:[%s377] sm:$0xff]
      %v395 = vld [vmem:[%s377 + $0x10] sm:$0xff]
      %v396 = vld [vmem:[%s377 + $0x20] sm:$0xff]
      %v397 = vld [vmem:[%s377 + $0x30] sm:$0xff]
      %v398 = vld [vmem:[%s377 + $0x40] sm:$0xff]
      %v399 = vld [vmem:[%s377 + $0x50] sm:$0xff]
      %v400 = vld [vmem:[%s377 + $0x60] sm:$0xff]
      %v401 = vld [vmem:[%s377 + $0x70] sm:$0xff]
      %v402 = vld [vmem:[%s377 + $0x1] sm:$0xff]
      %v403 = vld [vmem:[%s377 + $0x11] sm:$0xff]
      %v404 = vld [vmem:[%s377 + $0x21] sm:$0xff]
      %v405 = vld [vmem:[%s377 + $0x31] sm:$0xff]
      %v406 = vld [vmem:[%s377 + $0x41] sm:$0xff]
      %v407 = vld [vmem:[%s377 + $0x51] sm:$0xff]
      %v408 = vld [vmem:[%s377 + $0x61] sm:$0xff]
      %v409 = vld [vmem:[%s377 + $0x71] sm:$0xff]
      %v410 = vld [vmem:[%s377 + $0x2] sm:$0xff]
      %v411 = vld [vmem:[%s377 + $0x12] sm:$0xff]
      %v412 = vld [vmem:[%s377 + $0x22] sm:$0xff]
      %v413 = vld [vmem:[%s377 + $0x32] sm:$0xff]
      %v414 = vld [vmem:[%s377 + $0x42] sm:$0xff]
      %v415 = vld [vmem:[%s377 + $0x52] sm:$0xff]
      %v416 = vld [vmem:[%s377 + $0x62] sm:$0xff]
      %v417 = vld [vmem:[%s377 + $0x72] sm:$0xff]
      %s418 = scalar_lea.vmem %s377, 16
      %v419 = vld [vmem:[%s418] sm:$0xff]
      %v420 = vld [vmem:[%s418 + $0x10] sm:$0xff]
      %v421 = vld [vmem:[%s418 + $0x20] sm:$0xff]
      %v422 = vld [vmem:[%s418 + $0x30] sm:$0xff]
      %v423 = vld [vmem:[%s418 + $0x40] sm:$0xff]
      %v424 = vld [vmem:[%s418 + $0x50] sm:$0xff]
      %v425 = vld [vmem:[%s418 + $0x60] sm:$0xff]
      %v426 = vld [vmem:[%s418 + $0x70] sm:$0xff]
      %v427 = vld [vmem:[%s418 + $0x1] sm:$0xff]
      %v428 = vld [vmem:[%s418 + $0x11] sm:$0xff]
      %v429 = vld [vmem:[%s418 + $0x21] sm:$0xff]
      %v430 = vld [vmem:[%s418 + $0x31] sm:$0xff]
      %v431 = vld [vmem:[%s418 + $0x41] sm:$0xff]
      %v432 = vld [vmem:[%s418 + $0x51] sm:$0xff]
      %v433 = vld [vmem:[%s418 + $0x61] sm:$0xff]
      %v434 = vld [vmem:[%s418 + $0x71] sm:$0xff]
      %v435 = vld [vmem:[%s418 + $0x2] sm:$0xff]
      %v436 = vld [vmem:[%s418 + $0x12] sm:$0xff]
      %v437 = vld [vmem:[%s418 + $0x22] sm:$0xff]
      %v438 = vld [vmem:[%s418 + $0x32] sm:$0xff]
      %v439 = vld [vmem:[%s418 + $0x42] sm:$0xff]
      %v440 = vld [vmem:[%s418 + $0x52] sm:$0xff]
      %v441 = vld [vmem:[%s418 + $0x62] sm:$0xff]
      %v442 = vld [vmem:[%s418 + $0x72] sm:$0xff]
      %s443 = scalar_lea.vmem %s377, 32
      %v444 = vld [vmem:[%s443] sm:$0xff]
      %v445 = vld [vmem:[%s443 + $0x10] sm:$0xff]
      %v446 = vld [vmem:[%s443 + $0x20] sm:$0xff]
      %v447 = vld [vmem:[%s443 + $0x30] sm:$0xff]
      %v448 = vld [vmem:[%s443 + $0x40] sm:$0xff]
      %v449 = vld [vmem:[%s443 + $0x50] sm:$0xff]
      %v450 = vld [vmem:[%s443 + $0x60] sm:$0xff]
      %v451 = vld [vmem:[%s443 + $0x70] sm:$0xff]
      %v452 = vld [vmem:[%s443 + $0x1] sm:$0xff]
      %v453 = vld [vmem:[%s443 + $0x11] sm:$0xff]
      %v454 = vld [vmem:[%s443 + $0x21] sm:$0xff]
      %v455 = vld [vmem:[%s443 + $0x31] sm:$0xff]
      %v456 = vld [vmem:[%s443 + $0x41] sm:$0xff]
      %v457 = vld [vmem:[%s443 + $0x51] sm:$0xff]
      %v458 = vld [vmem:[%s443 + $0x61] sm:$0xff]
      %v459 = vld [vmem:[%s443 + $0x71] sm:$0xff]
      %v460 = vld [vmem:[%s443 + $0x2] sm:$0xff]
      %v461 = vld [vmem:[%s443 + $0x12] sm:$0xff]
      %v462 = vld [vmem:[%s443 + $0x22] sm:$0xff]
      %v463 = vld [vmem:[%s443 + $0x32] sm:$0xff]
      %v464 = vld [vmem:[%s443 + $0x42] sm:$0xff]
      %v465 = vld [vmem:[%s443 + $0x52] sm:$0xff]
      %v466 = vld [vmem:[%s443 + $0x62] sm:$0xff]
      %v467 = vld [vmem:[%s443 + $0x72] sm:$0xff]
      %476 = vrot.lane.b32.xlu0 %v402, 8
      %v477 = vpop.permute.xlu0 %476
      %478 = vrot.lane.b32.xlu0 %v403, 8
      %v479 = vpop.permute.xlu0 %478
      %480 = vrot.lane.b32.xlu0 %v404, 8
      %v481 = vpop.permute.xlu0 %480
      %482 = vrot.lane.b32.xlu0 %v405, 8
      %v483 = vpop.permute.xlu0 %482
      %484 = vrot.lane.b32.xlu0 %v406, 8
      %v485 = vpop.permute.xlu0 %484
      %486 = vrot.lane.b32.xlu0 %v407, 8
      %v487 = vpop.permute.xlu0 %486
      %488 = vrot.lane.b32.xlu0 %v408, 8
      %v489 = vpop.permute.xlu0 %488
      %490 = vrot.lane.b32.xlu0 %v409, 8
      %v491 = vpop.permute.xlu0 %490
      %508 = vrot.lane.b32.xlu0 %v410, 16
      %v509 = vpop.permute.xlu0 %508
      %510 = vrot.lane.b32.xlu0 %v411, 16
      %v511 = vpop.permute.xlu0 %510
      %512 = vrot.lane.b32.xlu0 %v412, 16
      %v513 = vpop.permute.xlu0 %512
      %514 = vrot.lane.b32.xlu0 %v413, 16
      %v515 = vpop.permute.xlu0 %514
      %516 = vrot.lane.b32.xlu0 %v414, 16
      %v517 = vpop.permute.xlu0 %516
      %518 = vrot.lane.b32.xlu0 %v415, 16
      %v519 = vpop.permute.xlu0 %518
      %520 = vrot.lane.b32.xlu0 %v416, 16
      %v521 = vpop.permute.xlu0 %520
      %522 = vrot.lane.b32.xlu0 %v417, 16
      %v523 = vpop.permute.xlu0 %522
      %540 = vrot.lane.b32.xlu0 %v419, 24
      %v541 = vpop.permute.xlu0 %540
      %542 = vrot.lane.b32.xlu0 %v420, 24
      %v543 = vpop.permute.xlu0 %542
      %544 = vrot.lane.b32.xlu0 %v421, 24
      %v545 = vpop.permute.xlu0 %544
      %546 = vrot.lane.b32.xlu0 %v422, 24
      %v547 = vpop.permute.xlu0 %546
      %548 = vrot.lane.b32.xlu0 %v423, 24
      %v549 = vpop.permute.xlu0 %548
      %550 = vrot.lane.b32.xlu0 %v424, 24
      %v551 = vpop.permute.xlu0 %550
      %552 = vrot.lane.b32.xlu0 %v425, 24
      %v553 = vpop.permute.xlu0 %552
      %554 = vrot.lane.b32.xlu0 %v426, 24
      %v555 = vpop.permute.xlu0 %554
      %572 = vrot.lane.b32.xlu0 %v427, 32
      %v573 = vpop.permute.xlu0 %572
      %574 = vrot.lane.b32.xlu0 %v428, 32
      %v575 = vpop.permute.xlu0 %574
      %576 = vrot.lane.b32.xlu0 %v429, 32
      %v577 = vpop.permute.xlu0 %576
      %578 = vrot.lane.b32.xlu0 %v430, 32
      %v579 = vpop.permute.xlu0 %578
      %580 = vrot.lane.b32.xlu0 %v431, 32
      %v581 = vpop.permute.xlu0 %580
      %582 = vrot.lane.b32.xlu0 %v432, 32
      %v583 = vpop.permute.xlu0 %582
      %584 = vrot.lane.b32.xlu0 %v433, 32
      %v585 = vpop.permute.xlu0 %584
      %586 = vrot.lane.b32.xlu0 %v434, 32
      %v587 = vpop.permute.xlu0 %586
      %604 = vrot.lane.b32.xlu0 %v435, 40
      %v605 = vpop.permute.xlu0 %604
      %606 = vrot.lane.b32.xlu0 %v436, 40
      %v607 = vpop.permute.xlu0 %606
      %608 = vrot.lane.b32.xlu0 %v437, 40
      %v609 = vpop.permute.xlu0 %608
      %610 = vrot.lane.b32.xlu0 %v438, 40
      %v611 = vpop.permute.xlu0 %610
      %612 = vrot.lane.b32.xlu0 %v439, 40
      %v613 = vpop.permute.xlu0 %612
      %614 = vrot.lane.b32.xlu0 %v440, 40
      %v615 = vpop.permute.xlu0 %614
      %616 = vrot.lane.b32.xlu0 %v441, 40
      %v617 = vpop.permute.xlu0 %616
      %618 = vrot.lane.b32.xlu0 %v442, 40
      %v619 = vpop.permute.xlu0 %618
      %636 = vrot.lane.b32.xlu0 %v444, 48
      %v637 = vpop.permute.xlu0 %636
      %638 = vrot.lane.b32.xlu0 %v445, 48
      %v639 = vpop.permute.xlu0 %638
      %640 = vrot.lane.b32.xlu0 %v446, 48
      %v641 = vpop.permute.xlu0 %640
      %642 = vrot.lane.b32.xlu0 %v447, 48
      %v643 = vpop.permute.xlu0 %642
      %644 = vrot.lane.b32.xlu0 %v448, 48
      %v645 = vpop.permute.xlu0 %644
      %646 = vrot.lane.b32.xlu0 %v449, 48
      %v647 = vpop.permute.xlu0 %646
      %648 = vrot.lane.b32.xlu0 %v450, 48
      %v649 = vpop.permute.xlu0 %648
      %650 = vrot.lane.b32.xlu0 %v451, 48
      %v651 = vpop.permute.xlu0 %650
      %668 = vrot.lane.b32.xlu0 %v452, 56
      %v669 = vpop.permute.xlu0 %668
      %670 = vrot.lane.b32.xlu0 %v453, 56
      %v671 = vpop.permute.xlu0 %670
      %672 = vrot.lane.b32.xlu0 %v454, 56
      %v673 = vpop.permute.xlu0 %672
      %674 = vrot.lane.b32.xlu0 %v455, 56
      %v675 = vpop.permute.xlu0 %674
      %676 = vrot.lane.b32.xlu0 %v456, 56
      %v677 = vpop.permute.xlu0 %676
      %678 = vrot.lane.b32.xlu0 %v457, 56
      %v679 = vpop.permute.xlu0 %678
      %680 = vrot.lane.b32.xlu0 %v458, 56
      %v681 = vpop.permute.xlu0 %680
      %682 = vrot.lane.b32.xlu0 %v459, 56
      %v683 = vpop.permute.xlu0 %682
      %700 = vrot.lane.b32.xlu0 %v460, 64
      %v701 = vpop.permute.xlu0 %700
      %702 = vrot.lane.b32.xlu0 %v461, 64
      %v703 = vpop.permute.xlu0 %702
      %704 = vrot.lane.b32.xlu0 %v462, 64
      %v705 = vpop.permute.xlu0 %704
      %706 = vrot.lane.b32.xlu0 %v463, 64
      %v707 = vpop.permute.xlu0 %706
      %708 = vrot.lane.b32.xlu0 %v464, 64
      %v709 = vpop.permute.xlu0 %708
      %710 = vrot.lane.b32.xlu0 %v465, 64
      %v711 = vpop.permute.xlu0 %710
      %712 = vrot.lane.b32.xlu0 %v466, 64
      %v713 = vpop.permute.xlu0 %712
      %714 = vrot.lane.b32.xlu0 %v467, 64
      %v715 = vpop.permute.xlu0 %714
      %vm724 = vcmask 64512
      %v725 = vsel %vm724, %v394, %v477
      %v726 = vsel %vm724, %v395, %v479
      %v727 = vsel %vm724, %v396, %v481
      %v728 = vsel %vm724, %v397, %v483
      %v729 = vsel %vm724, %v398, %v485
      %v730 = vsel %vm724, %v399, %v487
      %v731 = vsel %vm724, %v400, %v489
      %v732 = vsel %vm724, %v401, %v491
      %vm733 = vcmask 130048
      %v734 = vsel %vm733, %v725, %v509
      %v735 = vsel %vm733, %v726, %v511
      %v736 = vsel %vm733, %v727, %v513
      %v737 = vsel %vm733, %v728, %v515
      %v738 = vsel %vm733, %v729, %v517
      %v739 = vsel %vm733, %v730, %v519
      %v740 = vsel %vm733, %v731, %v521
      %v741 = vsel %vm733, %v732, %v523
      %vm742 = vcmask 195584
      %v743 = vsel %vm742, %v734, %v541
      %v744 = vsel %vm742, %v735, %v543
      %v745 = vsel %vm742, %v736, %v545
      %v746 = vsel %vm742, %v737, %v547
      %v747 = vsel %vm742, %v738, %v549
      %v748 = vsel %vm742, %v739, %v551
      %v749 = vsel %vm742, %v740, %v553
      %v750 = vsel %vm742, %v741, %v555
      %vm751 = vcmask 261120
      %v752 = vsel %vm751, %v743, %v573
      %v753 = vsel %vm751, %v744, %v575
      %v754 = vsel %vm751, %v745, %v577
      %v755 = vsel %vm751, %v746, %v579
      %v756 = vsel %vm751, %v747, %v581
      %v757 = vsel %vm751, %v748, %v583
      %v758 = vsel %vm751, %v749, %v585
      %v759 = vsel %vm751, %v750, %v587
      %vm760 = vcmask 326656
      %v761 = vsel %vm760, %v752, %v605
      %v762 = vsel %vm760, %v753, %v607
      %v763 = vsel %vm760, %v754, %v609
      %v764 = vsel %vm760, %v755, %v611
      %v765 = vsel %vm760, %v756, %v613
      %v766 = vsel %vm760, %v757, %v615
      %v767 = vsel %vm760, %v758, %v617
      %v768 = vsel %vm760, %v759, %v619
      %vm769 = vcmask 392192
      %v770 = vsel %vm769, %v761, %v637
      %v771 = vsel %vm769, %v762, %v639
      %v772 = vsel %vm769, %v763, %v641
      %v773 = vsel %vm769, %v764, %v643
      %v774 = vsel %vm769, %v765, %v645
      %v775 = vsel %vm769, %v766, %v647
      %v776 = vsel %vm769, %v767, %v649
      %v777 = vsel %vm769, %v768, %v651
      %vm778 = vcmask 457728
      %v779 = vsel %vm778, %v770, %v669
      %v780 = vsel %vm778, %v771, %v671
      %v781 = vsel %vm778, %v772, %v673
      %v782 = vsel %vm778, %v773, %v675
      %v783 = vsel %vm778, %v774, %v677
      %v784 = vsel %vm778, %v775, %v679
      %v785 = vsel %vm778, %v776, %v681
      %v786 = vsel %vm778, %v777, %v683
      %vm787 = vcmask 523264
      %v788 = vsel %vm787, %v779, %v701
      %v789 = vsel %vm787, %v780, %v703
      %v790 = vsel %vm787, %v781, %v705
      %v791 = vsel %vm787, %v782, %v707
      %v792 = vsel %vm787, %v783, %v709
      %v793 = vsel %vm787, %v784, %v711
      %v794 = vsel %vm787, %v785, %v713
      %v795 = vsel %vm787, %v786, %v715
      %v796 = vpack.c.bf16 %v789, %v788
      %v797 = vpack.c.bf16 %v791, %v790
      %v798 = vpack.c.bf16 %v793, %v792
      %v799 = vpack.c.bf16 %v795, %v794
      %v800 = vld [vmem:[%s2] sm:$0xff]
      %v801 = vld [vmem:[%s2 + $0x8] sm:$0xff]
      %v802 = vld [vmem:[%s2 + $0x10] sm:$0xff]
      %v803 = vld [vmem:[%s2 + $0x18] sm:$0xff]
      %v804 = vld [vmem:[%s2 + $0x20] sm:$0xff]
      %v805 = vld [vmem:[%s2 + $0x28] sm:$0xff]
      %v806 = vld [vmem:[%s2 + $0x30] sm:$0xff]
      %v807 = vld [vmem:[%s2 + $0x38] sm:$0xff]
      %v808 = vld [vmem:[%s2 + $0x40] sm:$0xff]
      %v809 = vpack.c.bf16 %v801, %v800
      %v810 = vpack.c.bf16 %v803, %v802
      %v811 = vpack.c.bf16 %v805, %v804
      %v812 = vpack.c.bf16 %v807, %v806
      %v813 = vpack.c.bf16 %v808, %v808
      %vm814 = vcmask 588800
      %v816 = vsel %vm814, %v796, 0
      %v819 = vsel %vm814, %v797, 0
      %v822 = vsel %vm814, %v798, 0
      %v825 = vsel %vm814, %v799, 0
      %vm827 = vcmask 1043456
      %v829 = vsel %vm827, %v813, 0
      %831 = vmatpush.bf16.msra.mxu0 0
      %832 = vmatpush.bf16.msra.mxu0 0
      %833 = vmatpush.bf16.msra.mxu0 0
      %834 = vmatpush.bf16.msra.mxu0 %v829
      %835 = vmatpush.bf16.msra.mxu0 %v812
      %836 = vmatpush.bf16.msra.mxu0 %v811
      %837 = vmatpush.bf16.msra.mxu0 %v810
      %838 = vmatpush.bf16.msra.mxu0 %v809
      %839 = vmatmul.bf16.gmra.mxu0 %v816
      %v840 = vpop.f32.mrf.mxu0
      %v841 = vadd.f32 0.0, %v840
      %v842 = vpop.f32.mrf.mxu0
      %v843 = vadd.f32 0.0, %v842
      %844 = vmatmul.bf16.gmra.mxu0 %v819
      %v845 = vpop.f32.mrf.mxu0
      %v846 = vadd.f32 0.0, %v845
      %v847 = vpop.f32.mrf.mxu0
      %v848 = vadd.f32 0.0, %v847
      %849 = vmatmul.bf16.gmra.mxu0 %v822
      %v850 = vpop.f32.mrf.mxu0
      %v851 = vadd.f32 0.0, %v850
      %v852 = vpop.f32.mrf.mxu0
      %v853 = vadd.f32 0.0, %v852
      %854 = vmatmul.bf16.gmra.mxu0 %v825
      %v855 = vpop.f32.mrf.mxu0
      %v856 = vadd.f32 0.0, %v855
      %v857 = vpop.f32.mrf.mxu0
      %v858 = vadd.f32 0.0, %v857
      %859 = vdwg.mxu0
      %v860 = vld [vmem:[%s382] sm:$0xff]
      %v861 = vld [vmem:[%s382 + $0x8] sm:$0xff]
      %v862 = vld [vmem:[%s382 + $0x18] sm:$0xff]
      %v863 = vld [vmem:[%s382 + $0x20] sm:$0xff]
      %v864 = vld [vmem:[%s382 + $0x30] sm:$0xff]
      %v865 = vld [vmem:[%s382 + $0x38] sm:$0xff]
      %v866 = vld [vmem:[%s382 + $0x48] sm:$0xff]
      %v867 = vld [vmem:[%s382 + $0x50] sm:$0xff]
      %v868 = vld [vmem:[%s382 + $0x60] sm:$0xff]
      %v869 = vld [vmem:[%s382 + $0x68] sm:$0xff]
      %v870 = vld [vmem:[%s382 + $0x78] sm:$0xff]
      %v871 = vld [vmem:[%s382 + $0x80] sm:$0xff]
      %v872 = vld [vmem:[%s382 + $0x90] sm:$0xff]
      %v873 = vld [vmem:[%s382 + $0x98] sm:$0xff]
      %v874 = vld [vmem:[%s382 + $0xa8] sm:$0xff]
      %v875 = vld [vmem:[%s382 + $0xb0] sm:$0xff]
      %v876 = vld [vmem:[%s382 + $0xc0] sm:$0xff]
      %v877 = vld [vmem:[%s382 + $0xc8] sm:$0xff]
      %v878 = vld [vmem:[%s382 + $0xd8] sm:$0xff]
      %v879 = vld [vmem:[%s382 + $0xe0] sm:$0xff]
      %v880 = vld [vmem:[%s382 + $0xf0] sm:$0xff]
      %v881 = vld [vmem:[%s382 + $0xf8] sm:$0xff]
      %v882 = vld [vmem:[%s382 + $0x108] sm:$0xff]
      %v883 = vld [vmem:[%s382 + $0x110] sm:$0xff]
      %v884 = vld [vmem:[%s382 + $0x120] sm:$0xff]
      %v885 = vld [vmem:[%s382 + $0x128] sm:$0xff]
      %v886 = vld [vmem:[%s382 + $0x138] sm:$0xff]
      %v887 = vld [vmem:[%s382 + $0x140] sm:$0xff]
      %v888 = vld [vmem:[%s382 + $0x150] sm:$0xff]
      %v889 = vld [vmem:[%s382 + $0x158] sm:$0xff]
      %v890 = vld [vmem:[%s382 + $0x168] sm:$0xff]
      %v891 = vld [vmem:[%s382 + $0x170] sm:$0xff]
      %v892 = vld [vmem:[%s382 + $0x1] sm:$0xff]
      %v893 = vld [vmem:[%s382 + $0x9] sm:$0xff]
      %v894 = vld [vmem:[%s382 + $0x19] sm:$0xff]
      %v895 = vld [vmem:[%s382 + $0x21] sm:$0xff]
      %v896 = vld [vmem:[%s382 + $0x31] sm:$0xff]
      %v897 = vld [vmem:[%s382 + $0x39] sm:$0xff]
      %v898 = vld [vmem:[%s382 + $0x49] sm:$0xff]
      %v899 = vld [vmem:[%s382 + $0x51] sm:$0xff]
      %v900 = vld [vmem:[%s382 + $0x61] sm:$0xff]
      %v901 = vld [vmem:[%s382 + $0x69] sm:$0xff]
      %v902 = vld [vmem:[%s382 + $0x79] sm:$0xff]
      %v903 = vld [vmem:[%s382 + $0x81] sm:$0xff]
      %v904 = vld [vmem:[%s382 + $0x91] sm:$0xff]
      %v905 = vld [vmem:[%s382 + $0x99] sm:$0xff]
      %v906 = vld [vmem:[%s382 + $0xa9] sm:$0xff]
      %v907 = vld [vmem:[%s382 + $0xb1] sm:$0xff]
      %v908 = vld [vmem:[%s382 + $0xc1] sm:$0xff]
      %v909 = vld [vmem:[%s382 + $0xc9] sm:$0xff]
      %v910 = vld [vmem:[%s382 + $0xd9] sm:$0xff]
      %v911 = vld [vmem:[%s382 + $0xe1] sm:$0xff]
      %v912 = vld [vmem:[%s382 + $0xf1] sm:$0xff]
      %v913 = vld [vmem:[%s382 + $0xf9] sm:$0xff]
      %v914 = vld [vmem:[%s382 + $0x109] sm:$0xff]
      %v915 = vld [vmem:[%s382 + $0x111] sm:$0xff]
      %v916 = vld [vmem:[%s382 + $0x121] sm:$0xff]
      %v917 = vld [vmem:[%s382 + $0x129] sm:$0xff]
      %v918 = vld [vmem:[%s382 + $0x139] sm:$0xff]
      %v919 = vld [vmem:[%s382 + $0x141] sm:$0xff]
      %v920 = vld [vmem:[%s382 + $0x151] sm:$0xff]
      %v921 = vld [vmem:[%s382 + $0x159] sm:$0xff]
      %v922 = vld [vmem:[%s382 + $0x169] sm:$0xff]
      %v923 = vld [vmem:[%s382 + $0x171] sm:$0xff]
      %v924 = vld [vmem:[%s382 + $0x2] sm:$0xff]
      %v925 = vld [vmem:[%s382 + $0xa] sm:$0xff]
      %v926 = vld [vmem:[%s382 + $0x1a] sm:$0xff]
      %v927 = vld [vmem:[%s382 + $0x22] sm:$0xff]
      %v928 = vld [vmem:[%s382 + $0x32] sm:$0xff]
      %v929 = vld [vmem:[%s382 + $0x3a] sm:$0xff]
      %v930 = vld [vmem:[%s382 + $0x4a] sm:$0xff]
      %v931 = vld [vmem:[%s382 + $0x52] sm:$0xff]
      %v932 = vld [vmem:[%s382 + $0x62] sm:$0xff]
      %v933 = vld [vmem:[%s382 + $0x6a] sm:$0xff]
      %v934 = vld [vmem:[%s382 + $0x7a] sm:$0xff]
      %v935 = vld [vmem:[%s382 + $0x82] sm:$0xff]
      %v936 = vld [vmem:[%s382 + $0x92] sm:$0xff]
      %v937 = vld [vmem:[%s382 + $0x9a] sm:$0xff]
      %v938 = vld [vmem:[%s382 + $0xaa] sm:$0xff]
      %v939 = vld [vmem:[%s382 + $0xb2] sm:$0xff]
      %v940 = vld [vmem:[%s382 + $0xc2] sm:$0xff]
      %v941 = vld [vmem:[%s382 + $0xca] sm:$0xff]
      %v942 = vld [vmem:[%s382 + $0xda] sm:$0xff]
      %v943 = vld [vmem:[%s382 + $0xe2] sm:$0xff]
      %v944 = vld [vmem:[%s382 + $0xf2] sm:$0xff]
      %v945 = vld [vmem:[%s382 + $0xfa] sm:$0xff]
      %v946 = vld [vmem:[%s382 + $0x10a] sm:$0xff]
      %v947 = vld [vmem:[%s382 + $0x112] sm:$0xff]
      %v948 = vld [vmem:[%s382 + $0x122] sm:$0xff]
      %v949 = vld [vmem:[%s382 + $0x12a] sm:$0xff]
      %v950 = vld [vmem:[%s382 + $0x13a] sm:$0xff]
      %v951 = vld [vmem:[%s382 + $0x142] sm:$0xff]
      %v952 = vld [vmem:[%s382 + $0x152] sm:$0xff]
      %v953 = vld [vmem:[%s382 + $0x15a] sm:$0xff]
      %v954 = vld [vmem:[%s382 + $0x16a] sm:$0xff]
      %v955 = vld [vmem:[%s382 + $0x172] sm:$0xff]
      %s956 = scalar_lea.vmem %s382, 24
      %v957 = vld [vmem:[%s956] sm:$0xff]
      %v958 = vld [vmem:[%s956 + $0x8] sm:$0xff]
      %v959 = vld [vmem:[%s956 + $0x18] sm:$0xff]
      %v960 = vld [vmem:[%s956 + $0x20] sm:$0xff]
      %v961 = vld [vmem:[%s956 + $0x30] sm:$0xff]
      %v962 = vld [vmem:[%s956 + $0x38] sm:$0xff]
      %v963 = vld [vmem:[%s956 + $0x48] sm:$0xff]
      %v964 = vld [vmem:[%s956 + $0x50] sm:$0xff]
      %v965 = vld [vmem:[%s956 + $0x60] sm:$0xff]
      %v966 = vld [vmem:[%s956 + $0x68] sm:$0xff]
      %v967 = vld [vmem:[%s956 + $0x78] sm:$0xff]
      %v968 = vld [vmem:[%s956 + $0x80] sm:$0xff]
      %v969 = vld [vmem:[%s956 + $0x90] sm:$0xff]
      %v970 = vld [vmem:[%s956 + $0x98] sm:$0xff]
      %v971 = vld [vmem:[%s956 + $0xa8] sm:$0xff]
      %v972 = vld [vmem:[%s956 + $0xb0] sm:$0xff]
      %v973 = vld [vmem:[%s956 + $0xc0] sm:$0xff]
      %v974 = vld [vmem:[%s956 + $0xc8] sm:$0xff]
      %v975 = vld [vmem:[%s956 + $0xd8] sm:$0xff]
      %v976 = vld [vmem:[%s956 + $0xe0] sm:$0xff]
      %v977 = vld [vmem:[%s956 + $0xf0] sm:$0xff]
      %v978 = vld [vmem:[%s956 + $0xf8] sm:$0xff]
      %v979 = vld [vmem:[%s956 + $0x108] sm:$0xff]
      %v980 = vld [vmem:[%s956 + $0x110] sm:$0xff]
      %v981 = vld [vmem:[%s956 + $0x120] sm:$0xff]
      %v982 = vld [vmem:[%s956 + $0x128] sm:$0xff]
      %v983 = vld [vmem:[%s956 + $0x138] sm:$0xff]
      %v984 = vld [vmem:[%s956 + $0x140] sm:$0xff]
      %v985 = vld [vmem:[%s956 + $0x150] sm:$0xff]
      %v986 = vld [vmem:[%s956 + $0x158] sm:$0xff]
      %v987 = vld [vmem:[%s956 + $0x168] sm:$0xff]
      %v988 = vld [vmem:[%s956 + $0x170] sm:$0xff]
      %v989 = vld [vmem:[%s956 + $0x1] sm:$0xff]
      %v990 = vld [vmem:[%s956 + $0x9] sm:$0xff]
      %v991 = vld [vmem:[%s956 + $0x19] sm:$0xff]
      %v992 = vld [vmem:[%s956 + $0x21] sm:$0xff]
      %v993 = vld [vmem:[%s956 + $0x31] sm:$0xff]
      %v994 = vld [vmem:[%s956 + $0x39] sm:$0xff]
      %v995 = vld [vmem:[%s956 + $0x49] sm:$0xff]
      %v996 = vld [vmem:[%s956 + $0x51] sm:$0xff]
      %v997 = vld [vmem:[%s956 + $0x61] sm:$0xff]
      %v998 = vld [vmem:[%s956 + $0x69] sm:$0xff]
      %v999 = vld [vmem:[%s956 + $0x79] sm:$0xff]
      %v1000 = vld [vmem:[%s956 + $0x81] sm:$0xff]
      %v1001 = vld [vmem:[%s956 + $0x91] sm:$0xff]
      %v1002 = vld [vmem:[%s956 + $0x99] sm:$0xff]
      %v1003 = vld [vmem:[%s956 + $0xa9] sm:$0xff]
      %v1004 = vld [vmem:[%s956 + $0xb1] sm:$0xff]
      %v1005 = vld [vmem:[%s956 + $0xc1] sm:$0xff]
      %v1006 = vld [vmem:[%s956 + $0xc9] sm:$0xff]
      %v1007 = vld [vmem:[%s956 + $0xd9] sm:$0xff]
      %v1008 = vld [vmem:[%s956 + $0xe1] sm:$0xff]
      %v1009 = vld [vmem:[%s956 + $0xf1] sm:$0xff]
      %v1010 = vld [vmem:[%s956 + $0xf9] sm:$0xff]
      %v1011 = vld [vmem:[%s956 + $0x109] sm:$0xff]
      %v1012 = vld [vmem:[%s956 + $0x111] sm:$0xff]
      %v1013 = vld [vmem:[%s956 + $0x121] sm:$0xff]
      %v1014 = vld [vmem:[%s956 + $0x129] sm:$0xff]
      %v1015 = vld [vmem:[%s956 + $0x139] sm:$0xff]
      %v1016 = vld [vmem:[%s956 + $0x141] sm:$0xff]
      %v1017 = vld [vmem:[%s956 + $0x151] sm:$0xff]
      %v1018 = vld [vmem:[%s956 + $0x159] sm:$0xff]
      %v1019 = vld [vmem:[%s956 + $0x169] sm:$0xff]
      %v1020 = vld [vmem:[%s956 + $0x171] sm:$0xff]
      %v1021 = vld [vmem:[%s956 + $0x2] sm:$0xff]
      %v1022 = vld [vmem:[%s956 + $0xa] sm:$0xff]
      %v1023 = vld [vmem:[%s956 + $0x1a] sm:$0xff]
      %v1024 = vld [vmem:[%s956 + $0x22] sm:$0xff]
      %v1025 = vld [vmem:[%s956 + $0x32] sm:$0xff]
      %v1026 = vld [vmem:[%s956 + $0x3a] sm:$0xff]
      %v1027 = vld [vmem:[%s956 + $0x4a] sm:$0xff]
      %v1028 = vld [vmem:[%s956 + $0x52] sm:$0xff]
      %v1029 = vld [vmem:[%s956 + $0x62] sm:$0xff]
      %v1030 = vld [vmem:[%s956 + $0x6a] sm:$0xff]
      %v1031 = vld [vmem:[%s956 + $0x7a] sm:$0xff]
      %v1032 = vld [vmem:[%s956 + $0x82] sm:$0xff]
      %v1033 = vld [vmem:[%s956 + $0x92] sm:$0xff]
      %v1034 = vld [vmem:[%s956 + $0x9a] sm:$0xff]
      %v1035 = vld [vmem:[%s956 + $0xaa] sm:$0xff]
      %v1036 = vld [vmem:[%s956 + $0xb2] sm:$0xff]
      %v1037 = vld [vmem:[%s956 + $0xc2] sm:$0xff]
      %v1038 = vld [vmem:[%s956 + $0xca] sm:$0xff]
      %v1039 = vld [vmem:[%s956 + $0xda] sm:$0xff]
      %v1040 = vld [vmem:[%s956 + $0xe2] sm:$0xff]
      %v1041 = vld [vmem:[%s956 + $0xf2] sm:$0xff]
      %v1042 = vld [vmem:[%s956 + $0xfa] sm:$0xff]
      %v1043 = vld [vmem:[%s956 + $0x10a] sm:$0xff]
      %v1044 = vld [vmem:[%s956 + $0x112] sm:$0xff]
      %v1045 = vld [vmem:[%s956 + $0x122] sm:$0xff]
      %v1046 = vld [vmem:[%s956 + $0x12a] sm:$0xff]
      %v1047 = vld [vmem:[%s956 + $0x13a] sm:$0xff]
      %v1048 = vld [vmem:[%s956 + $0x142] sm:$0xff]
      %v1049 = vld [vmem:[%s956 + $0x152] sm:$0xff]
      %v1050 = vld [vmem:[%s956 + $0x15a] sm:$0xff]
      %v1051 = vld [vmem:[%s956 + $0x16a] sm:$0xff]
      %v1052 = vld [vmem:[%s956 + $0x172] sm:$0xff]
      %s1053 = scalar_lea.vmem %s382, 48
      %v1054 = vld [vmem:[%s1053] sm:$0xff]
      %v1055 = vld [vmem:[%s1053 + $0x8] sm:$0xff]
      %v1056 = vld [vmem:[%s1053 + $0x18] sm:$0xff]
      %v1057 = vld [vmem:[%s1053 + $0x20] sm:$0xff]
      %v1058 = vld [vmem:[%s1053 + $0x30] sm:$0xff]
      %v1059 = vld [vmem:[%s1053 + $0x38] sm:$0xff]
      %v1060 = vld [vmem:[%s1053 + $0x48] sm:$0xff]
      %v1061 = vld [vmem:[%s1053 + $0x50] sm:$0xff]
      %v1062 = vld [vmem:[%s1053 + $0x60] sm:$0xff]
      %v1063 = vld [vmem:[%s1053 + $0x68] sm:$0xff]
      %v1064 = vld [vmem:[%s1053 + $0x78] sm:$0xff]
      %v1065 = vld [vmem:[%s1053 + $0x80] sm:$0xff]
      %v1066 = vld [vmem:[%s1053 + $0x90] sm:$0xff]
      %v1067 = vld [vmem:[%s1053 + $0x98] sm:$0xff]
      %v1068 = vld [vmem:[%s1053 + $0xa8] sm:$0xff]
      %v1069 = vld [vmem:[%s1053 + $0xb0] sm:$0xff]
      %v1070 = vld [vmem:[%s1053 + $0xc0] sm:$0xff]
      %v1071 = vld [vmem:[%s1053 + $0xc8] sm:$0xff]
      %v1072 = vld [vmem:[%s1053 + $0xd8] sm:$0xff]
      %v1073 = vld [vmem:[%s1053 + $0xe0] sm:$0xff]
      %v1074 = vld [vmem:[%s1053 + $0xf0] sm:$0xff]
      %v1075 = vld [vmem:[%s1053 + $0xf8] sm:$0xff]
      %v1076 = vld [vmem:[%s1053 + $0x108] sm:$0xff]
      %v1077 = vld [vmem:[%s1053 + $0x110] sm:$0xff]
      %v1078 = vld [vmem:[%s1053 + $0x120] sm:$0xff]
      %v1079 = vld [vmem:[%s1053 + $0x128] sm:$0xff]
      %v1080 = vld [vmem:[%s1053 + $0x138] sm:$0xff]
      %v1081 = vld [vmem:[%s1053 + $0x140] sm:$0xff]
      %v1082 = vld [vmem:[%s1053 + $0x150] sm:$0xff]
      %v1083 = vld [vmem:[%s1053 + $0x158] sm:$0xff]
      %v1084 = vld [vmem:[%s1053 + $0x168] sm:$0xff]
      %v1085 = vld [vmem:[%s1053 + $0x170] sm:$0xff]
      %v1086 = vld [vmem:[%s1053 + $0x1] sm:$0xff]
      %v1087 = vld [vmem:[%s1053 + $0x9] sm:$0xff]
      %v1088 = vld [vmem:[%s1053 + $0x19] sm:$0xff]
      %v1089 = vld [vmem:[%s1053 + $0x21] sm:$0xff]
      %v1090 = vld [vmem:[%s1053 + $0x31] sm:$0xff]
      %v1091 = vld [vmem:[%s1053 + $0x39] sm:$0xff]
      %v1092 = vld [vmem:[%s1053 + $0x49] sm:$0xff]
      %v1093 = vld [vmem:[%s1053 + $0x51] sm:$0xff]
      %v1094 = vld [vmem:[%s1053 + $0x61] sm:$0xff]
      %v1095 = vld [vmem:[%s1053 + $0x69] sm:$0xff]
      %v1096 = vld [vmem:[%s1053 + $0x79] sm:$0xff]
      %v1097 = vld [vmem:[%s1053 + $0x81] sm:$0xff]
      %v1098 = vld [vmem:[%s1053 + $0x91] sm:$0xff]
      %v1099 = vld [vmem:[%s1053 + $0x99] sm:$0xff]
      %v1100 = vld [vmem:[%s1053 + $0xa9] sm:$0xff]
      %v1101 = vld [vmem:[%s1053 + $0xb1] sm:$0xff]
      %v1102 = vld [vmem:[%s1053 + $0xc1] sm:$0xff]
      %v1103 = vld [vmem:[%s1053 + $0xc9] sm:$0xff]
      %v1104 = vld [vmem:[%s1053 + $0xd9] sm:$0xff]
      %v1105 = vld [vmem:[%s1053 + $0xe1] sm:$0xff]
      %v1106 = vld [vmem:[%s1053 + $0xf1] sm:$0xff]
      %v1107 = vld [vmem:[%s1053 + $0xf9] sm:$0xff]
      %v1108 = vld [vmem:[%s1053 + $0x109] sm:$0xff]
      %v1109 = vld [vmem:[%s1053 + $0x111] sm:$0xff]
      %v1110 = vld [vmem:[%s1053 + $0x121] sm:$0xff]
      %v1111 = vld [vmem:[%s1053 + $0x129] sm:$0xff]
      %v1112 = vld [vmem:[%s1053 + $0x139] sm:$0xff]
      %v1113 = vld [vmem:[%s1053 + $0x141] sm:$0xff]
      %v1114 = vld [vmem:[%s1053 + $0x151] sm:$0xff]
      %v1115 = vld [vmem:[%s1053 + $0x159] sm:$0xff]
      %v1116 = vld [vmem:[%s1053 + $0x169] sm:$0xff]
      %v1117 = vld [vmem:[%s1053 + $0x171] sm:$0xff]
      %v1118 = vld [vmem:[%s1053 + $0x2] sm:$0xff]
      %v1119 = vld [vmem:[%s1053 + $0xa] sm:$0xff]
      %v1120 = vld [vmem:[%s1053 + $0x1a] sm:$0xff]
      %v1121 = vld [vmem:[%s1053 + $0x22] sm:$0xff]
      %v1122 = vld [vmem:[%s1053 + $0x32] sm:$0xff]
      %v1123 = vld [vmem:[%s1053 + $0x3a] sm:$0xff]
      %v1124 = vld [vmem:[%s1053 + $0x4a] sm:$0xff]
      %v1125 = vld [vmem:[%s1053 + $0x52] sm:$0xff]
      %v1126 = vld [vmem:[%s1053 + $0x62] sm:$0xff]
      %v1127 = vld [vmem:[%s1053 + $0x6a] sm:$0xff]
      %v1128 = vld [vmem:[%s1053 + $0x7a] sm:$0xff]
      %v1129 = vld [vmem:[%s1053 + $0x82] sm:$0xff]
      %v1130 = vld [vmem:[%s1053 + $0x92] sm:$0xff]
      %v1131 = vld [vmem:[%s1053 + $0x9a] sm:$0xff]
      %v1132 = vld [vmem:[%s1053 + $0xaa] sm:$0xff]
      %v1133 = vld [vmem:[%s1053 + $0xb2] sm:$0xff]
      %v1134 = vld [vmem:[%s1053 + $0xc2] sm:$0xff]
      %v1135 = vld [vmem:[%s1053 + $0xca] sm:$0xff]
      %v1136 = vld [vmem:[%s1053 + $0xda] sm:$0xff]
      %v1137 = vld [vmem:[%s1053 + $0xe2] sm:$0xff]
      %v1138 = vld [vmem:[%s1053 + $0xf2] sm:$0xff]
      %v1139 = vld [vmem:[%s1053 + $0xfa] sm:$0xff]
      %v1140 = vld [vmem:[%s1053 + $0x10a] sm:$0xff]
      %v1141 = vld [vmem:[%s1053 + $0x112] sm:$0xff]
      %v1142 = vld [vmem:[%s1053 + $0x122] sm:$0xff]
      %v1143 = vld [vmem:[%s1053 + $0x12a] sm:$0xff]
      %v1144 = vld [vmem:[%s1053 + $0x13a] sm:$0xff]
      %v1145 = vld [vmem:[%s1053 + $0x142] sm:$0xff]
      %v1146 = vld [vmem:[%s1053 + $0x152] sm:$0xff]
      %v1147 = vld [vmem:[%s1053 + $0x15a] sm:$0xff]
      %v1148 = vld [vmem:[%s1053 + $0x16a] sm:$0xff]
      %v1149 = vld [vmem:[%s1053 + $0x172] sm:$0xff]
      %1182 = vrot.lane.b32.xlu0 %v892, 4
      %v1183 = vpop.permute.xlu0 %1182
      %1184 = vrot.lane.b32.xlu0 %v893, 4
      %v1185 = vpop.permute.xlu0 %1184
      %1186 = vrot.lane.b32.xlu0 %v894, 4
      %v1187 = vpop.permute.xlu0 %1186
      %1188 = vrot.lane.b32.xlu0 %v895, 4
      %v1189 = vpop.permute.xlu0 %1188
      %1190 = vrot.lane.b32.xlu0 %v896, 4
      %v1191 = vpop.permute.xlu0 %1190
      %1192 = vrot.lane.b32.xlu0 %v897, 4
      %v1193 = vpop.permute.xlu0 %1192
      %1194 = vrot.lane.b32.xlu0 %v898, 4
      %v1195 = vpop.permute.xlu0 %1194
      %1196 = vrot.lane.b32.xlu0 %v899, 4
      %v1197 = vpop.permute.xlu0 %1196
      %1198 = vrot.lane.b32.xlu0 %v900, 4
      %v1199 = vpop.permute.xlu0 %1198
      %1200 = vrot.lane.b32.xlu0 %v901, 4
      %v1201 = vpop.permute.xlu0 %1200
      %1202 = vrot.lane.b32.xlu0 %v902, 4
      %v1203 = vpop.permute.xlu0 %1202
      %1204 = vrot.lane.b32.xlu0 %v903, 4
      %v1205 = vpop.permute.xlu0 %1204
      %1206 = vrot.lane.b32.xlu0 %v904, 4
      %v1207 = vpop.permute.xlu0 %1206
      %1208 = vrot.lane.b32.xlu0 %v905, 4
      %v1209 = vpop.permute.xlu0 %1208
      %1210 = vrot.lane.b32.xlu0 %v906, 4
      %v1211 = vpop.permute.xlu0 %1210
      %1212 = vrot.lane.b32.xlu0 %v907, 4
      %v1213 = vpop.permute.xlu0 %1212
      %1214 = vrot.lane.b32.xlu0 %v908, 4
      %v1215 = vpop.permute.xlu0 %1214
      %1216 = vrot.lane.b32.xlu0 %v909, 4
      %v1217 = vpop.permute.xlu0 %1216
      %1218 = vrot.lane.b32.xlu0 %v910, 4
      %v1219 = vpop.permute.xlu0 %1218
      %1220 = vrot.lane.b32.xlu0 %v911, 4
      %v1221 = vpop.permute.xlu0 %1220
      %1222 = vrot.lane.b32.xlu0 %v912, 4
      %v1223 = vpop.permute.xlu0 %1222
      %1224 = vrot.lane.b32.xlu0 %v913, 4
      %v1225 = vpop.permute.xlu0 %1224
      %1226 = vrot.lane.b32.xlu0 %v914, 4
      %v1227 = vpop.permute.xlu0 %1226
      %1228 = vrot.lane.b32.xlu0 %v915, 4
      %v1229 = vpop.permute.xlu0 %1228
      %1230 = vrot.lane.b32.xlu0 %v916, 4
      %v1231 = vpop.permute.xlu0 %1230
      %1232 = vrot.lane.b32.xlu0 %v917, 4
      %v1233 = vpop.permute.xlu0 %1232
      %1234 = vrot.lane.b32.xlu0 %v918, 4
      %v1235 = vpop.permute.xlu0 %1234
      %1236 = vrot.lane.b32.xlu0 %v919, 4
      %v1237 = vpop.permute.xlu0 %1236
      %1238 = vrot.lane.b32.xlu0 %v920, 4
      %v1239 = vpop.permute.xlu0 %1238
      %1240 = vrot.lane.b32.xlu0 %v921, 4
      %v1241 = vpop.permute.xlu0 %1240
      %1242 = vrot.lane.b32.xlu0 %v922, 4
      %v1243 = vpop.permute.xlu0 %1242
      %1244 = vrot.lane.b32.xlu0 %v923, 4
      %v1245 = vpop.permute.xlu0 %1244
      %1310 = vrot.lane.b32.xlu0 %v924, 8
      %v1311 = vpop.permute.xlu0 %1310
      %1312 = vrot.lane.b32.xlu0 %v925, 8
      %v1313 = vpop.permute.xlu0 %1312
      %1314 = vrot.lane.b32.xlu0 %v926, 8
      %v1315 = vpop.permute.xlu0 %1314
      %1316 = vrot.lane.b32.xlu0 %v927, 8
      %v1317 = vpop.permute.xlu0 %1316
      %1318 = vrot.lane.b32.xlu0 %v928, 8
      %v1319 = vpop.permute.xlu0 %1318
      %1320 = vrot.lane.b32.xlu0 %v929, 8
      %v1321 = vpop.permute.xlu0 %1320
      %1322 = vrot.lane.b32.xlu0 %v930, 8
      %v1323 = vpop.permute.xlu0 %1322
      %1324 = vrot.lane.b32.xlu0 %v931, 8
      %v1325 = vpop.permute.xlu0 %1324
      %1326 = vrot.lane.b32.xlu0 %v932, 8
      %v1327 = vpop.permute.xlu0 %1326
      %1328 = vrot.lane.b32.xlu0 %v933, 8
      %v1329 = vpop.permute.xlu0 %1328
      %1330 = vrot.lane.b32.xlu0 %v934, 8
      %v1331 = vpop.permute.xlu0 %1330
      %1332 = vrot.lane.b32.xlu0 %v935, 8
      %v1333 = vpop.permute.xlu0 %1332
      %1334 = vrot.lane.b32.xlu0 %v936, 8
      %v1335 = vpop.permute.xlu0 %1334
      %1336 = vrot.lane.b32.xlu0 %v937, 8
      %v1337 = vpop.permute.xlu0 %1336
      %1338 = vrot.lane.b32.xlu0 %v938, 8
      %v1339 = vpop.permute.xlu0 %1338
      %1340 = vrot.lane.b32.xlu0 %v939, 8
      %v1341 = vpop.permute.xlu0 %1340
      %1342 = vrot.lane.b32.xlu0 %v940, 8
      %v1343 = vpop.permute.xlu0 %1342
      %1344 = vrot.lane.b32.xlu0 %v941, 8
      %v1345 = vpop.permute.xlu0 %1344
      %1346 = vrot.lane.b32.xlu0 %v942, 8
      %v1347 = vpop.permute.xlu0 %1346
      %1348 = vrot.lane.b32.xlu0 %v943, 8
      %v1349 = vpop.permute.xlu0 %1348
      %1350 = vrot.lane.b32.xlu0 %v944, 8
      %v1351 = vpop.permute.xlu0 %1350
      %1352 = vrot.lane.b32.xlu0 %v945, 8
      %v1353 = vpop.permute.xlu0 %1352
      %1354 = vrot.lane.b32.xlu0 %v946, 8
      %v1355 = vpop.permute.xlu0 %1354
      %1356 = vrot.lane.b32.xlu0 %v947, 8
      %v1357 = vpop.permute.xlu0 %1356
      %1358 = vrot.lane.b32.xlu0 %v948, 8
      %v1359 = vpop.permute.xlu0 %1358
      %1360 = vrot.lane.b32.xlu0 %v949, 8
      %v1361 = vpop.permute.xlu0 %1360
      %1362 = vrot.lane.b32.xlu0 %v950, 8
      %v1363 = vpop.permute.xlu0 %1362
      %1364 = vrot.lane.b32.xlu0 %v951, 8
      %v1365 = vpop.permute.xlu0 %1364
      %1366 = vrot.lane.b32.xlu0 %v952, 8
      %v1367 = vpop.permute.xlu0 %1366
      %1368 = vrot.lane.b32.xlu0 %v953, 8
      %v1369 = vpop.permute.xlu0 %1368
      %1370 = vrot.lane.b32.xlu0 %v954, 8
      %v1371 = vpop.permute.xlu0 %1370
      %1372 = vrot.lane.b32.xlu0 %v955, 8
      %v1373 = vpop.permute.xlu0 %1372
      %1438 = vrot.lane.b32.xlu0 %v957, 12
      %v1439 = vpop.permute.xlu0 %1438
      %1440 = vrot.lane.b32.xlu0 %v958, 12
      %v1441 = vpop.permute.xlu0 %1440
      %1442 = vrot.lane.b32.xlu0 %v959, 12
      %v1443 = vpop.permute.xlu0 %1442
      %1444 = vrot.lane.b32.xlu0 %v960, 12
      %v1445 = vpop.permute.xlu0 %1444
      %1446 = vrot.lane.b32.xlu0 %v961, 12
      %v1447 = vpop.permute.xlu0 %1446
      %1448 = vrot.lane.b32.xlu0 %v962, 12
      %v1449 = vpop.permute.xlu0 %1448
      %1450 = vrot.lane.b32.xlu0 %v963, 12
      %v1451 = vpop.permute.xlu0 %1450
      %1452 = vrot.lane.b32.xlu0 %v964, 12
      %v1453 = vpop.permute.xlu0 %1452
      %1454 = vrot.lane.b32.xlu0 %v965, 12
      %v1455 = vpop.permute.xlu0 %1454
      %1456 = vrot.lane.b32.xlu0 %v966, 12
      %v1457 = vpop.permute.xlu0 %1456
      %1458 = vrot.lane.b32.xlu0 %v967, 12
      %v1459 = vpop.permute.xlu0 %1458
      %1460 = vrot.lane.b32.xlu0 %v968, 12
      %v1461 = vpop.permute.xlu0 %1460
      %1462 = vrot.lane.b32.xlu0 %v969, 12
      %v1463 = vpop.permute.xlu0 %1462
      %1464 = vrot.lane.b32.xlu0 %v970, 12
      %v1465 = vpop.permute.xlu0 %1464
      %1466 = vrot.lane.b32.xlu0 %v971, 12
      %v1467 = vpop.permute.xlu0 %1466
      %1468 = vrot.lane.b32.xlu0 %v972, 12
      %v1469 = vpop.permute.xlu0 %1468
      %1470 = vrot.lane.b32.xlu0 %v973, 12
      %v1471 = vpop.permute.xlu0 %1470
      %1472 = vrot.lane.b32.xlu0 %v974, 12
      %v1473 = vpop.permute.xlu0 %1472
      %1474 = vrot.lane.b32.xlu0 %v975, 12
      %v1475 = vpop.permute.xlu0 %1474
      %1476 = vrot.lane.b32.xlu0 %v976, 12
      %v1477 = vpop.permute.xlu0 %1476
      %1478 = vrot.lane.b32.xlu0 %v977, 12
      %v1479 = vpop.permute.xlu0 %1478
      %1480 = vrot.lane.b32.xlu0 %v978, 12
      %v1481 = vpop.permute.xlu0 %1480
      %1482 = vrot.lane.b32.xlu0 %v979, 12
      %v1483 = vpop.permute.xlu0 %1482
      %1484 = vrot.lane.b32.xlu0 %v980, 12
      %v1485 = vpop.permute.xlu0 %1484
      %1486 = vrot.lane.b32.xlu0 %v981, 12
      %v1487 = vpop.permute.xlu0 %1486
      %1488 = vrot.lane.b32.xlu0 %v982, 12
      %v1489 = vpop.permute.xlu0 %1488
      %1490 = vrot.lane.b32.xlu0 %v983, 12
      %v1491 = vpop.permute.xlu0 %1490
      %1492 = vrot.lane.b32.xlu0 %v984, 12
      %v1493 = vpop.permute.xlu0 %1492
      %1494 = vrot.lane.b32.xlu0 %v985, 12
      %v1495 = vpop.permute.xlu0 %1494
      %1496 = vrot.lane.b32.xlu0 %v986, 12
      %v1497 = vpop.permute.xlu0 %1496
      %1498 = vrot.lane.b32.xlu0 %v987, 12
      %v1499 = vpop.permute.xlu0 %1498
      %1500 = vrot.lane.b32.xlu0 %v988, 12
      %v1501 = vpop.permute.xlu0 %1500
      %1566 = vrot.lane.b32.xlu0 %v989, 16
      %v1567 = vpop.permute.xlu0 %1566
      %1568 = vrot.lane.b32.xlu0 %v990, 16
      %v1569 = vpop.permute.xlu0 %1568
      %1570 = vrot.lane.b32.xlu0 %v991, 16
      %v1571 = vpop.permute.xlu0 %1570
      %1572 = vrot.lane.b32.xlu0 %v992, 16
      %v1573 = vpop.permute.xlu0 %1572
      %1574 = vrot.lane.b32.xlu0 %v993, 16
      %v1575 = vpop.permute.xlu0 %1574
      %1576 = vrot.lane.b32.xlu0 %v994, 16
      %v1577 = vpop.permute.xlu0 %1576
      %1578 = vrot.lane.b32.xlu0 %v995, 16
      %v1579 = vpop.permute.xlu0 %1578
      %1580 = vrot.lane.b32.xlu0 %v996, 16
      %v1581 = vpop.permute.xlu0 %1580
      %1582 = vrot.lane.b32.xlu0 %v997, 16
      %v1583 = vpop.permute.xlu0 %1582
      %1584 = vrot.lane.b32.xlu0 %v998, 16
      %v1585 = vpop.permute.xlu0 %1584
      %1586 = vrot.lane.b32.xlu0 %v999, 16
      %v1587 = vpop.permute.xlu0 %1586
      %1588 = vrot.lane.b32.xlu0 %v1000, 16
      %v1589 = vpop.permute.xlu0 %1588
      %1590 = vrot.lane.b32.xlu0 %v1001, 16
      %v1591 = vpop.permute.xlu0 %1590
      %1592 = vrot.lane.b32.xlu0 %v1002, 16
      %v1593 = vpop.permute.xlu0 %1592
      %1594 = vrot.lane.b32.xlu0 %v1003, 16
      %v1595 = vpop.permute.xlu0 %1594
      %1596 = vrot.lane.b32.xlu0 %v1004, 16
      %v1597 = vpop.permute.xlu0 %1596
      %1598 = vrot.lane.b32.xlu0 %v1005, 16
      %v1599 = vpop.permute.xlu0 %1598
      %1600 = vrot.lane.b32.xlu0 %v1006, 16
      %v1601 = vpop.permute.xlu0 %1600
      %1602 = vrot.lane.b32.xlu0 %v1007, 16
      %v1603 = vpop.permute.xlu0 %1602
      %1604 = vrot.lane.b32.xlu0 %v1008, 16
      %v1605 = vpop.permute.xlu0 %1604
      %1606 = vrot.lane.b32.xlu0 %v1009, 16
      %v1607 = vpop.permute.xlu0 %1606
      %1608 = vrot.lane.b32.xlu0 %v1010, 16
      %v1609 = vpop.permute.xlu0 %1608
      %1610 = vrot.lane.b32.xlu0 %v1011, 16
      %v1611 = vpop.permute.xlu0 %1610
      %1612 = vrot.lane.b32.xlu0 %v1012, 16
      %v1613 = vpop.permute.xlu0 %1612
      %1614 = vrot.lane.b32.xlu0 %v1013, 16
      %v1615 = vpop.permute.xlu0 %1614
      %1616 = vrot.lane.b32.xlu0 %v1014, 16
      %v1617 = vpop.permute.xlu0 %1616
      %1618 = vrot.lane.b32.xlu0 %v1015, 16
      %v1619 = vpop.permute.xlu0 %1618
      %1620 = vrot.lane.b32.xlu0 %v1016, 16
      %v1621 = vpop.permute.xlu0 %1620
      %1622 = vrot.lane.b32.xlu0 %v1017, 16
      %v1623 = vpop.permute.xlu0 %1622
      %1624 = vrot.lane.b32.xlu0 %v1018, 16
      %v1625 = vpop.permute.xlu0 %1624
      %1626 = vrot.lane.b32.xlu0 %v1019, 16
      %v1627 = vpop.permute.xlu0 %1626
      %1628 = vrot.lane.b32.xlu0 %v1020, 16
      %v1629 = vpop.permute.xlu0 %1628
      %1694 = vrot.lane.b32.xlu0 %v1021, 20
      %v1695 = vpop.permute.xlu0 %1694
      %1696 = vrot.lane.b32.xlu0 %v1022, 20
      %v1697 = vpop.permute.xlu0 %1696
      %1698 = vrot.lane.b32.xlu0 %v1023, 20
      %v1699 = vpop.permute.xlu0 %1698
      %1700 = vrot.lane.b32.xlu0 %v1024, 20
      %v1701 = vpop.permute.xlu0 %1700
      %1702 = vrot.lane.b32.xlu0 %v1025, 20
      %v1703 = vpop.permute.xlu0 %1702
      %1704 = vrot.lane.b32.xlu0 %v1026, 20
      %v1705 = vpop.permute.xlu0 %1704
      %1706 = vrot.lane.b32.xlu0 %v1027, 20
      %v1707 = vpop.permute.xlu0 %1706
      %1708 = vrot.lane.b32.xlu0 %v1028, 20
      %v1709 = vpop.permute.xlu0 %1708
      %1710 = vrot.lane.b32.xlu0 %v1029, 20
      %v1711 = vpop.permute.xlu0 %1710
      %1712 = vrot.lane.b32.xlu0 %v1030, 20
      %v1713 = vpop.permute.xlu0 %1712
      %1714 = vrot.lane.b32.xlu0 %v1031, 20
      %v1715 = vpop.permute.xlu0 %1714
      %1716 = vrot.lane.b32.xlu0 %v1032, 20
      %v1717 = vpop.permute.xlu0 %1716
      %1718 = vrot.lane.b32.xlu0 %v1033, 20
      %v1719 = vpop.permute.xlu0 %1718
      %1720 = vrot.lane.b32.xlu0 %v1034, 20
      %v1721 = vpop.permute.xlu0 %1720
      %1722 = vrot.lane.b32.xlu0 %v1035, 20
      %v1723 = vpop.permute.xlu0 %1722
      %1724 = vrot.lane.b32.xlu0 %v1036, 20
      %v1725 = vpop.permute.xlu0 %1724
      %1726 = vrot.lane.b32.xlu0 %v1037, 20
      %v1727 = vpop.permute.xlu0 %1726
      %1728 = vrot.lane.b32.xlu0 %v1038, 20
      %v1729 = vpop.permute.xlu0 %1728
      %1730 = vrot.lane.b32.xlu0 %v1039, 20
      %v1731 = vpop.permute.xlu0 %1730
      %1732 = vrot.lane.b32.xlu0 %v1040, 20
      %v1733 = vpop.permute.xlu0 %1732
      %1734 = vrot.lane.b32.xlu0 %v1041, 20
      %v1735 = vpop.permute.xlu0 %1734
      %1736 = vrot.lane.b32.xlu0 %v1042, 20
      %v1737 = vpop.permute.xlu0 %1736
      %1738 = vrot.lane.b32.xlu0 %v1043, 20
      %v1739 = vpop.permute.xlu0 %1738
      %1740 = vrot.lane.b32.xlu0 %v1044, 20
      %v1741 = vpop.permute.xlu0 %1740
      %1742 = vrot.lane.b32.xlu0 %v1045, 20
      %v1743 = vpop.permute.xlu0 %1742
      %1744 = vrot.lane.b32.xlu0 %v1046, 20
      %v1745 = vpop.permute.xlu0 %1744
      %1746 = vrot.lane.b32.xlu0 %v1047, 20
      %v1747 = vpop.permute.xlu0 %1746
      %1748 = vrot.lane.b32.xlu0 %v1048, 20
      %v1749 = vpop.permute.xlu0 %1748
      %1750 = vrot.lane.b32.xlu0 %v1049, 20
      %v1751 = vpop.permute.xlu0 %1750
      %1752 = vrot.lane.b32.xlu0 %v1050, 20
      %v1753 = vpop.permute.xlu0 %1752
      %1754 = vrot.lane.b32.xlu0 %v1051, 20
      %v1755 = vpop.permute.xlu0 %1754
      %1756 = vrot.lane.b32.xlu0 %v1052, 20
      %v1757 = vpop.permute.xlu0 %1756
      %1822 = vrot.lane.b32.xlu0 %v1054, 24
      %v1823 = vpop.permute.xlu0 %1822
      %1824 = vrot.lane.b32.xlu0 %v1055, 24
      %v1825 = vpop.permute.xlu0 %1824
      %1826 = vrot.lane.b32.xlu0 %v1056, 24
      %v1827 = vpop.permute.xlu0 %1826
      %1828 = vrot.lane.b32.xlu0 %v1057, 24
      %v1829 = vpop.permute.xlu0 %1828
      %1830 = vrot.lane.b32.xlu0 %v1058, 24
      %v1831 = vpop.permute.xlu0 %1830
      %1832 = vrot.lane.b32.xlu0 %v1059, 24
      %v1833 = vpop.permute.xlu0 %1832
      %1834 = vrot.lane.b32.xlu0 %v1060, 24
      %v1835 = vpop.permute.xlu0 %1834
      %1836 = vrot.lane.b32.xlu0 %v1061, 24
      %v1837 = vpop.permute.xlu0 %1836
      %1838 = vrot.lane.b32.xlu0 %v1062, 24
      %v1839 = vpop.permute.xlu0 %1838
      %1840 = vrot.lane.b32.xlu0 %v1063, 24
      %v1841 = vpop.permute.xlu0 %1840
      %1842 = vrot.lane.b32.xlu0 %v1064, 24
      %v1843 = vpop.permute.xlu0 %1842
      %1844 = vrot.lane.b32.xlu0 %v1065, 24
      %v1845 = vpop.permute.xlu0 %1844
      %1846 = vrot.lane.b32.xlu0 %v1066, 24
      %v1847 = vpop.permute.xlu0 %1846
      %1848 = vrot.lane.b32.xlu0 %v1067, 24
      %v1849 = vpop.permute.xlu0 %1848
      %1850 = vrot.lane.b32.xlu0 %v1068, 24
      %v1851 = vpop.permute.xlu0 %1850
      %1852 = vrot.lane.b32.xlu0 %v1069, 24
      %v1853 = vpop.permute.xlu0 %1852
      %1854 = vrot.lane.b32.xlu0 %v1070, 24
      %v1855 = vpop.permute.xlu0 %1854
      %1856 = vrot.lane.b32.xlu0 %v1071, 24
      %v1857 = vpop.permute.xlu0 %1856
      %1858 = vrot.lane.b32.xlu0 %v1072, 24
      %v1859 = vpop.permute.xlu0 %1858
      %1860 = vrot.lane.b32.xlu0 %v1073, 24
      %v1861 = vpop.permute.xlu0 %1860
      %1862 = vrot.lane.b32.xlu0 %v1074, 24
      %v1863 = vpop.permute.xlu0 %1862
      %1864 = vrot.lane.b32.xlu0 %v1075, 24
      %v1865 = vpop.permute.xlu0 %1864
      %1866 = vrot.lane.b32.xlu0 %v1076, 24
      %v1867 = vpop.permute.xlu0 %1866
      %1868 = vrot.lane.b32.xlu0 %v1077, 24
      %v1869 = vpop.permute.xlu0 %1868
      %1870 = vrot.lane.b32.xlu0 %v1078, 24
      %v1871 = vpop.permute.xlu0 %1870
      %1872 = vrot.lane.b32.xlu0 %v1079, 24
      %v1873 = vpop.permute.xlu0 %1872
      %1874 = vrot.lane.b32.xlu0 %v1080, 24
      %v1875 = vpop.permute.xlu0 %1874
      %1876 = vrot.lane.b32.xlu0 %v1081, 24
      %v1877 = vpop.permute.xlu0 %1876
      %1878 = vrot.lane.b32.xlu0 %v1082, 24
      %v1879 = vpop.permute.xlu0 %1878
      %1880 = vrot.lane.b32.xlu0 %v1083, 24
      %v1881 = vpop.permute.xlu0 %1880
      %1882 = vrot.lane.b32.xlu0 %v1084, 24
      %v1883 = vpop.permute.xlu0 %1882
      %1884 = vrot.lane.b32.xlu0 %v1085, 24
      %v1885 = vpop.permute.xlu0 %1884
      %1950 = vrot.lane.b32.xlu0 %v1086, 28
      %v1951 = vpop.permute.xlu0 %1950
      %1952 = vrot.lane.b32.xlu0 %v1087, 28
      %v1953 = vpop.permute.xlu0 %1952
      %1954 = vrot.lane.b32.xlu0 %v1088, 28
      %v1955 = vpop.permute.xlu0 %1954
      %1956 = vrot.lane.b32.xlu0 %v1089, 28
      %v1957 = vpop.permute.xlu0 %1956
      %1958 = vrot.lane.b32.xlu0 %v1090, 28
      %v1959 = vpop.permute.xlu0 %1958
      %1960 = vrot.lane.b32.xlu0 %v1091, 28
      %v1961 = vpop.permute.xlu0 %1960
      %1962 = vrot.lane.b32.xlu0 %v1092, 28
      %v1963 = vpop.permute.xlu0 %1962
      %1964 = vrot.lane.b32.xlu0 %v1093, 28
      %v1965 = vpop.permute.xlu0 %1964
      %1966 = vrot.lane.b32.xlu0 %v1094, 28
      %v1967 = vpop.permute.xlu0 %1966
      %1968 = vrot.lane.b32.xlu0 %v1095, 28
      %v1969 = vpop.permute.xlu0 %1968
      %1970 = vrot.lane.b32.xlu0 %v1096, 28
      %v1971 = vpop.permute.xlu0 %1970
      %1972 = vrot.lane.b32.xlu0 %v1097, 28
      %v1973 = vpop.permute.xlu0 %1972
      %1974 = vrot.lane.b32.xlu0 %v1098, 28
      %v1975 = vpop.permute.xlu0 %1974
      %1976 = vrot.lane.b32.xlu0 %v1099, 28
      %v1977 = vpop.permute.xlu0 %1976
      %1978 = vrot.lane.b32.xlu0 %v1100, 28
      %v1979 = vpop.permute.xlu0 %1978
      %1980 = vrot.lane.b32.xlu0 %v1101, 28
      %v1981 = vpop.permute.xlu0 %1980
      %1982 = vrot.lane.b32.xlu0 %v1102, 28
      %v1983 = vpop.permute.xlu0 %1982
      %1984 = vrot.lane.b32.xlu0 %v1103, 28
      %v1985 = vpop.permute.xlu0 %1984
      %1986 = vrot.lane.b32.xlu0 %v1104, 28
      %v1987 = vpop.permute.xlu0 %1986
      %1988 = vrot.lane.b32.xlu0 %v1105, 28
      %v1989 = vpop.permute.xlu0 %1988
      %1990 = vrot.lane.b32.xlu0 %v1106, 28
      %v1991 = vpop.permute.xlu0 %1990
      %1992 = vrot.lane.b32.xlu0 %v1107, 28
      %v1993 = vpop.permute.xlu0 %1992
      %1994 = vrot.lane.b32.xlu0 %v1108, 28
      %v1995 = vpop.permute.xlu0 %1994
      %1996 = vrot.lane.b32.xlu0 %v1109, 28
      %v1997 = vpop.permute.xlu0 %1996
      %1998 = vrot.lane.b32.xlu0 %v1110, 28
      %v1999 = vpop.permute.xlu0 %1998
      %2000 = vrot.lane.b32.xlu0 %v1111, 28
      %v2001 = vpop.permute.xlu0 %2000
      %2002 = vrot.lane.b32.xlu0 %v1112, 28
      %v2003 = vpop.permute.xlu0 %2002
      %2004 = vrot.lane.b32.xlu0 %v1113, 28
      %v2005 = vpop.permute.xlu0 %2004
      %2006 = vrot.lane.b32.xlu0 %v1114, 28
      %v2007 = vpop.permute.xlu0 %2006
      %2008 = vrot.lane.b32.xlu0 %v1115, 28
      %v2009 = vpop.permute.xlu0 %2008
      %2010 = vrot.lane.b32.xlu0 %v1116, 28
      %v2011 = vpop.permute.xlu0 %2010
      %2012 = vrot.lane.b32.xlu0 %v1117, 28
      %v2013 = vpop.permute.xlu0 %2012
      %2078 = vrot.lane.b32.xlu0 %v1118, 32
      %v2079 = vpop.permute.xlu0 %2078
      %2080 = vrot.lane.b32.xlu0 %v1119, 32
      %v2081 = vpop.permute.xlu0 %2080
      %2082 = vrot.lane.b32.xlu0 %v1120, 32
      %v2083 = vpop.permute.xlu0 %2082
      %2084 = vrot.lane.b32.xlu0 %v1121, 32
      %v2085 = vpop.permute.xlu0 %2084
      %2086 = vrot.lane.b32.xlu0 %v1122, 32
      %v2087 = vpop.permute.xlu0 %2086
      %2088 = vrot.lane.b32.xlu0 %v1123, 32
      %v2089 = vpop.permute.xlu0 %2088
      %2090 = vrot.lane.b32.xlu0 %v1124, 32
      %v2091 = vpop.permute.xlu0 %2090
      %2092 = vrot.lane.b32.xlu0 %v1125, 32
      %v2093 = vpop.permute.xlu0 %2092
      %2094 = vrot.lane.b32.xlu0 %v1126, 32
      %v2095 = vpop.permute.xlu0 %2094
      %2096 = vrot.lane.b32.xlu0 %v1127, 32
      %v2097 = vpop.permute.xlu0 %2096
      %2098 = vrot.lane.b32.xlu0 %v1128, 32
      %v2099 = vpop.permute.xlu0 %2098
      %2100 = vrot.lane.b32.xlu0 %v1129, 32
      %v2101 = vpop.permute.xlu0 %2100
      %2102 = vrot.lane.b32.xlu0 %v1130, 32
      %v2103 = vpop.permute.xlu0 %2102
      %2104 = vrot.lane.b32.xlu0 %v1131, 32
      %v2105 = vpop.permute.xlu0 %2104
      %2106 = vrot.lane.b32.xlu0 %v1132, 32
      %v2107 = vpop.permute.xlu0 %2106
      %2108 = vrot.lane.b32.xlu0 %v1133, 32
      %v2109 = vpop.permute.xlu0 %2108
      %2110 = vrot.lane.b32.xlu0 %v1134, 32
      %v2111 = vpop.permute.xlu0 %2110
      %2112 = vrot.lane.b32.xlu0 %v1135, 32
      %v2113 = vpop.permute.xlu0 %2112
      %2114 = vrot.lane.b32.xlu0 %v1136, 32
      %v2115 = vpop.permute.xlu0 %2114
      %2116 = vrot.lane.b32.xlu0 %v1137, 32
      %v2117 = vpop.permute.xlu0 %2116
      %2118 = vrot.lane.b32.xlu0 %v1138, 32
      %v2119 = vpop.permute.xlu0 %2118
      %2120 = vrot.lane.b32.xlu0 %v1139, 32
      %v2121 = vpop.permute.xlu0 %2120
      %2122 = vrot.lane.b32.xlu0 %v1140, 32
      %v2123 = vpop.permute.xlu0 %2122
      %2124 = vrot.lane.b32.xlu0 %v1141, 32
      %v2125 = vpop.permute.xlu0 %2124
      %2126 = vrot.lane.b32.xlu0 %v1142, 32
      %v2127 = vpop.permute.xlu0 %2126
      %2128 = vrot.lane.b32.xlu0 %v1143, 32
      %v2129 = vpop.permute.xlu0 %2128
      %2130 = vrot.lane.b32.xlu0 %v1144, 32
      %v2131 = vpop.permute.xlu0 %2130
      %2132 = vrot.lane.b32.xlu0 %v1145, 32
      %v2133 = vpop.permute.xlu0 %2132
      %2134 = vrot.lane.b32.xlu0 %v1146, 32
      %v2135 = vpop.permute.xlu0 %2134
      %2136 = vrot.lane.b32.xlu0 %v1147, 32
      %v2137 = vpop.permute.xlu0 %2136
      %2138 = vrot.lane.b32.xlu0 %v1148, 32
      %v2139 = vpop.permute.xlu0 %2138
      %2140 = vrot.lane.b32.xlu0 %v1149, 32
      %v2141 = vpop.permute.xlu0 %2140
      %vm2174 = vcmask 31744
      %v2175 = vsel %vm2174, %v860, %v1183
      %v2176 = vsel %vm2174, %v861, %v1185
      %v2177 = vsel %vm2174, %v862, %v1187
      %v2178 = vsel %vm2174, %v863, %v1189
      %v2179 = vsel %vm2174, %v864, %v1191
      %v2180 = vsel %vm2174, %v865, %v1193
      %v2181 = vsel %vm2174, %v866, %v1195
      %v2182 = vsel %vm2174, %v867, %v1197
      %v2183 = vsel %vm2174, %v868, %v1199
      %v2184 = vsel %vm2174, %v869, %v1201
      %v2185 = vsel %vm2174, %v870, %v1203
      %v2186 = vsel %vm2174, %v871, %v1205
      %v2187 = vsel %vm2174, %v872, %v1207
      %v2188 = vsel %vm2174, %v873, %v1209
      %v2189 = vsel %vm2174, %v874, %v1211
      %v2190 = vsel %vm2174, %v875, %v1213
      %v2191 = vsel %vm2174, %v876, %v1215
      %v2192 = vsel %vm2174, %v877, %v1217
      %v2193 = vsel %vm2174, %v878, %v1219
      %v2194 = vsel %vm2174, %v879, %v1221
      %v2195 = vsel %vm2174, %v880, %v1223
      %v2196 = vsel %vm2174, %v881, %v1225
      %v2197 = vsel %vm2174, %v882, %v1227
      %v2198 = vsel %vm2174, %v883, %v1229
      %v2199 = vsel %vm2174, %v884, %v1231
      %v2200 = vsel %vm2174, %v885, %v1233
      %v2201 = vsel %vm2174, %v886, %v1235
      %v2202 = vsel %vm2174, %v887, %v1237
      %v2203 = vsel %vm2174, %v888, %v1239
      %v2204 = vsel %vm2174, %v889, %v1241
      %v2205 = vsel %vm2174, %v890, %v1243
      %v2206 = vsel %vm2174, %v891, %v1245
      %v2207 = vsel %vm724, %v2175, %v1311
      %v2208 = vsel %vm724, %v2176, %v1313
      %v2209 = vsel %vm724, %v2177, %v1315
      %v2210 = vsel %vm724, %v2178, %v1317
      %v2211 = vsel %vm724, %v2179, %v1319
      %v2212 = vsel %vm724, %v2180, %v1321
      %v2213 = vsel %vm724, %v2181, %v1323
      %v2214 = vsel %vm724, %v2182, %v1325
      %v2215 = vsel %vm724, %v2183, %v1327
      %v2216 = vsel %vm724, %v2184, %v1329
      %v2217 = vsel %vm724, %v2185, %v1331
      %v2218 = vsel %vm724, %v2186, %v1333
      %v2219 = vsel %vm724, %v2187, %v1335
      %v2220 = vsel %vm724, %v2188, %v1337
      %v2221 = vsel %vm724, %v2189, %v1339
      %v2222 = vsel %vm724, %v2190, %v1341
      %v2223 = vsel %vm724, %v2191, %v1343
      %v2224 = vsel %vm724, %v2192, %v1345
      %v2225 = vsel %vm724, %v2193, %v1347
      %v2226 = vsel %vm724, %v2194, %v1349
      %v2227 = vsel %vm724, %v2195, %v1351
      %v2228 = vsel %vm724, %v2196, %v1353
      %v2229 = vsel %vm724, %v2197, %v1355
      %v2230 = vsel %vm724, %v2198, %v1357
      %v2231 = vsel %vm724, %v2199, %v1359
      %v2232 = vsel %vm724, %v2200, %v1361
      %v2233 = vsel %vm724, %v2201, %v1363
      %v2234 = vsel %vm724, %v2202, %v1365
      %v2235 = vsel %vm724, %v2203, %v1367
      %v2236 = vsel %vm724, %v2204, %v1369
      %v2237 = vsel %vm724, %v2205, %v1371
      %v2238 = vsel %vm724, %v2206, %v1373
      %vm2239 = vcmask 97280
      %v2240 = vsel %vm2239, %v2207, %v1439
      %v2241 = vsel %vm2239, %v2208, %v1441
      %v2242 = vsel %vm2239, %v2209, %v1443
      %v2243 = vsel %vm2239, %v2210, %v1445
      %v2244 = vsel %vm2239, %v2211, %v1447
      %v2245 = vsel %vm2239, %v2212, %v1449
      %v2246 = vsel %vm2239, %v2213, %v1451
      %v2247 = vsel %vm2239, %v2214, %v1453
      %v2248 = vsel %vm2239, %v2215, %v1455
      %v2249 = vsel %vm2239, %v2216, %v1457
      %v2250 = vsel %vm2239, %v2217, %v1459
      %v2251 = vsel %vm2239, %v2218, %v1461
      %v2252 = vsel %vm2239, %v2219, %v1463
      %v2253 = vsel %vm2239, %v2220, %v1465
      %v2254 = vsel %vm2239, %v2221, %v1467
      %v2255 = vsel %vm2239, %v2222, %v1469
      %v2256 = vsel %vm2239, %v2223, %v1471
      %v2257 = vsel %vm2239, %v2224, %v1473
      %v2258 = vsel %vm2239, %v2225, %v1475
      %v2259 = vsel %vm2239, %v2226, %v1477
      %v2260 = vsel %vm2239, %v2227, %v1479
      %v2261 = vsel %vm2239, %v2228, %v1481
      %v2262 = vsel %vm2239, %v2229, %v1483
      %v2263 = vsel %vm2239, %v2230, %v1485
      %v2264 = vsel %vm2239, %v2231, %v1487
      %v2265 = vsel %vm2239, %v2232, %v1489
      %v2266 = vsel %vm2239, %v2233, %v1491
      %v2267 = vsel %vm2239, %v2234, %v1493
      %v2268 = vsel %vm2239, %v2235, %v1495
      %v2269 = vsel %vm2239, %v2236, %v1497
      %v2270 = vsel %vm2239, %v2237, %v1499
      %v2271 = vsel %vm2239, %v2238, %v1501
      %v2272 = vsel %vm733, %v2240, %v1567
      %v2273 = vsel %vm733, %v2241, %v1569
      %v2274 = vsel %vm733, %v2242, %v1571
      %v2275 = vsel %vm733, %v2243, %v1573
      %v2276 = vsel %vm733, %v2244, %v1575
      %v2277 = vsel %vm733, %v2245, %v1577
      %v2278 = vsel %vm733, %v2246, %v1579
      %v2279 = vsel %vm733, %v2247, %v1581
      %v2280 = vsel %vm733, %v2248, %v1583
      %v2281 = vsel %vm733, %v2249, %v1585
      %v2282 = vsel %vm733, %v2250, %v1587
      %v2283 = vsel %vm733, %v2251, %v1589
      %v2284 = vsel %vm733, %v2252, %v1591
      %v2285 = vsel %vm733, %v2253, %v1593
      %v2286 = vsel %vm733, %v2254, %v1595
      %v2287 = vsel %vm733, %v2255, %v1597
      %v2288 = vsel %vm733, %v2256, %v1599
      %v2289 = vsel %vm733, %v2257, %v1601
      %v2290 = vsel %vm733, %v2258, %v1603
      %v2291 = vsel %vm733, %v2259, %v1605
      %v2292 = vsel %vm733, %v2260, %v1607
      %v2293 = vsel %vm733, %v2261, %v1609
      %v2294 = vsel %vm733, %v2262, %v1611
      %v2295 = vsel %vm733, %v2263, %v1613
      %v2296 = vsel %vm733, %v2264, %v1615
      %v2297 = vsel %vm733, %v2265, %v1617
      %v2298 = vsel %vm733, %v2266, %v1619
      %v2299 = vsel %vm733, %v2267, %v1621
      %v2300 = vsel %vm733, %v2268, %v1623
      %v2301 = vsel %vm733, %v2269, %v1625
      %v2302 = vsel %vm733, %v2270, %v1627
      %v2303 = vsel %vm733, %v2271, %v1629
      %vm2304 = vcmask 162816
      %v2305 = vsel %vm2304, %v2272, %v1695
      %v2306 = vsel %vm2304, %v2273, %v1697
      %v2307 = vsel %vm2304, %v2274, %v1699
      %v2308 = vsel %vm2304, %v2275, %v1701
      %v2309 = vsel %vm2304, %v2276, %v1703
      %v2310 = vsel %vm2304, %v2277, %v1705
      %v2311 = vsel %vm2304, %v2278, %v1707
      %v2312 = vsel %vm2304, %v2279, %v1709
      %v2313 = vsel %vm2304, %v2280, %v1711
      %v2314 = vsel %vm2304, %v2281, %v1713
      %v2315 = vsel %vm2304, %v2282, %v1715
      %v2316 = vsel %vm2304, %v2283, %v1717
      %v2317 = vsel %vm2304, %v2284, %v1719
      %v2318 = vsel %vm2304, %v2285, %v1721
      %v2319 = vsel %vm2304, %v2286, %v1723
      %v2320 = vsel %vm2304, %v2287, %v1725
      %v2321 = vsel %vm2304, %v2288, %v1727
      %v2322 = vsel %vm2304, %v2289, %v1729
      %v2323 = vsel %vm2304, %v2290, %v1731
      %v2324 = vsel %vm2304, %v2291, %v1733
      %v2325 = vsel %vm2304, %v2292, %v1735
      %v2326 = vsel %vm2304, %v2293, %v1737
      %v2327 = vsel %vm2304, %v2294, %v1739
      %v2328 = vsel %vm2304, %v2295, %v1741
      %v2329 = vsel %vm2304, %v2296, %v1743
      %v2330 = vsel %vm2304, %v2297, %v1745
      %v2331 = vsel %vm2304, %v2298, %v1747
      %v2332 = vsel %vm2304, %v2299, %v1749
      %v2333 = vsel %vm2304, %v2300, %v1751
      %v2334 = vsel %vm2304, %v2301, %v1753
      %v2335 = vsel %vm2304, %v2302, %v1755
      %v2336 = vsel %vm2304, %v2303, %v1757
      %v2337 = vsel %vm742, %v2305, %v1823
      %v2338 = vsel %vm742, %v2306, %v1825
      %v2339 = vsel %vm742, %v2307, %v1827
      %v2340 = vsel %vm742, %v2308, %v1829
      %v2341 = vsel %vm742, %v2309, %v1831
      %v2342 = vsel %vm742, %v2310, %v1833
      %v2343 = vsel %vm742, %v2311, %v1835
      %v2344 = vsel %vm742, %v2312, %v1837
      %v2345 = vsel %vm742, %v2313, %v1839
      %v2346 = vsel %vm742, %v2314, %v1841
      %v2347 = vsel %vm742, %v2315, %v1843
      %v2348 = vsel %vm742, %v2316, %v1845
      %v2349 = vsel %vm742, %v2317, %v1847
      %v2350 = vsel %vm742, %v2318, %v1849
      %v2351 = vsel %vm742, %v2319, %v1851
      %v2352 = vsel %vm742, %v2320, %v1853
      %v2353 = vsel %vm742, %v2321, %v1855
      %v2354 = vsel %vm742, %v2322, %v1857
      %v2355 = vsel %vm742, %v2323, %v1859
      %v2356 = vsel %vm742, %v2324, %v1861
      %v2357 = vsel %vm742, %v2325, %v1863
      %v2358 = vsel %vm742, %v2326, %v1865
      %v2359 = vsel %vm742, %v2327, %v1867
      %v2360 = vsel %vm742, %v2328, %v1869
      %v2361 = vsel %vm742, %v2329, %v1871
      %v2362 = vsel %vm742, %v2330, %v1873
      %v2363 = vsel %vm742, %v2331, %v1875
      %v2364 = vsel %vm742, %v2332, %v1877
      %v2365 = vsel %vm742, %v2333, %v1879
      %v2366 = vsel %vm742, %v2334, %v1881
      %v2367 = vsel %vm742, %v2335, %v1883
      %v2368 = vsel %vm742, %v2336, %v1885
      %vm2369 = vcmask 228352
      %v2370 = vsel %vm2369, %v2337, %v1951
      %v2371 = vsel %vm2369, %v2338, %v1953
      %v2372 = vsel %vm2369, %v2339, %v1955
      %v2373 = vsel %vm2369, %v2340, %v1957
      %v2374 = vsel %vm2369, %v2341, %v1959
      %v2375 = vsel %vm2369, %v2342, %v1961
      %v2376 = vsel %vm2369, %v2343, %v1963
      %v2377 = vsel %vm2369, %v2344, %v1965
      %v2378 = vsel %vm2369, %v2345, %v1967
      %v2379 = vsel %vm2369, %v2346, %v1969
      %v2380 = vsel %vm2369, %v2347, %v1971
      %v2381 = vsel %vm2369, %v2348, %v1973
      %v2382 = vsel %vm2369, %v2349, %v1975
      %v2383 = vsel %vm2369, %v2350, %v1977
      %v2384 = vsel %vm2369, %v2351, %v1979
      %v2385 = vsel %vm2369, %v2352, %v1981
      %v2386 = vsel %vm2369, %v2353, %v1983
      %v2387 = vsel %vm2369, %v2354, %v1985
      %v2388 = vsel %vm2369, %v2355, %v1987
      %v2389 = vsel %vm2369, %v2356, %v1989
      %v2390 = vsel %vm2369, %v2357, %v1991
      %v2391 = vsel %vm2369, %v2358, %v1993
      %v2392 = vsel %vm2369, %v2359, %v1995
      %v2393 = vsel %vm2369, %v2360, %v1997
      %v2394 = vsel %vm2369, %v2361, %v1999
      %v2395 = vsel %vm2369, %v2362, %v2001
      %v2396 = vsel %vm2369, %v2363, %v2003
      %v2397 = vsel %vm2369, %v2364, %v2005
      %v2398 = vsel %vm2369, %v2365, %v2007
      %v2399 = vsel %vm2369, %v2366, %v2009
      %v2400 = vsel %vm2369, %v2367, %v2011
      %v2401 = vsel %vm2369, %v2368, %v2013
      %v2402 = vsel %vm751, %v2370, %v2079
      %v2403 = vsel %vm751, %v2371, %v2081
      %v2404 = vsel %vm751, %v2372, %v2083
      %v2405 = vsel %vm751, %v2373, %v2085
      %v2406 = vsel %vm751, %v2374, %v2087
      %v2407 = vsel %vm751, %v2375, %v2089
      %v2408 = vsel %vm751, %v2376, %v2091
      %v2409 = vsel %vm751, %v2377, %v2093
      %v2410 = vsel %vm751, %v2378, %v2095
      %v2411 = vsel %vm751, %v2379, %v2097
      %v2412 = vsel %vm751, %v2380, %v2099
      %v2413 = vsel %vm751, %v2381, %v2101
      %v2414 = vsel %vm751, %v2382, %v2103
      %v2415 = vsel %vm751, %v2383, %v2105
      %v2416 = vsel %vm751, %v2384, %v2107
      %v2417 = vsel %vm751, %v2385, %v2109
      %v2418 = vsel %vm751, %v2386, %v2111
      %v2419 = vsel %vm751, %v2387, %v2113
      %v2420 = vsel %vm751, %v2388, %v2115
      %v2421 = vsel %vm751, %v2389, %v2117
      %v2422 = vsel %vm751, %v2390, %v2119
      %v2423 = vsel %vm751, %v2391, %v2121
      %v2424 = vsel %vm751, %v2392, %v2123
      %v2425 = vsel %vm751, %v2393, %v2125
      %v2426 = vsel %vm751, %v2394, %v2127
      %v2427 = vsel %vm751, %v2395, %v2129
      %v2428 = vsel %vm751, %v2396, %v2131
      %v2429 = vsel %vm751, %v2397, %v2133
      %v2430 = vsel %vm751, %v2398, %v2135
      %v2431 = vsel %vm751, %v2399, %v2137
      %v2432 = vsel %vm751, %v2400, %v2139
      %v2433 = vsel %vm751, %v2401, %v2141
      %v2434 = vpack.c.bf16 %v2403, %v2402
      %v2435 = vpack.c.bf16 %v2405, %v2404
      %v2436 = vpack.c.bf16 %v2407, %v2406
      %v2437 = vpack.c.bf16 %v2409, %v2408
      %v2438 = vpack.c.bf16 %v2411, %v2410
      %v2439 = vpack.c.bf16 %v2413, %v2412
      %v2440 = vpack.c.bf16 %v2415, %v2414
      %v2441 = vpack.c.bf16 %v2417, %v2416
      %v2442 = vpack.c.bf16 %v2419, %v2418
      %v2443 = vpack.c.bf16 %v2421, %v2420
      %v2444 = vpack.c.bf16 %v2423, %v2422
      %v2445 = vpack.c.bf16 %v2425, %v2424
      %v2446 = vpack.c.bf16 %v2427, %v2426
      %v2447 = vpack.c.bf16 %v2429, %v2428
      %v2448 = vpack.c.bf16 %v2431, %v2430
      %v2449 = vpack.c.bf16 %v2433, %v2432
      %v2450 = vld [vmem:[%s3] sm:$0xff]
      %v2451 = vld [vmem:[%s3 + $0x8] sm:$0xff]
      %v2452 = vld [vmem:[%s3 + $0x10] sm:$0xff]
      %v2453 = vld [vmem:[%s3 + $0x18] sm:$0xff]
      %v2454 = vld [vmem:[%s3 + $0x20] sm:$0xf]
      %v2455 = vpack.c.bf16 %v2451, %v2450
      %v2456 = vpack.c.bf16 %v2453, %v2452
      %v2457 = vpack.c.bf16 %v2454, %v2454
      %vm2458 = vcmask 293888
      %v2460 = vsel %vm2458, %v2434, 0
      %v2463 = vsel %vm2458, %v2435, 0
      %v2466 = vsel %vm2458, %v2436, 0
      %v2469 = vsel %vm2458, %v2437, 0
      %v2472 = vsel %vm2458, %v2438, 0
      %v2475 = vsel %vm2458, %v2439, 0
      %v2478 = vsel %vm2458, %v2440, 0
      %v2481 = vsel %vm2458, %v2441, 0
      %v2484 = vsel %vm2458, %v2442, 0
      %v2487 = vsel %vm2458, %v2443, 0
      %v2490 = vsel %vm2458, %v2444, 0
      %v2493 = vsel %vm2458, %v2445, 0
      %v2496 = vsel %vm2458, %v2446, 0
      %v2499 = vsel %vm2458, %v2447, 0
      %v2502 = vsel %vm2458, %v2448, 0
      %v2505 = vsel %vm2458, %v2449, 0
      %vm2507 = vcmask 1041408
      %v2509 = vsel %vm2507, %v2457, 0
      %2511 = vmatpush.bf16.msra.mxu0 0
      %2512 = vmatpush.bf16.msra.mxu0 0
      %2513 = vmatpush.bf16.msra.mxu0 0
      %2514 = vmatpush.bf16.msra.mxu0 0
      %2515 = vmatpush.bf16.msra.mxu0 0
      %2516 = vmatpush.bf16.msra.mxu0 %v2509
      %2517 = vmatpush.bf16.msra.mxu0 %v2456
      %2518 = vmatpush.bf16.msra.mxu0 %v2455
      %2519 = vmatmul.bf16.gmra.mxu0 %v2460
      %v2520 = vpop.f32.mrf.mxu0
      %v2521 = vadd.f32 0.0, %v2520
      %v2522 = vpop.f32.mrf.mxu0
      %v2523 = vadd.f32 0.0, %v2522
      %2524 = vmatmul.bf16.gmra.mxu0 %v2463
      %v2525 = vpop.f32.mrf.mxu0
      %v2526 = vadd.f32 0.0, %v2525
      %v2527 = vpop.f32.mrf.mxu0
      %v2528 = vadd.f32 0.0, %v2527
      %2529 = vmatmul.bf16.gmra.mxu0 %v2466
      %v2530 = vpop.f32.mrf.mxu0
      %v2531 = vadd.f32 0.0, %v2530
      %v2532 = vpop.f32.mrf.mxu0
      %v2533 = vadd.f32 0.0, %v2532
      %2534 = vmatmul.bf16.gmra.mxu0 %v2469
      %v2535 = vpop.f32.mrf.mxu0
      %v2536 = vadd.f32 0.0, %v2535
      %v2537 = vpop.f32.mrf.mxu0
      %v2538 = vadd.f32 0.0, %v2537
      %2539 = vmatmul.bf16.gmra.mxu0 %v2472
      %v2540 = vpop.f32.mrf.mxu0
      %v2541 = vadd.f32 0.0, %v2540
      %v2542 = vpop.f32.mrf.mxu0
      %v2543 = vadd.f32 0.0, %v2542
      %2544 = vmatmul.bf16.gmra.mxu0 %v2475
      %v2545 = vpop.f32.mrf.mxu0
      %v2546 = vadd.f32 0.0, %v2545
      %v2547 = vpop.f32.mrf.mxu0
      %v2548 = vadd.f32 0.0, %v2547
      %2549 = vmatmul.bf16.gmra.mxu0 %v2478
      %v2550 = vpop.f32.mrf.mxu0
      %v2551 = vadd.f32 0.0, %v2550
      %v2552 = vpop.f32.mrf.mxu0
      %v2553 = vadd.f32 0.0, %v2552
      %2554 = vmatmul.bf16.gmra.mxu0 %v2481
      %v2555 = vpop.f32.mrf.mxu0
      %v2556 = vadd.f32 0.0, %v2555
      %v2557 = vpop.f32.mrf.mxu0
      %v2558 = vadd.f32 0.0, %v2557
      %2559 = vmatmul.bf16.gmra.mxu0 %v2484
      %v2560 = vpop.f32.mrf.mxu0
      %v2561 = vadd.f32 0.0, %v2560
      %v2562 = vpop.f32.mrf.mxu0
      %v2563 = vadd.f32 0.0, %v2562
      %2564 = vmatmul.bf16.gmra.mxu0 %v2487
      %v2565 = vpop.f32.mrf.mxu0
      %v2566 = vadd.f32 0.0, %v2565
      %v2567 = vpop.f32.mrf.mxu0
      %v2568 = vadd.f32 0.0, %v2567
      %2569 = vmatmul.bf16.gmra.mxu0 %v2490
      %v2570 = vpop.f32.mrf.mxu0
      %v2571 = vadd.f32 0.0, %v2570
      %v2572 = vpop.f32.mrf.mxu0
      %v2573 = vadd.f32 0.0, %v2572
      %2574 = vmatmul.bf16.gmra.mxu0 %v2493
      %v2575 = vpop.f32.mrf.mxu0
      %v2576 = vadd.f32 0.0, %v2575
      %v2577 = vpop.f32.mrf.mxu0
      %v2578 = vadd.f32 0.0, %v2577
      %2579 = vmatmul.bf16.gmra.mxu0 %v2496
      %v2580 = vpop.f32.mrf.mxu0
      %v2581 = vadd.f32 0.0, %v2580
      %v2582 = vpop.f32.mrf.mxu0
      %v2583 = vadd.f32 0.0, %v2582
      %2584 = vmatmul.bf16.gmra.mxu0 %v2499
      %v2585 = vpop.f32.mrf.mxu0
      %v2586 = vadd.f32 0.0, %v2585
      %v2587 = vpop.f32.mrf.mxu0
      %v2588 = vadd.f32 0.0, %v2587
      %2589 = vmatmul.bf16.gmra.mxu0 %v2502
      %v2590 = vpop.f32.mrf.mxu0
      %v2591 = vadd.f32 0.0, %v2590
      %v2592 = vpop.f32.mrf.mxu0
      %v2593 = vadd.f32 0.0, %v2592
      %2594 = vmatmul.bf16.gmra.mxu0 %v2505
      %v2595 = vpop.f32.mrf.mxu0
      %v2596 = vadd.f32 0.0, %v2595
      %v2597 = vpop.f32.mrf.mxu0
      %v2598 = vadd.f32 0.0, %v2597
      %2599 = vdwg.mxu0
      %v2600 = vld [vmem:[%s4] sm:$0xff]
      %v2601 = vld [vmem:[%s4 + $0x8] sm:$0xff]
      %v2602 = vld [vmem:[%s4 + $0x10] sm:$0xff]
      %v2603 = vld [vmem:[%s4 + $0x18] sm:$0xff]
      %v2604 = vld [vmem:[%s4 + $0x20] sm:$0xff]
      %v2605 = vld [vmem:[%s4 + $0x28] sm:$0xff]
      %v2606 = vld [vmem:[%s4 + $0x30] sm:$0xff]
      %v2607 = vld [vmem:[%s4 + $0x38] sm:$0xff]
      %v2608 = vld [vmem:[%s4 + $0x40] sm:$0xff]
      %v2609 = vld [vmem:[%s4 + $0x48] sm:$0xff]
      %v2610 = vld [vmem:[%s4 + $0x50] sm:$0xff]
      %v2611 = vld [vmem:[%s4 + $0x58] sm:$0xff]
      %v2612 = vld [vmem:[%s4 + $0x60] sm:$0xff]
      %v2613 = vld [vmem:[%s4 + $0x68] sm:$0xff]
      %v2614 = vld [vmem:[%s4 + $0x70] sm:$0xff]
      %v2615 = vld [vmem:[%s4 + $0x78] sm:$0xff]
      %v2616 = vpack.c.bf16 %v2602, %v2600
      %v2617 = vpack.c.bf16 %v2603, %v2601
      %v2618 = vpack.c.bf16 %v2606, %v2604
      %v2619 = vpack.c.bf16 %v2607, %v2605
      %v2620 = vpack.c.bf16 %v2610, %v2608
      %v2621 = vpack.c.bf16 %v2611, %v2609
      %v2622 = vpack.c.bf16 %v2614, %v2612
      %v2623 = vpack.c.bf16 %v2615, %v2613
      %v2624 = vpack.c.bf16 %v2523, %v2521
      %v2625 = vpack.c.bf16 %v2528, %v2526
      %v2626 = vpack.c.bf16 %v2533, %v2531
      %v2627 = vpack.c.bf16 %v2538, %v2536
      %v2628 = vpack.c.bf16 %v2543, %v2541
      %v2629 = vpack.c.bf16 %v2548, %v2546
      %v2630 = vpack.c.bf16 %v2553, %v2551
      %v2631 = vpack.c.bf16 %v2558, %v2556
      %v2632 = vpack.c.bf16 %v2563, %v2561
      %v2633 = vpack.c.bf16 %v2568, %v2566
      %v2634 = vpack.c.bf16 %v2573, %v2571
      %v2635 = vpack.c.bf16 %v2578, %v2576
      %v2636 = vpack.c.bf16 %v2583, %v2581
      %v2637 = vpack.c.bf16 %v2588, %v2586
      %v2638 = vpack.c.bf16 %v2593, %v2591
      %v2639 = vpack.c.bf16 %v2598, %v2596
      %2640 = vmatpush.bf16.msra.mxu0 %v2631
      %2641 = vmatpush.bf16.msra.mxu0 %v2630
      %2642 = vmatpush.bf16.msra.mxu0 %v2629
      %2643 = vmatpush.bf16.msra.mxu0 %v2628
      %2644 = vmatpush.bf16.msra.mxu0 %v2627
      %2645 = vmatpush.bf16.msra.mxu0 %v2626
      %2646 = vmatpush.bf16.msra.mxu0 %v2625
      %2647 = vmatpush.bf16.msra.mxu0 %v2624
      %2648 = vmatmul.bf16.gmra.mxu0 %v2616
      %v2649 = vpop.f32.mrf.mxu0
      %v2650 = vadd.f32 0.0, %v2649
      %v2651 = vpop.f32.mrf.mxu0
      %v2652 = vadd.f32 0.0, %v2651
      %2653 = vmatmul.bf16.gmra.mxu0 %v2618
      %v2654 = vpop.f32.mrf.mxu0
      %v2655 = vadd.f32 0.0, %v2654
      %v2656 = vpop.f32.mrf.mxu0
      %v2657 = vadd.f32 0.0, %v2656
      %2658 = vmatmul.bf16.gmra.mxu0 %v2620
      %v2659 = vpop.f32.mrf.mxu0
      %v2660 = vadd.f32 0.0, %v2659
      %v2661 = vpop.f32.mrf.mxu0
      %v2662 = vadd.f32 0.0, %v2661
      %2663 = vmatmul.bf16.gmra.mxu0 %v2622
      %v2664 = vpop.f32.mrf.mxu0
      %v2665 = vadd.f32 0.0, %v2664
      %v2666 = vpop.f32.mrf.mxu0
      %v2667 = vadd.f32 0.0, %v2666
      %2668 = vdwg.mxu0
      %2669 = vmatpush.bf16.msra.mxu0 %v2639
      %2670 = vmatpush.bf16.msra.mxu0 %v2638
      %2671 = vmatpush.bf16.msra.mxu0 %v2637
      %2672 = vmatpush.bf16.msra.mxu0 %v2636
      %2673 = vmatpush.bf16.msra.mxu0 %v2635
      %2674 = vmatpush.bf16.msra.mxu0 %v2634
      %2675 = vmatpush.bf16.msra.mxu0 %v2633
      %2676 = vmatpush.bf16.msra.mxu0 %v2632
      %2677 = vmatmul.bf16.gmra.mxu0 %v2617
      %v2678 = vpop.f32.mrf.mxu0
      %v2679 = vadd.f32 %v2650, %v2678
      %v2680 = vpop.f32.mrf.mxu0
      %v2681 = vadd.f32 %v2652, %v2680
      %2682 = vmatmul.bf16.gmra.mxu0 %v2619
      %v2683 = vpop.f32.mrf.mxu0
      %v2684 = vadd.f32 %v2655, %v2683
      %v2685 = vpop.f32.mrf.mxu0
      %v2686 = vadd.f32 %v2657, %v2685
      %2687 = vmatmul.bf16.gmra.mxu0 %v2621
      %v2688 = vpop.f32.mrf.mxu0
      %v2689 = vadd.f32 %v2660, %v2688
      %v2690 = vpop.f32.mrf.mxu0
      %v2691 = vadd.f32 %v2662, %v2690
      %2692 = vmatmul.bf16.gmra.mxu0 %v2623
      %v2693 = vpop.f32.mrf.mxu0
      %v2694 = vadd.f32 %v2665, %v2693
      %v2695 = vpop.f32.mrf.mxu0
      %v2696 = vadd.f32 %v2667, %v2695
      %2697 = vdwg.mxu0
      %v2698 = vld [vmem:[%s5] sm:$0x1]
      %v2699 = vld [vmem:[%s6] sm:$0x1]
      %v2700 = vsel %vm2174, %v841, 0.0
      %2701 = vadd.xlane.f32.xlu0 %v2700
      %v2702 = vpop.xlane.xlu0 %2701
      %v2703 = vsel %vm2174, %v843, 0.0
      %2704 = vadd.xlane.f32.xlu0 %v2703
      %v2705 = vpop.xlane.xlu0 %2704
      %v2706 = vsel %vm2174, %v846, 0.0
      %2707 = vadd.xlane.f32.xlu0 %v2706
      %v2708 = vpop.xlane.xlu0 %2707
      %v2709 = vsel %vm2174, %v848, 0.0
      %2710 = vadd.xlane.f32.xlu0 %v2709
      %v2711 = vpop.xlane.xlu0 %2710
      %v2712 = vsel %vm2174, %v851, 0.0
      %2713 = vadd.xlane.f32.xlu0 %v2712
      %v2714 = vpop.xlane.xlu0 %2713
      %v2715 = vsel %vm2174, %v853, 0.0
      %2716 = vadd.xlane.f32.xlu0 %v2715
      %v2717 = vpop.xlane.xlu0 %2716
      %v2718 = vsel %vm2174, %v856, 0.0
      %2719 = vadd.xlane.f32.xlu0 %v2718
      %v2720 = vpop.xlane.xlu0 %2719
      %v2721 = vsel %vm2174, %v858, 0.0
      %2722 = vadd.xlane.f32.xlu0 %v2721
      %v2723 = vpop.xlane.xlu0 %2722
      %v2724 = vrcp.pop 4.0
      %v2725 = vmul.f32 4.0, %v2724
      %v2726 = vsub.f32 1.0, %v2725
      %v2727 = vmul.f32 %v2724, %v2726
      %v2728 = vadd.f32 %v2724, %v2727
      %vm2729 = vweird.f32 %v2724
      %v2730 = vsel %vm2729, %v2724, %v2728
      %v2731 = vmul.f32 %v2702, %v2730
      %v2732 = vmul.f32 %v2705, %v2730
      %v2733 = vmul.f32 %v2708, %v2730
      %v2734 = vmul.f32 %v2711, %v2730
      %v2735 = vmul.f32 %v2714, %v2730
      %v2736 = vmul.f32 %v2717, %v2730
      %v2737 = vmul.f32 %v2720, %v2730
      %v2738 = vmul.f32 %v2723, %v2730
      %v2739 = vsub.f32 %v841, %v2731
      %v2740 = vsub.f32 %v843, %v2732
      %v2741 = vsub.f32 %v846, %v2733
      %v2742 = vsub.f32 %v848, %v2734
      %v2743 = vsub.f32 %v851, %v2735
      %v2744 = vsub.f32 %v853, %v2736
      %v2745 = vsub.f32 %v856, %v2737
      %v2746 = vsub.f32 %v858, %v2738
      %v2747 = vmul.f32 %v2739, %v2739
      %v2748 = vmul.f32 %v2740, %v2740
      %v2749 = vmul.f32 %v2741, %v2741
      %v2750 = vmul.f32 %v2742, %v2742
      %v2751 = vmul.f32 %v2743, %v2743
      %v2752 = vmul.f32 %v2744, %v2744
      %v2753 = vmul.f32 %v2745, %v2745
      %v2754 = vmul.f32 %v2746, %v2746
      %v2755 = vsel %vm2174, %v2747, 0.0
      %2756 = vadd.xlane.f32.xlu0 %v2755
      %v2757 = vpop.xlane.xlu0 %2756
      %v2758 = vsel %vm2174, %v2748, 0.0
      %2759 = vadd.xlane.f32.xlu0 %v2758
      %v2760 = vpop.xlane.xlu0 %2759
      %v2761 = vsel %vm2174, %v2749, 0.0
      %2762 = vadd.xlane.f32.xlu0 %v2761
      %v2763 = vpop.xlane.xlu0 %2762
      %v2764 = vsel %vm2174, %v2750, 0.0
      %2765 = vadd.xlane.f32.xlu0 %v2764
      %v2766 = vpop.xlane.xlu0 %2765
      %v2767 = vsel %vm2174, %v2751, 0.0
      %2768 = vadd.xlane.f32.xlu0 %v2767
      %v2769 = vpop.xlane.xlu0 %2768
      %v2770 = vsel %vm2174, %v2752, 0.0
      %2771 = vadd.xlane.f32.xlu0 %v2770
      %v2772 = vpop.xlane.xlu0 %2771
      %v2773 = vsel %vm2174, %v2753, 0.0
      %2774 = vadd.xlane.f32.xlu0 %v2773
      %v2775 = vpop.xlane.xlu0 %2774
      %v2776 = vsel %vm2174, %v2754, 0.0
      %2777 = vadd.xlane.f32.xlu0 %v2776
      %v2778 = vpop.xlane.xlu0 %2777
      %v2779 = vmul.f32 %v2757, %v2730
      %v2780 = vmul.f32 %v2760, %v2730
      %v2781 = vmul.f32 %v2763, %v2730
      %v2782 = vmul.f32 %v2766, %v2730
      %v2783 = vmul.f32 %v2769, %v2730
      %v2784 = vmul.f32 %v2772, %v2730
      %v2785 = vmul.f32 %v2775, %v2730
      %v2786 = vmul.f32 %v2778, %v2730
      %v2787 = vadd.f32 %v2779, 1e-06
      %v2788 = vadd.f32 %v2780, 1e-06
      %v2789 = vadd.f32 %v2781, 1e-06
      %v2790 = vadd.f32 %v2782, 1e-06
      %v2791 = vadd.f32 %v2783, 1e-06
      %v2792 = vadd.f32 %v2784, 1e-06
      %v2793 = vadd.f32 %v2785, 1e-06
      %v2794 = vadd.f32 %v2786, 1e-06
      %v2795 = vrsqrt.pop %v2787
      %v2796 = vmul.f32 %v2795, %v2787
      %v2797 = vmul.f32 %v2796, %v2795
      %v2798 = vmul.f32 0.5, %v2797
      %v2799 = vsub.f32 1.5, %v2798
      %v2800 = vmul.f32 %v2795, %v2799
      %vm2801 = vweird.f32 %v2787
      %vm2802 = vweird.f32 %v2795
      %vm2803 = vmor %vm2801, %vm2802
      %v2804 = vsel %vm2803, %v2795, %v2800
      %v2805 = vrsqrt.pop %v2788
      %v2806 = vmul.f32 %v2805, %v2788
      %v2807 = vmul.f32 %v2806, %v2805
      %v2808 = vmul.f32 0.5, %v2807
      %v2809 = vsub.f32 1.5, %v2808
      %v2810 = vmul.f32 %v2805, %v2809
      %vm2811 = vweird.f32 %v2788
      %vm2812 = vweird.f32 %v2805
      %vm2813 = vmor %vm2811, %vm2812
      %v2814 = vsel %vm2813, %v2805, %v2810
      %v2815 = vrsqrt.pop %v2789
      %v2816 = vmul.f32 %v2815, %v2789
      %v2817 = vmul.f32 %v2816, %v2815
      %v2818 = vmul.f32 0.5, %v2817
      %v2819 = vsub.f32 1.5, %v2818
      %v2820 = vmul.f32 %v2815, %v2819
      %vm2821 = vweird.f32 %v2789
      %vm2822 = vweird.f32 %v2815
      %vm2823 = vmor %vm2821, %vm2822
      %v2824 = vsel %vm2823, %v2815, %v2820
      %v2825 = vrsqrt.pop %v2790
      %v2826 = vmul.f32 %v2825, %v2790
      %v2827 = vmul.f32 %v2826, %v2825
      %v2828 = vmul.f32 0.5, %v2827
      %v2829 = vsub.f32 1.5, %v2828
      %v2830 = vmul.f32 %v2825, %v2829
      %vm2831 = vweird.f32 %v2790
      %vm2832 = vweird.f32 %v2825
      %vm2833 = vmor %vm2831, %vm2832
      %v2834 = vsel %vm2833, %v2825, %v2830
      %v2835 = vrsqrt.pop %v2791
      %v2836 = vmul.f32 %v2835, %v2791
      %v2837 = vmul.f32 %v2836, %v2835
      %v2838 = vmul.f32 0.5, %v2837
      %v2839 = vsub.f32 1.5, %v2838
      %v2840 = vmul.f32 %v2835, %v2839
      %vm2841 = vweird.f32 %v2791
      %vm2842 = vweird.f32 %v2835
      %vm2843 = vmor %vm2841, %vm2842
      %v2844 = vsel %vm2843, %v2835, %v2840
      %v2845 = vrsqrt.pop %v2792
      %v2846 = vmul.f32 %v2845, %v2792
      %v2847 = vmul.f32 %v2846, %v2845
      %v2848 = vmul.f32 0.5, %v2847
      %v2849 = vsub.f32 1.5, %v2848
      %v2850 = vmul.f32 %v2845, %v2849
      %vm2851 = vweird.f32 %v2792
      %vm2852 = vweird.f32 %v2845
      %vm2853 = vmor %vm2851, %vm2852
      %v2854 = vsel %vm2853, %v2845, %v2850
      %v2855 = vrsqrt.pop %v2793
      %v2856 = vmul.f32 %v2855, %v2793
      %v2857 = vmul.f32 %v2856, %v2855
      %v2858 = vmul.f32 0.5, %v2857
      %v2859 = vsub.f32 1.5, %v2858
      %v2860 = vmul.f32 %v2855, %v2859
      %vm2861 = vweird.f32 %v2793
      %vm2862 = vweird.f32 %v2855
      %vm2863 = vmor %vm2861, %vm2862
      %v2864 = vsel %vm2863, %v2855, %v2860
      %v2865 = vrsqrt.pop %v2794
      %v2866 = vmul.f32 %v2865, %v2794
      %v2867 = vmul.f32 %v2866, %v2865
      %v2868 = vmul.f32 0.5, %v2867
      %v2869 = vsub.f32 1.5, %v2868
      %v2870 = vmul.f32 %v2865, %v2869
      %vm2871 = vweird.f32 %v2794
      %vm2872 = vweird.f32 %v2865
      %vm2873 = vmor %vm2871, %vm2872
      %v2874 = vsel %vm2873, %v2865, %v2870
      %v2875 = vmul.f32 %v2739, %v2804
      %v2876 = vmul.f32 %v2740, %v2814
      %v2877 = vmul.f32 %v2741, %v2824
      %v2878 = vmul.f32 %v2742, %v2834
      %v2879 = vmul.f32 %v2743, %v2844
      %v2880 = vmul.f32 %v2744, %v2854
      %v2881 = vmul.f32 %v2745, %v2864
      %v2882 = vmul.f32 %v2746, %v2874
      %v2883 = vperm.slane %v2698, 0
      %v2884 = vmul.f32 %v2875, %v2883
      %v2885 = vmul.f32 %v2876, %v2883
      %v2886 = vmul.f32 %v2877, %v2883
      %v2887 = vmul.f32 %v2878, %v2883
      %v2888 = vmul.f32 %v2879, %v2883
      %v2889 = vmul.f32 %v2880, %v2883
      %v2890 = vmul.f32 %v2881, %v2883
      %v2891 = vmul.f32 %v2882, %v2883
      %v2892 = vperm.slane %v2699, 0
      %v2893 = vadd.f32 %v2884, %v2892
      %v2894 = vadd.f32 %v2885, %v2892
      %v2895 = vadd.f32 %v2886, %v2892
      %v2896 = vadd.f32 %v2887, %v2892
      %v2897 = vadd.f32 %v2888, %v2892
      %v2898 = vadd.f32 %v2889, %v2892
      %v2899 = vadd.f32 %v2890, %v2892
      %v2900 = vadd.f32 %v2891, %v2892
      %v2901 = vld [vmem:[%s7] sm:$0x1]
      %v2902 = vld [vmem:[%s8] sm:$0x1]
      %2911 = vrot.lane.b32.xlu0 %v841, 112
      %v2912 = vpop.permute.xlu0 %2911
      %2913 = vrot.lane.b32.xlu0 %v843, 112
      %v2914 = vpop.permute.xlu0 %2913
      %2915 = vrot.lane.b32.xlu0 %v846, 112
      %v2916 = vpop.permute.xlu0 %2915
      %2917 = vrot.lane.b32.xlu0 %v848, 112
      %v2918 = vpop.permute.xlu0 %2917
      %2919 = vrot.lane.b32.xlu0 %v851, 112
      %v2920 = vpop.permute.xlu0 %2919
      %2921 = vrot.lane.b32.xlu0 %v853, 112
      %v2922 = vpop.permute.xlu0 %2921
      %2923 = vrot.lane.b32.xlu0 %v856, 112
      %v2924 = vpop.permute.xlu0 %2923
      %2925 = vrot.lane.b32.xlu0 %v858, 112
      %v2926 = vpop.permute.xlu0 %2925
      %v2935 = vsel %vm2174, %v2912, 0.0
      %2936 = vadd.xlane.f32.xlu0 %v2935
      %v2937 = vpop.xlane.xlu0 %2936
      %v2938 = vsel %vm2174, %v2914, 0.0
      %2939 = vadd.xlane.f32.xlu0 %v2938
      %v2940 = vpop.xlane.xlu0 %2939
      %v2941 = vsel %vm2174, %v2916, 0.0
      %2942 = vadd.xlane.f32.xlu0 %v2941
      %v2943 = vpop.xlane.xlu0 %2942
      %v2944 = vsel %vm2174, %v2918, 0.0
      %2945 = vadd.xlane.f32.xlu0 %v2944
      %v2946 = vpop.xlane.xlu0 %2945
      %v2947 = vsel %vm2174, %v2920, 0.0
      %2948 = vadd.xlane.f32.xlu0 %v2947
      %v2949 = vpop.xlane.xlu0 %2948
      %v2950 = vsel %vm2174, %v2922, 0.0
      %2951 = vadd.xlane.f32.xlu0 %v2950
      %v2952 = vpop.xlane.xlu0 %2951
      %v2953 = vsel %vm2174, %v2924, 0.0
      %2954 = vadd.xlane.f32.xlu0 %v2953
      %v2955 = vpop.xlane.xlu0 %2954
      %v2956 = vsel %vm2174, %v2926, 0.0
      %2957 = vadd.xlane.f32.xlu0 %v2956
      %v2958 = vpop.xlane.xlu0 %2957
      %v2959 = vmul.f32 %v2937, %v2730
      %v2960 = vmul.f32 %v2940, %v2730
      %v2961 = vmul.f32 %v2943, %v2730
      %v2962 = vmul.f32 %v2946, %v2730
      %v2963 = vmul.f32 %v2949, %v2730
      %v2964 = vmul.f32 %v2952, %v2730
      %v2965 = vmul.f32 %v2955, %v2730
      %v2966 = vmul.f32 %v2958, %v2730
      %v2967 = vsub.f32 %v841, %v2959
      %v2968 = vsub.f32 %v843, %v2960
      %v2969 = vsub.f32 %v846, %v2961
      %v2970 = vsub.f32 %v848, %v2962
      %v2971 = vsub.f32 %v851, %v2963
      %v2972 = vsub.f32 %v853, %v2964
      %v2973 = vsub.f32 %v856, %v2965
      %v2974 = vsub.f32 %v858, %v2966
      %v2975 = vmul.f32 %v2967, %v2967
      %v2976 = vmul.f32 %v2968, %v2968
      %v2977 = vmul.f32 %v2969, %v2969
      %v2978 = vmul.f32 %v2970, %v2970
      %v2979 = vmul.f32 %v2971, %v2971
      %v2980 = vmul.f32 %v2972, %v2972
      %v2981 = vmul.f32 %v2973, %v2973
      %v2982 = vmul.f32 %v2974, %v2974
      %2991 = vrot.lane.b32.xlu0 %v2975, 112
      %v2992 = vpop.permute.xlu0 %2991
      %2993 = vrot.lane.b32.xlu0 %v2976, 112
      %v2994 = vpop.permute.xlu0 %2993
      %2995 = vrot.lane.b32.xlu0 %v2977, 112
      %v2996 = vpop.permute.xlu0 %2995
      %2997 = vrot.lane.b32.xlu0 %v2978, 112
      %v2998 = vpop.permute.xlu0 %2997
      %2999 = vrot.lane.b32.xlu0 %v2979, 112
      %v3000 = vpop.permute.xlu0 %2999
      %3001 = vrot.lane.b32.xlu0 %v2980, 112
      %v3002 = vpop.permute.xlu0 %3001
      %3003 = vrot.lane.b32.xlu0 %v2981, 112
      %v3004 = vpop.permute.xlu0 %3003
      %3005 = vrot.lane.b32.xlu0 %v2982, 112
      %v3006 = vpop.permute.xlu0 %3005
      %v3015 = vsel %vm2174, %v2992, 0.0
      %3016 = vadd.xlane.f32.xlu0 %v3015
      %v3017 = vpop.xlane.xlu0 %3016
      %v3018 = vsel %vm2174, %v2994, 0.0
      %3019 = vadd.xlane.f32.xlu0 %v3018
      %v3020 = vpop.xlane.xlu0 %3019
      %v3021 = vsel %vm2174, %v2996, 0.0
      %3022 = vadd.xlane.f32.xlu0 %v3021
      %v3023 = vpop.xlane.xlu0 %3022
      %v3024 = vsel %vm2174, %v2998, 0.0
      %3025 = vadd.xlane.f32.xlu0 %v3024
      %v3026 = vpop.xlane.xlu0 %3025
      %v3027 = vsel %vm2174, %v3000, 0.0
      %3028 = vadd.xlane.f32.xlu0 %v3027
      %v3029 = vpop.xlane.xlu0 %3028
      %v3030 = vsel %vm2174, %v3002, 0.0
      %3031 = vadd.xlane.f32.xlu0 %v3030
      %v3032 = vpop.xlane.xlu0 %3031
      %v3033 = vsel %vm2174, %v3004, 0.0
      %3034 = vadd.xlane.f32.xlu0 %v3033
      %v3035 = vpop.xlane.xlu0 %3034
      %v3036 = vsel %vm2174, %v3006, 0.0
      %3037 = vadd.xlane.f32.xlu0 %v3036
      %v3038 = vpop.xlane.xlu0 %3037
      %v3039 = vmul.f32 %v3017, %v2730
      %v3040 = vmul.f32 %v3020, %v2730
      %v3041 = vmul.f32 %v3023, %v2730
      %v3042 = vmul.f32 %v3026, %v2730
      %v3043 = vmul.f32 %v3029, %v2730
      %v3044 = vmul.f32 %v3032, %v2730
      %v3045 = vmul.f32 %v3035, %v2730
      %v3046 = vmul.f32 %v3038, %v2730
      %v3047 = vadd.f32 %v3039, 1e-06
      %v3048 = vadd.f32 %v3040, 1e-06
      %v3049 = vadd.f32 %v3041, 1e-06
      %v3050 = vadd.f32 %v3042, 1e-06
      %v3051 = vadd.f32 %v3043, 1e-06
      %v3052 = vadd.f32 %v3044, 1e-06
      %v3053 = vadd.f32 %v3045, 1e-06
      %v3054 = vadd.f32 %v3046, 1e-06
      %v3055 = vrsqrt.pop %v3047
      %v3056 = vmul.f32 %v3055, %v3047
      %v3057 = vmul.f32 %v3056, %v3055
      %v3058 = vmul.f32 0.5, %v3057
      %v3059 = vsub.f32 1.5, %v3058
      %v3060 = vmul.f32 %v3055, %v3059
      %vm3061 = vweird.f32 %v3047
      %vm3062 = vweird.f32 %v3055
      %vm3063 = vmor %vm3061, %vm3062
      %v3064 = vsel %vm3063, %v3055, %v3060
      %v3065 = vrsqrt.pop %v3048
      %v3066 = vmul.f32 %v3065, %v3048
      %v3067 = vmul.f32 %v3066, %v3065
      %v3068 = vmul.f32 0.5, %v3067
      %v3069 = vsub.f32 1.5, %v3068
      %v3070 = vmul.f32 %v3065, %v3069
      %vm3071 = vweird.f32 %v3048
      %vm3072 = vweird.f32 %v3065
      %vm3073 = vmor %vm3071, %vm3072
      %v3074 = vsel %vm3073, %v3065, %v3070
      %v3075 = vrsqrt.pop %v3049
      %v3076 = vmul.f32 %v3075, %v3049
      %v3077 = vmul.f32 %v3076, %v3075
      %v3078 = vmul.f32 0.5, %v3077
      %v3079 = vsub.f32 1.5, %v3078
      %v3080 = vmul.f32 %v3075, %v3079
      %vm3081 = vweird.f32 %v3049
      %vm3082 = vweird.f32 %v3075
      %vm3083 = vmor %vm3081, %vm3082
      %v3084 = vsel %vm3083, %v3075, %v3080
      %v3085 = vrsqrt.pop %v3050
      %v3086 = vmul.f32 %v3085, %v3050
      %v3087 = vmul.f32 %v3086, %v3085
      %v3088 = vmul.f32 0.5, %v3087
      %v3089 = vsub.f32 1.5, %v3088
      %v3090 = vmul.f32 %v3085, %v3089
      %vm3091 = vweird.f32 %v3050
      %vm3092 = vweird.f32 %v3085
      %vm3093 = vmor %vm3091, %vm3092
      %v3094 = vsel %vm3093, %v3085, %v3090
      %v3095 = vrsqrt.pop %v3051
      %v3096 = vmul.f32 %v3095, %v3051
      %v3097 = vmul.f32 %v3096, %v3095
      %v3098 = vmul.f32 0.5, %v3097
      %v3099 = vsub.f32 1.5, %v3098
      %v3100 = vmul.f32 %v3095, %v3099
      %vm3101 = vweird.f32 %v3051
      %vm3102 = vweird.f32 %v3095
      %vm3103 = vmor %vm3101, %vm3102
      %v3104 = vsel %vm3103, %v3095, %v3100
      %v3105 = vrsqrt.pop %v3052
      %v3106 = vmul.f32 %v3105, %v3052
      %v3107 = vmul.f32 %v3106, %v3105
      %v3108 = vmul.f32 0.5, %v3107
      %v3109 = vsub.f32 1.5, %v3108
      %v3110 = vmul.f32 %v3105, %v3109
      %vm3111 = vweird.f32 %v3052
      %vm3112 = vweird.f32 %v3105
      %vm3113 = vmor %vm3111, %vm3112
      %v3114 = vsel %vm3113, %v3105, %v3110
      %v3115 = vrsqrt.pop %v3053
      %v3116 = vmul.f32 %v3115, %v3053
      %v3117 = vmul.f32 %v3116, %v3115
      %v3118 = vmul.f32 0.5, %v3117
      %v3119 = vsub.f32 1.5, %v3118
      %v3120 = vmul.f32 %v3115, %v3119
      %vm3121 = vweird.f32 %v3053
      %vm3122 = vweird.f32 %v3115
      %vm3123 = vmor %vm3121, %vm3122
      %v3124 = vsel %vm3123, %v3115, %v3120
      %v3125 = vrsqrt.pop %v3054
      %v3126 = vmul.f32 %v3125, %v3054
      %v3127 = vmul.f32 %v3126, %v3125
      %v3128 = vmul.f32 0.5, %v3127
      %v3129 = vsub.f32 1.5, %v3128
      %v3130 = vmul.f32 %v3125, %v3129
      %vm3131 = vweird.f32 %v3054
      %vm3132 = vweird.f32 %v3125
      %vm3133 = vmor %vm3131, %vm3132
      %v3134 = vsel %vm3133, %v3125, %v3130
      %v3135 = vmul.f32 %v2967, %v3064
      %v3136 = vmul.f32 %v2968, %v3074
      %v3137 = vmul.f32 %v2969, %v3084
      %v3138 = vmul.f32 %v2970, %v3094
      %v3139 = vmul.f32 %v2971, %v3104
      %v3140 = vmul.f32 %v2972, %v3114
      %v3141 = vmul.f32 %v2973, %v3124
      %v3142 = vmul.f32 %v2974, %v3134
      %v3143 = vperm.slane %v2901, 0
      %3145 = vrot.lane.b32.xlu0 %v3143, 16
      %v3146 = vpop.permute.xlu0 %3145
      %v3148 = vmul.f32 %v3135, %v3146
      %v3149 = vmul.f32 %v3136, %v3146
      %v3150 = vmul.f32 %v3137, %v3146
      %v3151 = vmul.f32 %v3138, %v3146
      %v3152 = vmul.f32 %v3139, %v3146
      %v3153 = vmul.f32 %v3140, %v3146
      %v3154 = vmul.f32 %v3141, %v3146
      %v3155 = vmul.f32 %v3142, %v3146
      %v3156 = vperm.slane %v2902, 0
      %3158 = vrot.lane.b32.xlu0 %v3156, 16
      %v3159 = vpop.permute.xlu0 %3158
      %v3161 = vadd.f32 %v3148, %v3159
      %v3162 = vadd.f32 %v3149, %v3159
      %v3163 = vadd.f32 %v3150, %v3159
      %v3164 = vadd.f32 %v3151, %v3159
      %v3165 = vadd.f32 %v3152, %v3159
      %v3166 = vadd.f32 %v3153, %v3159
      %v3167 = vadd.f32 %v3154, %v3159
      %v3168 = vadd.f32 %v3155, %v3159
      %v3169 = vpack.c.bf16 %v2894, %v2893
      %v3170 = vpack.c.bf16 %v2896, %v2895
      %v3171 = vpack.c.bf16 %v2898, %v2897
      %v3172 = vpack.c.bf16 %v2900, %v2899
      %v3173 = vpack.c.bf16 %v3162, %v3161
      %v3174 = vpack.c.bf16 %v3164, %v3163
      %v3175 = vpack.c.bf16 %v3166, %v3165
      %v3176 = vpack.c.bf16 %v3168, %v3167
      %3181 = vrot.lane.b32.xlu0 %v3173, 112
      %v3182 = vpop.permute.xlu0 %3181
      %3183 = vrot.lane.b32.xlu0 %v3174, 112
      %v3184 = vpop.permute.xlu0 %3183
      %3185 = vrot.lane.b32.xlu0 %v3175, 112
      %v3186 = vpop.permute.xlu0 %3185
      %3187 = vrot.lane.b32.xlu0 %v3176, 112
      %v3188 = vpop.permute.xlu0 %3187
      %v3190 = vsel %vm2174, %v3169, 0
      %v3193 = vsel %vm2174, %v3170, 0
      %v3196 = vsel %vm2174, %v3171, 0
      %v3199 = vsel %vm2174, %v3172, 0
      %v3202 = vsel %vm2174, %v3182, 0
      %v3205 = vsel %vm2174, %v3184, 0
      %v3208 = vsel %vm2174, %v3186, 0
      %v3211 = vsel %vm2174, %v3188, 0
      %3213 = vmatpush.bf16.xpose.msra.mxu0 0
      %3214 = vmatpush.bf16.xpose.msra.mxu0 0
      %3215 = vmatpush.bf16.xpose.msra.mxu0 0
      %3216 = vmatpush.bf16.xpose.msra.mxu0 0
      %3217 = vmatpush.bf16.xpose.msra.mxu0 %v3211
      %3218 = vmatpush.bf16.xpose.msra.mxu0 %v3208
      %3219 = vmatpush.bf16.xpose.msra.mxu0 %v3205
      %3220 = vmatpush.bf16.xpose.msra.mxu0 %v3202
      %3221 = vmatmul.bf16.gmra.mxu0 %v3190
      %v3222 = vpop.f32.mrf.mxu0
      %v3223 = vadd.f32 0.0, %v3222
      %v3224 = vpop.f32.mrf.mxu0
      %v3225 = vadd.f32 0.0, %v3224
      %3226 = vmatmul.bf16.gmra.mxu0 %v3193
      %v3227 = vpop.f32.mrf.mxu0
      %v3228 = vadd.f32 0.0, %v3227
      %v3229 = vpop.f32.mrf.mxu0
      %v3230 = vadd.f32 0.0, %v3229
      %3231 = vmatmul.bf16.gmra.mxu0 %v3196
      %v3232 = vpop.f32.mrf.mxu0
      %v3233 = vadd.f32 0.0, %v3232
      %v3234 = vpop.f32.mrf.mxu0
      %v3235 = vadd.f32 0.0, %v3234
      %3236 = vmatmul.bf16.gmra.mxu0 %v3199
      %v3237 = vpop.f32.mrf.mxu0
      %v3238 = vadd.f32 0.0, %v3237
      %v3239 = vpop.f32.mrf.mxu0
      %v3240 = vadd.f32 0.0, %v3239
      %3241 = vdwg.mxu0
      %v3242 = vmul.f32 %v3223, 0.5
      %v3243 = vmul.f32 %v3225, 0.5
      %v3244 = vmul.f32 %v3228, 0.5
      %v3245 = vmul.f32 %v3230, 0.5
      %v3246 = vmul.f32 %v3233, 0.5
      %v3247 = vmul.f32 %v3235, 0.5
      %v3248 = vmul.f32 %v3238, 0.5
      %v3249 = vmul.f32 %v3240, 0.5
      %v3250 = vsel %vm787, %v3242, -inf
      %3251 = vmax.xlane.f32.xlu0 %v3250
      %v3252 = vpop.xlane.xlu0 %3251
      %v3253 = vsel %vm787, %v3243, -inf
      %3254 = vmax.xlane.f32.xlu0 %v3253
      %v3255 = vpop.xlane.xlu0 %3254
      %v3256 = vsel %vm787, %v3244, -inf
      %3257 = vmax.xlane.f32.xlu0 %v3256
      %v3258 = vpop.xlane.xlu0 %3257
      %v3259 = vsel %vm787, %v3245, -inf
      %3260 = vmax.xlane.f32.xlu0 %v3259
      %v3261 = vpop.xlane.xlu0 %3260
      %v3262 = vsel %vm787, %v3246, -inf
      %3263 = vmax.xlane.f32.xlu0 %v3262
      %v3264 = vpop.xlane.xlu0 %3263
      %v3265 = vsel %vm787, %v3247, -inf
      %3266 = vmax.xlane.f32.xlu0 %v3265
      %v3267 = vpop.xlane.xlu0 %3266
      %v3268 = vsel %vm787, %v3248, -inf
      %3269 = vmax.xlane.f32.xlu0 %v3268
      %v3270 = vpop.xlane.xlu0 %3269
      %v3271 = vsel %vm787, %v3249, -inf
      %3272 = vmax.xlane.f32.xlu0 %v3271
      %v3273 = vpop.xlane.xlu0 %3272
      %v3274 = vsub.f32 %v3242, %v3252
      %v3275 = vsub.f32 %v3243, %v3255
      %v3276 = vsub.f32 %v3244, %v3258
      %v3277 = vsub.f32 %v3245, %v3261
      %v3278 = vsub.f32 %v3246, %v3264
      %v3279 = vsub.f32 %v3247, %v3267
      %v3280 = vsub.f32 %v3248, %v3270
      %v3281 = vsub.f32 %v3249, %v3273
      %v3282 = vmul.f32 %v3274, 1.442695
      %v3283 = vpow.pop %v3282
      %v3284 = vmul.f32 %v3275, 1.442695
      %v3285 = vpow.pop %v3284
      %v3286 = vmul.f32 %v3276, 1.442695
      %v3287 = vpow.pop %v3286
      %v3288 = vmul.f32 %v3277, 1.442695
      %v3289 = vpow.pop %v3288
      %v3290 = vmul.f32 %v3278, 1.442695
      %v3291 = vpow.pop %v3290
      %v3292 = vmul.f32 %v3279, 1.442695
      %v3293 = vpow.pop %v3292
      %v3294 = vmul.f32 %v3280, 1.442695
      %v3295 = vpow.pop %v3294
      %v3296 = vmul.f32 %v3281, 1.442695
      %v3297 = vpow.pop %v3296
      %v3298 = vsel %vm787, %v3283, 0.0
      %3299 = vadd.xlane.f32.xlu0 %v3298
      %v3300 = vpop.xlane.xlu0 %3299
      %v3301 = vsel %vm787, %v3285, 0.0
      %3302 = vadd.xlane.f32.xlu0 %v3301
      %v3303 = vpop.xlane.xlu0 %3302
      %v3304 = vsel %vm787, %v3287, 0.0
      %3305 = vadd.xlane.f32.xlu0 %v3304
      %v3306 = vpop.xlane.xlu0 %3305
      %v3307 = vsel %vm787, %v3289, 0.0
      %3308 = vadd.xlane.f32.xlu0 %v3307
      %v3309 = vpop.xlane.xlu0 %3308
      %v3310 = vsel %vm787, %v3291, 0.0
      %3311 = vadd.xlane.f32.xlu0 %v3310
      %v3312 = vpop.xlane.xlu0 %3311
      %v3313 = vsel %vm787, %v3293, 0.0
      %3314 = vadd.xlane.f32.xlu0 %v3313
      %v3315 = vpop.xlane.xlu0 %3314
      %v3316 = vsel %vm787, %v3295, 0.0
      %3317 = vadd.xlane.f32.xlu0 %v3316
      %v3318 = vpop.xlane.xlu0 %3317
      %v3319 = vsel %vm787, %v3297, 0.0
      %3320 = vadd.xlane.f32.xlu0 %v3319
      %v3321 = vpop.xlane.xlu0 %3320
      %v3322 = vrcp.pop %v3300
      %v3323 = vrcp.pop %v3303
      %v3324 = vrcp.pop %v3306
      %v3325 = vrcp.pop %v3309
      %v3326 = vrcp.pop %v3312
      %v3327 = vrcp.pop %v3315
      %v3328 = vrcp.pop %v3318
      %v3329 = vrcp.pop %v3321
      %v3330 = vmul.f32 %v3283, %v3322
      %v3331 = vmul.f32 %v3285, %v3323
      %v3332 = vmul.f32 %v3287, %v3324
      %v3333 = vmul.f32 %v3289, %v3325
      %v3334 = vmul.f32 %v3291, %v3326
      %v3335 = vmul.f32 %v3293, %v3327
      %v3336 = vmul.f32 %v3295, %v3328
      %v3337 = vmul.f32 %v3297, %v3329
      %v3338 = vpack.c.bf16 %v3331, %v3330
      %v3339 = vpack.c.bf16 %v3333, %v3332
      %v3340 = vpack.c.bf16 %v3335, %v3334
      %v3341 = vpack.c.bf16 %v3337, %v3336
      %v3342 = vpack.c.bf16 %v2681, %v2679
      %v3343 = vpack.c.bf16 %v2686, %v2684
      %v3344 = vpack.c.bf16 %v2691, %v2689
      %v3345 = vpack.c.bf16 %v2696, %v2694
      %v3347 = vsel %vm787, %v3338, 0
      %v3350 = vsel %vm787, %v3339, 0
      %v3353 = vsel %vm787, %v3340, 0
      %v3356 = vsel %vm787, %v3341, 0
      %3358 = vmatpush.bf16.msra.mxu0 0
      %3359 = vmatpush.bf16.msra.mxu0 0
      %3360 = vmatpush.bf16.msra.mxu0 0
      %3361 = vmatpush.bf16.msra.mxu0 0
      %3362 = vmatpush.bf16.msra.mxu0 %v3345
      %3363 = vmatpush.bf16.msra.mxu0 %v3344
      %3364 = vmatpush.bf16.msra.mxu0 %v3343
      %3365 = vmatpush.bf16.msra.mxu0 %v3342
      %3366 = vmatmul.bf16.gmra.mxu0 %v3347
      %v3367 = vpop.f32.mrf.mxu0
      %v3368 = vadd.f32 0.0, %v3367
      %v3369 = vpop.f32.mrf.mxu0
      %v3370 = vadd.f32 0.0, %v3369
      %3371 = vmatmul.bf16.gmra.mxu0 %v3350
      %v3372 = vpop.f32.mrf.mxu0
      %v3373 = vadd.f32 0.0, %v3372
      %v3374 = vpop.f32.mrf.mxu0
      %v3375 = vadd.f32 0.0, %v3374
      %3376 = vmatmul.bf16.gmra.mxu0 %v3353
      %v3377 = vpop.f32.mrf.mxu0
      %v3378 = vadd.f32 0.0, %v3377
      %v3379 = vpop.f32.mrf.mxu0
      %v3380 = vadd.f32 0.0, %v3379
      %3381 = vmatmul.bf16.gmra.mxu0 %v3356
      %v3382 = vpop.f32.mrf.mxu0
      %v3383 = vadd.f32 0.0, %v3382
      %v3384 = vpop.f32.mrf.mxu0
      %v3385 = vadd.f32 0.0, %v3384
      %3386 = vdwg.mxu0
      %v3387 = vld [vmem:[%s5 + $0x1] sm:$0x1]
      %v3388 = vld [vmem:[%s6 + $0x1] sm:$0x1]
      %3389 = vrot.lane.b32.xlu0 %v841, 124
      %v3390 = vpop.permute.xlu0 %3389
      %3391 = vrot.lane.b32.xlu0 %v843, 124
      %v3392 = vpop.permute.xlu0 %3391
      %3393 = vrot.lane.b32.xlu0 %v846, 124
      %v3394 = vpop.permute.xlu0 %3393
      %3395 = vrot.lane.b32.xlu0 %v848, 124
      %v3396 = vpop.permute.xlu0 %3395
      %3397 = vrot.lane.b32.xlu0 %v851, 124
      %v3398 = vpop.permute.xlu0 %3397
      %3399 = vrot.lane.b32.xlu0 %v853, 124
      %v3400 = vpop.permute.xlu0 %3399
      %3401 = vrot.lane.b32.xlu0 %v856, 124
      %v3402 = vpop.permute.xlu0 %3401
      %3403 = vrot.lane.b32.xlu0 %v858, 124
      %v3404 = vpop.permute.xlu0 %3403
      %v3413 = vsel %vm2174, %v3390, 0.0
      %3414 = vadd.xlane.f32.xlu0 %v3413
      %v3415 = vpop.xlane.xlu0 %3414
      %v3416 = vsel %vm2174, %v3392, 0.0
      %3417 = vadd.xlane.f32.xlu0 %v3416
      %v3418 = vpop.xlane.xlu0 %3417
      %v3419 = vsel %vm2174, %v3394, 0.0
      %3420 = vadd.xlane.f32.xlu0 %v3419
      %v3421 = vpop.xlane.xlu0 %3420
      %v3422 = vsel %vm2174, %v3396, 0.0
      %3423 = vadd.xlane.f32.xlu0 %v3422
      %v3424 = vpop.xlane.xlu0 %3423
      %v3425 = vsel %vm2174, %v3398, 0.0
      %3426 = vadd.xlane.f32.xlu0 %v3425
      %v3427 = vpop.xlane.xlu0 %3426
      %v3428 = vsel %vm2174, %v3400, 0.0
      %3429 = vadd.xlane.f32.xlu0 %v3428
      %v3430 = vpop.xlane.xlu0 %3429
      %v3431 = vsel %vm2174, %v3402, 0.0
      %3432 = vadd.xlane.f32.xlu0 %v3431
      %v3433 = vpop.xlane.xlu0 %3432
      %v3434 = vsel %vm2174, %v3404, 0.0
      %3435 = vadd.xlane.f32.xlu0 %v3434
      %v3436 = vpop.xlane.xlu0 %3435
      %v3437 = vmul.f32 %v3415, %v2730
      %v3438 = vmul.f32 %v3418, %v2730
      %v3439 = vmul.f32 %v3421, %v2730
      %v3440 = vmul.f32 %v3424, %v2730
      %v3441 = vmul.f32 %v3427, %v2730
      %v3442 = vmul.f32 %v3430, %v2730
      %v3443 = vmul.f32 %v3433, %v2730
      %v3444 = vmul.f32 %v3436, %v2730
      %v3445 = vsub.f32 %v841, %v3437
      %v3446 = vsub.f32 %v843, %v3438
      %v3447 = vsub.f32 %v846, %v3439
      %v3448 = vsub.f32 %v848, %v3440
      %v3449 = vsub.f32 %v851, %v3441
      %v3450 = vsub.f32 %v853, %v3442
      %v3451 = vsub.f32 %v856, %v3443
      %v3452 = vsub.f32 %v858, %v3444
      %v3453 = vmul.f32 %v3445, %v3445
      %v3454 = vmul.f32 %v3446, %v3446
      %v3455 = vmul.f32 %v3447, %v3447
      %v3456 = vmul.f32 %v3448, %v3448
      %v3457 = vmul.f32 %v3449, %v3449
      %v3458 = vmul.f32 %v3450, %v3450
      %v3459 = vmul.f32 %v3451, %v3451
      %v3460 = vmul.f32 %v3452, %v3452
      %3469 = vrot.lane.b32.xlu0 %v3453, 124
      %v3470 = vpop.permute.xlu0 %3469
      %3471 = vrot.lane.b32.xlu0 %v3454, 124
      %v3472 = vpop.permute.xlu0 %3471
      %3473 = vrot.lane.b32.xlu0 %v3455, 124
      %v3474 = vpop.permute.xlu0 %3473
      %3475 = vrot.lane.b32.xlu0 %v3456, 124
      %v3476 = vpop.permute.xlu0 %3475
      %3477 = vrot.lane.b32.xlu0 %v3457, 124
      %v3478 = vpop.permute.xlu0 %3477
      %3479 = vrot.lane.b32.xlu0 %v3458, 124
      %v3480 = vpop.permute.xlu0 %3479
      %3481 = vrot.lane.b32.xlu0 %v3459, 124
      %v3482 = vpop.permute.xlu0 %3481
      %3483 = vrot.lane.b32.xlu0 %v3460, 124
      %v3484 = vpop.permute.xlu0 %3483
      %v3493 = vsel %vm2174, %v3470, 0.0
      %3494 = vadd.xlane.f32.xlu0 %v3493
      %v3495 = vpop.xlane.xlu0 %3494
      %v3496 = vsel %vm2174, %v3472, 0.0
      %3497 = vadd.xlane.f32.xlu0 %v3496
      %v3498 = vpop.xlane.xlu0 %3497
      %v3499 = vsel %vm2174, %v3474, 0.0
      %3500 = vadd.xlane.f32.xlu0 %v3499
      %v3501 = vpop.xlane.xlu0 %3500
      %v3502 = vsel %vm2174, %v3476, 0.0
      %3503 = vadd.xlane.f32.xlu0 %v3502
      %v3504 = vpop.xlane.xlu0 %3503
      %v3505 = vsel %vm2174, %v3478, 0.0
      %3506 = vadd.xlane.f32.xlu0 %v3505
      %v3507 = vpop.xlane.xlu0 %3506
      %v3508 = vsel %vm2174, %v3480, 0.0
      %3509 = vadd.xlane.f32.xlu0 %v3508
      %v3510 = vpop.xlane.xlu0 %3509
      %v3511 = vsel %vm2174, %v3482, 0.0
      %3512 = vadd.xlane.f32.xlu0 %v3511
      %v3513 = vpop.xlane.xlu0 %3512
      %v3514 = vsel %vm2174, %v3484, 0.0
      %3515 = vadd.xlane.f32.xlu0 %v3514
      %v3516 = vpop.xlane.xlu0 %3515
      %v3517 = vmul.f32 %v3495, %v2730
      %v3518 = vmul.f32 %v3498, %v2730
      %v3519 = vmul.f32 %v3501, %v2730
      %v3520 = vmul.f32 %v3504, %v2730
      %v3521 = vmul.f32 %v3507, %v2730
      %v3522 = vmul.f32 %v3510, %v2730
      %v3523 = vmul.f32 %v3513, %v2730
      %v3524 = vmul.f32 %v3516, %v2730
      %v3525 = vadd.f32 %v3517, 1e-06
      %v3526 = vadd.f32 %v3518, 1e-06
      %v3527 = vadd.f32 %v3519, 1e-06
      %v3528 = vadd.f32 %v3520, 1e-06
      %v3529 = vadd.f32 %v3521, 1e-06
      %v3530 = vadd.f32 %v3522, 1e-06
      %v3531 = vadd.f32 %v3523, 1e-06
      %v3532 = vadd.f32 %v3524, 1e-06
      %v3533 = vrsqrt.pop %v3525
      %v3534 = vmul.f32 %v3533, %v3525
      %v3535 = vmul.f32 %v3534, %v3533
      %v3536 = vmul.f32 0.5, %v3535
      %v3537 = vsub.f32 1.5, %v3536
      %v3538 = vmul.f32 %v3533, %v3537
      %vm3539 = vweird.f32 %v3525
      %vm3540 = vweird.f32 %v3533
      %vm3541 = vmor %vm3539, %vm3540
      %v3542 = vsel %vm3541, %v3533, %v3538
      %v3543 = vrsqrt.pop %v3526
      %v3544 = vmul.f32 %v3543, %v3526
      %v3545 = vmul.f32 %v3544, %v3543
      %v3546 = vmul.f32 0.5, %v3545
      %v3547 = vsub.f32 1.5, %v3546
      %v3548 = vmul.f32 %v3543, %v3547
      %vm3549 = vweird.f32 %v3526
      %vm3550 = vweird.f32 %v3543
      %vm3551 = vmor %vm3549, %vm3550
      %v3552 = vsel %vm3551, %v3543, %v3548
      %v3553 = vrsqrt.pop %v3527
      %v3554 = vmul.f32 %v3553, %v3527
      %v3555 = vmul.f32 %v3554, %v3553
      %v3556 = vmul.f32 0.5, %v3555
      %v3557 = vsub.f32 1.5, %v3556
      %v3558 = vmul.f32 %v3553, %v3557
      %vm3559 = vweird.f32 %v3527
      %vm3560 = vweird.f32 %v3553
      %vm3561 = vmor %vm3559, %vm3560
      %v3562 = vsel %vm3561, %v3553, %v3558
      %v3563 = vrsqrt.pop %v3528
      %v3564 = vmul.f32 %v3563, %v3528
      %v3565 = vmul.f32 %v3564, %v3563
      %v3566 = vmul.f32 0.5, %v3565
      %v3567 = vsub.f32 1.5, %v3566
      %v3568 = vmul.f32 %v3563, %v3567
      %vm3569 = vweird.f32 %v3528
      %vm3570 = vweird.f32 %v3563
      %vm3571 = vmor %vm3569, %vm3570
      %v3572 = vsel %vm3571, %v3563, %v3568
      %v3573 = vrsqrt.pop %v3529
      %v3574 = vmul.f32 %v3573, %v3529
      %v3575 = vmul.f32 %v3574, %v3573
      %v3576 = vmul.f32 0.5, %v3575
      %v3577 = vsub.f32 1.5, %v3576
      %v3578 = vmul.f32 %v3573, %v3577
      %vm3579 = vweird.f32 %v3529
      %vm3580 = vweird.f32 %v3573
      %vm3581 = vmor %vm3579, %vm3580
      %v3582 = vsel %vm3581, %v3573, %v3578
      %v3583 = vrsqrt.pop %v3530
      %v3584 = vmul.f32 %v3583, %v3530
      %v3585 = vmul.f32 %v3584, %v3583
      %v3586 = vmul.f32 0.5, %v3585
      %v3587 = vsub.f32 1.5, %v3586
      %v3588 = vmul.f32 %v3583, %v3587
      %vm3589 = vweird.f32 %v3530
      %vm3590 = vweird.f32 %v3583
      %vm3591 = vmor %vm3589, %vm3590
      %v3592 = vsel %vm3591, %v3583, %v3588
      %v3593 = vrsqrt.pop %v3531
      %v3594 = vmul.f32 %v3593, %v3531
      %v3595 = vmul.f32 %v3594, %v3593
      %v3596 = vmul.f32 0.5, %v3595
      %v3597 = vsub.f32 1.5, %v3596
      %v3598 = vmul.f32 %v3593, %v3597
      %vm3599 = vweird.f32 %v3531
      %vm3600 = vweird.f32 %v3593
      %vm3601 = vmor %vm3599, %vm3600
      %v3602 = vsel %vm3601, %v3593, %v3598
      %v3603 = vrsqrt.pop %v3532
      %v3604 = vmul.f32 %v3603, %v3532
      %v3605 = vmul.f32 %v3604, %v3603
      %v3606 = vmul.f32 0.5, %v3605
      %v3607 = vsub.f32 1.5, %v3606
      %v3608 = vmul.f32 %v3603, %v3607
      %vm3609 = vweird.f32 %v3532
      %vm3610 = vweird.f32 %v3603
      %vm3611 = vmor %vm3609, %vm3610
      %v3612 = vsel %vm3611, %v3603, %v3608
      %v3613 = vmul.f32 %v3445, %v3542
      %v3614 = vmul.f32 %v3446, %v3552
      %v3615 = vmul.f32 %v3447, %v3562
      %v3616 = vmul.f32 %v3448, %v3572
      %v3617 = vmul.f32 %v3449, %v3582
      %v3618 = vmul.f32 %v3450, %v3592
      %v3619 = vmul.f32 %v3451, %v3602
      %v3620 = vmul.f32 %v3452, %v3612
      %v3621 = vperm.slane %v3387, 0
      %3623 = vrot.lane.b32.xlu0 %v3621, 4
      %v3624 = vpop.permute.xlu0 %3623
      %v3626 = vmul.f32 %v3613, %v3624
      %v3627 = vmul.f32 %v3614, %v3624
      %v3628 = vmul.f32 %v3615, %v3624
      %v3629 = vmul.f32 %v3616, %v3624
      %v3630 = vmul.f32 %v3617, %v3624
      %v3631 = vmul.f32 %v3618, %v3624
      %v3632 = vmul.f32 %v3619, %v3624
      %v3633 = vmul.f32 %v3620, %v3624
      %v3634 = vperm.slane %v3388, 0
      %3636 = vrot.lane.b32.xlu0 %v3634, 4
      %v3637 = vpop.permute.xlu0 %3636
      %v3639 = vadd.f32 %v3626, %v3637
      %v3640 = vadd.f32 %v3627, %v3637
      %v3641 = vadd.f32 %v3628, %v3637
      %v3642 = vadd.f32 %v3629, %v3637
      %v3643 = vadd.f32 %v3630, %v3637
      %v3644 = vadd.f32 %v3631, %v3637
      %v3645 = vadd.f32 %v3632, %v3637
      %v3646 = vadd.f32 %v3633, %v3637
      %v3647 = vld [vmem:[%s7 + $0x1] sm:$0x1]
      %v3648 = vld [vmem:[%s8 + $0x1] sm:$0x1]
      %3649 = vrot.lane.b32.xlu0 %v841, 108
      %v3650 = vpop.permute.xlu0 %3649
      %3651 = vrot.lane.b32.xlu0 %v843, 108
      %v3652 = vpop.permute.xlu0 %3651
      %3653 = vrot.lane.b32.xlu0 %v846, 108
      %v3654 = vpop.permute.xlu0 %3653
      %3655 = vrot.lane.b32.xlu0 %v848, 108
      %v3656 = vpop.permute.xlu0 %3655
      %3657 = vrot.lane.b32.xlu0 %v851, 108
      %v3658 = vpop.permute.xlu0 %3657
      %3659 = vrot.lane.b32.xlu0 %v853, 108
      %v3660 = vpop.permute.xlu0 %3659
      %3661 = vrot.lane.b32.xlu0 %v856, 108
      %v3662 = vpop.permute.xlu0 %3661
      %3663 = vrot.lane.b32.xlu0 %v858, 108
      %v3664 = vpop.permute.xlu0 %3663
      %v3673 = vsel %vm2174, %v3650, 0.0
      %3674 = vadd.xlane.f32.xlu0 %v3673
      %v3675 = vpop.xlane.xlu0 %3674
      %v3676 = vsel %vm2174, %v3652, 0.0
      %3677 = vadd.xlane.f32.xlu0 %v3676
      %v3678 = vpop.xlane.xlu0 %3677
      %v3679 = vsel %vm2174, %v3654, 0.0
      %3680 = vadd.xlane.f32.xlu0 %v3679
      %v3681 = vpop.xlane.xlu0 %3680
      %v3682 = vsel %vm2174, %v3656, 0.0
      %3683 = vadd.xlane.f32.xlu0 %v3682
      %v3684 = vpop.xlane.xlu0 %3683
      %v3685 = vsel %vm2174, %v3658, 0.0
      %3686 = vadd.xlane.f32.xlu0 %v3685
      %v3687 = vpop.xlane.xlu0 %3686
      %v3688 = vsel %vm2174, %v3660, 0.0
      %3689 = vadd.xlane.f32.xlu0 %v3688
      %v3690 = vpop.xlane.xlu0 %3689
      %v3691 = vsel %vm2174, %v3662, 0.0
      %3692 = vadd.xlane.f32.xlu0 %v3691
      %v3693 = vpop.xlane.xlu0 %3692
      %v3694 = vsel %vm2174, %v3664, 0.0
      %3695 = vadd.xlane.f32.xlu0 %v3694
      %v3696 = vpop.xlane.xlu0 %3695
      %v3697 = vmul.f32 %v3675, %v2730
      %v3698 = vmul.f32 %v3678, %v2730
      %v3699 = vmul.f32 %v3681, %v2730
      %v3700 = vmul.f32 %v3684, %v2730
      %v3701 = vmul.f32 %v3687, %v2730
      %v3702 = vmul.f32 %v3690, %v2730
      %v3703 = vmul.f32 %v3693, %v2730
      %v3704 = vmul.f32 %v3696, %v2730
      %v3705 = vsub.f32 %v841, %v3697
      %v3706 = vsub.f32 %v843, %v3698
      %v3707 = vsub.f32 %v846, %v3699
      %v3708 = vsub.f32 %v848, %v3700
      %v3709 = vsub.f32 %v851, %v3701
      %v3710 = vsub.f32 %v853, %v3702
      %v3711 = vsub.f32 %v856, %v3703
      %v3712 = vsub.f32 %v858, %v3704
      %v3713 = vmul.f32 %v3705, %v3705
      %v3714 = vmul.f32 %v3706, %v3706
      %v3715 = vmul.f32 %v3707, %v3707
      %v3716 = vmul.f32 %v3708, %v3708
      %v3717 = vmul.f32 %v3709, %v3709
      %v3718 = vmul.f32 %v3710, %v3710
      %v3719 = vmul.f32 %v3711, %v3711
      %v3720 = vmul.f32 %v3712, %v3712
      %3729 = vrot.lane.b32.xlu0 %v3713, 108
      %v3730 = vpop.permute.xlu0 %3729
      %3731 = vrot.lane.b32.xlu0 %v3714, 108
      %v3732 = vpop.permute.xlu0 %3731
      %3733 = vrot.lane.b32.xlu0 %v3715, 108
      %v3734 = vpop.permute.xlu0 %3733
      %3735 = vrot.lane.b32.xlu0 %v3716, 108
      %v3736 = vpop.permute.xlu0 %3735
      %3737 = vrot.lane.b32.xlu0 %v3717, 108
      %v3738 = vpop.permute.xlu0 %3737
      %3739 = vrot.lane.b32.xlu0 %v3718, 108
      %v3740 = vpop.permute.xlu0 %3739
      %3741 = vrot.lane.b32.xlu0 %v3719, 108
      %v3742 = vpop.permute.xlu0 %3741
      %3743 = vrot.lane.b32.xlu0 %v3720, 108
      %v3744 = vpop.permute.xlu0 %3743
      %v3753 = vsel %vm2174, %v3730, 0.0
      %3754 = vadd.xlane.f32.xlu0 %v3753
      %v3755 = vpop.xlane.xlu0 %3754
      %v3756 = vsel %vm2174, %v3732, 0.0
      %3757 = vadd.xlane.f32.xlu0 %v3756
      %v3758 = vpop.xlane.xlu0 %3757
      %v3759 = vsel %vm2174, %v3734, 0.0
      %3760 = vadd.xlane.f32.xlu0 %v3759
      %v3761 = vpop.xlane.xlu0 %3760
      %v3762 = vsel %vm2174, %v3736, 0.0
      %3763 = vadd.xlane.f32.xlu0 %v3762
      %v3764 = vpop.xlane.xlu0 %3763
      %v3765 = vsel %vm2174, %v3738, 0.0
      %3766 = vadd.xlane.f32.xlu0 %v3765
      %v3767 = vpop.xlane.xlu0 %3766
      %v3768 = vsel %vm2174, %v3740, 0.0
      %3769 = vadd.xlane.f32.xlu0 %v3768
      %v3770 = vpop.xlane.xlu0 %3769
      %v3771 = vsel %vm2174, %v3742, 0.0
      %3772 = vadd.xlane.f32.xlu0 %v3771
      %v3773 = vpop.xlane.xlu0 %3772
      %v3774 = vsel %vm2174, %v3744, 0.0
      %3775 = vadd.xlane.f32.xlu0 %v3774
      %v3776 = vpop.xlane.xlu0 %3775
      %v3777 = vmul.f32 %v3755, %v2730
      %v3778 = vmul.f32 %v3758, %v2730
      %v3779 = vmul.f32 %v3761, %v2730
      %v3780 = vmul.f32 %v3764, %v2730
      %v3781 = vmul.f32 %v3767, %v2730
      %v3782 = vmul.f32 %v3770, %v2730
      %v3783 = vmul.f32 %v3773, %v2730
      %v3784 = vmul.f32 %v3776, %v2730
      %v3785 = vadd.f32 %v3777, 1e-06
      %v3786 = vadd.f32 %v3778, 1e-06
      %v3787 = vadd.f32 %v3779, 1e-06
      %v3788 = vadd.f32 %v3780, 1e-06
      %v3789 = vadd.f32 %v3781, 1e-06
      %v3790 = vadd.f32 %v3782, 1e-06
      %v3791 = vadd.f32 %v3783, 1e-06
      %v3792 = vadd.f32 %v3784, 1e-06
      %v3793 = vrsqrt.pop %v3785
      %v3794 = vmul.f32 %v3793, %v3785
      %v3795 = vmul.f32 %v3794, %v3793
      %v3796 = vmul.f32 0.5, %v3795
      %v3797 = vsub.f32 1.5, %v3796
      %v3798 = vmul.f32 %v3793, %v3797
      %vm3799 = vweird.f32 %v3785
      %vm3800 = vweird.f32 %v3793
      %vm3801 = vmor %vm3799, %vm3800
      %v3802 = vsel %vm3801, %v3793, %v3798
      %v3803 = vrsqrt.pop %v3786
      %v3804 = vmul.f32 %v3803, %v3786
      %v3805 = vmul.f32 %v3804, %v3803
      %v3806 = vmul.f32 0.5, %v3805
      %v3807 = vsub.f32 1.5, %v3806
      %v3808 = vmul.f32 %v3803, %v3807
      %vm3809 = vweird.f32 %v3786
      %vm3810 = vweird.f32 %v3803
      %vm3811 = vmor %vm3809, %vm3810
      %v3812 = vsel %vm3811, %v3803, %v3808
      %v3813 = vrsqrt.pop %v3787
      %v3814 = vmul.f32 %v3813, %v3787
      %v3815 = vmul.f32 %v3814, %v3813
      %v3816 = vmul.f32 0.5, %v3815
      %v3817 = vsub.f32 1.5, %v3816
      %v3818 = vmul.f32 %v3813, %v3817
      %vm3819 = vweird.f32 %v3787
      %vm3820 = vweird.f32 %v3813
      %vm3821 = vmor %vm3819, %vm3820
      %v3822 = vsel %vm3821, %v3813, %v3818
      %v3823 = vrsqrt.pop %v3788
      %v3824 = vmul.f32 %v3823, %v3788
      %v3825 = vmul.f32 %v3824, %v3823
      %v3826 = vmul.f32 0.5, %v3825
      %v3827 = vsub.f32 1.5, %v3826
      %v3828 = vmul.f32 %v3823, %v3827
      %vm3829 = vweird.f32 %v3788
      %vm3830 = vweird.f32 %v3823
      %vm3831 = vmor %vm3829, %vm3830
      %v3832 = vsel %vm3831, %v3823, %v3828
      %v3833 = vrsqrt.pop %v3789
      %v3834 = vmul.f32 %v3833, %v3789
      %v3835 = vmul.f32 %v3834, %v3833
      %v3836 = vmul.f32 0.5, %v3835
      %v3837 = vsub.f32 1.5, %v3836
      %v3838 = vmul.f32 %v3833, %v3837
      %vm3839 = vweird.f32 %v3789
      %vm3840 = vweird.f32 %v3833
      %vm3841 = vmor %vm3839, %vm3840
      %v3842 = vsel %vm3841, %v3833, %v3838
      %v3843 = vrsqrt.pop %v3790
      %v3844 = vmul.f32 %v3843, %v3790
      %v3845 = vmul.f32 %v3844, %v3843
      %v3846 = vmul.f32 0.5, %v3845
      %v3847 = vsub.f32 1.5, %v3846
      %v3848 = vmul.f32 %v3843, %v3847
      %vm3849 = vweird.f32 %v3790
      %vm3850 = vweird.f32 %v3843
      %vm3851 = vmor %vm3849, %vm3850
      %v3852 = vsel %vm3851, %v3843, %v3848
      %v3853 = vrsqrt.pop %v3791
      %v3854 = vmul.f32 %v3853, %v3791
      %v3855 = vmul.f32 %v3854, %v3853
      %v3856 = vmul.f32 0.5, %v3855
      %v3857 = vsub.f32 1.5, %v3856
      %v3858 = vmul.f32 %v3853, %v3857
      %vm3859 = vweird.f32 %v3791
      %vm3860 = vweird.f32 %v3853
      %vm3861 = vmor %vm3859, %vm3860
      %v3862 = vsel %vm3861, %v3853, %v3858
      %v3863 = vrsqrt.pop %v3792
      %v3864 = vmul.f32 %v3863, %v3792
      %v3865 = vmul.f32 %v3864, %v3863
      %v3866 = vmul.f32 0.5, %v3865
      %v3867 = vsub.f32 1.5, %v3866
      %v3868 = vmul.f32 %v3863, %v3867
      %vm3869 = vweird.f32 %v3792
      %vm3870 = vweird.f32 %v3863
      %vm3871 = vmor %vm3869, %vm3870
      %v3872 = vsel %vm3871, %v3863, %v3868
      %v3873 = vmul.f32 %v3705, %v3802
      %v3874 = vmul.f32 %v3706, %v3812
      %v3875 = vmul.f32 %v3707, %v3822
      %v3876 = vmul.f32 %v3708, %v3832
      %v3877 = vmul.f32 %v3709, %v3842
      %v3878 = vmul.f32 %v3710, %v3852
      %v3879 = vmul.f32 %v3711, %v3862
      %v3880 = vmul.f32 %v3712, %v3872
      %v3881 = vperm.slane %v3647, 0
      %3883 = vrot.lane.b32.xlu0 %v3881, 20
      %v3884 = vpop.permute.xlu0 %3883
      %v3886 = vmul.f32 %v3873, %v3884
      %v3887 = vmul.f32 %v3874, %v3884
      %v3888 = vmul.f32 %v3875, %v3884
      %v3889 = vmul.f32 %v3876, %v3884
      %v3890 = vmul.f32 %v3877, %v3884
      %v3891 = vmul.f32 %v3878, %v3884
      %v3892 = vmul.f32 %v3879, %v3884
      %v3893 = vmul.f32 %v3880, %v3884
      %v3894 = vperm.slane %v3648, 0
      %3896 = vrot.lane.b32.xlu0 %v3894, 20
      %v3897 = vpop.permute.xlu0 %3896
      %v3899 = vadd.f32 %v3886, %v3897
      %v3900 = vadd.f32 %v3887, %v3897
      %v3901 = vadd.f32 %v3888, %v3897
      %v3902 = vadd.f32 %v3889, %v3897
      %v3903 = vadd.f32 %v3890, %v3897
      %v3904 = vadd.f32 %v3891, %v3897
      %v3905 = vadd.f32 %v3892, %v3897
      %v3906 = vadd.f32 %v3893, %v3897
      %v3907 = vpack.c.bf16 %v3640, %v3639
      %v3908 = vpack.c.bf16 %v3642, %v3641
      %v3909 = vpack.c.bf16 %v3644, %v3643
      %v3910 = vpack.c.bf16 %v3646, %v3645
      %v3911 = vpack.c.bf16 %v3900, %v3899
      %v3912 = vpack.c.bf16 %v3902, %v3901
      %v3913 = vpack.c.bf16 %v3904, %v3903
      %v3914 = vpack.c.bf16 %v3906, %v3905
      %3919 = vrot.lane.b32.xlu0 %v3907, 124
      %v3920 = vpop.permute.xlu0 %3919
      %3921 = vrot.lane.b32.xlu0 %v3908, 124
      %v3922 = vpop.permute.xlu0 %3921
      %3923 = vrot.lane.b32.xlu0 %v3909, 124
      %v3924 = vpop.permute.xlu0 %3923
      %3925 = vrot.lane.b32.xlu0 %v3910, 124
      %v3926 = vpop.permute.xlu0 %3925
      %3931 = vrot.lane.b32.xlu0 %v3911, 108
      %v3932 = vpop.permute.xlu0 %3931
      %3933 = vrot.lane.b32.xlu0 %v3912, 108
      %v3934 = vpop.permute.xlu0 %3933
      %3935 = vrot.lane.b32.xlu0 %v3913, 108
      %v3936 = vpop.permute.xlu0 %3935
      %3937 = vrot.lane.b32.xlu0 %v3914, 108
      %v3938 = vpop.permute.xlu0 %3937
      %v3940 = vsel %vm2174, %v3920, 0
      %v3943 = vsel %vm2174, %v3922, 0
      %v3946 = vsel %vm2174, %v3924, 0
      %v3949 = vsel %vm2174, %v3926, 0
      %v3952 = vsel %vm2174, %v3932, 0
      %v3955 = vsel %vm2174, %v3934, 0
      %v3958 = vsel %vm2174, %v3936, 0
      %v3961 = vsel %vm2174, %v3938, 0
      %3963 = vmatpush.bf16.xpose.msra.mxu0 0
      %3964 = vmatpush.bf16.xpose.msra.mxu0 0
      %3965 = vmatpush.bf16.xpose.msra.mxu0 0
      %3966 = vmatpush.bf16.xpose.msra.mxu0 0
      %3967 = vmatpush.bf16.xpose.msra.mxu0 %v3961
      %3968 = vmatpush.bf16.xpose.msra.mxu0 %v3958
      %3969 = vmatpush.bf16.xpose.msra.mxu0 %v3955
      %3970 = vmatpush.bf16.xpose.msra.mxu0 %v3952
      %3971 = vmatmul.bf16.gmra.mxu0 %v3940
      %v3972 = vpop.f32.mrf.mxu0
      %v3973 = vadd.f32 0.0, %v3972
      %v3974 = vpop.f32.mrf.mxu0
      %v3975 = vadd.f32 0.0, %v3974
      %3976 = vmatmul.bf16.gmra.mxu0 %v3943
      %v3977 = vpop.f32.mrf.mxu0
      %v3978 = vadd.f32 0.0, %v3977
      %v3979 = vpop.f32.mrf.mxu0
      %v3980 = vadd.f32 0.0, %v3979
      %3981 = vmatmul.bf16.gmra.mxu0 %v3946
      %v3982 = vpop.f32.mrf.mxu0
      %v3983 = vadd.f32 0.0, %v3982
      %v3984 = vpop.f32.mrf.mxu0
      %v3985 = vadd.f32 0.0, %v3984
      %3986 = vmatmul.bf16.gmra.mxu0 %v3949
      %v3987 = vpop.f32.mrf.mxu0
      %v3988 = vadd.f32 0.0, %v3987
      %v3989 = vpop.f32.mrf.mxu0
      %v3990 = vadd.f32 0.0, %v3989
      %3991 = vdwg.mxu0
      %v3992 = vmul.f32 %v3973, 0.5
      %v3993 = vmul.f32 %v3975, 0.5
      %v3994 = vmul.f32 %v3978, 0.5
      %v3995 = vmul.f32 %v3980, 0.5
      %v3996 = vmul.f32 %v3983, 0.5
      %v3997 = vmul.f32 %v3985, 0.5
      %v3998 = vmul.f32 %v3988, 0.5
      %v3999 = vmul.f32 %v3990, 0.5
      %v4000 = vsel %vm787, %v3992, -inf
      %4001 = vmax.xlane.f32.xlu0 %v4000
      %v4002 = vpop.xlane.xlu0 %4001
      %v4003 = vsel %vm787, %v3993, -inf
      %4004 = vmax.xlane.f32.xlu0 %v4003
      %v4005 = vpop.xlane.xlu0 %4004
      %v4006 = vsel %vm787, %v3994, -inf
      %4007 = vmax.xlane.f32.xlu0 %v4006
      %v4008 = vpop.xlane.xlu0 %4007
      %v4009 = vsel %vm787, %v3995, -inf
      %4010 = vmax.xlane.f32.xlu0 %v4009
      %v4011 = vpop.xlane.xlu0 %4010
      %v4012 = vsel %vm787, %v3996, -inf
      %4013 = vmax.xlane.f32.xlu0 %v4012
      %v4014 = vpop.xlane.xlu0 %4013
      %v4015 = vsel %vm787, %v3997, -inf
      %4016 = vmax.xlane.f32.xlu0 %v4015
      %v4017 = vpop.xlane.xlu0 %4016
      %v4018 = vsel %vm787, %v3998, -inf
      %4019 = vmax.xlane.f32.xlu0 %v4018
      %v4020 = vpop.xlane.xlu0 %4019
      %v4021 = vsel %vm787, %v3999, -inf
      %4022 = vmax.xlane.f32.xlu0 %v4021
      %v4023 = vpop.xlane.xlu0 %4022
      %v4024 = vsub.f32 %v3992, %v4002
      %v4025 = vsub.f32 %v3993, %v4005
      %v4026 = vsub.f32 %v3994, %v4008
      %v4027 = vsub.f32 %v3995, %v4011
      %v4028 = vsub.f32 %v3996, %v4014
      %v4029 = vsub.f32 %v3997, %v4017
      %v4030 = vsub.f32 %v3998, %v4020
      %v4031 = vsub.f32 %v3999, %v4023
      %v4032 = vmul.f32 %v4024, 1.442695
      %v4033 = vpow.pop %v4032
      %v4034 = vmul.f32 %v4025, 1.442695
      %v4035 = vpow.pop %v4034
      %v4036 = vmul.f32 %v4026, 1.442695
      %v4037 = vpow.pop %v4036
      %v4038 = vmul.f32 %v4027, 1.442695
      %v4039 = vpow.pop %v4038
      %v4040 = vmul.f32 %v4028, 1.442695
      %v4041 = vpow.pop %v4040
      %v4042 = vmul.f32 %v4029, 1.442695
      %v4043 = vpow.pop %v4042
      %v4044 = vmul.f32 %v4030, 1.442695
      %v4045 = vpow.pop %v4044
      %v4046 = vmul.f32 %v4031, 1.442695
      %v4047 = vpow.pop %v4046
      %v4048 = vsel %vm787, %v4033, 0.0
      %4049 = vadd.xlane.f32.xlu0 %v4048
      %v4050 = vpop.xlane.xlu0 %4049
      %v4051 = vsel %vm787, %v4035, 0.0
      %4052 = vadd.xlane.f32.xlu0 %v4051
      %v4053 = vpop.xlane.xlu0 %4052
      %v4054 = vsel %vm787, %v4037, 0.0
      %4055 = vadd.xlane.f32.xlu0 %v4054
      %v4056 = vpop.xlane.xlu0 %4055
      %v4057 = vsel %vm787, %v4039, 0.0
      %4058 = vadd.xlane.f32.xlu0 %v4057
      %v4059 = vpop.xlane.xlu0 %4058
      %v4060 = vsel %vm787, %v4041, 0.0
      %4061 = vadd.xlane.f32.xlu0 %v4060
      %v4062 = vpop.xlane.xlu0 %4061
      %v4063 = vsel %vm787, %v4043, 0.0
      %4064 = vadd.xlane.f32.xlu0 %v4063
      %v4065 = vpop.xlane.xlu0 %4064
      %v4066 = vsel %vm787, %v4045, 0.0
      %4067 = vadd.xlane.f32.xlu0 %v4066
      %v4068 = vpop.xlane.xlu0 %4067
      %v4069 = vsel %vm787, %v4047, 0.0
      %4070 = vadd.xlane.f32.xlu0 %v4069
      %v4071 = vpop.xlane.xlu0 %4070
      %v4072 = vrcp.pop %v4050
      %v4073 = vrcp.pop %v4053
      %v4074 = vrcp.pop %v4056
      %v4075 = vrcp.pop %v4059
      %v4076 = vrcp.pop %v4062
      %v4077 = vrcp.pop %v4065
      %v4078 = vrcp.pop %v4068
      %v4079 = vrcp.pop %v4071
      %v4080 = vmul.f32 %v4033, %v4072
      %v4081 = vmul.f32 %v4035, %v4073
      %v4082 = vmul.f32 %v4037, %v4074
      %v4083 = vmul.f32 %v4039, %v4075
      %v4084 = vmul.f32 %v4041, %v4076
      %v4085 = vmul.f32 %v4043, %v4077
      %v4086 = vmul.f32 %v4045, %v4078
      %v4087 = vmul.f32 %v4047, %v4079
      %v4088 = vpack.c.bf16 %v4081, %v4080
      %v4089 = vpack.c.bf16 %v4083, %v4082
      %v4090 = vpack.c.bf16 %v4085, %v4084
      %v4091 = vpack.c.bf16 %v4087, %v4086
      %4096 = vrot.lane.b32.xlu0 %v3342, 124
      %v4097 = vpop.permute.xlu0 %4096
      %4098 = vrot.lane.b32.xlu0 %v3343, 124
      %v4099 = vpop.permute.xlu0 %4098
      %4100 = vrot.lane.b32.xlu0 %v3344, 124
      %v4101 = vpop.permute.xlu0 %4100
      %4102 = vrot.lane.b32.xlu0 %v3345, 124
      %v4103 = vpop.permute.xlu0 %4102
      %v4109 = vsel %vm787, %v4088, 0
      %v4112 = vsel %vm787, %v4089, 0
      %v4115 = vsel %vm787, %v4090, 0
      %v4118 = vsel %vm787, %v4091, 0
      %4120 = vmatpush.bf16.msra.mxu0 0
      %4121 = vmatpush.bf16.msra.mxu0 0
      %4122 = vmatpush.bf16.msra.mxu0 0
      %4123 = vmatpush.bf16.msra.mxu0 0
      %4124 = vmatpush.bf16.msra.mxu0 %v4103
      %4125 = vmatpush.bf16.msra.mxu0 %v4101
      %4126 = vmatpush.bf16.msra.mxu0 %v4099
      %4127 = vmatpush.bf16.msra.mxu0 %v4097
      %4128 = vmatmul.bf16.gmra.mxu0 %v4109
      %v4129 = vpop.f32.mrf.mxu0
      %v4130 = vadd.f32 0.0, %v4129
      %v4131 = vpop.f32.mrf.mxu0
      %v4132 = vadd.f32 0.0, %v4131
      %4133 = vmatmul.bf16.gmra.mxu0 %v4112
      %v4134 = vpop.f32.mrf.mxu0
      %v4135 = vadd.f32 0.0, %v4134
      %v4136 = vpop.f32.mrf.mxu0
      %v4137 = vadd.f32 0.0, %v4136
      %4138 = vmatmul.bf16.gmra.mxu0 %v4115
      %v4139 = vpop.f32.mrf.mxu0
      %v4140 = vadd.f32 0.0, %v4139
      %v4141 = vpop.f32.mrf.mxu0
      %v4142 = vadd.f32 0.0, %v4141
      %4143 = vmatmul.bf16.gmra.mxu0 %v4118
      %v4144 = vpop.f32.mrf.mxu0
      %v4145 = vadd.f32 0.0, %v4144
      %v4146 = vpop.f32.mrf.mxu0
      %v4147 = vadd.f32 0.0, %v4146
      %4148 = vdwg.mxu0
      %v4149 = vld [vmem:[%s5 + $0x2] sm:$0x1]
      %v4150 = vld [vmem:[%s6 + $0x2] sm:$0x1]
      %4151 = vrot.lane.b32.xlu0 %v841, 120
      %v4152 = vpop.permute.xlu0 %4151
      %4153 = vrot.lane.b32.xlu0 %v843, 120
      %v4154 = vpop.permute.xlu0 %4153
      %4155 = vrot.lane.b32.xlu0 %v846, 120
      %v4156 = vpop.permute.xlu0 %4155
      %4157 = vrot.lane.b32.xlu0 %v848, 120
      %v4158 = vpop.permute.xlu0 %4157
      %4159 = vrot.lane.b32.xlu0 %v851, 120
      %v4160 = vpop.permute.xlu0 %4159
      %4161 = vrot.lane.b32.xlu0 %v853, 120
      %v4162 = vpop.permute.xlu0 %4161
      %4163 = vrot.lane.b32.xlu0 %v856, 120
      %v4164 = vpop.permute.xlu0 %4163
      %4165 = vrot.lane.b32.xlu0 %v858, 120
      %v4166 = vpop.permute.xlu0 %4165
      %v4175 = vsel %vm2174, %v4152, 0.0
      %4176 = vadd.xlane.f32.xlu0 %v4175
      %v4177 = vpop.xlane.xlu0 %4176
      %v4178 = vsel %vm2174, %v4154, 0.0
      %4179 = vadd.xlane.f32.xlu0 %v4178
      %v4180 = vpop.xlane.xlu0 %4179
      %v4181 = vsel %vm2174, %v4156, 0.0
      %4182 = vadd.xlane.f32.xlu0 %v4181
      %v4183 = vpop.xlane.xlu0 %4182
      %v4184 = vsel %vm2174, %v4158, 0.0
      %4185 = vadd.xlane.f32.xlu0 %v4184
      %v4186 = vpop.xlane.xlu0 %4185
      %v4187 = vsel %vm2174, %v4160, 0.0
      %4188 = vadd.xlane.f32.xlu0 %v4187
      %v4189 = vpop.xlane.xlu0 %4188
      %v4190 = vsel %vm2174, %v4162, 0.0
      %4191 = vadd.xlane.f32.xlu0 %v4190
      %v4192 = vpop.xlane.xlu0 %4191
      %v4193 = vsel %vm2174, %v4164, 0.0
      %4194 = vadd.xlane.f32.xlu0 %v4193
      %v4195 = vpop.xlane.xlu0 %4194
      %v4196 = vsel %vm2174, %v4166, 0.0
      %4197 = vadd.xlane.f32.xlu0 %v4196
      %v4198 = vpop.xlane.xlu0 %4197
      %v4199 = vmul.f32 %v4177, %v2730
      %v4200 = vmul.f32 %v4180, %v2730
      %v4201 = vmul.f32 %v4183, %v2730
      %v4202 = vmul.f32 %v4186, %v2730
      %v4203 = vmul.f32 %v4189, %v2730
      %v4204 = vmul.f32 %v4192, %v2730
      %v4205 = vmul.f32 %v4195, %v2730
      %v4206 = vmul.f32 %v4198, %v2730
      %v4207 = vsub.f32 %v841, %v4199
      %v4208 = vsub.f32 %v843, %v4200
      %v4209 = vsub.f32 %v846, %v4201
      %v4210 = vsub.f32 %v848, %v4202
      %v4211 = vsub.f32 %v851, %v4203
      %v4212 = vsub.f32 %v853, %v4204
      %v4213 = vsub.f32 %v856, %v4205
      %v4214 = vsub.f32 %v858, %v4206
      %v4215 = vmul.f32 %v4207, %v4207
      %v4216 = vmul.f32 %v4208, %v4208
      %v4217 = vmul.f32 %v4209, %v4209
      %v4218 = vmul.f32 %v4210, %v4210
      %v4219 = vmul.f32 %v4211, %v4211
      %v4220 = vmul.f32 %v4212, %v4212
      %v4221 = vmul.f32 %v4213, %v4213
      %v4222 = vmul.f32 %v4214, %v4214
      %4231 = vrot.lane.b32.xlu0 %v4215, 120
      %v4232 = vpop.permute.xlu0 %4231
      %4233 = vrot.lane.b32.xlu0 %v4216, 120
      %v4234 = vpop.permute.xlu0 %4233
      %4235 = vrot.lane.b32.xlu0 %v4217, 120
      %v4236 = vpop.permute.xlu0 %4235
      %4237 = vrot.lane.b32.xlu0 %v4218, 120
      %v4238 = vpop.permute.xlu0 %4237
      %4239 = vrot.lane.b32.xlu0 %v4219, 120
      %v4240 = vpop.permute.xlu0 %4239
      %4241 = vrot.lane.b32.xlu0 %v4220, 120
      %v4242 = vpop.permute.xlu0 %4241
      %4243 = vrot.lane.b32.xlu0 %v4221, 120
      %v4244 = vpop.permute.xlu0 %4243
      %4245 = vrot.lane.b32.xlu0 %v4222, 120
      %v4246 = vpop.permute.xlu0 %4245
      %v4255 = vsel %vm2174, %v4232, 0.0
      %4256 = vadd.xlane.f32.xlu0 %v4255
      %v4257 = vpop.xlane.xlu0 %4256
      %v4258 = vsel %vm2174, %v4234, 0.0
      %4259 = vadd.xlane.f32.xlu0 %v4258
      %v4260 = vpop.xlane.xlu0 %4259
      %v4261 = vsel %vm2174, %v4236, 0.0
      %4262 = vadd.xlane.f32.xlu0 %v4261
      %v4263 = vpop.xlane.xlu0 %4262
      %v4264 = vsel %vm2174, %v4238, 0.0
      %4265 = vadd.xlane.f32.xlu0 %v4264
      %v4266 = vpop.xlane.xlu0 %4265
      %v4267 = vsel %vm2174, %v4240, 0.0
      %4268 = vadd.xlane.f32.xlu0 %v4267
      %v4269 = vpop.xlane.xlu0 %4268
      %v4270 = vsel %vm2174, %v4242, 0.0
      %4271 = vadd.xlane.f32.xlu0 %v4270
      %v4272 = vpop.xlane.xlu0 %4271
      %v4273 = vsel %vm2174, %v4244, 0.0
      %4274 = vadd.xlane.f32.xlu0 %v4273
      %v4275 = vpop.xlane.xlu0 %4274
      %v4276 = vsel %vm2174, %v4246, 0.0
      %4277 = vadd.xlane.f32.xlu0 %v4276
      %v4278 = vpop.xlane.xlu0 %4277
      %v4279 = vmul.f32 %v4257, %v2730
      %v4280 = vmul.f32 %v4260, %v2730
      %v4281 = vmul.f32 %v4263, %v2730
      %v4282 = vmul.f32 %v4266, %v2730
      %v4283 = vmul.f32 %v4269, %v2730
      %v4284 = vmul.f32 %v4272, %v2730
      %v4285 = vmul.f32 %v4275, %v2730
      %v4286 = vmul.f32 %v4278, %v2730
      %v4287 = vadd.f32 %v4279, 1e-06
      %v4288 = vadd.f32 %v4280, 1e-06
      %v4289 = vadd.f32 %v4281, 1e-06
      %v4290 = vadd.f32 %v4282, 1e-06
      %v4291 = vadd.f32 %v4283, 1e-06
      %v4292 = vadd.f32 %v4284, 1e-06
      %v4293 = vadd.f32 %v4285, 1e-06
      %v4294 = vadd.f32 %v4286, 1e-06
      %v4295 = vrsqrt.pop %v4287
      %v4296 = vmul.f32 %v4295, %v4287
      %v4297 = vmul.f32 %v4296, %v4295
      %v4298 = vmul.f32 0.5, %v4297
      %v4299 = vsub.f32 1.5, %v4298
      %v4300 = vmul.f32 %v4295, %v4299
      %vm4301 = vweird.f32 %v4287
      %vm4302 = vweird.f32 %v4295
      %vm4303 = vmor %vm4301, %vm4302
      %v4304 = vsel %vm4303, %v4295, %v4300
      %v4305 = vrsqrt.pop %v4288
      %v4306 = vmul.f32 %v4305, %v4288
      %v4307 = vmul.f32 %v4306, %v4305
      %v4308 = vmul.f32 0.5, %v4307
      %v4309 = vsub.f32 1.5, %v4308
      %v4310 = vmul.f32 %v4305, %v4309
      %vm4311 = vweird.f32 %v4288
      %vm4312 = vweird.f32 %v4305
      %vm4313 = vmor %vm4311, %vm4312
      %v4314 = vsel %vm4313, %v4305, %v4310
      %v4315 = vrsqrt.pop %v4289
      %v4316 = vmul.f32 %v4315, %v4289
      %v4317 = vmul.f32 %v4316, %v4315
      %v4318 = vmul.f32 0.5, %v4317
      %v4319 = vsub.f32 1.5, %v4318
      %v4320 = vmul.f32 %v4315, %v4319
      %vm4321 = vweird.f32 %v4289
      %vm4322 = vweird.f32 %v4315
      %vm4323 = vmor %vm4321, %vm4322
      %v4324 = vsel %vm4323, %v4315, %v4320
      %v4325 = vrsqrt.pop %v4290
      %v4326 = vmul.f32 %v4325, %v4290
      %v4327 = vmul.f32 %v4326, %v4325
      %v4328 = vmul.f32 0.5, %v4327
      %v4329 = vsub.f32 1.5, %v4328
      %v4330 = vmul.f32 %v4325, %v4329
      %vm4331 = vweird.f32 %v4290
      %vm4332 = vweird.f32 %v4325
      %vm4333 = vmor %vm4331, %vm4332
      %v4334 = vsel %vm4333, %v4325, %v4330
      %v4335 = vrsqrt.pop %v4291
      %v4336 = vmul.f32 %v4335, %v4291
      %v4337 = vmul.f32 %v4336, %v4335
      %v4338 = vmul.f32 0.5, %v4337
      %v4339 = vsub.f32 1.5, %v4338
      %v4340 = vmul.f32 %v4335, %v4339
      %vm4341 = vweird.f32 %v4291
      %vm4342 = vweird.f32 %v4335
      %vm4343 = vmor %vm4341, %vm4342
      %v4344 = vsel %vm4343, %v4335, %v4340
      %v4345 = vrsqrt.pop %v4292
      %v4346 = vmul.f32 %v4345, %v4292
      %v4347 = vmul.f32 %v4346, %v4345
      %v4348 = vmul.f32 0.5, %v4347
      %v4349 = vsub.f32 1.5, %v4348
      %v4350 = vmul.f32 %v4345, %v4349
      %vm4351 = vweird.f32 %v4292
      %vm4352 = vweird.f32 %v4345
      %vm4353 = vmor %vm4351, %vm4352
      %v4354 = vsel %vm4353, %v4345, %v4350
      %v4355 = vrsqrt.pop %v4293
      %v4356 = vmul.f32 %v4355, %v4293
      %v4357 = vmul.f32 %v4356, %v4355
      %v4358 = vmul.f32 0.5, %v4357
      %v4359 = vsub.f32 1.5, %v4358
      %v4360 = vmul.f32 %v4355, %v4359
      %vm4361 = vweird.f32 %v4293
      %vm4362 = vweird.f32 %v4355
      %vm4363 = vmor %vm4361, %vm4362
      %v4364 = vsel %vm4363, %v4355, %v4360
      %v4365 = vrsqrt.pop %v4294
      %v4366 = vmul.f32 %v4365, %v4294
      %v4367 = vmul.f32 %v4366, %v4365
      %v4368 = vmul.f32 0.5, %v4367
      %v4369 = vsub.f32 1.5, %v4368
      %v4370 = vmul.f32 %v4365, %v4369
      %vm4371 = vweird.f32 %v4294
      %vm4372 = vweird.f32 %v4365
      %vm4373 = vmor %vm4371, %vm4372
      %v4374 = vsel %vm4373, %v4365, %v4370
      %v4375 = vmul.f32 %v4207, %v4304
      %v4376 = vmul.f32 %v4208, %v4314
      %v4377 = vmul.f32 %v4209, %v4324
      %v4378 = vmul.f32 %v4210, %v4334
      %v4379 = vmul.f32 %v4211, %v4344
      %v4380 = vmul.f32 %v4212, %v4354
      %v4381 = vmul.f32 %v4213, %v4364
      %v4382 = vmul.f32 %v4214, %v4374
      %v4383 = vperm.slane %v4149, 0
      %4385 = vrot.lane.b32.xlu0 %v4383, 8
      %v4386 = vpop.permute.xlu0 %4385
      %v4388 = vmul.f32 %v4375, %v4386
      %v4389 = vmul.f32 %v4376, %v4386
      %v4390 = vmul.f32 %v4377, %v4386
      %v4391 = vmul.f32 %v4378, %v4386
      %v4392 = vmul.f32 %v4379, %v4386
      %v4393 = vmul.f32 %v4380, %v4386
      %v4394 = vmul.f32 %v4381, %v4386
      %v4395 = vmul.f32 %v4382, %v4386
      %v4396 = vperm.slane %v4150, 0
      %4398 = vrot.lane.b32.xlu0 %v4396, 8
      %v4399 = vpop.permute.xlu0 %4398
      %v4401 = vadd.f32 %v4388, %v4399
      %v4402 = vadd.f32 %v4389, %v4399
      %v4403 = vadd.f32 %v4390, %v4399
      %v4404 = vadd.f32 %v4391, %v4399
      %v4405 = vadd.f32 %v4392, %v4399
      %v4406 = vadd.f32 %v4393, %v4399
      %v4407 = vadd.f32 %v4394, %v4399
      %v4408 = vadd.f32 %v4395, %v4399
      %v4409 = vld [vmem:[%s7 + $0x2] sm:$0x1]
      %v4410 = vld [vmem:[%s8 + $0x2] sm:$0x1]
      %4411 = vrot.lane.b32.xlu0 %v841, 104
      %v4412 = vpop.permute.xlu0 %4411
      %4413 = vrot.lane.b32.xlu0 %v843, 104
      %v4414 = vpop.permute.xlu0 %4413
      %4415 = vrot.lane.b32.xlu0 %v846, 104
      %v4416 = vpop.permute.xlu0 %4415
      %4417 = vrot.lane.b32.xlu0 %v848, 104
      %v4418 = vpop.permute.xlu0 %4417
      %4419 = vrot.lane.b32.xlu0 %v851, 104
      %v4420 = vpop.permute.xlu0 %4419
      %4421 = vrot.lane.b32.xlu0 %v853, 104
      %v4422 = vpop.permute.xlu0 %4421
      %4423 = vrot.lane.b32.xlu0 %v856, 104
      %v4424 = vpop.permute.xlu0 %4423
      %4425 = vrot.lane.b32.xlu0 %v858, 104
      %v4426 = vpop.permute.xlu0 %4425
      %v4435 = vsel %vm2174, %v4412, 0.0
      %4436 = vadd.xlane.f32.xlu0 %v4435
      %v4437 = vpop.xlane.xlu0 %4436
      %v4438 = vsel %vm2174, %v4414, 0.0
      %4439 = vadd.xlane.f32.xlu0 %v4438
      %v4440 = vpop.xlane.xlu0 %4439
      %v4441 = vsel %vm2174, %v4416, 0.0
      %4442 = vadd.xlane.f32.xlu0 %v4441
      %v4443 = vpop.xlane.xlu0 %4442
      %v4444 = vsel %vm2174, %v4418, 0.0
      %4445 = vadd.xlane.f32.xlu0 %v4444
      %v4446 = vpop.xlane.xlu0 %4445
      %v4447 = vsel %vm2174, %v4420, 0.0
      %4448 = vadd.xlane.f32.xlu0 %v4447
      %v4449 = vpop.xlane.xlu0 %4448
      %v4450 = vsel %vm2174, %v4422, 0.0
      %4451 = vadd.xlane.f32.xlu0 %v4450
      %v4452 = vpop.xlane.xlu0 %4451
      %v4453 = vsel %vm2174, %v4424, 0.0
      %4454 = vadd.xlane.f32.xlu0 %v4453
      %v4455 = vpop.xlane.xlu0 %4454
      %v4456 = vsel %vm2174, %v4426, 0.0
      %4457 = vadd.xlane.f32.xlu0 %v4456
      %v4458 = vpop.xlane.xlu0 %4457
      %v4459 = vmul.f32 %v4437, %v2730
      %v4460 = vmul.f32 %v4440, %v2730
      %v4461 = vmul.f32 %v4443, %v2730
      %v4462 = vmul.f32 %v4446, %v2730
      %v4463 = vmul.f32 %v4449, %v2730
      %v4464 = vmul.f32 %v4452, %v2730
      %v4465 = vmul.f32 %v4455, %v2730
      %v4466 = vmul.f32 %v4458, %v2730
      %v4467 = vsub.f32 %v841, %v4459
      %v4468 = vsub.f32 %v843, %v4460
      %v4469 = vsub.f32 %v846, %v4461
      %v4470 = vsub.f32 %v848, %v4462
      %v4471 = vsub.f32 %v851, %v4463
      %v4472 = vsub.f32 %v853, %v4464
      %v4473 = vsub.f32 %v856, %v4465
      %v4474 = vsub.f32 %v858, %v4466
      %v4475 = vmul.f32 %v4467, %v4467
      %v4476 = vmul.f32 %v4468, %v4468
      %v4477 = vmul.f32 %v4469, %v4469
      %v4478 = vmul.f32 %v4470, %v4470
      %v4479 = vmul.f32 %v4471, %v4471
      %v4480 = vmul.f32 %v4472, %v4472
      %v4481 = vmul.f32 %v4473, %v4473
      %v4482 = vmul.f32 %v4474, %v4474
      %4491 = vrot.lane.b32.xlu0 %v4475, 104
      %v4492 = vpop.permute.xlu0 %4491
      %4493 = vrot.lane.b32.xlu0 %v4476, 104
      %v4494 = vpop.permute.xlu0 %4493
      %4495 = vrot.lane.b32.xlu0 %v4477, 104
      %v4496 = vpop.permute.xlu0 %4495
      %4497 = vrot.lane.b32.xlu0 %v4478, 104
      %v4498 = vpop.permute.xlu0 %4497
      %4499 = vrot.lane.b32.xlu0 %v4479, 104
      %v4500 = vpop.permute.xlu0 %4499
      %4501 = vrot.lane.b32.xlu0 %v4480, 104
      %v4502 = vpop.permute.xlu0 %4501
      %4503 = vrot.lane.b32.xlu0 %v4481, 104
      %v4504 = vpop.permute.xlu0 %4503
      %4505 = vrot.lane.b32.xlu0 %v4482, 104
      %v4506 = vpop.permute.xlu0 %4505
      %v4515 = vsel %vm2174, %v4492, 0.0
      %4516 = vadd.xlane.f32.xlu0 %v4515
      %v4517 = vpop.xlane.xlu0 %4516
      %v4518 = vsel %vm2174, %v4494, 0.0
      %4519 = vadd.xlane.f32.xlu0 %v4518
      %v4520 = vpop.xlane.xlu0 %4519
      %v4521 = vsel %vm2174, %v4496, 0.0
      %4522 = vadd.xlane.f32.xlu0 %v4521
      %v4523 = vpop.xlane.xlu0 %4522
      %v4524 = vsel %vm2174, %v4498, 0.0
      %4525 = vadd.xlane.f32.xlu0 %v4524
      %v4526 = vpop.xlane.xlu0 %4525
      %v4527 = vsel %vm2174, %v4500, 0.0
      %4528 = vadd.xlane.f32.xlu0 %v4527
      %v4529 = vpop.xlane.xlu0 %4528
      %v4530 = vsel %vm2174, %v4502, 0.0
      %4531 = vadd.xlane.f32.xlu0 %v4530
      %v4532 = vpop.xlane.xlu0 %4531
      %v4533 = vsel %vm2174, %v4504, 0.0
      %4534 = vadd.xlane.f32.xlu0 %v4533
      %v4535 = vpop.xlane.xlu0 %4534
      %v4536 = vsel %vm2174, %v4506, 0.0
      %4537 = vadd.xlane.f32.xlu0 %v4536
      %v4538 = vpop.xlane.xlu0 %4537
      %v4539 = vmul.f32 %v4517, %v2730
      %v4540 = vmul.f32 %v4520, %v2730
      %v4541 = vmul.f32 %v4523, %v2730
      %v4542 = vmul.f32 %v4526, %v2730
      %v4543 = vmul.f32 %v4529, %v2730
      %v4544 = vmul.f32 %v4532, %v2730
      %v4545 = vmul.f32 %v4535, %v2730
      %v4546 = vmul.f32 %v4538, %v2730
      %v4547 = vadd.f32 %v4539, 1e-06
      %v4548 = vadd.f32 %v4540, 1e-06
      %v4549 = vadd.f32 %v4541, 1e-06
      %v4550 = vadd.f32 %v4542, 1e-06
      %v4551 = vadd.f32 %v4543, 1e-06
      %v4552 = vadd.f32 %v4544, 1e-06
      %v4553 = vadd.f32 %v4545, 1e-06
      %v4554 = vadd.f32 %v4546, 1e-06
      %v4555 = vrsqrt.pop %v4547
      %v4556 = vmul.f32 %v4555, %v4547
      %v4557 = vmul.f32 %v4556, %v4555
      %v4558 = vmul.f32 0.5, %v4557
      %v4559 = vsub.f32 1.5, %v4558
      %v4560 = vmul.f32 %v4555, %v4559
      %vm4561 = vweird.f32 %v4547
      %vm4562 = vweird.f32 %v4555
      %vm4563 = vmor %vm4561, %vm4562
      %v4564 = vsel %vm4563, %v4555, %v4560
      %v4565 = vrsqrt.pop %v4548
      %v4566 = vmul.f32 %v4565, %v4548
      %v4567 = vmul.f32 %v4566, %v4565
      %v4568 = vmul.f32 0.5, %v4567
      %v4569 = vsub.f32 1.5, %v4568
      %v4570 = vmul.f32 %v4565, %v4569
      %vm4571 = vweird.f32 %v4548
      %vm4572 = vweird.f32 %v4565
      %vm4573 = vmor %vm4571, %vm4572
      %v4574 = vsel %vm4573, %v4565, %v4570
      %v4575 = vrsqrt.pop %v4549
      %v4576 = vmul.f32 %v4575, %v4549
      %v4577 = vmul.f32 %v4576, %v4575
      %v4578 = vmul.f32 0.5, %v4577
      %v4579 = vsub.f32 1.5, %v4578
      %v4580 = vmul.f32 %v4575, %v4579
      %vm4581 = vweird.f32 %v4549
      %vm4582 = vweird.f32 %v4575
      %vm4583 = vmor %vm4581, %vm4582
      %v4584 = vsel %vm4583, %v4575, %v4580
      %v4585 = vrsqrt.pop %v4550
      %v4586 = vmul.f32 %v4585, %v4550
      %v4587 = vmul.f32 %v4586, %v4585
      %v4588 = vmul.f32 0.5, %v4587
      %v4589 = vsub.f32 1.5, %v4588
      %v4590 = vmul.f32 %v4585, %v4589
      %vm4591 = vweird.f32 %v4550
      %vm4592 = vweird.f32 %v4585
      %vm4593 = vmor %vm4591, %vm4592
      %v4594 = vsel %vm4593, %v4585, %v4590
      %v4595 = vrsqrt.pop %v4551
      %v4596 = vmul.f32 %v4595, %v4551
      %v4597 = vmul.f32 %v4596, %v4595
      %v4598 = vmul.f32 0.5, %v4597
      %v4599 = vsub.f32 1.5, %v4598
      %v4600 = vmul.f32 %v4595, %v4599
      %vm4601 = vweird.f32 %v4551
      %vm4602 = vweird.f32 %v4595
      %vm4603 = vmor %vm4601, %vm4602
      %v4604 = vsel %vm4603, %v4595, %v4600
      %v4605 = vrsqrt.pop %v4552
      %v4606 = vmul.f32 %v4605, %v4552
      %v4607 = vmul.f32 %v4606, %v4605
      %v4608 = vmul.f32 0.5, %v4607
      %v4609 = vsub.f32 1.5, %v4608
      %v4610 = vmul.f32 %v4605, %v4609
      %vm4611 = vweird.f32 %v4552
      %vm4612 = vweird.f32 %v4605
      %vm4613 = vmor %vm4611, %vm4612
      %v4614 = vsel %vm4613, %v4605, %v4610
      %v4615 = vrsqrt.pop %v4553
      %v4616 = vmul.f32 %v4615, %v4553
      %v4617 = vmul.f32 %v4616, %v4615
      %v4618 = vmul.f32 0.5, %v4617
      %v4619 = vsub.f32 1.5, %v4618
      %v4620 = vmul.f32 %v4615, %v4619
      %vm4621 = vweird.f32 %v4553
      %vm4622 = vweird.f32 %v4615
      %vm4623 = vmor %vm4621, %vm4622
      %v4624 = vsel %vm4623, %v4615, %v4620
      %v4625 = vrsqrt.pop %v4554
      %v4626 = vmul.f32 %v4625, %v4554
      %v4627 = vmul.f32 %v4626, %v4625
      %v4628 = vmul.f32 0.5, %v4627
      %v4629 = vsub.f32 1.5, %v4628
      %v4630 = vmul.f32 %v4625, %v4629
      %vm4631 = vweird.f32 %v4554
      %vm4632 = vweird.f32 %v4625
      %vm4633 = vmor %vm4631, %vm4632
      %v4634 = vsel %vm4633, %v4625, %v4630
      %v4635 = vmul.f32 %v4467, %v4564
      %v4636 = vmul.f32 %v4468, %v4574
      %v4637 = vmul.f32 %v4469, %v4584
      %v4638 = vmul.f32 %v4470, %v4594
      %v4639 = vmul.f32 %v4471, %v4604
      %v4640 = vmul.f32 %v4472, %v4614
      %v4641 = vmul.f32 %v4473, %v4624
      %v4642 = vmul.f32 %v4474, %v4634
      %v4643 = vperm.slane %v4409, 0
      %4645 = vrot.lane.b32.xlu0 %v4643, 24
      %v4646 = vpop.permute.xlu0 %4645
      %v4648 = vmul.f32 %v4635, %v4646
      %v4649 = vmul.f32 %v4636, %v4646
      %v4650 = vmul.f32 %v4637, %v4646
      %v4651 = vmul.f32 %v4638, %v4646
      %v4652 = vmul.f32 %v4639, %v4646
      %v4653 = vmul.f32 %v4640, %v4646
      %v4654 = vmul.f32 %v4641, %v4646
      %v4655 = vmul.f32 %v4642, %v4646
      %v4656 = vperm.slane %v4410, 0
      %4658 = vrot.lane.b32.xlu0 %v4656, 24
      %v4659 = vpop.permute.xlu0 %4658
      %v4661 = vadd.f32 %v4648, %v4659
      %v4662 = vadd.f32 %v4649, %v4659
      %v4663 = vadd.f32 %v4650, %v4659
      %v4664 = vadd.f32 %v4651, %v4659
      %v4665 = vadd.f32 %v4652, %v4659
      %v4666 = vadd.f32 %v4653, %v4659
      %v4667 = vadd.f32 %v4654, %v4659
      %v4668 = vadd.f32 %v4655, %v4659
      %v4669 = vpack.c.bf16 %v4402, %v4401
      %v4670 = vpack.c.bf16 %v4404, %v4403
      %v4671 = vpack.c.bf16 %v4406, %v4405
      %v4672 = vpack.c.bf16 %v4408, %v4407
      %v4673 = vpack.c.bf16 %v4662, %v4661
      %v4674 = vpack.c.bf16 %v4664, %v4663
      %v4675 = vpack.c.bf16 %v4666, %v4665
      %v4676 = vpack.c.bf16 %v4668, %v4667
      %4681 = vrot.lane.b32.xlu0 %v4669, 120
      %v4682 = vpop.permute.xlu0 %4681
      %4683 = vrot.lane.b32.xlu0 %v4670, 120
      %v4684 = vpop.permute.xlu0 %4683
      %4685 = vrot.lane.b32.xlu0 %v4671, 120
      %v4686 = vpop.permute.xlu0 %4685
      %4687 = vrot.lane.b32.xlu0 %v4672, 120
      %v4688 = vpop.permute.xlu0 %4687
      %4693 = vrot.lane.b32.xlu0 %v4673, 104
      %v4694 = vpop.permute.xlu0 %4693
      %4695 = vrot.lane.b32.xlu0 %v4674, 104
      %v4696 = vpop.permute.xlu0 %4695
      %4697 = vrot.lane.b32.xlu0 %v4675, 104
      %v4698 = vpop.permute.xlu0 %4697
      %4699 = vrot.lane.b32.xlu0 %v4676, 104
      %v4700 = vpop.permute.xlu0 %4699
      %v4702 = vsel %vm2174, %v4682, 0
      %v4705 = vsel %vm2174, %v4684, 0
      %v4708 = vsel %vm2174, %v4686, 0
      %v4711 = vsel %vm2174, %v4688, 0
      %v4714 = vsel %vm2174, %v4694, 0
      %v4717 = vsel %vm2174, %v4696, 0
      %v4720 = vsel %vm2174, %v4698, 0
      %v4723 = vsel %vm2174, %v4700, 0
      %4725 = vmatpush.bf16.xpose.msra.mxu0 0
      %4726 = vmatpush.bf16.xpose.msra.mxu0 0
      %4727 = vmatpush.bf16.xpose.msra.mxu0 0
      %4728 = vmatpush.bf16.xpose.msra.mxu0 0
      %4729 = vmatpush.bf16.xpose.msra.mxu0 %v4723
      %4730 = vmatpush.bf16.xpose.msra.mxu0 %v4720
      %4731 = vmatpush.bf16.xpose.msra.mxu0 %v4717
      %4732 = vmatpush.bf16.xpose.msra.mxu0 %v4714
      %4733 = vmatmul.bf16.gmra.mxu0 %v4702
      %v4734 = vpop.f32.mrf.mxu0
      %v4735 = vadd.f32 0.0, %v4734
      %v4736 = vpop.f32.mrf.mxu0
      %v4737 = vadd.f32 0.0, %v4736
      %4738 = vmatmul.bf16.gmra.mxu0 %v4705
      %v4739 = vpop.f32.mrf.mxu0
      %v4740 = vadd.f32 0.0, %v4739
      %v4741 = vpop.f32.mrf.mxu0
      %v4742 = vadd.f32 0.0, %v4741
      %4743 = vmatmul.bf16.gmra.mxu0 %v4708
      %v4744 = vpop.f32.mrf.mxu0
      %v4745 = vadd.f32 0.0, %v4744
      %v4746 = vpop.f32.mrf.mxu0
      %v4747 = vadd.f32 0.0, %v4746
      %4748 = vmatmul.bf16.gmra.mxu0 %v4711
      %v4749 = vpop.f32.mrf.mxu0
      %v4750 = vadd.f32 0.0, %v4749
      %v4751 = vpop.f32.mrf.mxu0
      %v4752 = vadd.f32 0.0, %v4751
      %4753 = vdwg.mxu0
      %v4754 = vmul.f32 %v4735, 0.5
      %v4755 = vmul.f32 %v4737, 0.5
      %v4756 = vmul.f32 %v4740, 0.5
      %v4757 = vmul.f32 %v4742, 0.5
      %v4758 = vmul.f32 %v4745, 0.5
      %v4759 = vmul.f32 %v4747, 0.5
      %v4760 = vmul.f32 %v4750, 0.5
      %v4761 = vmul.f32 %v4752, 0.5
      %v4762 = vsel %vm787, %v4754, -inf
      %4763 = vmax.xlane.f32.xlu0 %v4762
      %v4764 = vpop.xlane.xlu0 %4763
      %v4765 = vsel %vm787, %v4755, -inf
      %4766 = vmax.xlane.f32.xlu0 %v4765
      %v4767 = vpop.xlane.xlu0 %4766
      %v4768 = vsel %vm787, %v4756, -inf
      %4769 = vmax.xlane.f32.xlu0 %v4768
      %v4770 = vpop.xlane.xlu0 %4769
      %v4771 = vsel %vm787, %v4757, -inf
      %4772 = vmax.xlane.f32.xlu0 %v4771
      %v4773 = vpop.xlane.xlu0 %4772
      %v4774 = vsel %vm787, %v4758, -inf
      %4775 = vmax.xlane.f32.xlu0 %v4774
      %v4776 = vpop.xlane.xlu0 %4775
      %v4777 = vsel %vm787, %v4759, -inf
      %4778 = vmax.xlane.f32.xlu0 %v4777
      %v4779 = vpop.xlane.xlu0 %4778
      %v4780 = vsel %vm787, %v4760, -inf
      %4781 = vmax.xlane.f32.xlu0 %v4780
      %v4782 = vpop.xlane.xlu0 %4781
      %v4783 = vsel %vm787, %v4761, -inf
      %4784 = vmax.xlane.f32.xlu0 %v4783
      %v4785 = vpop.xlane.xlu0 %4784
      %v4786 = vsub.f32 %v4754, %v4764
      %v4787 = vsub.f32 %v4755, %v4767
      %v4788 = vsub.f32 %v4756, %v4770
      %v4789 = vsub.f32 %v4757, %v4773
      %v4790 = vsub.f32 %v4758, %v4776
      %v4791 = vsub.f32 %v4759, %v4779
      %v4792 = vsub.f32 %v4760, %v4782
      %v4793 = vsub.f32 %v4761, %v4785
      %v4794 = vmul.f32 %v4786, 1.442695
      %v4795 = vpow.pop %v4794
      %v4796 = vmul.f32 %v4787, 1.442695
      %v4797 = vpow.pop %v4796
      %v4798 = vmul.f32 %v4788, 1.442695
      %v4799 = vpow.pop %v4798
      %v4800 = vmul.f32 %v4789, 1.442695
      %v4801 = vpow.pop %v4800
      %v4802 = vmul.f32 %v4790, 1.442695
      %v4803 = vpow.pop %v4802
      %v4804 = vmul.f32 %v4791, 1.442695
      %v4805 = vpow.pop %v4804
      %v4806 = vmul.f32 %v4792, 1.442695
      %v4807 = vpow.pop %v4806
      %v4808 = vmul.f32 %v4793, 1.442695
      %v4809 = vpow.pop %v4808
      %v4810 = vsel %vm787, %v4795, 0.0
      %4811 = vadd.xlane.f32.xlu0 %v4810
      %v4812 = vpop.xlane.xlu0 %4811
      %v4813 = vsel %vm787, %v4797, 0.0
      %4814 = vadd.xlane.f32.xlu0 %v4813
      %v4815 = vpop.xlane.xlu0 %4814
      %v4816 = vsel %vm787, %v4799, 0.0
      %4817 = vadd.xlane.f32.xlu0 %v4816
      %v4818 = vpop.xlane.xlu0 %4817
      %v4819 = vsel %vm787, %v4801, 0.0
      %4820 = vadd.xlane.f32.xlu0 %v4819
      %v4821 = vpop.xlane.xlu0 %4820
      %v4822 = vsel %vm787, %v4803, 0.0
      %4823 = vadd.xlane.f32.xlu0 %v4822
      %v4824 = vpop.xlane.xlu0 %4823
      %v4825 = vsel %vm787, %v4805, 0.0
      %4826 = vadd.xlane.f32.xlu0 %v4825
      %v4827 = vpop.xlane.xlu0 %4826
      %v4828 = vsel %vm787, %v4807, 0.0
      %4829 = vadd.xlane.f32.xlu0 %v4828
      %v4830 = vpop.xlane.xlu0 %4829
      %v4831 = vsel %vm787, %v4809, 0.0
      %4832 = vadd.xlane.f32.xlu0 %v4831
      %v4833 = vpop.xlane.xlu0 %4832
      %v4834 = vrcp.pop %v4812
      %v4835 = vrcp.pop %v4815
      %v4836 = vrcp.pop %v4818
      %v4837 = vrcp.pop %v4821
      %v4838 = vrcp.pop %v4824
      %v4839 = vrcp.pop %v4827
      %v4840 = vrcp.pop %v4830
      %v4841 = vrcp.pop %v4833
      %v4842 = vmul.f32 %v4795, %v4834
      %v4843 = vmul.f32 %v4797, %v4835
      %v4844 = vmul.f32 %v4799, %v4836
      %v4845 = vmul.f32 %v4801, %v4837
      %v4846 = vmul.f32 %v4803, %v4838
      %v4847 = vmul.f32 %v4805, %v4839
      %v4848 = vmul.f32 %v4807, %v4840
      %v4849 = vmul.f32 %v4809, %v4841
      %v4850 = vpack.c.bf16 %v4843, %v4842
      %v4851 = vpack.c.bf16 %v4845, %v4844
      %v4852 = vpack.c.bf16 %v4847, %v4846
      %v4853 = vpack.c.bf16 %v4849, %v4848
      %4854 = vrot.lane.b32.xlu0 %v3342, 120
      %v4855 = vpop.permute.xlu0 %4854
      %4856 = vrot.lane.b32.xlu0 %v3343, 120
      %v4857 = vpop.permute.xlu0 %4856
      %4858 = vrot.lane.b32.xlu0 %v3344, 120
      %v4859 = vpop.permute.xlu0 %4858
      %4860 = vrot.lane.b32.xlu0 %v3345, 120
      %v4861 = vpop.permute.xlu0 %4860
      %v4867 = vsel %vm787, %v4850, 0
      %v4870 = vsel %vm787, %v4851, 0
      %v4873 = vsel %vm787, %v4852, 0
      %v4876 = vsel %vm787, %v4853, 0
      %4878 = vmatpush.bf16.msra.mxu0 0
      %4879 = vmatpush.bf16.msra.mxu0 0
      %4880 = vmatpush.bf16.msra.mxu0 0
      %4881 = vmatpush.bf16.msra.mxu0 0
      %4882 = vmatpush.bf16.msra.mxu0 %v4861
      %4883 = vmatpush.bf16.msra.mxu0 %v4859
      %4884 = vmatpush.bf16.msra.mxu0 %v4857
      %4885 = vmatpush.bf16.msra.mxu0 %v4855
      %4886 = vmatmul.bf16.gmra.mxu0 %v4867
      %v4887 = vpop.f32.mrf.mxu0
      %v4888 = vadd.f32 0.0, %v4887
      %v4889 = vpop.f32.mrf.mxu0
      %v4890 = vadd.f32 0.0, %v4889
      %4891 = vmatmul.bf16.gmra.mxu0 %v4870
      %v4892 = vpop.f32.mrf.mxu0
      %v4893 = vadd.f32 0.0, %v4892
      %v4894 = vpop.f32.mrf.mxu0
      %v4895 = vadd.f32 0.0, %v4894
      %4896 = vmatmul.bf16.gmra.mxu0 %v4873
      %v4897 = vpop.f32.mrf.mxu0
      %v4898 = vadd.f32 0.0, %v4897
      %v4899 = vpop.f32.mrf.mxu0
      %v4900 = vadd.f32 0.0, %v4899
      %4901 = vmatmul.bf16.gmra.mxu0 %v4876
      %v4902 = vpop.f32.mrf.mxu0
      %v4903 = vadd.f32 0.0, %v4902
      %v4904 = vpop.f32.mrf.mxu0
      %v4905 = vadd.f32 0.0, %v4904
      %4906 = vdwg.mxu0
      %v4907 = vld [vmem:[%s5 + $0x3] sm:$0x1]
      %v4908 = vld [vmem:[%s6 + $0x3] sm:$0x1]
      %4909 = vrot.lane.b32.xlu0 %v841, 116
      %v4910 = vpop.permute.xlu0 %4909
      %4911 = vrot.lane.b32.xlu0 %v843, 116
      %v4912 = vpop.permute.xlu0 %4911
      %4913 = vrot.lane.b32.xlu0 %v846, 116
      %v4914 = vpop.permute.xlu0 %4913
      %4915 = vrot.lane.b32.xlu0 %v848, 116
      %v4916 = vpop.permute.xlu0 %4915
      %4917 = vrot.lane.b32.xlu0 %v851, 116
      %v4918 = vpop.permute.xlu0 %4917
      %4919 = vrot.lane.b32.xlu0 %v853, 116
      %v4920 = vpop.permute.xlu0 %4919
      %4921 = vrot.lane.b32.xlu0 %v856, 116
      %v4922 = vpop.permute.xlu0 %4921
      %4923 = vrot.lane.b32.xlu0 %v858, 116
      %v4924 = vpop.permute.xlu0 %4923
      %v4933 = vsel %vm2174, %v4910, 0.0
      %4934 = vadd.xlane.f32.xlu0 %v4933
      %v4935 = vpop.xlane.xlu0 %4934
      %v4936 = vsel %vm2174, %v4912, 0.0
      %4937 = vadd.xlane.f32.xlu0 %v4936
      %v4938 = vpop.xlane.xlu0 %4937
      %v4939 = vsel %vm2174, %v4914, 0.0
      %4940 = vadd.xlane.f32.xlu0 %v4939
      %v4941 = vpop.xlane.xlu0 %4940
      %v4942 = vsel %vm2174, %v4916, 0.0
      %4943 = vadd.xlane.f32.xlu0 %v4942
      %v4944 = vpop.xlane.xlu0 %4943
      %v4945 = vsel %vm2174, %v4918, 0.0
      %4946 = vadd.xlane.f32.xlu0 %v4945
      %v4947 = vpop.xlane.xlu0 %4946
      %v4948 = vsel %vm2174, %v4920, 0.0
      %4949 = vadd.xlane.f32.xlu0 %v4948
      %v4950 = vpop.xlane.xlu0 %4949
      %v4951 = vsel %vm2174, %v4922, 0.0
      %4952 = vadd.xlane.f32.xlu0 %v4951
      %v4953 = vpop.xlane.xlu0 %4952
      %v4954 = vsel %vm2174, %v4924, 0.0
      %4955 = vadd.xlane.f32.xlu0 %v4954
      %v4956 = vpop.xlane.xlu0 %4955
      %v4957 = vmul.f32 %v4935, %v2730
      %v4958 = vmul.f32 %v4938, %v2730
      %v4959 = vmul.f32 %v4941, %v2730
      %v4960 = vmul.f32 %v4944, %v2730
      %v4961 = vmul.f32 %v4947, %v2730
      %v4962 = vmul.f32 %v4950, %v2730
      %v4963 = vmul.f32 %v4953, %v2730
      %v4964 = vmul.f32 %v4956, %v2730
      %v4965 = vsub.f32 %v841, %v4957
      %v4966 = vsub.f32 %v843, %v4958
      %v4967 = vsub.f32 %v846, %v4959
      %v4968 = vsub.f32 %v848, %v4960
      %v4969 = vsub.f32 %v851, %v4961
      %v4970 = vsub.f32 %v853, %v4962
      %v4971 = vsub.f32 %v856, %v4963
      %v4972 = vsub.f32 %v858, %v4964
      %v4973 = vmul.f32 %v4965, %v4965
      %v4974 = vmul.f32 %v4966, %v4966
      %v4975 = vmul.f32 %v4967, %v4967
      %v4976 = vmul.f32 %v4968, %v4968
      %v4977 = vmul.f32 %v4969, %v4969
      %v4978 = vmul.f32 %v4970, %v4970
      %v4979 = vmul.f32 %v4971, %v4971
      %v4980 = vmul.f32 %v4972, %v4972
      %4989 = vrot.lane.b32.xlu0 %v4973, 116
      %v4990 = vpop.permute.xlu0 %4989
      %4991 = vrot.lane.b32.xlu0 %v4974, 116
      %v4992 = vpop.permute.xlu0 %4991
      %4993 = vrot.lane.b32.xlu0 %v4975, 116
      %v4994 = vpop.permute.xlu0 %4993
      %4995 = vrot.lane.b32.xlu0 %v4976, 116
      %v4996 = vpop.permute.xlu0 %4995
      %4997 = vrot.lane.b32.xlu0 %v4977, 116
      %v4998 = vpop.permute.xlu0 %4997
      %4999 = vrot.lane.b32.xlu0 %v4978, 116
      %v5000 = vpop.permute.xlu0 %4999
      %5001 = vrot.lane.b32.xlu0 %v4979, 116
      %v5002 = vpop.permute.xlu0 %5001
      %5003 = vrot.lane.b32.xlu0 %v4980, 116
      %v5004 = vpop.permute.xlu0 %5003
      %v5013 = vsel %vm2174, %v4990, 0.0
      %5014 = vadd.xlane.f32.xlu0 %v5013
      %v5015 = vpop.xlane.xlu0 %5014
      %v5016 = vsel %vm2174, %v4992, 0.0
      %5017 = vadd.xlane.f32.xlu0 %v5016
      %v5018 = vpop.xlane.xlu0 %5017
      %v5019 = vsel %vm2174, %v4994, 0.0
      %5020 = vadd.xlane.f32.xlu0 %v5019
      %v5021 = vpop.xlane.xlu0 %5020
      %v5022 = vsel %vm2174, %v4996, 0.0
      %5023 = vadd.xlane.f32.xlu0 %v5022
      %v5024 = vpop.xlane.xlu0 %5023
      %v5025 = vsel %vm2174, %v4998, 0.0
      %5026 = vadd.xlane.f32.xlu0 %v5025
      %v5027 = vpop.xlane.xlu0 %5026
      %v5028 = vsel %vm2174, %v5000, 0.0
      %5029 = vadd.xlane.f32.xlu0 %v5028
      %v5030 = vpop.xlane.xlu0 %5029
      %v5031 = vsel %vm2174, %v5002, 0.0
      %5032 = vadd.xlane.f32.xlu0 %v5031
      %v5033 = vpop.xlane.xlu0 %5032
      %v5034 = vsel %vm2174, %v5004, 0.0
      %5035 = vadd.xlane.f32.xlu0 %v5034
      %v5036 = vpop.xlane.xlu0 %5035
      %v5037 = vmul.f32 %v5015, %v2730
      %v5038 = vmul.f32 %v5018, %v2730
      %v5039 = vmul.f32 %v5021, %v2730
      %v5040 = vmul.f32 %v5024, %v2730
      %v5041 = vmul.f32 %v5027, %v2730
      %v5042 = vmul.f32 %v5030, %v2730
      %v5043 = vmul.f32 %v5033, %v2730
      %v5044 = vmul.f32 %v5036, %v2730
      %v5045 = vadd.f32 %v5037, 1e-06
      %v5046 = vadd.f32 %v5038, 1e-06
      %v5047 = vadd.f32 %v5039, 1e-06
      %v5048 = vadd.f32 %v5040, 1e-06
      %v5049 = vadd.f32 %v5041, 1e-06
      %v5050 = vadd.f32 %v5042, 1e-06
      %v5051 = vadd.f32 %v5043, 1e-06
      %v5052 = vadd.f32 %v5044, 1e-06
      %v5053 = vrsqrt.pop %v5045
      %v5054 = vmul.f32 %v5053, %v5045
      %v5055 = vmul.f32 %v5054, %v5053
      %v5056 = vmul.f32 0.5, %v5055
      %v5057 = vsub.f32 1.5, %v5056
      %v5058 = vmul.f32 %v5053, %v5057
      %vm5059 = vweird.f32 %v5045
      %vm5060 = vweird.f32 %v5053
      %vm5061 = vmor %vm5059, %vm5060
      %v5062 = vsel %vm5061, %v5053, %v5058
      %v5063 = vrsqrt.pop %v5046
      %v5064 = vmul.f32 %v5063, %v5046
      %v5065 = vmul.f32 %v5064, %v5063
      %v5066 = vmul.f32 0.5, %v5065
      %v5067 = vsub.f32 1.5, %v5066
      %v5068 = vmul.f32 %v5063, %v5067
      %vm5069 = vweird.f32 %v5046
      %vm5070 = vweird.f32 %v5063
      %vm5071 = vmor %vm5069, %vm5070
      %v5072 = vsel %vm5071, %v5063, %v5068
      %v5073 = vrsqrt.pop %v5047
      %v5074 = vmul.f32 %v5073, %v5047
      %v5075 = vmul.f32 %v5074, %v5073
      %v5076 = vmul.f32 0.5, %v5075
      %v5077 = vsub.f32 1.5, %v5076
      %v5078 = vmul.f32 %v5073, %v5077
      %vm5079 = vweird.f32 %v5047
      %vm5080 = vweird.f32 %v5073
      %vm5081 = vmor %vm5079, %vm5080
      %v5082 = vsel %vm5081, %v5073, %v5078
      %v5083 = vrsqrt.pop %v5048
      %v5084 = vmul.f32 %v5083, %v5048
      %v5085 = vmul.f32 %v5084, %v5083
      %v5086 = vmul.f32 0.5, %v5085
      %v5087 = vsub.f32 1.5, %v5086
      %v5088 = vmul.f32 %v5083, %v5087
      %vm5089 = vweird.f32 %v5048
      %vm5090 = vweird.f32 %v5083
      %vm5091 = vmor %vm5089, %vm5090
      %v5092 = vsel %vm5091, %v5083, %v5088
      %v5093 = vrsqrt.pop %v5049
      %v5094 = vmul.f32 %v5093, %v5049
      %v5095 = vmul.f32 %v5094, %v5093
      %v5096 = vmul.f32 0.5, %v5095
      %v5097 = vsub.f32 1.5, %v5096
      %v5098 = vmul.f32 %v5093, %v5097
      %vm5099 = vweird.f32 %v5049
      %vm5100 = vweird.f32 %v5093
      %vm5101 = vmor %vm5099, %vm5100
      %v5102 = vsel %vm5101, %v5093, %v5098
      %v5103 = vrsqrt.pop %v5050
      %v5104 = vmul.f32 %v5103, %v5050
      %v5105 = vmul.f32 %v5104, %v5103
      %v5106 = vmul.f32 0.5, %v5105
      %v5107 = vsub.f32 1.5, %v5106
      %v5108 = vmul.f32 %v5103, %v5107
      %vm5109 = vweird.f32 %v5050
      %vm5110 = vweird.f32 %v5103
      %vm5111 = vmor %vm5109, %vm5110
      %v5112 = vsel %vm5111, %v5103, %v5108
      %v5113 = vrsqrt.pop %v5051
      %v5114 = vmul.f32 %v5113, %v5051
      %v5115 = vmul.f32 %v5114, %v5113
      %v5116 = vmul.f32 0.5, %v5115
      %v5117 = vsub.f32 1.5, %v5116
      %v5118 = vmul.f32 %v5113, %v5117
      %vm5119 = vweird.f32 %v5051
      %vm5120 = vweird.f32 %v5113
      %vm5121 = vmor %vm5119, %vm5120
      %v5122 = vsel %vm5121, %v5113, %v5118
      %v5123 = vrsqrt.pop %v5052
      %v5124 = vmul.f32 %v5123, %v5052
      %v5125 = vmul.f32 %v5124, %v5123
      %v5126 = vmul.f32 0.5, %v5125
      %v5127 = vsub.f32 1.5, %v5126
      %v5128 = vmul.f32 %v5123, %v5127
      %vm5129 = vweird.f32 %v5052
      %vm5130 = vweird.f32 %v5123
      %vm5131 = vmor %vm5129, %vm5130
      %v5132 = vsel %vm5131, %v5123, %v5128
      %v5133 = vmul.f32 %v4965, %v5062
      %v5134 = vmul.f32 %v4966, %v5072
      %v5135 = vmul.f32 %v4967, %v5082
      %v5136 = vmul.f32 %v4968, %v5092
      %v5137 = vmul.f32 %v4969, %v5102
      %v5138 = vmul.f32 %v4970, %v5112
      %v5139 = vmul.f32 %v4971, %v5122
      %v5140 = vmul.f32 %v4972, %v5132
      %v5141 = vperm.slane %v4907, 0
      %5143 = vrot.lane.b32.xlu0 %v5141, 12
      %v5144 = vpop.permute.xlu0 %5143
      %v5146 = vmul.f32 %v5133, %v5144
      %v5147 = vmul.f32 %v5134, %v5144
      %v5148 = vmul.f32 %v5135, %v5144
      %v5149 = vmul.f32 %v5136, %v5144
      %v5150 = vmul.f32 %v5137, %v5144
      %v5151 = vmul.f32 %v5138, %v5144
      %v5152 = vmul.f32 %v5139, %v5144
      %v5153 = vmul.f32 %v5140, %v5144
      %v5154 = vperm.slane %v4908, 0
      %5156 = vrot.lane.b32.xlu0 %v5154, 12
      %v5157 = vpop.permute.xlu0 %5156
      %v5159 = vadd.f32 %v5146, %v5157
      %v5160 = vadd.f32 %v5147, %v5157
      %v5161 = vadd.f32 %v5148, %v5157
      %v5162 = vadd.f32 %v5149, %v5157
      %v5163 = vadd.f32 %v5150, %v5157
      %v5164 = vadd.f32 %v5151, %v5157
      %v5165 = vadd.f32 %v5152, %v5157
      %v5166 = vadd.f32 %v5153, %v5157
      %v5167 = vld [vmem:[%s7 + $0x3] sm:$0x1]
      %v5168 = vld [vmem:[%s8 + $0x3] sm:$0x1]
      %5169 = vrot.lane.b32.xlu0 %v841, 100
      %v5170 = vpop.permute.xlu0 %5169
      %5171 = vrot.lane.b32.xlu0 %v843, 100
      %v5172 = vpop.permute.xlu0 %5171
      %5173 = vrot.lane.b32.xlu0 %v846, 100
      %v5174 = vpop.permute.xlu0 %5173
      %5175 = vrot.lane.b32.xlu0 %v848, 100
      %v5176 = vpop.permute.xlu0 %5175
      %5177 = vrot.lane.b32.xlu0 %v851, 100
      %v5178 = vpop.permute.xlu0 %5177
      %5179 = vrot.lane.b32.xlu0 %v853, 100
      %v5180 = vpop.permute.xlu0 %5179
      %5181 = vrot.lane.b32.xlu0 %v856, 100
      %v5182 = vpop.permute.xlu0 %5181
      %5183 = vrot.lane.b32.xlu0 %v858, 100
      %v5184 = vpop.permute.xlu0 %5183
      %v5193 = vsel %vm2174, %v5170, 0.0
      %5194 = vadd.xlane.f32.xlu0 %v5193
      %v5195 = vpop.xlane.xlu0 %5194
      %v5196 = vsel %vm2174, %v5172, 0.0
      %5197 = vadd.xlane.f32.xlu0 %v5196
      %v5198 = vpop.xlane.xlu0 %5197
      %v5199 = vsel %vm2174, %v5174, 0.0
      %5200 = vadd.xlane.f32.xlu0 %v5199
      %v5201 = vpop.xlane.xlu0 %5200
      %v5202 = vsel %vm2174, %v5176, 0.0
      %5203 = vadd.xlane.f32.xlu0 %v5202
      %v5204 = vpop.xlane.xlu0 %5203
      %v5205 = vsel %vm2174, %v5178, 0.0
      %5206 = vadd.xlane.f32.xlu0 %v5205
      %v5207 = vpop.xlane.xlu0 %5206
      %v5208 = vsel %vm2174, %v5180, 0.0
      %5209 = vadd.xlane.f32.xlu0 %v5208
      %v5210 = vpop.xlane.xlu0 %5209
      %v5211 = vsel %vm2174, %v5182, 0.0
      %5212 = vadd.xlane.f32.xlu0 %v5211
      %v5213 = vpop.xlane.xlu0 %5212
      %v5214 = vsel %vm2174, %v5184, 0.0
      %5215 = vadd.xlane.f32.xlu0 %v5214
      %v5216 = vpop.xlane.xlu0 %5215
      %v5217 = vmul.f32 %v5195, %v2730
      %v5218 = vmul.f32 %v5198, %v2730
      %v5219 = vmul.f32 %v5201, %v2730
      %v5220 = vmul.f32 %v5204, %v2730
      %v5221 = vmul.f32 %v5207, %v2730
      %v5222 = vmul.f32 %v5210, %v2730
      %v5223 = vmul.f32 %v5213, %v2730
      %v5224 = vmul.f32 %v5216, %v2730
      %v5225 = vsub.f32 %v841, %v5217
      %v5226 = vsub.f32 %v843, %v5218
      %v5227 = vsub.f32 %v846, %v5219
      %v5228 = vsub.f32 %v848, %v5220
      %v5229 = vsub.f32 %v851, %v5221
      %v5230 = vsub.f32 %v853, %v5222
      %v5231 = vsub.f32 %v856, %v5223
      %v5232 = vsub.f32 %v858, %v5224
      %v5233 = vmul.f32 %v5225, %v5225
      %v5234 = vmul.f32 %v5226, %v5226
      %v5235 = vmul.f32 %v5227, %v5227
      %v5236 = vmul.f32 %v5228, %v5228
      %v5237 = vmul.f32 %v5229, %v5229
      %v5238 = vmul.f32 %v5230, %v5230
      %v5239 = vmul.f32 %v5231, %v5231
      %v5240 = vmul.f32 %v5232, %v5232
      %5249 = vrot.lane.b32.xlu0 %v5233, 100
      %v5250 = vpop.permute.xlu0 %5249
      %5251 = vrot.lane.b32.xlu0 %v5234, 100
      %v5252 = vpop.permute.xlu0 %5251
      %5253 = vrot.lane.b32.xlu0 %v5235, 100
      %v5254 = vpop.permute.xlu0 %5253
      %5255 = vrot.lane.b32.xlu0 %v5236, 100
      %v5256 = vpop.permute.xlu0 %5255
      %5257 = vrot.lane.b32.xlu0 %v5237, 100
      %v5258 = vpop.permute.xlu0 %5257
      %5259 = vrot.lane.b32.xlu0 %v5238, 100
      %v5260 = vpop.permute.xlu0 %5259
      %5261 = vrot.lane.b32.xlu0 %v5239, 100
      %v5262 = vpop.permute.xlu0 %5261
      %5263 = vrot.lane.b32.xlu0 %v5240, 100
      %v5264 = vpop.permute.xlu0 %5263
      %v5273 = vsel %vm2174, %v5250, 0.0
      %5274 = vadd.xlane.f32.xlu0 %v5273
      %v5275 = vpop.xlane.xlu0 %5274
      %v5276 = vsel %vm2174, %v5252, 0.0
      %5277 = vadd.xlane.f32.xlu0 %v5276
      %v5278 = vpop.xlane.xlu0 %5277
      %v5279 = vsel %vm2174, %v5254, 0.0
      %5280 = vadd.xlane.f32.xlu0 %v5279
      %v5281 = vpop.xlane.xlu0 %5280
      %v5282 = vsel %vm2174, %v5256, 0.0
      %5283 = vadd.xlane.f32.xlu0 %v5282
      %v5284 = vpop.xlane.xlu0 %5283
      %v5285 = vsel %vm2174, %v5258, 0.0
      %5286 = vadd.xlane.f32.xlu0 %v5285
      %v5287 = vpop.xlane.xlu0 %5286
      %v5288 = vsel %vm2174, %v5260, 0.0
      %5289 = vadd.xlane.f32.xlu0 %v5288
      %v5290 = vpop.xlane.xlu0 %5289
      %v5291 = vsel %vm2174, %v5262, 0.0
      %5292 = vadd.xlane.f32.xlu0 %v5291
      %v5293 = vpop.xlane.xlu0 %5292
      %v5294 = vsel %vm2174, %v5264, 0.0
      %5295 = vadd.xlane.f32.xlu0 %v5294
      %v5296 = vpop.xlane.xlu0 %5295
      %v5297 = vmul.f32 %v5275, %v2730
      %v5298 = vmul.f32 %v5278, %v2730
      %v5299 = vmul.f32 %v5281, %v2730
      %v5300 = vmul.f32 %v5284, %v2730
      %v5301 = vmul.f32 %v5287, %v2730
      %v5302 = vmul.f32 %v5290, %v2730
      %v5303 = vmul.f32 %v5293, %v2730
      %v5304 = vmul.f32 %v5296, %v2730
      %v5305 = vadd.f32 %v5297, 1e-06
      %v5306 = vadd.f32 %v5298, 1e-06
      %v5307 = vadd.f32 %v5299, 1e-06
      %v5308 = vadd.f32 %v5300, 1e-06
      %v5309 = vadd.f32 %v5301, 1e-06
      %v5310 = vadd.f32 %v5302, 1e-06
      %v5311 = vadd.f32 %v5303, 1e-06
      %v5312 = vadd.f32 %v5304, 1e-06
      %v5313 = vrsqrt.pop %v5305
      %v5314 = vmul.f32 %v5313, %v5305
      %v5315 = vmul.f32 %v5314, %v5313
      %v5316 = vmul.f32 0.5, %v5315
      %v5317 = vsub.f32 1.5, %v5316
      %v5318 = vmul.f32 %v5313, %v5317
      %vm5319 = vweird.f32 %v5305
      %vm5320 = vweird.f32 %v5313
      %vm5321 = vmor %vm5319, %vm5320
      %v5322 = vsel %vm5321, %v5313, %v5318
      %v5323 = vrsqrt.pop %v5306
      %v5324 = vmul.f32 %v5323, %v5306
      %v5325 = vmul.f32 %v5324, %v5323
      %v5326 = vmul.f32 0.5, %v5325
      %v5327 = vsub.f32 1.5, %v5326
      %v5328 = vmul.f32 %v5323, %v5327
      %vm5329 = vweird.f32 %v5306
      %vm5330 = vweird.f32 %v5323
      %vm5331 = vmor %vm5329, %vm5330
      %v5332 = vsel %vm5331, %v5323, %v5328
      %v5333 = vrsqrt.pop %v5307
      %v5334 = vmul.f32 %v5333, %v5307
      %v5335 = vmul.f32 %v5334, %v5333
      %v5336 = vmul.f32 0.5, %v5335
      %v5337 = vsub.f32 1.5, %v5336
      %v5338 = vmul.f32 %v5333, %v5337
      %vm5339 = vweird.f32 %v5307
      %vm5340 = vweird.f32 %v5333
      %vm5341 = vmor %vm5339, %vm5340
      %v5342 = vsel %vm5341, %v5333, %v5338
      %v5343 = vrsqrt.pop %v5308
      %v5344 = vmul.f32 %v5343, %v5308
      %v5345 = vmul.f32 %v5344, %v5343
      %v5346 = vmul.f32 0.5, %v5345
      %v5347 = vsub.f32 1.5, %v5346
      %v5348 = vmul.f32 %v5343, %v5347
      %vm5349 = vweird.f32 %v5308
      %vm5350 = vweird.f32 %v5343
      %vm5351 = vmor %vm5349, %vm5350
      %v5352 = vsel %vm5351, %v5343, %v5348
      %v5353 = vrsqrt.pop %v5309
      %v5354 = vmul.f32 %v5353, %v5309
      %v5355 = vmul.f32 %v5354, %v5353
      %v5356 = vmul.f32 0.5, %v5355
      %v5357 = vsub.f32 1.5, %v5356
      %v5358 = vmul.f32 %v5353, %v5357
      %vm5359 = vweird.f32 %v5309
      %vm5360 = vweird.f32 %v5353
      %vm5361 = vmor %vm5359, %vm5360
      %v5362 = vsel %vm5361, %v5353, %v5358
      %v5363 = vrsqrt.pop %v5310
      %v5364 = vmul.f32 %v5363, %v5310
      %v5365 = vmul.f32 %v5364, %v5363
      %v5366 = vmul.f32 0.5, %v5365
      %v5367 = vsub.f32 1.5, %v5366
      %v5368 = vmul.f32 %v5363, %v5367
      %vm5369 = vweird.f32 %v5310
      %vm5370 = vweird.f32 %v5363
      %vm5371 = vmor %vm5369, %vm5370
      %v5372 = vsel %vm5371, %v5363, %v5368
      %v5373 = vrsqrt.pop %v5311
      %v5374 = vmul.f32 %v5373, %v5311
      %v5375 = vmul.f32 %v5374, %v5373
      %v5376 = vmul.f32 0.5, %v5375
      %v5377 = vsub.f32 1.5, %v5376
      %v5378 = vmul.f32 %v5373, %v5377
      %vm5379 = vweird.f32 %v5311
      %vm5380 = vweird.f32 %v5373
      %vm5381 = vmor %vm5379, %vm5380
      %v5382 = vsel %vm5381, %v5373, %v5378
      %v5383 = vrsqrt.pop %v5312
      %v5384 = vmul.f32 %v5383, %v5312
      %v5385 = vmul.f32 %v5384, %v5383
      %v5386 = vmul.f32 0.5, %v5385
      %v5387 = vsub.f32 1.5, %v5386
      %v5388 = vmul.f32 %v5383, %v5387
      %vm5389 = vweird.f32 %v5312
      %vm5390 = vweird.f32 %v5383
      %vm5391 = vmor %vm5389, %vm5390
      %v5392 = vsel %vm5391, %v5383, %v5388
      %v5393 = vmul.f32 %v5225, %v5322
      %v5394 = vmul.f32 %v5226, %v5332
      %v5395 = vmul.f32 %v5227, %v5342
      %v5396 = vmul.f32 %v5228, %v5352
      %v5397 = vmul.f32 %v5229, %v5362
      %v5398 = vmul.f32 %v5230, %v5372
      %v5399 = vmul.f32 %v5231, %v5382
      %v5400 = vmul.f32 %v5232, %v5392
      %v5401 = vperm.slane %v5167, 0
      %5403 = vrot.lane.b32.xlu0 %v5401, 28
      %v5404 = vpop.permute.xlu0 %5403
      %v5406 = vmul.f32 %v5393, %v5404
      %v5407 = vmul.f32 %v5394, %v5404
      %v5408 = vmul.f32 %v5395, %v5404
      %v5409 = vmul.f32 %v5396, %v5404
      %v5410 = vmul.f32 %v5397, %v5404
      %v5411 = vmul.f32 %v5398, %v5404
      %v5412 = vmul.f32 %v5399, %v5404
      %v5413 = vmul.f32 %v5400, %v5404
      %v5414 = vperm.slane %v5168, 0
      %5416 = vrot.lane.b32.xlu0 %v5414, 28
      %v5417 = vpop.permute.xlu0 %5416
      %v5419 = vadd.f32 %v5406, %v5417
      %v5420 = vadd.f32 %v5407, %v5417
      %v5421 = vadd.f32 %v5408, %v5417
      %v5422 = vadd.f32 %v5409, %v5417
      %v5423 = vadd.f32 %v5410, %v5417
      %v5424 = vadd.f32 %v5411, %v5417
      %v5425 = vadd.f32 %v5412, %v5417
      %v5426 = vadd.f32 %v5413, %v5417
      %v5427 = vpack.c.bf16 %v5160, %v5159
      %v5428 = vpack.c.bf16 %v5162, %v5161
      %v5429 = vpack.c.bf16 %v5164, %v5163
      %v5430 = vpack.c.bf16 %v5166, %v5165
      %v5431 = vpack.c.bf16 %v5420, %v5419
      %v5432 = vpack.c.bf16 %v5422, %v5421
      %v5433 = vpack.c.bf16 %v5424, %v5423
      %v5434 = vpack.c.bf16 %v5426, %v5425
      %5439 = vrot.lane.b32.xlu0 %v5427, 116
      %v5440 = vpop.permute.xlu0 %5439
      %5441 = vrot.lane.b32.xlu0 %v5428, 116
      %v5442 = vpop.permute.xlu0 %5441
      %5443 = vrot.lane.b32.xlu0 %v5429, 116
      %v5444 = vpop.permute.xlu0 %5443
      %5445 = vrot.lane.b32.xlu0 %v5430, 116
      %v5446 = vpop.permute.xlu0 %5445
      %5451 = vrot.lane.b32.xlu0 %v5431, 100
      %v5452 = vpop.permute.xlu0 %5451
      %5453 = vrot.lane.b32.xlu0 %v5432, 100
      %v5454 = vpop.permute.xlu0 %5453
      %5455 = vrot.lane.b32.xlu0 %v5433, 100
      %v5456 = vpop.permute.xlu0 %5455
      %5457 = vrot.lane.b32.xlu0 %v5434, 100
      %v5458 = vpop.permute.xlu0 %5457
      %v5460 = vsel %vm2174, %v5440, 0
      %v5463 = vsel %vm2174, %v5442, 0
      %v5466 = vsel %vm2174, %v5444, 0
      %v5469 = vsel %vm2174, %v5446, 0
      %v5472 = vsel %vm2174, %v5452, 0
      %v5475 = vsel %vm2174, %v5454, 0
      %v5478 = vsel %vm2174, %v5456, 0
      %v5481 = vsel %vm2174, %v5458, 0
      %5483 = vmatpush.bf16.xpose.msra.mxu0 0
      %5484 = vmatpush.bf16.xpose.msra.mxu0 0
      %5485 = vmatpush.bf16.xpose.msra.mxu0 0
      %5486 = vmatpush.bf16.xpose.msra.mxu0 0
      %5487 = vmatpush.bf16.xpose.msra.mxu0 %v5481
      %5488 = vmatpush.bf16.xpose.msra.mxu0 %v5478
      %5489 = vmatpush.bf16.xpose.msra.mxu0 %v5475
      %5490 = vmatpush.bf16.xpose.msra.mxu0 %v5472
      %5491 = vmatmul.bf16.gmra.mxu0 %v5460
      %v5492 = vpop.f32.mrf.mxu0
      %v5493 = vadd.f32 0.0, %v5492
      %v5494 = vpop.f32.mrf.mxu0
      %v5495 = vadd.f32 0.0, %v5494
      %5496 = vmatmul.bf16.gmra.mxu0 %v5463
      %v5497 = vpop.f32.mrf.mxu0
      %v5498 = vadd.f32 0.0, %v5497
      %v5499 = vpop.f32.mrf.mxu0
      %v5500 = vadd.f32 0.0, %v5499
      %5501 = vmatmul.bf16.gmra.mxu0 %v5466
      %v5502 = vpop.f32.mrf.mxu0
      %v5503 = vadd.f32 0.0, %v5502
      %v5504 = vpop.f32.mrf.mxu0
      %v5505 = vadd.f32 0.0, %v5504
      %5506 = vmatmul.bf16.gmra.mxu0 %v5469
      %v5507 = vpop.f32.mrf.mxu0
      %v5508 = vadd.f32 0.0, %v5507
      %v5509 = vpop.f32.mrf.mxu0
      %v5510 = vadd.f32 0.0, %v5509
      %5511 = vdwg.mxu0
      %v5512 = vmul.f32 %v5493, 0.5
      %v5513 = vmul.f32 %v5495, 0.5
      %v5514 = vmul.f32 %v5498, 0.5
      %v5515 = vmul.f32 %v5500, 0.5
      %v5516 = vmul.f32 %v5503, 0.5
      %v5517 = vmul.f32 %v5505, 0.5
      %v5518 = vmul.f32 %v5508, 0.5
      %v5519 = vmul.f32 %v5510, 0.5
      %v5520 = vsel %vm787, %v5512, -inf
      %5521 = vmax.xlane.f32.xlu0 %v5520
      %v5522 = vpop.xlane.xlu0 %5521
      %v5523 = vsel %vm787, %v5513, -inf
      %5524 = vmax.xlane.f32.xlu0 %v5523
      %v5525 = vpop.xlane.xlu0 %5524
      %v5526 = vsel %vm787, %v5514, -inf
      %5527 = vmax.xlane.f32.xlu0 %v5526
      %v5528 = vpop.xlane.xlu0 %5527
      %v5529 = vsel %vm787, %v5515, -inf
      %5530 = vmax.xlane.f32.xlu0 %v5529
      %v5531 = vpop.xlane.xlu0 %5530
      %v5532 = vsel %vm787, %v5516, -inf
      %5533 = vmax.xlane.f32.xlu0 %v5532
      %v5534 = vpop.xlane.xlu0 %5533
      %v5535 = vsel %vm787, %v5517, -inf
      %5536 = vmax.xlane.f32.xlu0 %v5535
      %v5537 = vpop.xlane.xlu0 %5536
      %v5538 = vsel %vm787, %v5518, -inf
      %5539 = vmax.xlane.f32.xlu0 %v5538
      %v5540 = vpop.xlane.xlu0 %5539
      %v5541 = vsel %vm787, %v5519, -inf
      %5542 = vmax.xlane.f32.xlu0 %v5541
      %v5543 = vpop.xlane.xlu0 %5542
      %v5544 = vsub.f32 %v5512, %v5522
      %v5545 = vsub.f32 %v5513, %v5525
      %v5546 = vsub.f32 %v5514, %v5528
      %v5547 = vsub.f32 %v5515, %v5531
      %v5548 = vsub.f32 %v5516, %v5534
      %v5549 = vsub.f32 %v5517, %v5537
      %v5550 = vsub.f32 %v5518, %v5540
      %v5551 = vsub.f32 %v5519, %v5543
      %v5552 = vmul.f32 %v5544, 1.442695
      %v5553 = vpow.pop %v5552
      %v5554 = vmul.f32 %v5545, 1.442695
      %v5555 = vpow.pop %v5554
      %v5556 = vmul.f32 %v5546, 1.442695
      %v5557 = vpow.pop %v5556
      %v5558 = vmul.f32 %v5547, 1.442695
      %v5559 = vpow.pop %v5558
      %v5560 = vmul.f32 %v5548, 1.442695
      %v5561 = vpow.pop %v5560
      %v5562 = vmul.f32 %v5549, 1.442695
      %v5563 = vpow.pop %v5562
      %v5564 = vmul.f32 %v5550, 1.442695
      %v5565 = vpow.pop %v5564
      %v5566 = vmul.f32 %v5551, 1.442695
      %v5567 = vpow.pop %v5566
      %v5568 = vsel %vm787, %v5553, 0.0
      %5569 = vadd.xlane.f32.xlu0 %v5568
      %v5570 = vpop.xlane.xlu0 %5569
      %v5571 = vsel %vm787, %v5555, 0.0
      %5572 = vadd.xlane.f32.xlu0 %v5571
      %v5573 = vpop.xlane.xlu0 %5572
      %v5574 = vsel %vm787, %v5557, 0.0
      %5575 = vadd.xlane.f32.xlu0 %v5574
      %v5576 = vpop.xlane.xlu0 %5575
      %v5577 = vsel %vm787, %v5559, 0.0
      %5578 = vadd.xlane.f32.xlu0 %v5577
      %v5579 = vpop.xlane.xlu0 %5578
      %v5580 = vsel %vm787, %v5561, 0.0
      %5581 = vadd.xlane.f32.xlu0 %v5580
      %v5582 = vpop.xlane.xlu0 %5581
      %v5583 = vsel %vm787, %v5563, 0.0
      %5584 = vadd.xlane.f32.xlu0 %v5583
      %v5585 = vpop.xlane.xlu0 %5584
      %v5586 = vsel %vm787, %v5565, 0.0
      %5587 = vadd.xlane.f32.xlu0 %v5586
      %v5588 = vpop.xlane.xlu0 %5587
      %v5589 = vsel %vm787, %v5567, 0.0
      %5590 = vadd.xlane.f32.xlu0 %v5589
      %v5591 = vpop.xlane.xlu0 %5590
      %v5592 = vrcp.pop %v5570
      %v5593 = vrcp.pop %v5573
      %v5594 = vrcp.pop %v5576
      %v5595 = vrcp.pop %v5579
      %v5596 = vrcp.pop %v5582
      %v5597 = vrcp.pop %v5585
      %v5598 = vrcp.pop %v5588
      %v5599 = vrcp.pop %v5591
      %v5600 = vmul.f32 %v5553, %v5592
      %v5601 = vmul.f32 %v5555, %v5593
      %v5602 = vmul.f32 %v5557, %v5594
      %v5603 = vmul.f32 %v5559, %v5595
      %v5604 = vmul.f32 %v5561, %v5596
      %v5605 = vmul.f32 %v5563, %v5597
      %v5606 = vmul.f32 %v5565, %v5598
      %v5607 = vmul.f32 %v5567, %v5599
      %v5608 = vpack.c.bf16 %v5601, %v5600
      %v5609 = vpack.c.bf16 %v5603, %v5602
      %v5610 = vpack.c.bf16 %v5605, %v5604
      %v5611 = vpack.c.bf16 %v5607, %v5606
      %5612 = vrot.lane.b32.xlu0 %v3342, 116
      %v5613 = vpop.permute.xlu0 %5612
      %5614 = vrot.lane.b32.xlu0 %v3343, 116
      %v5615 = vpop.permute.xlu0 %5614
      %5616 = vrot.lane.b32.xlu0 %v3344, 116
      %v5617 = vpop.permute.xlu0 %5616
      %5618 = vrot.lane.b32.xlu0 %v3345, 116
      %v5619 = vpop.permute.xlu0 %5618
      %v5625 = vsel %vm787, %v5608, 0
      %v5628 = vsel %vm787, %v5609, 0
      %v5631 = vsel %vm787, %v5610, 0
      %v5634 = vsel %vm787, %v5611, 0
      %5636 = vmatpush.bf16.msra.mxu0 0
      %5637 = vmatpush.bf16.msra.mxu0 0
      %5638 = vmatpush.bf16.msra.mxu0 0
      %5639 = vmatpush.bf16.msra.mxu0 0
      %5640 = vmatpush.bf16.msra.mxu0 %v5619
      %5641 = vmatpush.bf16.msra.mxu0 %v5617
      %5642 = vmatpush.bf16.msra.mxu0 %v5615
      %5643 = vmatpush.bf16.msra.mxu0 %v5613
      %5644 = vmatmul.bf16.gmra.mxu0 %v5625
      %v5645 = vpop.f32.mrf.mxu0
      %v5646 = vadd.f32 0.0, %v5645
      %v5647 = vpop.f32.mrf.mxu0
      %v5648 = vadd.f32 0.0, %v5647
      %5649 = vmatmul.bf16.gmra.mxu0 %v5628
      %v5650 = vpop.f32.mrf.mxu0
      %v5651 = vadd.f32 0.0, %v5650
      %v5652 = vpop.f32.mrf.mxu0
      %v5653 = vadd.f32 0.0, %v5652
      %5654 = vmatmul.bf16.gmra.mxu0 %v5631
      %v5655 = vpop.f32.mrf.mxu0
      %v5656 = vadd.f32 0.0, %v5655
      %v5657 = vpop.f32.mrf.mxu0
      %v5658 = vadd.f32 0.0, %v5657
      %5659 = vmatmul.bf16.gmra.mxu0 %v5634
      %v5660 = vpop.f32.mrf.mxu0
      %v5661 = vadd.f32 0.0, %v5660
      %v5662 = vpop.f32.mrf.mxu0
      %v5663 = vadd.f32 0.0, %v5662
      %5664 = vdwg.mxu0
      %5673 = vrot.lane.b32.xlu0 %v4130, 4
      %v5674 = vpop.permute.xlu0 %5673
      %5675 = vrot.lane.b32.xlu0 %v4132, 4
      %v5676 = vpop.permute.xlu0 %5675
      %5677 = vrot.lane.b32.xlu0 %v4135, 4
      %v5678 = vpop.permute.xlu0 %5677
      %5679 = vrot.lane.b32.xlu0 %v4137, 4
      %v5680 = vpop.permute.xlu0 %5679
      %5681 = vrot.lane.b32.xlu0 %v4140, 4
      %v5682 = vpop.permute.xlu0 %5681
      %5683 = vrot.lane.b32.xlu0 %v4142, 4
      %v5684 = vpop.permute.xlu0 %5683
      %5685 = vrot.lane.b32.xlu0 %v4145, 4
      %v5686 = vpop.permute.xlu0 %5685
      %5687 = vrot.lane.b32.xlu0 %v4147, 4
      %v5688 = vpop.permute.xlu0 %5687
      %5705 = vrot.lane.b32.xlu0 %v4888, 8
      %v5706 = vpop.permute.xlu0 %5705
      %5707 = vrot.lane.b32.xlu0 %v4890, 8
      %v5708 = vpop.permute.xlu0 %5707
      %5709 = vrot.lane.b32.xlu0 %v4893, 8
      %v5710 = vpop.permute.xlu0 %5709
      %5711 = vrot.lane.b32.xlu0 %v4895, 8
      %v5712 = vpop.permute.xlu0 %5711
      %5713 = vrot.lane.b32.xlu0 %v4898, 8
      %v5714 = vpop.permute.xlu0 %5713
      %5715 = vrot.lane.b32.xlu0 %v4900, 8
      %v5716 = vpop.permute.xlu0 %5715
      %5717 = vrot.lane.b32.xlu0 %v4903, 8
      %v5718 = vpop.permute.xlu0 %5717
      %5719 = vrot.lane.b32.xlu0 %v4905, 8
      %v5720 = vpop.permute.xlu0 %5719
      %5737 = vrot.lane.b32.xlu0 %v5646, 12
      %v5738 = vpop.permute.xlu0 %5737
      %5739 = vrot.lane.b32.xlu0 %v5648, 12
      %v5740 = vpop.permute.xlu0 %5739
      %5741 = vrot.lane.b32.xlu0 %v5651, 12
      %v5742 = vpop.permute.xlu0 %5741
      %5743 = vrot.lane.b32.xlu0 %v5653, 12
      %v5744 = vpop.permute.xlu0 %5743
      %5745 = vrot.lane.b32.xlu0 %v5656, 12
      %v5746 = vpop.permute.xlu0 %5745
      %5747 = vrot.lane.b32.xlu0 %v5658, 12
      %v5748 = vpop.permute.xlu0 %5747
      %5749 = vrot.lane.b32.xlu0 %v5661, 12
      %v5750 = vpop.permute.xlu0 %5749
      %5751 = vrot.lane.b32.xlu0 %v5663, 12
      %v5752 = vpop.permute.xlu0 %5751
      %v5761 = vsel %vm2174, %v3368, %v5674
      %v5762 = vsel %vm2174, %v3370, %v5676
      %v5763 = vsel %vm2174, %v3373, %v5678
      %v5764 = vsel %vm2174, %v3375, %v5680
      %v5765 = vsel %vm2174, %v3378, %v5682
      %v5766 = vsel %vm2174, %v3380, %v5684
      %v5767 = vsel %vm2174, %v3383, %v5686
      %v5768 = vsel %vm2174, %v3385, %v5688
      %v5769 = vsel %vm724, %v5761, %v5706
      %v5770 = vsel %vm724, %v5762, %v5708
      %v5771 = vsel %vm724, %v5763, %v5710
      %v5772 = vsel %vm724, %v5764, %v5712
      %v5773 = vsel %vm724, %v5765, %v5714
      %v5774 = vsel %vm724, %v5766, %v5716
      %v5775 = vsel %vm724, %v5767, %v5718
      %v5776 = vsel %vm724, %v5768, %v5720
      %v5777 = vsel %vm2239, %v5769, %v5738
      %v5778 = vsel %vm2239, %v5770, %v5740
      %v5779 = vsel %vm2239, %v5771, %v5742
      %v5780 = vsel %vm2239, %v5772, %v5744
      %v5781 = vsel %vm2239, %v5773, %v5746
      %v5782 = vsel %vm2239, %v5774, %v5748
      %v5783 = vsel %vm2239, %v5775, %v5750
      %v5784 = vsel %vm2239, %v5776, %v5752
      %5785 = vst.msk [vmem:[%s387] sm:$0xff] %vm733, %v5777
      %5786 = vst.msk [vmem:[%s387 + $0x8] sm:$0xff] %vm733, %v5778
      %5787 = vst.msk [vmem:[%s387 + $0x10] sm:$0xff] %vm733, %v5779
      %5788 = vst.msk [vmem:[%s387 + $0x18] sm:$0xff] %vm733, %v5780
      %5789 = vst.msk [vmem:[%s387 + $0x20] sm:$0xff] %vm733, %v5781
      %5790 = vst.msk [vmem:[%s387 + $0x28] sm:$0xff] %vm733, %v5782
      %5791 = vst.msk [vmem:[%s387 + $0x30] sm:$0xff] %vm733, %v5783
      %5792 = vst.msk [vmem:[%s387 + $0x38] sm:$0xff] %vm733, %v5784
      %5793 = vrot.lane.b32.xlu0 %v841, 96
      %v5794 = vpop.permute.xlu0 %5793
      %5795 = vrot.lane.b32.xlu0 %v843, 96
      %v5796 = vpop.permute.xlu0 %5795
      %5797 = vrot.lane.b32.xlu0 %v846, 96
      %v5798 = vpop.permute.xlu0 %5797
      %5799 = vrot.lane.b32.xlu0 %v848, 96
      %v5800 = vpop.permute.xlu0 %5799
      %5801 = vrot.lane.b32.xlu0 %v851, 96
      %v5802 = vpop.permute.xlu0 %5801
      %5803 = vrot.lane.b32.xlu0 %v853, 96
      %v5804 = vpop.permute.xlu0 %5803
      %5805 = vrot.lane.b32.xlu0 %v856, 96
      %v5806 = vpop.permute.xlu0 %5805
      %5807 = vrot.lane.b32.xlu0 %v858, 96
      %v5808 = vpop.permute.xlu0 %5807
      %5817 = vst.msk [vmem:[%s392] sm:$0xff] %vm2174, %v5794
      %5818 = vst.msk [vmem:[%s392 + $0x8] sm:$0xff] %vm2174, %v5796
      %5819 = vst.msk [vmem:[%s392 + $0x10] sm:$0xff] %vm2174, %v5798
      %5820 = vst.msk [vmem:[%s392 + $0x18] sm:$0xff] %vm2174, %v5800
      %5821 = vst.msk [vmem:[%s392 + $0x20] sm:$0xff] %vm2174, %v5802
      %5822 = vst.msk [vmem:[%s392 + $0x28] sm:$0xff] %vm2174, %v5804
      %5823 = vst.msk [vmem:[%s392 + $0x30] sm:$0xff] %vm2174, %v5806
      %5824 = vst.msk [vmem:[%s392 + $0x38] sm:$0xff] %vm2174, %v5808
      %p5825 = scmp.lt.s32.totalorder %s22, 1
      %s5826 = scalar_select %p5825, %s22, 1
      %s5827 = smul.addr %s5826, 8
      %s5828 = smul.addr %s5827, 8
      %s5829 = scalar_lea.vmem %s9, %s5828
      %p5830 = scmp.lt.s32.totalorder %s22, 1
      %s5831 = scalar_select %p5830, %s22, 1
      %s5832 = smul.addr %s5831, 8
      %s5833 = smul.addr %s5832, 8
      %s5834 = scalar_lea.vmem %s10, %s5833
      // Predicated region
      $region57: #{upblock_forward.3} parent=55 // pred_check
        %p5835 = pneg %p239
      $region58: #{upblock_forward.3} parent=55 // pred_check_branch
        %5837 = sbr.rel (%p5835) target = $region60
      $region59: #{upblock_forward.3} parent=55 // pred_region
        _
      $region60: #{upblock_forward.3} parent=55 // pred_fallthru
        _
      // Predicated region
      $region61: #{upblock_forward.3} parent=55 // pred_check
        %p5838 = pneg %p265
      $region62: #{upblock_forward.3} parent=55 // pred_check_branch
        %5840 = sbr.rel (%p5838) target = $region64
      $region63: #{upblock_forward.3} parent=55 // pred_region
        _
      $region64: #{upblock_forward.3} parent=55 // pred_fallthru
        _
    $region56: #{upblock_forward.3} parent=5 // pred_fallthru
      _
    %p5841 = scmp.le.s32.totalorder 2, %s17
    // Predicated region
    $region65: #{upblock_forward.3} parent=5 // pred_check
      %p5842 = pneg %p5841
    $region66: #{upblock_forward.3} parent=5 // pred_check_branch
      %5844 = sbr.rel (%p5842) target = $region68
    $region67: #{upblock_forward.3} parent=5 // pred_region
      %s5845 = ssub.s32 %s17, 2
      // Predicated region
      $region69: #{upblock_forward.3} parent=67 // pred_check
        %p5846 = pneg %p245
      $region70: #{upblock_forward.3} parent=67 // pred_check_branch
        %5848 = sbr.rel (%p5846) target = $region72
      $region71: #{upblock_forward.3} parent=67 // pred_region
        %p5849 = scmp.lt.s32.totalorder %s23, 1
        %s5850 = scalar_select %p5849, %s23, 1
        %s5851 = smul.addr %s5850, 8
        %s5852 = smul.addr %s5851, 8
        %s5853 = scalar_lea.vmem %s9, %s5852
      $region72: #{upblock_forward.3} parent=67 // pred_fallthru
        _
      // Predicated region
      $region73: #{upblock_forward.3} parent=67 // pred_check
        %p5854 = pneg %p271
      $region74: #{upblock_forward.3} parent=67 // pred_check_branch
        %5856 = sbr.rel (%p5854) target = $region76
      $region75: #{upblock_forward.3} parent=67 // pred_region
        %p5857 = scmp.lt.s32.totalorder %s23, 1
        %s5858 = scalar_select %p5857, %s23, 1
        %s5859 = smul.addr %s5858, 8
        %s5860 = smul.addr %s5859, 8
        %s5861 = scalar_lea.vmem %s10, %s5860
      $region76: #{upblock_forward.3} parent=67 // pred_fallthru
        _
    $region68: #{upblock_forward.3} parent=5 // pred_fallthru
      _
  $region6: #{upblock_forward.3} parent=0 // loop_footer
    %s21 = sadd.s32 1, %s17
  $region7: #{upblock_forward.3} parent=0 // loop_footer_branch
    %16 = sbr.rel target = $region3
  $region8: #{upblock_forward.3} parent=0 // loop_exit
    _

// kernel: upblock_forward.5
$region0: #{upblock_forward.5}
  #allocation0 [shape = 'u32[]', space=smem, size = 0x4, offset = 0x4, fixed_abs, tag = 'smem constant byte address 0x4 - core index']
  #allocation1 [shape = 'u32[72,128]{1,0:T(1,128)}', space=vmem, size = 0x9000, scoped, tag = 'internal scratch']
  #allocation2 [shape = 'f32[18,18,4]{2,1,0:T(8,128)}', space=vmem, size = 0x36000, scoped, tag = 'scratch operand']
  %s0 = inlined_call_operand.vmem [shape: f32[2,18,18,8], index: 0, kind: input, shape index: {}]
  %s1 = inlined_call_operand.vmem [shape: f32[72,4], index: 1, kind: input, shape index: {}]
  %s2 = inlined_call_operand.vmem [shape: f32[1,4], index: 2, kind: input, shape index: {}]
  %s3 = inlined_call_operand.vmem [shape: f32[36,4], index: 3, kind: input, shape index: {}]
  %s4 = inlined_call_operand.vmem [shape: f32[1,4], index: 4, kind: input, shape index: {}]
  %s5 = inlined_call_operand.vmem [shape: f32[2,4,256], index: 5, kind: output, shape index: {}]
  %s6 = sld [smem:[#allocation0]]
  $region53: #{upblock_forward.5} parent=0
    _
  %s8 = ssub.s32 1, %s6
  %s9 = scalar_select 0, %s8, %s6
  loop: start=0, step=1, limit=4
  $region2: #{upblock_forward.5} parent=0 // loop_pre_header
    _
  $region3: #{upblock_forward.5} parent=0 // loop_header
    %s11 = sphi 0, %s15
    %p12 = scmp.ge.s32.totalorder %s11, 4
    %s21 = sphi 0, %s23
    %s24 = sphi 0, %s21
    %s25 = sphi 0, %s24
    %s41 = sphi 0, %s25
    %s45 = sphi 0, %s45
    %s47 = sphi 0, %s45
    %s48 = sphi 0, %s47
    %s62 = sphi 0, %s48
    %s66 = sphi 0, %s66
    %s68 = sphi 0, %s66
    %s69 = sphi 0, %s68
    %s83 = sphi 0, %s69
    %s87 = sphi 0, %s87
    %s89 = sphi 0, %s87
    %s90 = sphi 0, %s89
    %s104 = sphi 0, %s90
    %s108 = sphi 0, %s108
    %s110 = sphi 0, %s108
    %s111 = sphi 0, %s110
    %s125 = sphi 0, %s111
    %s131 = sphi 0, %s133
    %s134 = sphi 0, %s131
    %s135 = sphi 0, %s134
    %s151 = sphi 0, %s135
  $region4: #{upblock_forward.5} parent=0 // loop_header_branch
    %14 = sbr.rel (%p12) target = $region8
  $region5: #{upblock_forward.5} parent=0 // loop_body
    %s16 = ssub.s32 %s11, 1
    %s17 = ssub.s32 %s11, 2
    %s18 = sadd.s32 %s11, 1
    %s19 = ssub.s32 %s11, %s18
    %p20 = scmp.eq.s32.totalorder %s19, 0
    %s22 = sadd.s32 %s21, 1
    %s23 = scalar_select %p20, %s21, %s22
    %p26 = pneg %p20
    %p27 = scmp.eq.s32.totalorder %s11, 1
    %p28 = por %p26, %p27
    %p29 = scmp.ne.s32.totalorder %s21, %s24
    %p30 = scmp.eq.s32.totalorder %s11, 0
    %p31 = por %p29, %p30
    %p32 = scmp.ne.s32.totalorder %s21, %s24
    %p33 = scmp.eq.s32.totalorder %s16, 1
    %p34 = por %p32, %p33
    %p35 = scmp.ne.s32.totalorder %s24, %s25
    %p36 = scmp.eq.s32.totalorder %s16, 0
    %p37 = por %p35, %p36
    %p38 = scmp.ne.s32.totalorder %s24, %s25
    %p39 = scmp.eq.s32.totalorder %s17, 1
    %p40 = por %p38, %p39
    %p42 = scmp.ne.s32.totalorder %s25, %s41
    %p43 = scmp.eq.s32.totalorder %s17, 0
    %p44 = por %p42, %p43
    %s46 = sadd.s32 %s45, 1
    %p49 = scmp.eq.s32.totalorder %s11, 1
    %p50 = scmp.ne.s32.totalorder %s45, %s47
    %p51 = scmp.eq.s32.totalorder %s11, 0
    %p52 = por %p50, %p51
    %p53 = scmp.ne.s32.totalorder %s45, %s47
    %p54 = scmp.eq.s32.totalorder %s16, 1
    %p55 = por %p53, %p54
    %p56 = scmp.ne.s32.totalorder %s47, %s48
    %p57 = scmp.eq.s32.totalorder %s16, 0
    %p58 = por %p56, %p57
    %p59 = scmp.ne.s32.totalorder %s47, %s48
    %p60 = scmp.eq.s32.totalorder %s17, 1
    %p61 = por %p59, %p60
    %p63 = scmp.ne.s32.totalorder %s48, %s62
    %p64 = scmp.eq.s32.totalorder %s17, 0
    %p65 = por %p63, %p64
    %s67 = sadd.s32 %s66, 1
    %p70 = scmp.eq.s32.totalorder %s11, 1
    %p71 = scmp.ne.s32.totalorder %s66, %s68
    %p72 = scmp.eq.s32.totalorder %s11, 0
    %p73 = por %p71, %p72
    %p74 = scmp.ne.s32.totalorder %s66, %s68
    %p75 = scmp.eq.s32.totalorder %s16, 1
    %p76 = por %p74, %p75
    %p77 = scmp.ne.s32.totalorder %s68, %s69
    %p78 = scmp.eq.s32.totalorder %s16, 0
    %p79 = por %p77, %p78
    %p80 = scmp.ne.s32.totalorder %s68, %s69
    %p81 = scmp.eq.s32.totalorder %s17, 1
    %p82 = por %p80, %p81
    %p84 = scmp.ne.s32.totalorder %s69, %s83
    %p85 = scmp.eq.s32.totalorder %s17, 0
    %p86 = por %p84, %p85
    %s88 = sadd.s32 %s87, 1
    %p91 = scmp.eq.s32.totalorder %s11, 1
    %p92 = scmp.ne.s32.totalorder %s87, %s89
    %p93 = scmp.eq.s32.totalorder %s11, 0
    %p94 = por %p92, %p93
    %p95 = scmp.ne.s32.totalorder %s87, %s89
    %p96 = scmp.eq.s32.totalorder %s16, 1
    %p97 = por %p95, %p96
    %p98 = scmp.ne.s32.totalorder %s89, %s90
    %p99 = scmp.eq.s32.totalorder %s16, 0
    %p100 = por %p98, %p99
    %p101 = scmp.ne.s32.totalorder %s89, %s90
    %p102 = scmp.eq.s32.totalorder %s17, 1
    %p103 = por %p101, %p102
    %p105 = scmp.ne.s32.totalorder %s90, %s104
    %p106 = scmp.eq.s32.totalorder %s17, 0
    %p107 = por %p105, %p106
    %s109 = sadd.s32 %s108, 1
    %p112 = scmp.eq.s32.totalorder %s11, 1
    %p113 = scmp.ne.s32.totalorder %s108, %s110
    %p114 = scmp.eq.s32.totalorder %s11, 0
    %p115 = por %p113, %p114
    %p116 = scmp.ne.s32.totalorder %s108, %s110
    %p117 = scmp.eq.s32.totalorder %s16, 1
    %p118 = por %p116, %p117
    %p119 = scmp.ne.s32.totalorder %s110, %s111
    %p120 = scmp.eq.s32.totalorder %s16, 0
    %p121 = por %p119, %p120
    %p122 = scmp.ne.s32.totalorder %s110, %s111
    %p123 = scmp.eq.s32.totalorder %s17, 1
    %p124 = por %p122, %p123
    %p126 = scmp.ne.s32.totalorder %s111, %s125
    %p127 = scmp.eq.s32.totalorder %s17, 0
    %p128 = por %p126, %p127
    %s129 = ssub.s32 %s11, %s18
    %p130 = scmp.eq.s32.totalorder %s129, 0
    %s132 = sadd.s32 %s131, 1
    %s133 = scalar_select %p130, %s131, %s132
    %p136 = pneg %p130
    %p137 = scmp.eq.s32.totalorder %s11, 1
    %p138 = por %p136, %p137
    %p139 = scmp.ne.s32.totalorder %s131, %s134
    %p140 = scmp.eq.s32.totalorder %s11, 0
    %p141 = por %p139, %p140
    %p142 = scmp.ne.s32.totalorder %s131, %s134
    %p143 = scmp.eq.s32.totalorder %s16, 1
    %p144 = por %p142, %p143
    %p145 = scmp.ne.s32.totalorder %s134, %s135
    %p146 = scmp.eq.s32.totalorder %s16, 0
    %p147 = por %p145, %p146
    %p148 = scmp.ne.s32.totalorder %s134, %s135
    %p149 = scmp.eq.s32.totalorder %s17, 1
    %p150 = por %p148, %p149
    %p152 = scmp.ne.s32.totalorder %s135, %s151
    %p153 = scmp.eq.s32.totalorder %s17, 0
    %p154 = por %p152, %p153
    %p155 = scmp.le.s32.totalorder 1, %s11
    %p156 = scmp.lt.s32.totalorder %s11, 3
    %p157 = pnand %p155, %p156
    %p158 = pneg %p157
    // Predicated region
    $region9: #{upblock_forward.5} parent=5 // pred_check
      _
    $region10: #{upblock_forward.5} parent=5 // pred_check_branch
      %160 = sbr.rel (%p157) target = $region12
    $region11: #{upblock_forward.5} parent=5 // pred_region
      %s161 = ssub.s32 %s11, 1
      // Predicated region
      $region13: #{upblock_forward.5} parent=11 // pred_check
        %p162 = pneg %p58
      $region14: #{upblock_forward.5} parent=11 // pred_check_branch
        %164 = sbr.rel (%p162) target = $region16
      $region15: #{upblock_forward.5} parent=11 // pred_region
        _
      $region16: #{upblock_forward.5} parent=11 // pred_fallthru
        _
      // Predicated region
      $region17: #{upblock_forward.5} parent=11 // pred_check
        %p165 = pneg %p79
      $region18: #{upblock_forward.5} parent=11 // pred_check_branch
        %167 = sbr.rel (%p165) target = $region20
      $region19: #{upblock_forward.5} parent=11 // pred_region
        _
      $region20: #{upblock_forward.5} parent=11 // pred_fallthru
        _
      // Predicated region
      $region21: #{upblock_forward.5} parent=11 // pred_check
        %p168 = pneg %p100
      $region22: #{upblock_forward.5} parent=11 // pred_check_branch
        %170 = sbr.rel (%p168) target = $region24
      $region23: #{upblock_forward.5} parent=11 // pred_region
        _
      $region24: #{upblock_forward.5} parent=11 // pred_fallthru
        _
      // Predicated region
      $region25: #{upblock_forward.5} parent=11 // pred_check
        %p171 = pneg %p121
      $region26: #{upblock_forward.5} parent=11 // pred_check_branch
        %173 = sbr.rel (%p171) target = $region28
      $region27: #{upblock_forward.5} parent=11 // pred_region
        _
      $region28: #{upblock_forward.5} parent=11 // pred_fallthru
        _
    $region12: #{upblock_forward.5} parent=5 // pred_fallthru
      _
    %p174 = scmp.lt.s32.totalorder %s11, 2
    // Predicated region
    $region29: #{upblock_forward.5} parent=5 // pred_check
      %p175 = pneg %p174
    $region30: #{upblock_forward.5} parent=5 // pred_check_branch
      %177 = sbr.rel (%p175) target = $region32
    $region31: #{upblock_forward.5} parent=5 // pred_region
      // Predicated region
      $region33: #{upblock_forward.5} parent=31 // pred_check
        %p178 = pneg %p31
      $region34: #{upblock_forward.5} parent=31 // pred_check_branch
        %180 = sbr.rel (%p178) target = $region36
      $region35: #{upblock_forward.5} parent=31 // pred_region
        %p181 = scmp.lt.s32.totalorder %s11, 1
        %s182 = scalar_select %p181, %s11, 1
        %s183 = smul.addr %s182, 54
        %s184 = smul.addr %s183, 8
        %s185 = scalar_lea.vmem %s0, %s184
      $region36: #{upblock_forward.5} parent=31 // pred_fallthru
        _
    $region32: #{upblock_forward.5} parent=5 // pred_fallthru
      _
    %p186 = scmp.le.s32.totalorder 1, %s11
    %p187 = scmp.lt.s32.totalorder %s11, 3
    %p188 = pnand %p186, %p187
    %p189 = pneg %p188
    // Predicated region
    $region37: #{upblock_forward.5} parent=5 // pred_check
      _
    $region38: #{upblock_forward.5} parent=5 // pred_check_branch
      %191 = sbr.rel (%p188) target = $region40
    $region39: #{upblock_forward.5} parent=5 // pred_region
      %s192 = ssub.s32 %s11, 1
      %p193 = scmp.lt.s32.totalorder %s16, 1
      %s194 = scalar_select %p193, %s16, 1
      %s195 = smul.addr %s194, 54
      %s196 = smul.addr %s195, 8
      %s197 = scalar_lea.vmem %s0, %s196
      %p198 = pneg %p37
      %p199 = pneg %p34
      %p200 = pneg %p58
      %p201 = pneg %p55
      %p202 = pneg %p79
      %p203 = pneg %p76
      %p204 = pneg %p100
      %p205 = pneg %p97
      %p206 = pneg %p121
      %p207 = pneg %p118
      %p208 = pneg %p147
      %p209 = pneg %p144
      %p210 = scmp.lt.s32.totalorder %s16, 1
      %s211 = scalar_select %p210, %s16, 1
      %s212 = smul.addr %s211, 2
      %s213 = smul.addr %s212, 4
      %s214 = scalar_lea.vmem %s5, %s213
      %p215 = scmp.lt.s32.totalorder %s16, 1
      %s216 = scalar_select %p215, %s16, 1
      %s217 = smul.addr %s216, 54
      %s218 = smul.addr %s217, 8
      %s219 = scalar_lea.vmem %s0, %s218
      %p220 = scmp.lt.s32.totalorder %s16, 1
      %s221 = scalar_select %p220, %s16, 1
      %s222 = smul.addr %s221, 2
      %s223 = smul.addr %s222, 4
      %s224 = scalar_lea.vmem %s5, %s223
      %v226 = vld [vmem:[%s219] sm:$0xff]
      %v227 = vld [vmem:[%s219 + $0x8] sm:$0xff]
      %v228 = vld [vmem:[%s219 + $0x18] sm:$0xff]
      %v229 = vld [vmem:[%s219 + $0x20] sm:$0xff]
      %v230 = vld [vmem:[%s219 + $0x30] sm:$0xff]
      %v231 = vld [vmem:[%s219 + $0x38] sm:$0xff]
      %v232 = vld [vmem:[%s219 + $0x48] sm:$0xff]
      %v233 = vld [vmem:[%s219 + $0x50] sm:$0xff]
      %v234 = vld [vmem:[%s219 + $0x60] sm:$0xff]
      %v235 = vld [vmem:[%s219 + $0x68] sm:$0xff]
      %v236 = vld [vmem:[%s219 + $0x78] sm:$0xff]
      %v237 = vld [vmem:[%s219 + $0x80] sm:$0xff]
      %v238 = vld [vmem:[%s219 + $0x90] sm:$0xff]
      %v239 = vld [vmem:[%s219 + $0x98] sm:$0xff]
      %v240 = vld [vmem:[%s219 + $0xa8] sm:$0xff]
      %v241 = vld [vmem:[%s219 + $0xb0] sm:$0xff]
      %v242 = vld [vmem:[%s219 + $0xc0] sm:$0xff]
      %v243 = vld [vmem:[%s219 + $0xc8] sm:$0xff]
      %v244 = vld [vmem:[%s219 + $0xd8] sm:$0xff]
      %v245 = vld [vmem:[%s219 + $0xe0] sm:$0xff]
      %v246 = vld [vmem:[%s219 + $0xf0] sm:$0xff]
      %v247 = vld [vmem:[%s219 + $0xf8] sm:$0xff]
      %v248 = vld [vmem:[%s219 + $0x108] sm:$0xff]
      %v249 = vld [vmem:[%s219 + $0x110] sm:$0xff]
      %v250 = vld [vmem:[%s219 + $0x120] sm:$0xff]
      %v251 = vld [vmem:[%s219 + $0x128] sm:$0xff]
      %v252 = vld [vmem:[%s219 + $0x138] sm:$0xff]
      %v253 = vld [vmem:[%s219 + $0x140] sm:$0xff]
      %v254 = vld [vmem:[%s219 + $0x150] sm:$0xff]
      %v255 = vld [vmem:[%s219 + $0x158] sm:$0xff]
      %v256 = vld [vmem:[%s219 + $0x168] sm:$0xff]
      %v257 = vld [vmem:[%s219 + $0x170] sm:$0xff]
      %v258 = vld [vmem:[%s219 + $0x1] sm:$0xff]
      %v259 = vld [vmem:[%s219 + $0x9] sm:$0xff]
      %v260 = vld [vmem:[%s219 + $0x19] sm:$0xff]
      %v261 = vld [vmem:[%s219 + $0x21] sm:$0xff]
      %v262 = vld [vmem:[%s219 + $0x31] sm:$0xff]
      %v263 = vld [vmem:[%s219 + $0x39] sm:$0xff]
      %v264 = vld [vmem:[%s219 + $0x49] sm:$0xff]
      %v265 = vld [vmem:[%s219 + $0x51] sm:$0xff]
      %v266 = vld [vmem:[%s219 + $0x61] sm:$0xff]
      %v267 = vld [vmem:[%s219 + $0x69] sm:$0xff]
      %v268 = vld [vmem:[%s219 + $0x79] sm:$0xff]
      %v269 = vld [vmem:[%s219 + $0x81] sm:$0xff]
      %v270 = vld [vmem:[%s219 + $0x91] sm:$0xff]
      %v271 = vld [vmem:[%s219 + $0x99] sm:$0xff]
      %v272 = vld [vmem:[%s219 + $0xa9] sm:$0xff]
      %v273 = vld [vmem:[%s219 + $0xb1] sm:$0xff]
      %v274 = vld [vmem:[%s219 + $0xc1] sm:$0xff]
      %v275 = vld [vmem:[%s219 + $0xc9] sm:$0xff]
      %v276 = vld [vmem:[%s219 + $0xd9] sm:$0xff]
      %v277 = vld [vmem:[%s219 + $0xe1] sm:$0xff]
      %v278 = vld [vmem:[%s219 + $0xf1] sm:$0xff]
      %v279 = vld [vmem:[%s219 + $0xf9] sm:$0xff]
      %v280 = vld [vmem:[%s219 + $0x109] sm:$0xff]
      %v281 = vld [vmem:[%s219 + $0x111] sm:$0xff]
      %v282 = vld [vmem:[%s219 + $0x121] sm:$0xff]
      %v283 = vld [vmem:[%s219 + $0x129] sm:$0xff]
      %v284 = vld [vmem:[%s219 + $0x139] sm:$0xff]
      %v285 = vld [vmem:[%s219 + $0x141] sm:$0xff]
      %v286 = vld [vmem:[%s219 + $0x151] sm:$0xff]
      %v287 = vld [vmem:[%s219 + $0x159] sm:$0xff]
      %v288 = vld [vmem:[%s219 + $0x169] sm:$0xff]
      %v289 = vld [vmem:[%s219 + $0x171] sm:$0xff]
      %v290 = vld [vmem:[%s219 + $0x2] sm:$0xff]
      %v291 = vld [vmem:[%s219 + $0xa] sm:$0xff]
      %v292 = vld [vmem:[%s219 + $0x1a] sm:$0xff]
      %v293 = vld [vmem:[%s219 + $0x22] sm:$0xff]
      %v294 = vld [vmem:[%s219 + $0x32] sm:$0xff]
      %v295 = vld [vmem:[%s219 + $0x3a] sm:$0xff]
      %v296 = vld [vmem:[%s219 + $0x4a] sm:$0xff]
      %v297 = vld [vmem:[%s219 + $0x52] sm:$0xff]
      %v298 = vld [vmem:[%s219 + $0x62] sm:$0xff]
      %v299 = vld [vmem:[%s219 + $0x6a] sm:$0xff]
      %v300 = vld [vmem:[%s219 + $0x7a] sm:$0xff]
      %v301 = vld [vmem:[%s219 + $0x82] sm:$0xff]
      %v302 = vld [vmem:[%s219 + $0x92] sm:$0xff]
      %v303 = vld [vmem:[%s219 + $0x9a] sm:$0xff]
      %v304 = vld [vmem:[%s219 + $0xaa] sm:$0xff]
      %v305 = vld [vmem:[%s219 + $0xb2] sm:$0xff]
      %v306 = vld [vmem:[%s219 + $0xc2] sm:$0xff]
      %v307 = vld [vmem:[%s219 + $0xca] sm:$0xff]
      %v308 = vld [vmem:[%s219 + $0xda] sm:$0xff]
      %v309 = vld [vmem:[%s219 + $0xe2] sm:$0xff]
      %v310 = vld [vmem:[%s219 + $0xf2] sm:$0xff]
      %v311 = vld [vmem:[%s219 + $0xfa] sm:$0xff]
      %v312 = vld [vmem:[%s219 + $0x10a] sm:$0xff]
      %v313 = vld [vmem:[%s219 + $0x112] sm:$0xff]
      %v314 = vld [vmem:[%s219 + $0x122] sm:$0xff]
      %v315 = vld [vmem:[%s219 + $0x12a] sm:$0xff]
      %v316 = vld [vmem:[%s219 + $0x13a] sm:$0xff]
      %v317 = vld [vmem:[%s219 + $0x142] sm:$0xff]
      %v318 = vld [vmem:[%s219 + $0x152] sm:$0xff]
      %v319 = vld [vmem:[%s219 + $0x15a] sm:$0xff]
      %v320 = vld [vmem:[%s219 + $0x16a] sm:$0xff]
      %v321 = vld [vmem:[%s219 + $0x172] sm:$0xff]
      %s322 = scalar_lea.vmem %s219, 24
      %v323 = vld [vmem:[%s322] sm:$0xff]
      %v324 = vld [vmem:[%s322 + $0x8] sm:$0xff]
      %v325 = vld [vmem:[%s322 + $0x18] sm:$0xff]
      %v326 = vld [vmem:[%s322 + $0x20] sm:$0xff]
      %v327 = vld [vmem:[%s322 + $0x30] sm:$0xff]
      %v328 = vld [vmem:[%s322 + $0x38] sm:$0xff]
      %v329 = vld [vmem:[%s322 + $0x48] sm:$0xff]
      %v330 = vld [vmem:[%s322 + $0x50] sm:$0xff]
      %v331 = vld [vmem:[%s322 + $0x60] sm:$0xff]
      %v332 = vld [vmem:[%s322 + $0x68] sm:$0xff]
      %v333 = vld [vmem:[%s322 + $0x78] sm:$0xff]
      %v334 = vld [vmem:[%s322 + $0x80] sm:$0xff]
      %v335 = vld [vmem:[%s322 + $0x90] sm:$0xff]
      %v336 = vld [vmem:[%s322 + $0x98] sm:$0xff]
      %v337 = vld [vmem:[%s322 + $0xa8] sm:$0xff]
      %v338 = vld [vmem:[%s322 + $0xb0] sm:$0xff]
      %v339 = vld [vmem:[%s322 + $0xc0] sm:$0xff]
      %v340 = vld [vmem:[%s322 + $0xc8] sm:$0xff]
      %v341 = vld [vmem:[%s322 + $0xd8] sm:$0xff]
      %v342 = vld [vmem:[%s322 + $0xe0] sm:$0xff]
      %v343 = vld [vmem:[%s322 + $0xf0] sm:$0xff]
      %v344 = vld [vmem:[%s322 + $0xf8] sm:$0xff]
      %v345 = vld [vmem:[%s322 + $0x108] sm:$0xff]
      %v346 = vld [vmem:[%s322 + $0x110] sm:$0xff]
      %v347 = vld [vmem:[%s322 + $0x120] sm:$0xff]
      %v348 = vld [vmem:[%s322 + $0x128] sm:$0xff]
      %v349 = vld [vmem:[%s322 + $0x138] sm:$0xff]
      %v350 = vld [vmem:[%s322 + $0x140] sm:$0xff]
      %v351 = vld [vmem:[%s322 + $0x150] sm:$0xff]
      %v352 = vld [vmem:[%s322 + $0x158] sm:$0xff]
      %v353 = vld [vmem:[%s322 + $0x168] sm:$0xff]
      %v354 = vld [vmem:[%s322 + $0x170] sm:$0xff]
      %v355 = vld [vmem:[%s322 + $0x1] sm:$0xff]
      %v356 = vld [vmem:[%s322 + $0x9] sm:$0xff]
      %v357 = vld [vmem:[%s322 + $0x19] sm:$0xff]
      %v358 = vld [vmem:[%s322 + $0x21] sm:$0xff]
      %v359 = vld [vmem:[%s322 + $0x31] sm:$0xff]
      %v360 = vld [vmem:[%s322 + $0x39] sm:$0xff]
      %v361 = vld [vmem:[%s322 + $0x49] sm:$0xff]
      %v362 = vld [vmem:[%s322 + $0x51] sm:$0xff]
      %v363 = vld [vmem:[%s322 + $0x61] sm:$0xff]
      %v364 = vld [vmem:[%s322 + $0x69] sm:$0xff]
      %v365 = vld [vmem:[%s322 + $0x79] sm:$0xff]
      %v366 = vld [vmem:[%s322 + $0x81] sm:$0xff]
      %v367 = vld [vmem:[%s322 + $0x91] sm:$0xff]
      %v368 = vld [vmem:[%s322 + $0x99] sm:$0xff]
      %v369 = vld [vmem:[%s322 + $0xa9] sm:$0xff]
      %v370 = vld [vmem:[%s322 + $0xb1] sm:$0xff]
      %v371 = vld [vmem:[%s322 + $0xc1] sm:$0xff]
      %v372 = vld [vmem:[%s322 + $0xc9] sm:$0xff]
      %v373 = vld [vmem:[%s322 + $0xd9] sm:$0xff]
      %v374 = vld [vmem:[%s322 + $0xe1] sm:$0xff]
      %v375 = vld [vmem:[%s322 + $0xf1] sm:$0xff]
      %v376 = vld [vmem:[%s322 + $0xf9] sm:$0xff]
      %v377 = vld [vmem:[%s322 + $0x109] sm:$0xff]
      %v378 = vld [vmem:[%s322 + $0x111] sm:$0xff]
      %v379 = vld [vmem:[%s322 + $0x121] sm:$0xff]
      %v380 = vld [vmem:[%s322 + $0x129] sm:$0xff]
      %v381 = vld [vmem:[%s322 + $0x139] sm:$0xff]
      %v382 = vld [vmem:[%s322 + $0x141] sm:$0xff]
      %v383 = vld [vmem:[%s322 + $0x151] sm:$0xff]
      %v384 = vld [vmem:[%s322 + $0x159] sm:$0xff]
      %v385 = vld [vmem:[%s322 + $0x169] sm:$0xff]
      %v386 = vld [vmem:[%s322 + $0x171] sm:$0xff]
      %v387 = vld [vmem:[%s322 + $0x2] sm:$0xff]
      %v388 = vld [vmem:[%s322 + $0xa] sm:$0xff]
      %v389 = vld [vmem:[%s322 + $0x1a] sm:$0xff]
      %v390 = vld [vmem:[%s322 + $0x22] sm:$0xff]
      %v391 = vld [vmem:[%s322 + $0x32] sm:$0xff]
      %v392 = vld [vmem:[%s322 + $0x3a] sm:$0xff]
      %v393 = vld [vmem:[%s322 + $0x4a] sm:$0xff]
      %v394 = vld [vmem:[%s322 + $0x52] sm:$0xff]
      %v395 = vld [vmem:[%s322 + $0x62] sm:$0xff]
      %v396 = vld [vmem:[%s322 + $0x6a] sm:$0xff]
      %v397 = vld [vmem:[%s322 + $0x7a] sm:$0xff]
      %v398 = vld [vmem:[%s322 + $0x82] sm:$0xff]
      %v399 = vld [vmem:[%s322 + $0x92] sm:$0xff]
      %v400 = vld [vmem:[%s322 + $0x9a] sm:$0xff]
      %v401 = vld [vmem:[%s322 + $0xaa] sm:$0xff]
      %v402 = vld [vmem:[%s322 + $0xb2] sm:$0xff]
      %v403 = vld [vmem:[%s322 + $0xc2] sm:$0xff]
      %v404 = vld [vmem:[%s322 + $0xca] sm:$0xff]
      %v405 = vld [vmem:[%s322 + $0xda] sm:$0xff]
      %v406 = vld [vmem:[%s322 + $0xe2] sm:$0xff]
      %v407 = vld [vmem:[%s322 + $0xf2] sm:$0xff]
      %v408 = vld [vmem:[%s322 + $0xfa] sm:$0xff]
      %v409 = vld [vmem:[%s322 + $0x10a] sm:$0xff]
      %v410 = vld [vmem:[%s322 + $0x112] sm:$0xff]
      %v411 = vld [vmem:[%s322 + $0x122] sm:$0xff]
      %v412 = vld [vmem:[%s322 + $0x12a] sm:$0xff]
      %v413 = vld [vmem:[%s322 + $0x13a] sm:$0xff]
      %v414 = vld [vmem:[%s322 + $0x142] sm:$0xff]
      %v415 = vld [vmem:[%s322 + $0x152] sm:$0xff]
      %v416 = vld [vmem:[%s322 + $0x15a] sm:$0xff]
      %v417 = vld [vmem:[%s322 + $0x16a] sm:$0xff]
      %v418 = vld [vmem:[%s322 + $0x172] sm:$0xff]
      %s419 = scalar_lea.vmem %s219, 48
      %v420 = vld [vmem:[%s419] sm:$0xff]
      %v421 = vld [vmem:[%s419 + $0x8] sm:$0xff]
      %v422 = vld [vmem:[%s419 + $0x18] sm:$0xff]
      %v423 = vld [vmem:[%s419 + $0x20] sm:$0xff]
      %v424 = vld [vmem:[%s419 + $0x30] sm:$0xff]
      %v425 = vld [vmem:[%s419 + $0x38] sm:$0xff]
      %v426 = vld [vmem:[%s419 + $0x48] sm:$0xff]
      %v427 = vld [vmem:[%s419 + $0x50] sm:$0xff]
      %v428 = vld [vmem:[%s419 + $0x60] sm:$0xff]
      %v429 = vld [vmem:[%s419 + $0x68] sm:$0xff]
      %v430 = vld [vmem:[%s419 + $0x78] sm:$0xff]
      %v431 = vld [vmem:[%s419 + $0x80] sm:$0xff]
      %v432 = vld [vmem:[%s419 + $0x90] sm:$0xff]
      %v433 = vld [vmem:[%s419 + $0x98] sm:$0xff]
      %v434 = vld [vmem:[%s419 + $0xa8] sm:$0xff]
      %v435 = vld [vmem:[%s419 + $0xb0] sm:$0xff]
      %v436 = vld [vmem:[%s419 + $0xc0] sm:$0xff]
      %v437 = vld [vmem:[%s419 + $0xc8] sm:$0xff]
      %v438 = vld [vmem:[%s419 + $0xd8] sm:$0xff]
      %v439 = vld [vmem:[%s419 + $0xe0] sm:$0xff]
      %v440 = vld [vmem:[%s419 + $0xf0] sm:$0xff]
      %v441 = vld [vmem:[%s419 + $0xf8] sm:$0xff]
      %v442 = vld [vmem:[%s419 + $0x108] sm:$0xff]
      %v443 = vld [vmem:[%s419 + $0x110] sm:$0xff]
      %v444 = vld [vmem:[%s419 + $0x120] sm:$0xff]
      %v445 = vld [vmem:[%s419 + $0x128] sm:$0xff]
      %v446 = vld [vmem:[%s419 + $0x138] sm:$0xff]
      %v447 = vld [vmem:[%s419 + $0x140] sm:$0xff]
      %v448 = vld [vmem:[%s419 + $0x150] sm:$0xff]
      %v449 = vld [vmem:[%s419 + $0x158] sm:$0xff]
      %v450 = vld [vmem:[%s419 + $0x168] sm:$0xff]
      %v451 = vld [vmem:[%s419 + $0x170] sm:$0xff]
      %v452 = vld [vmem:[%s419 + $0x1] sm:$0xff]
      %v453 = vld [vmem:[%s419 + $0x9] sm:$0xff]
      %v454 = vld [vmem:[%s419 + $0x19] sm:$0xff]
      %v455 = vld [vmem:[%s419 + $0x21] sm:$0xff]
      %v456 = vld [vmem:[%s419 + $0x31] sm:$0xff]
      %v457 = vld [vmem:[%s419 + $0x39] sm:$0xff]
      %v458 = vld [vmem:[%s419 + $0x49] sm:$0xff]
      %v459 = vld [vmem:[%s419 + $0x51] sm:$0xff]
      %v460 = vld [vmem:[%s419 + $0x61] sm:$0xff]
      %v461 = vld [vmem:[%s419 + $0x69] sm:$0xff]
      %v462 = vld [vmem:[%s419 + $0x79] sm:$0xff]
      %v463 = vld [vmem:[%s419 + $0x81] sm:$0xff]
      %v464 = vld [vmem:[%s419 + $0x91] sm:$0xff]
      %v465 = vld [vmem:[%s419 + $0x99] sm:$0xff]
      %v466 = vld [vmem:[%s419 + $0xa9] sm:$0xff]
      %v467 = vld [vmem:[%s419 + $0xb1] sm:$0xff]
      %v468 = vld [vmem:[%s419 + $0xc1] sm:$0xff]
      %v469 = vld [vmem:[%s419 + $0xc9] sm:$0xff]
      %v470 = vld [vmem:[%s419 + $0xd9] sm:$0xff]
      %v471 = vld [vmem:[%s419 + $0xe1] sm:$0xff]
      %v472 = vld [vmem:[%s419 + $0xf1] sm:$0xff]
      %v473 = vld [vmem:[%s419 + $0xf9] sm:$0xff]
      %v474 = vld [vmem:[%s419 + $0x109] sm:$0xff]
      %v475 = vld [vmem:[%s419 + $0x111] sm:$0xff]
      %v476 = vld [vmem:[%s419 + $0x121] sm:$0xff]
      %v477 = vld [vmem:[%s419 + $0x129] sm:$0xff]
      %v478 = vld [vmem:[%s419 + $0x139] sm:$0xff]
      %v479 = vld [vmem:[%s419 + $0x141] sm:$0xff]
      %v480 = vld [vmem:[%s419 + $0x151] sm:$0xff]
      %v481 = vld [vmem:[%s419 + $0x159] sm:$0xff]
      %v482 = vld [vmem:[%s419 + $0x169] sm:$0xff]
      %v483 = vld [vmem:[%s419 + $0x171] sm:$0xff]
      %v484 = vld [vmem:[%s419 + $0x2] sm:$0xff]
      %v485 = vld [vmem:[%s419 + $0xa] sm:$0xff]
      %v486 = vld [vmem:[%s419 + $0x1a] sm:$0xff]
      %v487 = vld [vmem:[%s419 + $0x22] sm:$0xff]
      %v488 = vld [vmem:[%s419 + $0x32] sm:$0xff]
      %v489 = vld [vmem:[%s419 + $0x3a] sm:$0xff]
      %v490 = vld [vmem:[%s419 + $0x4a] sm:$0xff]
      %v491 = vld [vmem:[%s419 + $0x52] sm:$0xff]
      %v492 = vld [vmem:[%s419 + $0x62] sm:$0xff]
      %v493 = vld [vmem:[%s419 + $0x6a] sm:$0xff]
      %v494 = vld [vmem:[%s419 + $0x7a] sm:$0xff]
      %v495 = vld [vmem:[%s419 + $0x82] sm:$0xff]
      %v496 = vld [vmem:[%s419 + $0x92] sm:$0xff]
      %v497 = vld [vmem:[%s419 + $0x9a] sm:$0xff]
      %v498 = vld [vmem:[%s419 + $0xaa] sm:$0xff]
      %v499 = vld [vmem:[%s419 + $0xb2] sm:$0xff]
      %v500 = vld [vmem:[%s419 + $0xc2] sm:$0xff]
      %v501 = vld [vmem:[%s419 + $0xca] sm:$0xff]
      %v502 = vld [vmem:[%s419 + $0xda] sm:$0xff]
      %v503 = vld [vmem:[%s419 + $0xe2] sm:$0xff]
      %v504 = vld [vmem:[%s419 + $0xf2] sm:$0xff]
      %v505 = vld [vmem:[%s419 + $0xfa] sm:$0xff]
      %v506 = vld [vmem:[%s419 + $0x10a] sm:$0xff]
      %v507 = vld [vmem:[%s419 + $0x112] sm:$0xff]
      %v508 = vld [vmem:[%s419 + $0x122] sm:$0xff]
      %v509 = vld [vmem:[%s419 + $0x12a] sm:$0xff]
      %v510 = vld [vmem:[%s419 + $0x13a] sm:$0xff]
      %v511 = vld [vmem:[%s419 + $0x142] sm:$0xff]
      %v512 = vld [vmem:[%s419 + $0x152] sm:$0xff]
      %v513 = vld [vmem:[%s419 + $0x15a] sm:$0xff]
      %v514 = vld [vmem:[%s419 + $0x16a] sm:$0xff]
      %v515 = vld [vmem:[%s419 + $0x172] sm:$0xff]
      %548 = vrot.lane.b32.xlu0 %v258, 8
      %v549 = vpop.permute.xlu0 %548
      %550 = vrot.lane.b32.xlu0 %v259, 8
      %v551 = vpop.permute.xlu0 %550
      %552 = vrot.lane.b32.xlu0 %v260, 8
      %v553 = vpop.permute.xlu0 %552
      %554 = vrot.lane.b32.xlu0 %v261, 8
      %v555 = vpop.permute.xlu0 %554
      %556 = vrot.lane.b32.xlu0 %v262, 8
      %v557 = vpop.permute.xlu0 %556
      %558 = vrot.lane.b32.xlu0 %v263, 8
      %v559 = vpop.permute.xlu0 %558
      %560 = vrot.lane.b32.xlu0 %v264, 8
      %v561 = vpop.permute.xlu0 %560
      %562 = vrot.lane.b32.xlu0 %v265, 8
      %v563 = vpop.permute.xlu0 %562
      %564 = vrot.lane.b32.xlu0 %v266, 8
      %v565 = vpop.permute.xlu0 %564
      %566 = vrot.lane.b32.xlu0 %v267, 8
      %v567 = vpop.permute.xlu0 %566
      %568 = vrot.lane.b32.xlu0 %v268, 8
      %v569 = vpop.permute.xlu0 %568
      %570 = vrot.lane.b32.xlu0 %v269, 8
      %v571 = vpop.permute.xlu0 %570
      %572 = vrot.lane.b32.xlu0 %v270, 8
      %v573 = vpop.permute.xlu0 %572
      %574 = vrot.lane.b32.xlu0 %v271, 8
      %v575 = vpop.permute.xlu0 %574
      %576 = vrot.lane.b32.xlu0 %v272, 8
      %v577 = vpop.permute.xlu0 %576
      %578 = vrot.lane.b32.xlu0 %v273, 8
      %v579 = vpop.permute.xlu0 %578
      %580 = vrot.lane.b32.xlu0 %v274, 8
      %v581 = vpop.permute.xlu0 %580
      %582 = vrot.lane.b32.xlu0 %v275, 8
      %v583 = vpop.permute.xlu0 %582
      %584 = vrot.lane.b32.xlu0 %v276, 8
      %v585 = vpop.permute.xlu0 %584
      %586 = vrot.lane.b32.xlu0 %v277, 8
      %v587 = vpop.permute.xlu0 %586
      %588 = vrot.lane.b32.xlu0 %v278, 8
      %v589 = vpop.permute.xlu0 %588
      %590 = vrot.lane.b32.xlu0 %v279, 8
      %v591 = vpop.permute.xlu0 %590
      %592 = vrot.lane.b32.xlu0 %v280, 8
      %v593 = vpop.permute.xlu0 %592
      %594 = vrot.lane.b32.xlu0 %v281, 8
      %v595 = vpop.permute.xlu0 %594
      %596 = vrot.lane.b32.xlu0 %v282, 8
      %v597 = vpop.permute.xlu0 %596
      %598 = vrot.lane.b32.xlu0 %v283, 8
      %v599 = vpop.permute.xlu0 %598
      %600 = vrot.lane.b32.xlu0 %v284, 8
      %v601 = vpop.permute.xlu0 %600
      %602 = vrot.lane.b32.xlu0 %v285, 8
      %v603 = vpop.permute.xlu0 %602
      %604 = vrot.lane.b32.xlu0 %v286, 8
      %v605 = vpop.permute.xlu0 %604
      %606 = vrot.lane.b32.xlu0 %v287, 8
      %v607 = vpop.permute.xlu0 %606
      %608 = vrot.lane.b32.xlu0 %v288, 8
      %v609 = vpop.permute.xlu0 %608
      %610 = vrot.lane.b32.xlu0 %v289, 8
      %v611 = vpop.permute.xlu0 %610
      %676 = vrot.lane.b32.xlu0 %v290, 16
      %v677 = vpop.permute.xlu0 %676
      %678 = vrot.lane.b32.xlu0 %v291, 16
      %v679 = vpop.permute.xlu0 %678
      %680 = vrot.lane.b32.xlu0 %v292, 16
      %v681 = vpop.permute.xlu0 %680
      %682 = vrot.lane.b32.xlu0 %v293, 16
      %v683 = vpop.permute.xlu0 %682
      %684 = vrot.lane.b32.xlu0 %v294, 16
      %v685 = vpop.permute.xlu0 %684
      %686 = vrot.lane.b32.xlu0 %v295, 16
      %v687 = vpop.permute.xlu0 %686
      %688 = vrot.lane.b32.xlu0 %v296, 16
      %v689 = vpop.permute.xlu0 %688
      %690 = vrot.lane.b32.xlu0 %v297, 16
      %v691 = vpop.permute.xlu0 %690
      %692 = vrot.lane.b32.xlu0 %v298, 16
      %v693 = vpop.permute.xlu0 %692
      %694 = vrot.lane.b32.xlu0 %v299, 16
      %v695 = vpop.permute.xlu0 %694
      %696 = vrot.lane.b32.xlu0 %v300, 16
      %v697 = vpop.permute.xlu0 %696
      %698 = vrot.lane.b32.xlu0 %v301, 16
      %v699 = vpop.permute.xlu0 %698
      %700 = vrot.lane.b32.xlu0 %v302, 16
      %v701 = vpop.permute.xlu0 %700
      %702 = vrot.lane.b32.xlu0 %v303, 16
      %v703 = vpop.permute.xlu0 %702
      %704 = vrot.lane.b32.xlu0 %v304, 16
      %v705 = vpop.permute.xlu0 %704
      %706 = vrot.lane.b32.xlu0 %v305, 16
      %v707 = vpop.permute.xlu0 %706
      %708 = vrot.lane.b32.xlu0 %v306, 16
      %v709 = vpop.permute.xlu0 %708
      %710 = vrot.lane.b32.xlu0 %v307, 16
      %v711 = vpop.permute.xlu0 %710
      %712 = vrot.lane.b32.xlu0 %v308, 16
      %v713 = vpop.permute.xlu0 %712
      %714 = vrot.lane.b32.xlu0 %v309, 16
      %v715 = vpop.permute.xlu0 %714
      %716 = vrot.lane.b32.xlu0 %v310, 16
      %v717 = vpop.permute.xlu0 %716
      %718 = vrot.lane.b32.xlu0 %v311, 16
      %v719 = vpop.permute.xlu0 %718
      %720 = vrot.lane.b32.xlu0 %v312, 16
      %v721 = vpop.permute.xlu0 %720
      %722 = vrot.lane.b32.xlu0 %v313, 16
      %v723 = vpop.permute.xlu0 %722
      %724 = vrot.lane.b32.xlu0 %v314, 16
      %v725 = vpop.permute.xlu0 %724
      %726 = vrot.lane.b32.xlu0 %v315, 16
      %v727 = vpop.permute.xlu0 %726
      %728 = vrot.lane.b32.xlu0 %v316, 16
      %v729 = vpop.permute.xlu0 %728
      %730 = vrot.lane.b32.xlu0 %v317, 16
      %v731 = vpop.permute.xlu0 %730
      %732 = vrot.lane.b32.xlu0 %v318, 16
      %v733 = vpop.permute.xlu0 %732
      %734 = vrot.lane.b32.xlu0 %v319, 16
      %v735 = vpop.permute.xlu0 %734
      %736 = vrot.lane.b32.xlu0 %v320, 16
      %v737 = vpop.permute.xlu0 %736
      %738 = vrot.lane.b32.xlu0 %v321, 16
      %v739 = vpop.permute.xlu0 %738
      %804 = vrot.lane.b32.xlu0 %v323, 24
      %v805 = vpop.permute.xlu0 %804
      %806 = vrot.lane.b32.xlu0 %v324, 24
      %v807 = vpop.permute.xlu0 %806
      %808 = vrot.lane.b32.xlu0 %v325, 24
      %v809 = vpop.permute.xlu0 %808
      %810 = vrot.lane.b32.xlu0 %v326, 24
      %v811 = vpop.permute.xlu0 %810
      %812 = vrot.lane.b32.xlu0 %v327, 24
      %v813 = vpop.permute.xlu0 %812
      %814 = vrot.lane.b32.xlu0 %v328, 24
      %v815 = vpop.permute.xlu0 %814
      %816 = vrot.lane.b32.xlu0 %v329, 24
      %v817 = vpop.permute.xlu0 %816
      %818 = vrot.lane.b32.xlu0 %v330, 24
      %v819 = vpop.permute.xlu0 %818
      %820 = vrot.lane.b32.xlu0 %v331, 24
      %v821 = vpop.permute.xlu0 %820
      %822 = vrot.lane.b32.xlu0 %v332, 24
      %v823 = vpop.permute.xlu0 %822
      %824 = vrot.lane.b32.xlu0 %v333, 24
      %v825 = vpop.permute.xlu0 %824
      %826 = vrot.lane.b32.xlu0 %v334, 24
      %v827 = vpop.permute.xlu0 %826
      %828 = vrot.lane.b32.xlu0 %v335, 24
      %v829 = vpop.permute.xlu0 %828
      %830 = vrot.lane.b32.xlu0 %v336, 24
      %v831 = vpop.permute.xlu0 %830
      %832 = vrot.lane.b32.xlu0 %v337, 24
      %v833 = vpop.permute.xlu0 %832
      %834 = vrot.lane.b32.xlu0 %v338, 24
      %v835 = vpop.permute.xlu0 %834
      %836 = vrot.lane.b32.xlu0 %v339, 24
      %v837 = vpop.permute.xlu0 %836
      %838 = vrot.lane.b32.xlu0 %v340, 24
      %v839 = vpop.permute.xlu0 %838
      %840 = vrot.lane.b32.xlu0 %v341, 24
      %v841 = vpop.permute.xlu0 %840
      %842 = vrot.lane.b32.xlu0 %v342, 24
      %v843 = vpop.permute.xlu0 %842
      %844 = vrot.lane.b32.xlu0 %v343, 24
      %v845 = vpop.permute.xlu0 %844
      %846 = vrot.lane.b32.xlu0 %v344, 24
      %v847 = vpop.permute.xlu0 %846
      %848 = vrot.lane.b32.xlu0 %v345, 24
      %v849 = vpop.permute.xlu0 %848
      %850 = vrot.lane.b32.xlu0 %v346, 24
      %v851 = vpop.permute.xlu0 %850
      %852 = vrot.lane.b32.xlu0 %v347, 24
      %v853 = vpop.permute.xlu0 %852
      %854 = vrot.lane.b32.xlu0 %v348, 24
      %v855 = vpop.permute.xlu0 %854
      %856 = vrot.lane.b32.xlu0 %v349, 24
      %v857 = vpop.permute.xlu0 %856
      %858 = vrot.lane.b32.xlu0 %v350, 24
      %v859 = vpop.permute.xlu0 %858
      %860 = vrot.lane.b32.xlu0 %v351, 24
      %v861 = vpop.permute.xlu0 %860
      %862 = vrot.lane.b32.xlu0 %v352, 24
      %v863 = vpop.permute.xlu0 %862
      %864 = vrot.lane.b32.xlu0 %v353, 24
      %v865 = vpop.permute.xlu0 %864
      %866 = vrot.lane.b32.xlu0 %v354, 24
      %v867 = vpop.permute.xlu0 %866
      %932 = vrot.lane.b32.xlu0 %v355, 32
      %v933 = vpop.permute.xlu0 %932
      %934 = vrot.lane.b32.xlu0 %v356, 32
      %v935 = vpop.permute.xlu0 %934
      %936 = vrot.lane.b32.xlu0 %v357, 32
      %v937 = vpop.permute.xlu0 %936
      %938 = vrot.lane.b32.xlu0 %v358, 32
      %v939 = vpop.permute.xlu0 %938
      %940 = vrot.lane.b32.xlu0 %v359, 32
      %v941 = vpop.permute.xlu0 %940
      %942 = vrot.lane.b32.xlu0 %v360, 32
      %v943 = vpop.permute.xlu0 %942
      %944 = vrot.lane.b32.xlu0 %v361, 32
      %v945 = vpop.permute.xlu0 %944
      %946 = vrot.lane.b32.xlu0 %v362, 32
      %v947 = vpop.permute.xlu0 %946
      %948 = vrot.lane.b32.xlu0 %v363, 32
      %v949 = vpop.permute.xlu0 %948
      %950 = vrot.lane.b32.xlu0 %v364, 32
      %v951 = vpop.permute.xlu0 %950
      %952 = vrot.lane.b32.xlu0 %v365, 32
      %v953 = vpop.permute.xlu0 %952
      %954 = vrot.lane.b32.xlu0 %v366, 32
      %v955 = vpop.permute.xlu0 %954
      %956 = vrot.lane.b32.xlu0 %v367, 32
      %v957 = vpop.permute.xlu0 %956
      %958 = vrot.lane.b32.xlu0 %v368, 32
      %v959 = vpop.permute.xlu0 %958
      %960 = vrot.lane.b32.xlu0 %v369, 32
      %v961 = vpop.permute.xlu0 %960
      %962 = vrot.lane.b32.xlu0 %v370, 32
      %v963 = vpop.permute.xlu0 %962
      %964 = vrot.lane.b32.xlu0 %v371, 32
      %v965 = vpop.permute.xlu0 %964
      %966 = vrot.lane.b32.xlu0 %v372, 32
      %v967 = vpop.permute.xlu0 %966
      %968 = vrot.lane.b32.xlu0 %v373, 32
      %v969 = vpop.permute.xlu0 %968
      %970 = vrot.lane.b32.xlu0 %v374, 32
      %v971 = vpop.permute.xlu0 %970
      %972 = vrot.lane.b32.xlu0 %v375, 32
      %v973 = vpop.permute.xlu0 %972
      %974 = vrot.lane.b32.xlu0 %v376, 32
      %v975 = vpop.permute.xlu0 %974
      %976 = vrot.lane.b32.xlu0 %v377, 32
      %v977 = vpop.permute.xlu0 %976
      %978 = vrot.lane.b32.xlu0 %v378, 32
      %v979 = vpop.permute.xlu0 %978
      %980 = vrot.lane.b32.xlu0 %v379, 32
      %v981 = vpop.permute.xlu0 %980
      %982 = vrot.lane.b32.xlu0 %v380, 32
      %v983 = vpop.permute.xlu0 %982
      %984 = vrot.lane.b32.xlu0 %v381, 32
      %v985 = vpop.permute.xlu0 %984
      %986 = vrot.lane.b32.xlu0 %v382, 32
      %v987 = vpop.permute.xlu0 %986
      %988 = vrot.lane.b32.xlu0 %v383, 32
      %v989 = vpop.permute.xlu0 %988
      %990 = vrot.lane.b32.xlu0 %v384, 32
      %v991 = vpop.permute.xlu0 %990
      %992 = vrot.lane.b32.xlu0 %v385, 32
      %v993 = vpop.permute.xlu0 %992
      %994 = vrot.lane.b32.xlu0 %v386, 32
      %v995 = vpop.permute.xlu0 %994
      %1060 = vrot.lane.b32.xlu0 %v387, 40
      %v1061 = vpop.permute.xlu0 %1060
      %1062 = vrot.lane.b32.xlu0 %v388, 40
      %v1063 = vpop.permute.xlu0 %1062
      %1064 = vrot.lane.b32.xlu0 %v389, 40
      %v1065 = vpop.permute.xlu0 %1064
      %1066 = vrot.lane.b32.xlu0 %v390, 40
      %v1067 = vpop.permute.xlu0 %1066
      %1068 = vrot.lane.b32.xlu0 %v391, 40
      %v1069 = vpop.permute.xlu0 %1068
      %1070 = vrot.lane.b32.xlu0 %v392, 40
      %v1071 = vpop.permute.xlu0 %1070
      %1072 = vrot.lane.b32.xlu0 %v393, 40
      %v1073 = vpop.permute.xlu0 %1072
      %1074 = vrot.lane.b32.xlu0 %v394, 40
      %v1075 = vpop.permute.xlu0 %1074
      %1076 = vrot.lane.b32.xlu0 %v395, 40
      %v1077 = vpop.permute.xlu0 %1076
      %1078 = vrot.lane.b32.xlu0 %v396, 40
      %v1079 = vpop.permute.xlu0 %1078
      %1080 = vrot.lane.b32.xlu0 %v397, 40
      %v1081 = vpop.permute.xlu0 %1080
      %1082 = vrot.lane.b32.xlu0 %v398, 40
      %v1083 = vpop.permute.xlu0 %1082
      %1084 = vrot.lane.b32.xlu0 %v399, 40
      %v1085 = vpop.permute.xlu0 %1084
      %1086 = vrot.lane.b32.xlu0 %v400, 40
      %v1087 = vpop.permute.xlu0 %1086
      %1088 = vrot.lane.b32.xlu0 %v401, 40
      %v1089 = vpop.permute.xlu0 %1088
      %1090 = vrot.lane.b32.xlu0 %v402, 40
      %v1091 = vpop.permute.xlu0 %1090
      %1092 = vrot.lane.b32.xlu0 %v403, 40
      %v1093 = vpop.permute.xlu0 %1092
      %1094 = vrot.lane.b32.xlu0 %v404, 40
      %v1095 = vpop.permute.xlu0 %1094
      %1096 = vrot.lane.b32.xlu0 %v405, 40
      %v1097 = vpop.permute.xlu0 %1096
      %1098 = vrot.lane.b32.xlu0 %v406, 40
      %v1099 = vpop.permute.xlu0 %1098
      %1100 = vrot.lane.b32.xlu0 %v407, 40
      %v1101 = vpop.permute.xlu0 %1100
      %1102 = vrot.lane.b32.xlu0 %v408, 40
      %v1103 = vpop.permute.xlu0 %1102
      %1104 = vrot.lane.b32.xlu0 %v409, 40
      %v1105 = vpop.permute.xlu0 %1104
      %1106 = vrot.lane.b32.xlu0 %v410, 40
      %v1107 = vpop.permute.xlu0 %1106
      %1108 = vrot.lane.b32.xlu0 %v411, 40
      %v1109 = vpop.permute.xlu0 %1108
      %1110 = vrot.lane.b32.xlu0 %v412, 40
      %v1111 = vpop.permute.xlu0 %1110
      %1112 = vrot.lane.b32.xlu0 %v413, 40
      %v1113 = vpop.permute.xlu0 %1112
      %1114 = vrot.lane.b32.xlu0 %v414, 40
      %v1115 = vpop.permute.xlu0 %1114
      %1116 = vrot.lane.b32.xlu0 %v415, 40
      %v1117 = vpop.permute.xlu0 %1116
      %1118 = vrot.lane.b32.xlu0 %v416, 40
      %v1119 = vpop.permute.xlu0 %1118
      %1120 = vrot.lane.b32.xlu0 %v417, 40
      %v1121 = vpop.permute.xlu0 %1120
      %1122 = vrot.lane.b32.xlu0 %v418, 40
      %v1123 = vpop.permute.xlu0 %1122
      %1188 = vrot.lane.b32.xlu0 %v420, 48
      %v1189 = vpop.permute.xlu0 %1188
      %1190 = vrot.lane.b32.xlu0 %v421, 48
      %v1191 = vpop.permute.xlu0 %1190
      %1192 = vrot.lane.b32.xlu0 %v422, 48
      %v1193 = vpop.permute.xlu0 %1192
      %1194 = vrot.lane.b32.xlu0 %v423, 48
      %v1195 = vpop.permute.xlu0 %1194
      %1196 = vrot.lane.b32.xlu0 %v424, 48
      %v1197 = vpop.permute.xlu0 %1196
      %1198 = vrot.lane.b32.xlu0 %v425, 48
      %v1199 = vpop.permute.xlu0 %1198
      %1200 = vrot.lane.b32.xlu0 %v426, 48
      %v1201 = vpop.permute.xlu0 %1200
      %1202 = vrot.lane.b32.xlu0 %v427, 48
      %v1203 = vpop.permute.xlu0 %1202
      %1204 = vrot.lane.b32.xlu0 %v428, 48
      %v1205 = vpop.permute.xlu0 %1204
      %1206 = vrot.lane.b32.xlu0 %v429, 48
      %v1207 = vpop.permute.xlu0 %1206
      %1208 = vrot.lane.b32.xlu0 %v430, 48
      %v1209 = vpop.permute.xlu0 %1208
      %1210 = vrot.lane.b32.xlu0 %v431, 48
      %v1211 = vpop.permute.xlu0 %1210
      %1212 = vrot.lane.b32.xlu0 %v432, 48
      %v1213 = vpop.permute.xlu0 %1212
      %1214 = vrot.lane.b32.xlu0 %v433, 48
      %v1215 = vpop.permute.xlu0 %1214
      %1216 = vrot.lane.b32.xlu0 %v434, 48
      %v1217 = vpop.permute.xlu0 %1216
      %1218 = vrot.lane.b32.xlu0 %v435, 48
      %v1219 = vpop.permute.xlu0 %1218
      %1220 = vrot.lane.b32.xlu0 %v436, 48
      %v1221 = vpop.permute.xlu0 %1220
      %1222 = vrot.lane.b32.xlu0 %v437, 48
      %v1223 = vpop.permute.xlu0 %1222
      %1224 = vrot.lane.b32.xlu0 %v438, 48
      %v1225 = vpop.permute.xlu0 %1224
      %1226 = vrot.lane.b32.xlu0 %v439, 48
      %v1227 = vpop.permute.xlu0 %1226
      %1228 = vrot.lane.b32.xlu0 %v440, 48
      %v1229 = vpop.permute.xlu0 %1228
      %1230 = vrot.lane.b32.xlu0 %v441, 48
      %v1231 = vpop.permute.xlu0 %1230
      %1232 = vrot.lane.b32.xlu0 %v442, 48
      %v1233 = vpop.permute.xlu0 %1232
      %1234 = vrot.lane.b32.xlu0 %v443, 48
      %v1235 = vpop.permute.xlu0 %1234
      %1236 = vrot.lane.b32.xlu0 %v444, 48
      %v1237 = vpop.permute.xlu0 %1236
      %1238 = vrot.lane.b32.xlu0 %v445, 48
      %v1239 = vpop.permute.xlu0 %1238
      %1240 = vrot.lane.b32.xlu0 %v446, 48
      %v1241 = vpop.permute.xlu0 %1240
      %1242 = vrot.lane.b32.xlu0 %v447, 48
      %v1243 = vpop.permute.xlu0 %1242
      %1244 = vrot.lane.b32.xlu0 %v448, 48
      %v1245 = vpop.permute.xlu0 %1244
      %1246 = vrot.lane.b32.xlu0 %v449, 48
      %v1247 = vpop.permute.xlu0 %1246
      %1248 = vrot.lane.b32.xlu0 %v450, 48
      %v1249 = vpop.permute.xlu0 %1248
      %1250 = vrot.lane.b32.xlu0 %v451, 48
      %v1251 = vpop.permute.xlu0 %1250
      %1316 = vrot.lane.b32.xlu0 %v452, 56
      %v1317 = vpop.permute.xlu0 %1316
      %1318 = vrot.lane.b32.xlu0 %v453, 56
      %v1319 = vpop.permute.xlu0 %1318
      %1320 = vrot.lane.b32.xlu0 %v454, 56
      %v1321 = vpop.permute.xlu0 %1320
      %1322 = vrot.lane.b32.xlu0 %v455, 56
      %v1323 = vpop.permute.xlu0 %1322
      %1324 = vrot.lane.b32.xlu0 %v456, 56
      %v1325 = vpop.permute.xlu0 %1324
      %1326 = vrot.lane.b32.xlu0 %v457, 56
      %v1327 = vpop.permute.xlu0 %1326
      %1328 = vrot.lane.b32.xlu0 %v458, 56
      %v1329 = vpop.permute.xlu0 %1328
      %1330 = vrot.lane.b32.xlu0 %v459, 56
      %v1331 = vpop.permute.xlu0 %1330
      %1332 = vrot.lane.b32.xlu0 %v460, 56
      %v1333 = vpop.permute.xlu0 %1332
      %1334 = vrot.lane.b32.xlu0 %v461, 56
      %v1335 = vpop.permute.xlu0 %1334
      %1336 = vrot.lane.b32.xlu0 %v462, 56
      %v1337 = vpop.permute.xlu0 %1336
      %1338 = vrot.lane.b32.xlu0 %v463, 56
      %v1339 = vpop.permute.xlu0 %1338
      %1340 = vrot.lane.b32.xlu0 %v464, 56
      %v1341 = vpop.permute.xlu0 %1340
      %1342 = vrot.lane.b32.xlu0 %v465, 56
      %v1343 = vpop.permute.xlu0 %1342
      %1344 = vrot.lane.b32.xlu0 %v466, 56
      %v1345 = vpop.permute.xlu0 %1344
      %1346 = vrot.lane.b32.xlu0 %v467, 56
      %v1347 = vpop.permute.xlu0 %1346
      %1348 = vrot.lane.b32.xlu0 %v468, 56
      %v1349 = vpop.permute.xlu0 %1348
      %1350 = vrot.lane.b32.xlu0 %v469, 56
      %v1351 = vpop.permute.xlu0 %1350
      %1352 = vrot.lane.b32.xlu0 %v470, 56
      %v1353 = vpop.permute.xlu0 %1352
      %1354 = vrot.lane.b32.xlu0 %v471, 56
      %v1355 = vpop.permute.xlu0 %1354
      %1356 = vrot.lane.b32.xlu0 %v472, 56
      %v1357 = vpop.permute.xlu0 %1356
      %1358 = vrot.lane.b32.xlu0 %v473, 56
      %v1359 = vpop.permute.xlu0 %1358
      %1360 = vrot.lane.b32.xlu0 %v474, 56
      %v1361 = vpop.permute.xlu0 %1360
      %1362 = vrot.lane.b32.xlu0 %v475, 56
      %v1363 = vpop.permute.xlu0 %1362
      %1364 = vrot.lane.b32.xlu0 %v476, 56
      %v1365 = vpop.permute.xlu0 %1364
      %1366 = vrot.lane.b32.xlu0 %v477, 56
      %v1367 = vpop.permute.xlu0 %1366
      %1368 = vrot.lane.b32.xlu0 %v478, 56
      %v1369 = vpop.permute.xlu0 %1368
      %1370 = vrot.lane.b32.xlu0 %v479, 56
      %v1371 = vpop.permute.xlu0 %1370
      %1372 = vrot.lane.b32.xlu0 %v480, 56
      %v1373 = vpop.permute.xlu0 %1372
      %1374 = vrot.lane.b32.xlu0 %v481, 56
      %v1375 = vpop.permute.xlu0 %1374
      %1376 = vrot.lane.b32.xlu0 %v482, 56
      %v1377 = vpop.permute.xlu0 %1376
      %1378 = vrot.lane.b32.xlu0 %v483, 56
      %v1379 = vpop.permute.xlu0 %1378
      %1444 = vrot.lane.b32.xlu0 %v484, 64
      %v1445 = vpop.permute.xlu0 %1444
      %1446 = vrot.lane.b32.xlu0 %v485, 64
      %v1447 = vpop.permute.xlu0 %1446
      %1448 = vrot.lane.b32.xlu0 %v486, 64
      %v1449 = vpop.permute.xlu0 %1448
      %1450 = vrot.lane.b32.xlu0 %v487, 64
      %v1451 = vpop.permute.xlu0 %1450
      %1452 = vrot.lane.b32.xlu0 %v488, 64
      %v1453 = vpop.permute.xlu0 %1452
      %1454 = vrot.lane.b32.xlu0 %v489, 64
      %v1455 = vpop.permute.xlu0 %1454
      %1456 = vrot.lane.b32.xlu0 %v490, 64
      %v1457 = vpop.permute.xlu0 %1456
      %1458 = vrot.lane.b32.xlu0 %v491, 64
      %v1459 = vpop.permute.xlu0 %1458
      %1460 = vrot.lane.b32.xlu0 %v492, 64
      %v1461 = vpop.permute.xlu0 %1460
      %1462 = vrot.lane.b32.xlu0 %v493, 64
      %v1463 = vpop.permute.xlu0 %1462
      %1464 = vrot.lane.b32.xlu0 %v494, 64
      %v1465 = vpop.permute.xlu0 %1464
      %1466 = vrot.lane.b32.xlu0 %v495, 64
      %v1467 = vpop.permute.xlu0 %1466
      %1468 = vrot.lane.b32.xlu0 %v496, 64
      %v1469 = vpop.permute.xlu0 %1468
      %1470 = vrot.lane.b32.xlu0 %v497, 64
      %v1471 = vpop.permute.xlu0 %1470
      %1472 = vrot.lane.b32.xlu0 %v498, 64
      %v1473 = vpop.permute.xlu0 %1472
      %1474 = vrot.lane.b32.xlu0 %v499, 64
      %v1475 = vpop.permute.xlu0 %1474
      %1476 = vrot.lane.b32.xlu0 %v500, 64
      %v1477 = vpop.permute.xlu0 %1476
      %1478 = vrot.lane.b32.xlu0 %v501, 64
      %v1479 = vpop.permute.xlu0 %1478
      %1480 = vrot.lane.b32.xlu0 %v502, 64
      %v1481 = vpop.permute.xlu0 %1480
      %1482 = vrot.lane.b32.xlu0 %v503, 64
      %v1483 = vpop.permute.xlu0 %1482
      %1484 = vrot.lane.b32.xlu0 %v504, 64
      %v1485 = vpop.permute.xlu0 %1484
      %1486 = vrot.lane.b32.xlu0 %v505, 64
      %v1487 = vpop.permute.xlu0 %1486
      %1488 = vrot.lane.b32.xlu0 %v506, 64
      %v1489 = vpop.permute.xlu0 %1488
      %1490 = vrot.lane.b32.xlu0 %v507, 64
      %v1491 = vpop.permute.xlu0 %1490
      %1492 = vrot.lane.b32.xlu0 %v508, 64
      %v1493 = vpop.permute.xlu0 %1492
      %1494 = vrot.lane.b32.xlu0 %v509, 64
      %v1495 = vpop.permute.xlu0 %1494
      %1496 = vrot.lane.b32.xlu0 %v510, 64
      %v1497 = vpop.permute.xlu0 %1496
      %1498 = vrot.lane.b32.xlu0 %v511, 64
      %v1499 = vpop.permute.xlu0 %1498
      %1500 = vrot.lane.b32.xlu0 %v512, 64
      %v1501 = vpop.permute.xlu0 %1500
      %1502 = vrot.lane.b32.xlu0 %v513, 64
      %v1503 = vpop.permute.xlu0 %1502
      %1504 = vrot.lane.b32.xlu0 %v514, 64
      %v1505 = vpop.permute.xlu0 %1504
      %1506 = vrot.lane.b32.xlu0 %v515, 64
      %v1507 = vpop.permute.xlu0 %1506
      %vm1540 = vcmask 64512
      %v1541 = vsel %vm1540, %v226, %v549
      %v1542 = vsel %vm1540, %v227, %v551
      %v1543 = vsel %vm1540, %v228, %v553
      %v1544 = vsel %vm1540, %v229, %v555
      %v1545 = vsel %vm1540, %v230, %v557
      %v1546 = vsel %vm1540, %v231, %v559
      %v1547 = vsel %vm1540, %v232, %v561
      %v1548 = vsel %vm1540, %v233, %v563
      %v1549 = vsel %vm1540, %v234, %v565
      %v1550 = vsel %vm1540, %v235, %v567
      %v1551 = vsel %vm1540, %v236, %v569
      %v1552 = vsel %vm1540, %v237, %v571
      %v1553 = vsel %vm1540, %v238, %v573
      %v1554 = vsel %vm1540, %v239, %v575
      %v1555 = vsel %vm1540, %v240, %v577
      %v1556 = vsel %vm1540, %v241, %v579
      %v1557 = vsel %vm1540, %v242, %v581
      %v1558 = vsel %vm1540, %v243, %v583
      %v1559 = vsel %vm1540, %v244, %v585
      %v1560 = vsel %vm1540, %v245, %v587
      %v1561 = vsel %vm1540, %v246, %v589
      %v1562 = vsel %vm1540, %v247, %v591
      %v1563 = vsel %vm1540, %v248, %v593
      %v1564 = vsel %vm1540, %v249, %v595
      %v1565 = vsel %vm1540, %v250, %v597
      %v1566 = vsel %vm1540, %v251, %v599
      %v1567 = vsel %vm1540, %v252, %v601
      %v1568 = vsel %vm1540, %v253, %v603
      %v1569 = vsel %vm1540, %v254, %v605
      %v1570 = vsel %vm1540, %v255, %v607
      %v1571 = vsel %vm1540, %v256, %v609
      %v1572 = vsel %vm1540, %v257, %v611
      %vm1573 = vcmask 130048
      %v1574 = vsel %vm1573, %v1541, %v677
      %v1575 = vsel %vm1573, %v1542, %v679
      %v1576 = vsel %vm1573, %v1543, %v681
      %v1577 = vsel %vm1573, %v1544, %v683
      %v1578 = vsel %vm1573, %v1545, %v685
      %v1579 = vsel %vm1573, %v1546, %v687
      %v1580 = vsel %vm1573, %v1547, %v689
      %v1581 = vsel %vm1573, %v1548, %v691
      %v1582 = vsel %vm1573, %v1549, %v693
      %v1583 = vsel %vm1573, %v1550, %v695
      %v1584 = vsel %vm1573, %v1551, %v697
      %v1585 = vsel %vm1573, %v1552, %v699
      %v1586 = vsel %vm1573, %v1553, %v701
      %v1587 = vsel %vm1573, %v1554, %v703
      %v1588 = vsel %vm1573, %v1555, %v705
      %v1589 = vsel %vm1573, %v1556, %v707
      %v1590 = vsel %vm1573, %v1557, %v709
      %v1591 = vsel %vm1573, %v1558, %v711
      %v1592 = vsel %vm1573, %v1559, %v713
      %v1593 = vsel %vm1573, %v1560, %v715
      %v1594 = vsel %vm1573, %v1561, %v717
      %v1595 = vsel %vm1573, %v1562, %v719
      %v1596 = vsel %vm1573, %v1563, %v721
      %v1597 = vsel %vm1573, %v1564, %v723
      %v1598 = vsel %vm1573, %v1565, %v725
      %v1599 = vsel %vm1573, %v1566, %v727
      %v1600 = vsel %vm1573, %v1567, %v729
      %v1601 = vsel %vm1573, %v1568, %v731
      %v1602 = vsel %vm1573, %v1569, %v733
      %v1603 = vsel %vm1573, %v1570, %v735
      %v1604 = vsel %vm1573, %v1571, %v737
      %v1605 = vsel %vm1573, %v1572, %v739
      %vm1606 = vcmask 195584
      %v1607 = vsel %vm1606, %v1574, %v805
      %v1608 = vsel %vm1606, %v1575, %v807
      %v1609 = vsel %vm1606, %v1576, %v809
      %v1610 = vsel %vm1606, %v1577, %v811
      %v1611 = vsel %vm1606, %v1578, %v813
      %v1612 = vsel %vm1606, %v1579, %v815
      %v1613 = vsel %vm1606, %v1580, %v817
      %v1614 = vsel %vm1606, %v1581, %v819
      %v1615 = vsel %vm1606, %v1582, %v821
      %v1616 = vsel %vm1606, %v1583, %v823
      %v1617 = vsel %vm1606, %v1584, %v825
      %v1618 = vsel %vm1606, %v1585, %v827
      %v1619 = vsel %vm1606, %v1586, %v829
      %v1620 = vsel %vm1606, %v1587, %v831
      %v1621 = vsel %vm1606, %v1588, %v833
      %v1622 = vsel %vm1606, %v1589, %v835
      %v1623 = vsel %vm1606, %v1590, %v837
      %v1624 = vsel %vm1606, %v1591, %v839
      %v1625 = vsel %vm1606, %v1592, %v841
      %v1626 = vsel %vm1606, %v1593, %v843
      %v1627 = vsel %vm1606, %v1594, %v845
      %v1628 = vsel %vm1606, %v1595, %v847
      %v1629 = vsel %vm1606, %v1596, %v849
      %v1630 = vsel %vm1606, %v1597, %v851
      %v1631 = vsel %vm1606, %v1598, %v853
      %v1632 = vsel %vm1606, %v1599, %v855
      %v1633 = vsel %vm1606, %v1600, %v857
      %v1634 = vsel %vm1606, %v1601, %v859
      %v1635 = vsel %vm1606, %v1602, %v861
      %v1636 = vsel %vm1606, %v1603, %v863
      %v1637 = vsel %vm1606, %v1604, %v865
      %v1638 = vsel %vm1606, %v1605, %v867
      %vm1639 = vcmask 261120
      %v1640 = vsel %vm1639, %v1607, %v933
      %v1641 = vsel %vm1639, %v1608, %v935
      %v1642 = vsel %vm1639, %v1609, %v937
      %v1643 = vsel %vm1639, %v1610, %v939
      %v1644 = vsel %vm1639, %v1611, %v941
      %v1645 = vsel %vm1639, %v1612, %v943
      %v1646 = vsel %vm1639, %v1613, %v945
      %v1647 = vsel %vm1639, %v1614, %v947
      %v1648 = vsel %vm1639, %v1615, %v949
      %v1649 = vsel %vm1639, %v1616, %v951
      %v1650 = vsel %vm1639, %v1617, %v953
      %v1651 = vsel %vm1639, %v1618, %v955
      %v1652 = vsel %vm1639, %v1619, %v957
      %v1653 = vsel %vm1639, %v1620, %v959
      %v1654 = vsel %vm1639, %v1621, %v961
      %v1655 = vsel %vm1639, %v1622, %v963
      %v1656 = vsel %vm1639, %v1623, %v965
      %v1657 = vsel %vm1639, %v1624, %v967
      %v1658 = vsel %vm1639, %v1625, %v969
      %v1659 = vsel %vm1639, %v1626, %v971
      %v1660 = vsel %vm1639, %v1627, %v973
      %v1661 = vsel %vm1639, %v1628, %v975
      %v1662 = vsel %vm1639, %v1629, %v977
      %v1663 = vsel %vm1639, %v1630, %v979
      %v1664 = vsel %vm1639, %v1631, %v981
      %v1665 = vsel %vm1639, %v1632, %v983
      %v1666 = vsel %vm1639, %v1633, %v985
      %v1667 = vsel %vm1639, %v1634, %v987
      %v1668 = vsel %vm1639, %v1635, %v989
      %v1669 = vsel %vm1639, %v1636, %v991
      %v1670 = vsel %vm1639, %v1637, %v993
      %v1671 = vsel %vm1639, %v1638, %v995
      %vm1672 = vcmask 326656
      %v1673 = vsel %vm1672, %v1640, %v1061
      %v1674 = vsel %vm1672, %v1641, %v1063
      %v1675 = vsel %vm1672, %v1642, %v1065
      %v1676 = vsel %vm1672, %v1643, %v1067
      %v1677 = vsel %vm1672, %v1644, %v1069
      %v1678 = vsel %vm1672, %v1645, %v1071
      %v1679 = vsel %vm1672, %v1646, %v1073
      %v1680 = vsel %vm1672, %v1647, %v1075
      %v1681 = vsel %vm1672, %v1648, %v1077
      %v1682 = vsel %vm1672, %v1649, %v1079
      %v1683 = vsel %vm1672, %v1650, %v1081
      %v1684 = vsel %vm1672, %v1651, %v1083
      %v1685 = vsel %vm1672, %v1652, %v1085
      %v1686 = vsel %vm1672, %v1653, %v1087
      %v1687 = vsel %vm1672, %v1654, %v1089
      %v1688 = vsel %vm1672, %v1655, %v1091
      %v1689 = vsel %vm1672, %v1656, %v1093
      %v1690 = vsel %vm1672, %v1657, %v1095
      %v1691 = vsel %vm1672, %v1658, %v1097
      %v1692 = vsel %vm1672, %v1659, %v1099
      %v1693 = vsel %vm1672, %v1660, %v1101
      %v1694 = vsel %vm1672, %v1661, %v1103
      %v1695 = vsel %vm1672, %v1662, %v1105
      %v1696 = vsel %vm1672, %v1663, %v1107
      %v1697 = vsel %vm1672, %v1664, %v1109
      %v1698 = vsel %vm1672, %v1665, %v1111
      %v1699 = vsel %vm1672, %v1666, %v1113
      %v1700 = vsel %vm1672, %v1667, %v1115
      %v1701 = vsel %vm1672, %v1668, %v1117
      %v1702 = vsel %vm1672, %v1669, %v1119
      %v1703 = vsel %vm1672, %v1670, %v1121
      %v1704 = vsel %vm1672, %v1671, %v1123
      %vm1705 = vcmask 392192
      %v1706 = vsel %vm1705, %v1673, %v1189
      %v1707 = vsel %vm1705, %v1674, %v1191
      %v1708 = vsel %vm1705, %v1675, %v1193
      %v1709 = vsel %vm1705, %v1676, %v1195
      %v1710 = vsel %vm1705, %v1677, %v1197
      %v1711 = vsel %vm1705, %v1678, %v1199
      %v1712 = vsel %vm1705, %v1679, %v1201
      %v1713 = vsel %vm1705, %v1680, %v1203
      %v1714 = vsel %vm1705, %v1681, %v1205
      %v1715 = vsel %vm1705, %v1682, %v1207
      %v1716 = vsel %vm1705, %v1683, %v1209
      %v1717 = vsel %vm1705, %v1684, %v1211
      %v1718 = vsel %vm1705, %v1685, %v1213
      %v1719 = vsel %vm1705, %v1686, %v1215
      %v1720 = vsel %vm1705, %v1687, %v1217
      %v1721 = vsel %vm1705, %v1688, %v1219
      %v1722 = vsel %vm1705, %v1689, %v1221
      %v1723 = vsel %vm1705, %v1690, %v1223
      %v1724 = vsel %vm1705, %v1691, %v1225
      %v1725 = vsel %vm1705, %v1692, %v1227
      %v1726 = vsel %vm1705, %v1693, %v1229
      %v1727 = vsel %vm1705, %v1694, %v1231
      %v1728 = vsel %vm1705, %v1695, %v1233
      %v1729 = vsel %vm1705, %v1696, %v1235
      %v1730 = vsel %vm1705, %v1697, %v1237
      %v1731 = vsel %vm1705, %v1698, %v1239
      %v1732 = vsel %vm1705, %v1699, %v1241
      %v1733 = vsel %vm1705, %v1700, %v1243
      %v1734 = vsel %vm1705, %v1701, %v1245
      %v1735 = vsel %vm1705, %v1702, %v1247
      %v1736 = vsel %vm1705, %v1703, %v1249
      %v1737 = vsel %vm1705, %v1704, %v1251
      %vm1738 = vcmask 457728
      %v1739 = vsel %vm1738, %v1706, %v1317
      %v1740 = vsel %vm1738, %v1707, %v1319
      %v1741 = vsel %vm1738, %v1708, %v1321
      %v1742 = vsel %vm1738, %v1709, %v1323
      %v1743 = vsel %vm1738, %v1710, %v1325
      %v1744 = vsel %vm1738, %v1711, %v1327
      %v1745 = vsel %vm1738, %v1712, %v1329
      %v1746 = vsel %vm1738, %v1713, %v1331
      %v1747 = vsel %vm1738, %v1714, %v1333
      %v1748 = vsel %vm1738, %v1715, %v1335
      %v1749 = vsel %vm1738, %v1716, %v1337
      %v1750 = vsel %vm1738, %v1717, %v1339
      %v1751 = vsel %vm1738, %v1718, %v1341
      %v1752 = vsel %vm1738, %v1719, %v1343
      %v1753 = vsel %vm1738, %v1720, %v1345
      %v1754 = vsel %vm1738, %v1721, %v1347
      %v1755 = vsel %vm1738, %v1722, %v1349
      %v1756 = vsel %vm1738, %v1723, %v1351
      %v1757 = vsel %vm1738, %v1724, %v1353
      %v1758 = vsel %vm1738, %v1725, %v1355
      %v1759 = vsel %vm1738, %v1726, %v1357
      %v1760 = vsel %vm1738, %v1727, %v1359
      %v1761 = vsel %vm1738, %v1728, %v1361
      %v1762 = vsel %vm1738, %v1729, %v1363
      %v1763 = vsel %vm1738, %v1730, %v1365
      %v1764 = vsel %vm1738, %v1731, %v1367
      %v1765 = vsel %vm1738, %v1732, %v1369
      %v1766 = vsel %vm1738, %v1733, %v1371
      %v1767 = vsel %vm1738, %v1734, %v1373
      %v1768 = vsel %vm1738, %v1735, %v1375
      %v1769 = vsel %vm1738, %v1736, %v1377
      %v1770 = vsel %vm1738, %v1737, %v1379
      %vm1771 = vcmask 523264
      %v1772 = vsel %vm1771, %v1739, %v1445
      %v1773 = vsel %vm1771, %v1740, %v1447
      %v1774 = vsel %vm1771, %v1741, %v1449
      %v1775 = vsel %vm1771, %v1742, %v1451
      %v1776 = vsel %vm1771, %v1743, %v1453
      %v1777 = vsel %vm1771, %v1744, %v1455
      %v1778 = vsel %vm1771, %v1745, %v1457
      %v1779 = vsel %vm1771, %v1746, %v1459
      %v1780 = vsel %vm1771, %v1747, %v1461
      %v1781 = vsel %vm1771, %v1748, %v1463
      %v1782 = vsel %vm1771, %v1749, %v1465
      %v1783 = vsel %vm1771, %v1750, %v1467
      %v1784 = vsel %vm1771, %v1751, %v1469
      %v1785 = vsel %vm1771, %v1752, %v1471
      %v1786 = vsel %vm1771, %v1753, %v1473
      %v1787 = vsel %vm1771, %v1754, %v1475
      %v1788 = vsel %vm1771, %v1755, %v1477
      %v1789 = vsel %vm1771, %v1756, %v1479
      %v1790 = vsel %vm1771, %v1757, %v1481
      %v1791 = vsel %vm1771, %v1758, %v1483
      %v1792 = vsel %vm1771, %v1759, %v1485
      %v1793 = vsel %vm1771, %v1760, %v1487
      %v1794 = vsel %vm1771, %v1761, %v1489
      %v1795 = vsel %vm1771, %v1762, %v1491
      %v1796 = vsel %vm1771, %v1763, %v1493
      %v1797 = vsel %vm1771, %v1764, %v1495
      %v1798 = vsel %vm1771, %v1765, %v1497
      %v1799 = vsel %vm1771, %v1766, %v1499
      %v1800 = vsel %vm1771, %v1767, %v1501
      %v1801 = vsel %vm1771, %v1768, %v1503
      %v1802 = vsel %vm1771, %v1769, %v1505
      %v1803 = vsel %vm1771, %v1770, %v1507
      %v1804 = vpack.c.bf16 %v1773, %v1772
      %v1805 = vpack.c.bf16 %v1775, %v1774
      %v1806 = vpack.c.bf16 %v1777, %v1776
      %v1807 = vpack.c.bf16 %v1779, %v1778
      %v1808 = vpack.c.bf16 %v1781, %v1780
      %v1809 = vpack.c.bf16 %v1783, %v1782
      %v1810 = vpack.c.bf16 %v1785, %v1784
      %v1811 = vpack.c.bf16 %v1787, %v1786
      %v1812 = vpack.c.bf16 %v1789, %v1788
      %v1813 = vpack.c.bf16 %v1791, %v1790
      %v1814 = vpack.c.bf16 %v1793, %v1792
      %v1815 = vpack.c.bf16 %v1795, %v1794
      %v1816 = vpack.c.bf16 %v1797, %v1796
      %v1817 = vpack.c.bf16 %v1799, %v1798
      %v1818 = vpack.c.bf16 %v1801, %v1800
      %v1819 = vpack.c.bf16 %v1803, %v1802
      %v1820 = vld [vmem:[%s1] sm:$0xff]
      %v1821 = vld [vmem:[%s1 + $0x8] sm:$0xff]
      %v1822 = vld [vmem:[%s1 + $0x10] sm:$0xff]
      %v1823 = vld [vmem:[%s1 + $0x18] sm:$0xff]
      %v1824 = vld [vmem:[%s1 + $0x20] sm:$0xff]
      %v1825 = vld [vmem:[%s1 + $0x28] sm:$0xff]
      %v1826 = vld [vmem:[%s1 + $0x30] sm:$0xff]
      %v1827 = vld [vmem:[%s1 + $0x38] sm:$0xff]
      %v1828 = vld [vmem:[%s1 + $0x40] sm:$0xff]
      %v1829 = vpack.c.bf16 %v1821, %v1820
      %v1830 = vpack.c.bf16 %v1823, %v1822
      %v1831 = vpack.c.bf16 %v1825, %v1824
      %v1832 = vpack.c.bf16 %v1827, %v1826
      %v1833 = vpack.c.bf16 %v1828, %v1828
      %v1834 = vld [vmem:[%s2] sm:$0x1]
      %v1836 = vperm.slane %v1834, 0
      %vm1838 = vcmask 588800
      %v1840 = vsel %vm1838, %v1804, 0
      %v1843 = vsel %vm1838, %v1805, 0
      %v1846 = vsel %vm1838, %v1806, 0
      %v1849 = vsel %vm1838, %v1807, 0
      %v1852 = vsel %vm1838, %v1808, 0
      %v1855 = vsel %vm1838, %v1809, 0
      %v1858 = vsel %vm1838, %v1810, 0
      %v1861 = vsel %vm1838, %v1811, 0
      %v1864 = vsel %vm1838, %v1812, 0
      %v1867 = vsel %vm1838, %v1813, 0
      %v1870 = vsel %vm1838, %v1814, 0
      %v1873 = vsel %vm1838, %v1815, 0
      %v1876 = vsel %vm1838, %v1816, 0
      %v1879 = vsel %vm1838, %v1817, 0
      %v1882 = vsel %vm1838, %v1818, 0
      %v1885 = vsel %vm1838, %v1819, 0
      %vm1887 = vcmask 1043456
      %v1889 = vsel %vm1887, %v1833, 0
      %1891 = vmatpush.bf16.msra.mxu0 0
      %1892 = vmatpush.bf16.msra.mxu0 0
      %1893 = vmatpush.bf16.msra.mxu0 0
      %1894 = vmatpush.bf16.msra.mxu0 %v1889
      %1895 = vmatpush.bf16.msra.mxu0 %v1832
      %1896 = vmatpush.bf16.msra.mxu0 %v1831
      %1897 = vmatpush.bf16.msra.mxu0 %v1830
      %1898 = vmatpush.bf16.msra.mxu0 %v1829
      %1899 = vmatmul.bf16.gmra.mxu0 %v1840
      %v1900 = vpop.f32.mrf.mxu0
      %v1901 = vadd.f32 %v1836, %v1900
      %v1902 = vpop.f32.mrf.mxu0
      %v1903 = vadd.f32 %v1836, %v1902
      %1904 = vmatmul.bf16.gmra.mxu0 %v1843
      %v1905 = vpop.f32.mrf.mxu0
      %v1906 = vadd.f32 %v1836, %v1905
      %v1907 = vpop.f32.mrf.mxu0
      %v1908 = vadd.f32 %v1836, %v1907
      %1909 = vmatmul.bf16.gmra.mxu0 %v1846
      %v1910 = vpop.f32.mrf.mxu0
      %v1911 = vadd.f32 %v1836, %v1910
      %v1912 = vpop.f32.mrf.mxu0
      %v1913 = vadd.f32 %v1836, %v1912
      %1914 = vmatmul.bf16.gmra.mxu0 %v1849
      %v1915 = vpop.f32.mrf.mxu0
      %v1916 = vadd.f32 %v1836, %v1915
      %v1917 = vpop.f32.mrf.mxu0
      %v1918 = vadd.f32 %v1836, %v1917
      %1919 = vmatmul.bf16.gmra.mxu0 %v1852
      %v1920 = vpop.f32.mrf.mxu0
      %v1921 = vadd.f32 %v1836, %v1920
      %v1922 = vpop.f32.mrf.mxu0
      %v1923 = vadd.f32 %v1836, %v1922
      %1924 = vmatmul.bf16.gmra.mxu0 %v1855
      %v1925 = vpop.f32.mrf.mxu0
      %v1926 = vadd.f32 %v1836, %v1925
      %v1927 = vpop.f32.mrf.mxu0
      %v1928 = vadd.f32 %v1836, %v1927
      %1929 = vmatmul.bf16.gmra.mxu0 %v1858
      %v1930 = vpop.f32.mrf.mxu0
      %v1931 = vadd.f32 %v1836, %v1930
      %v1932 = vpop.f32.mrf.mxu0
      %v1933 = vadd.f32 %v1836, %v1932
      %1934 = vmatmul.bf16.gmra.mxu0 %v1861
      %v1935 = vpop.f32.mrf.mxu0
      %v1936 = vadd.f32 %v1836, %v1935
      %v1937 = vpop.f32.mrf.mxu0
      %v1938 = vadd.f32 %v1836, %v1937
      %1939 = vmatmul.bf16.gmra.mxu0 %v1864
      %v1940 = vpop.f32.mrf.mxu0
      %v1941 = vadd.f32 %v1836, %v1940
      %v1942 = vpop.f32.mrf.mxu0
      %v1943 = vadd.f32 %v1836, %v1942
      %1944 = vmatmul.bf16.gmra.mxu0 %v1867
      %v1945 = vpop.f32.mrf.mxu0
      %v1946 = vadd.f32 %v1836, %v1945
      %v1947 = vpop.f32.mrf.mxu0
      %v1948 = vadd.f32 %v1836, %v1947
      %1949 = vmatmul.bf16.gmra.mxu0 %v1870
      %v1950 = vpop.f32.mrf.mxu0
      %v1951 = vadd.f32 %v1836, %v1950
      %v1952 = vpop.f32.mrf.mxu0
      %v1953 = vadd.f32 %v1836, %v1952
      %1954 = vmatmul.bf16.gmra.mxu0 %v1873
      %v1955 = vpop.f32.mrf.mxu0
      %v1956 = vadd.f32 %v1836, %v1955
      %v1957 = vpop.f32.mrf.mxu0
      %v1958 = vadd.f32 %v1836, %v1957
      %1959 = vmatmul.bf16.gmra.mxu0 %v1876
      %v1960 = vpop.f32.mrf.mxu0
      %v1961 = vadd.f32 %v1836, %v1960
      %v1962 = vpop.f32.mrf.mxu0
      %v1963 = vadd.f32 %v1836, %v1962
      %1964 = vmatmul.bf16.gmra.mxu0 %v1879
      %v1965 = vpop.f32.mrf.mxu0
      %v1966 = vadd.f32 %v1836, %v1965
      %v1967 = vpop.f32.mrf.mxu0
      %v1968 = vadd.f32 %v1836, %v1967
      %1969 = vmatmul.bf16.gmra.mxu0 %v1882
      %v1970 = vpop.f32.mrf.mxu0
      %v1971 = vadd.f32 %v1836, %v1970
      %v1972 = vpop.f32.mrf.mxu0
      %v1973 = vadd.f32 %v1836, %v1972
      %1974 = vmatmul.bf16.gmra.mxu0 %v1885
      %v1975 = vpop.f32.mrf.mxu0
      %v1976 = vadd.f32 %v1836, %v1975
      %v1977 = vpop.f32.mrf.mxu0
      %v1978 = vadd.f32 %v1836, %v1977
      %1979 = vdwg.mxu0
      %v1980 = vmax.f32 %v1901, 0.0
      %v1981 = vmax.f32 %v1903, 0.0
      %v1982 = vmax.f32 %v1906, 0.0
      %v1983 = vmax.f32 %v1908, 0.0
      %v1984 = vmax.f32 %v1911, 0.0
      %v1985 = vmax.f32 %v1913, 0.0
      %v1986 = vmax.f32 %v1916, 0.0
      %v1987 = vmax.f32 %v1918, 0.0
      %v1988 = vmax.f32 %v1921, 0.0
      %v1989 = vmax.f32 %v1923, 0.0
      %v1990 = vmax.f32 %v1926, 0.0
      %v1991 = vmax.f32 %v1928, 0.0
      %v1992 = vmax.f32 %v1931, 0.0
      %v1993 = vmax.f32 %v1933, 0.0
      %v1994 = vmax.f32 %v1936, 0.0
      %v1995 = vmax.f32 %v1938, 0.0
      %v1996 = vmax.f32 %v1941, 0.0
      %v1997 = vmax.f32 %v1943, 0.0
      %v1998 = vmax.f32 %v1946, 0.0
      %v1999 = vmax.f32 %v1948, 0.0
      %v2000 = vmax.f32 %v1951, 0.0
      %v2001 = vmax.f32 %v1953, 0.0
      %v2002 = vmax.f32 %v1956, 0.0
      %v2003 = vmax.f32 %v1958, 0.0
      %v2004 = vmax.f32 %v1961, 0.0
      %v2005 = vmax.f32 %v1963, 0.0
      %v2006 = vmax.f32 %v1966, 0.0
      %v2007 = vmax.f32 %v1968, 0.0
      %v2008 = vmax.f32 %v1971, 0.0
      %v2009 = vmax.f32 %v1973, 0.0
      %v2010 = vmax.f32 %v1976, 0.0
      %v2011 = vmax.f32 %v1978, 0.0
      %vm2012 = vcmask 31744
      %2013 = vst.msk [vmem:[#allocation2] sm:$0xff] %vm2012, 0.0
      %2014 = vst.msk [vmem:[#allocation2 + $0x8] sm:$0xff] %vm2012, 0.0
      %vm2015 = vcmask 25600
      %2016 = vst.msk [vmem:[#allocation2 + $0x10] sm:$0x3] %vm2015, 0.0
      %2017 = vst.msk [vmem:[#allocation2 + $0x18] sm:$0xff] %vm2012, 0.0
      %2018 = vst.msk [vmem:[#allocation2 + $0x20] sm:$0xff] %vm2012, 0.0
      %2019 = vst.msk [vmem:[#allocation2 + $0x28] sm:$0x3] %vm2015, 0.0
      %2020 = vst.msk [vmem:[#allocation2 + $0x30] sm:$0xff] %vm2012, 0.0
      %2021 = vst.msk [vmem:[#allocation2 + $0x38] sm:$0xff] %vm2012, 0.0
      %2022 = vst.msk [vmem:[#allocation2 + $0x40] sm:$0x3] %vm2015, 0.0
      %2023 = vst.msk [vmem:[#allocation2 + $0x48] sm:$0xff] %vm2012, 0.0
      %2024 = vst.msk [vmem:[#allocation2 + $0x50] sm:$0xff] %vm2012, 0.0
      %2025 = vst.msk [vmem:[#allocation2 + $0x58] sm:$0x3] %vm2015, 0.0
      %2026 = vst.msk [vmem:[#allocation2 + $0x60] sm:$0xff] %vm2012, 0.0
      %2027 = vst.msk [vmem:[#allocation2 + $0x68] sm:$0xff] %vm2012, 0.0
      %2028 = vst.msk [vmem:[#allocation2 + $0x70] sm:$0x3] %vm2015, 0.0
      %2029 = vst.msk [vmem:[#allocation2 + $0x78] sm:$0xff] %vm2012, 0.0
      %2030 = vst.msk [vmem:[#allocation2 + $0x80] sm:$0xff] %vm2012, 0.0
      %2031 = vst.msk [vmem:[#allocation2 + $0x88] sm:$0x3] %vm2015, 0.0
      %2032 = vst.msk [vmem:[#allocation2 + $0x90] sm:$0xff] %vm2012, 0.0
      %2033 = vst.msk [vmem:[#allocation2 + $0x98] sm:$0xff] %vm2012, 0.0
      %2034 = vst.msk [vmem:[#allocation2 + $0xa0] sm:$0x3] %vm2015, 0.0
      %2035 = vst.msk [vmem:[#allocation2 + $0xa8] sm:$0xff] %vm2012, 0.0
      %2036 = vst.msk [vmem:[#allocation2 + $0xb0] sm:$0xff] %vm2012, 0.0
      %2037 = vst.msk [vmem:[#allocation2 + $0xb8] sm:$0x3] %vm2015, 0.0
      %2038 = vst.msk [vmem:[#allocation2 + $0xc0] sm:$0xff] %vm2012, 0.0
      %2039 = vst.msk [vmem:[#allocation2 + $0xc8] sm:$0xff] %vm2012, 0.0
      %2040 = vst.msk [vmem:[#allocation2 + $0xd0] sm:$0x3] %vm2015, 0.0
      %2041 = vst.msk [vmem:[#allocation2 + $0xd8] sm:$0xff] %vm2012, 0.0
      %2042 = vst.msk [vmem:[#allocation2 + $0xe0] sm:$0xff] %vm2012, 0.0
      %2043 = vst.msk [vmem:[#allocation2 + $0xe8] sm:$0x3] %vm2015, 0.0
      %2044 = vst.msk [vmem:[#allocation2 + $0xf0] sm:$0xff] %vm2012, 0.0
      %2045 = vst.msk [vmem:[#allocation2 + $0xf8] sm:$0xff] %vm2012, 0.0
      %2046 = vst.msk [vmem:[#allocation2 + $0x100] sm:$0x3] %vm2015, 0.0
      %2047 = vst.msk [vmem:[#allocation2 + $0x108] sm:$0xff] %vm2012, 0.0
      %2048 = vst.msk [vmem:[#allocation2 + $0x110] sm:$0xff] %vm2012, 0.0
      %2049 = vst.msk [vmem:[#allocation2 + $0x118] sm:$0x3] %vm2015, 0.0
      %2050 = vst.msk [vmem:[#allocation2 + $0x120] sm:$0xff] %vm2012, 0.0
      %2051 = vst.msk [vmem:[#allocation2 + $0x128] sm:$0xff] %vm2012, 0.0
      %2052 = vst.msk [vmem:[#allocation2 + $0x130] sm:$0x3] %vm2015, 0.0
      %2053 = vst.msk [vmem:[#allocation2 + $0x138] sm:$0xff] %vm2012, 0.0
      %2054 = vst.msk [vmem:[#allocation2 + $0x140] sm:$0xff] %vm2012, 0.0
      %2055 = vst.msk [vmem:[#allocation2 + $0x148] sm:$0x3] %vm2015, 0.0
      %2056 = vst.msk [vmem:[#allocation2 + $0x150] sm:$0xff] %vm2012, 0.0
      %2057 = vst.msk [vmem:[#allocation2 + $0x158] sm:$0xff] %vm2012, 0.0
      %2058 = vst.msk [vmem:[#allocation2 + $0x160] sm:$0x3] %vm2015, 0.0
      %2059 = vst.msk [vmem:[#allocation2 + $0x168] sm:$0xff] %vm2012, 0.0
      %2060 = vst.msk [vmem:[#allocation2 + $0x170] sm:$0xff] %vm2012, 0.0
      %2061 = vst.msk [vmem:[#allocation2 + $0x178] sm:$0x3] %vm2015, 0.0
      %2062 = vst.msk [vmem:[#allocation2 + $0x180] sm:$0xff] %vm2012, 0.0
      %2063 = vst.msk [vmem:[#allocation2 + $0x188] sm:$0xff] %vm2012, 0.0
      %2064 = vst.msk [vmem:[#allocation2 + $0x190] sm:$0x3] %vm2015, 0.0
      %2065 = vst.msk [vmem:[#allocation2 + $0x198] sm:$0xff] %vm2012, 0.0
      %2066 = vst.msk [vmem:[#allocation2 + $0x1a0] sm:$0xff] %vm2012, 0.0
      %2067 = vst.msk [vmem:[#allocation2 + $0x1a8] sm:$0x3] %vm2015, 0.0
      %s2068 = scalar_lea.vmem [#allocation2], 24
      %2069 = vst.msk [vmem:[%s2068 + $0x1] sm:$0xff] %vm2012, %v1980
      %2070 = vst.msk [vmem:[%s2068 + $0x9] sm:$0xff] %vm2012, %v1981
      %2071 = vst.msk [vmem:[%s2068 + $0x19] sm:$0xff] %vm2012, %v1982
      %2072 = vst.msk [vmem:[%s2068 + $0x21] sm:$0xff] %vm2012, %v1983
      %2073 = vst.msk [vmem:[%s2068 + $0x31] sm:$0xff] %vm2012, %v1984
      %2074 = vst.msk [vmem:[%s2068 + $0x39] sm:$0xff] %vm2012, %v1985
      %2075 = vst.msk [vmem:[%s2068 + $0x49] sm:$0xff] %vm2012, %v1986
      %2076 = vst.msk [vmem:[%s2068 + $0x51] sm:$0xff] %vm2012, %v1987
      %2077 = vst.msk [vmem:[%s2068 + $0x61] sm:$0xff] %vm2012, %v1988
      %2078 = vst.msk [vmem:[%s2068 + $0x69] sm:$0xff] %vm2012, %v1989
      %2079 = vst.msk [vmem:[%s2068 + $0x79] sm:$0xff] %vm2012, %v1990
      %2080 = vst.msk [vmem:[%s2068 + $0x81] sm:$0xff] %vm2012, %v1991
      %2081 = vst.msk [vmem:[%s2068 + $0x91] sm:$0xff] %vm2012, %v1992
      %2082 = vst.msk [vmem:[%s2068 + $0x99] sm:$0xff] %vm2012, %v1993
      %2083 = vst.msk [vmem:[%s2068 + $0xa9] sm:$0xff] %vm2012, %v1994
      %2084 = vst.msk [vmem:[%s2068 + $0xb1] sm:$0xff] %vm2012, %v1995
      %2085 = vst.msk [vmem:[%s2068 + $0xc1] sm:$0xff] %vm2012, %v1996
      %2086 = vst.msk [vmem:[%s2068 + $0xc9] sm:$0xff] %vm2012, %v1997
      %2087 = vst.msk [vmem:[%s2068 + $0xd9] sm:$0xff] %vm2012, %v1998
      %2088 = vst.msk [vmem:[%s2068 + $0xe1] sm:$0xff] %vm2012, %v1999
      %2089 = vst.msk [vmem:[%s2068 + $0xf1] sm:$0xff] %vm2012, %v2000
      %2090 = vst.msk [vmem:[%s2068 + $0xf9] sm:$0xff] %vm2012, %v2001
      %2091 = vst.msk [vmem:[%s2068 + $0x109] sm:$0xff] %vm2012, %v2002
      %2092 = vst.msk [vmem:[%s2068 + $0x111] sm:$0xff] %vm2012, %v2003
      %2093 = vst.msk [vmem:[%s2068 + $0x121] sm:$0xff] %vm2012, %v2004
      %2094 = vst.msk [vmem:[%s2068 + $0x129] sm:$0xff] %vm2012, %v2005
      %2095 = vst.msk [vmem:[%s2068 + $0x139] sm:$0xff] %vm2012, %v2006
      %2096 = vst.msk [vmem:[%s2068 + $0x141] sm:$0xff] %vm2012, %v2007
      %2097 = vst.msk [vmem:[%s2068 + $0x151] sm:$0xff] %vm2012, %v2008
      %2098 = vst.msk [vmem:[%s2068 + $0x159] sm:$0xff] %vm2012, %v2009
      %2099 = vst.msk [vmem:[%s2068 + $0x169] sm:$0xff] %vm2012, %v2010
      %2100 = vst.msk [vmem:[%s2068 + $0x171] sm:$0xff] %vm2012, %v2011
      %v2101 = vld [vmem:[#allocation2] sm:$0xff]
      %v2102 = vld [vmem:[#allocation2 + $0x8] sm:$0xff]
      %v2103 = vld [vmem:[#allocation2 + $0x18] sm:$0xff]
      %v2104 = vld [vmem:[#allocation2 + $0x20] sm:$0xff]
      %v2105 = vld [vmem:[#allocation2 + $0x30] sm:$0xff]
      %v2106 = vld [vmem:[#allocation2 + $0x38] sm:$0xff]
      %v2107 = vld [vmem:[#allocation2 + $0x48] sm:$0xff]
      %v2108 = vld [vmem:[#allocation2 + $0x50] sm:$0xff]
      %v2109 = vld [vmem:[#allocation2 + $0x60] sm:$0xff]
      %v2110 = vld [vmem:[#allocation2 + $0x68] sm:$0xff]
      %v2111 = vld [vmem:[#allocation2 + $0x78] sm:$0xff]
      %v2112 = vld [vmem:[#allocation2 + $0x80] sm:$0xff]
      %v2113 = vld [vmem:[#allocation2 + $0x90] sm:$0xff]
      %v2114 = vld [vmem:[#allocation2 + $0x98] sm:$0xff]
      %v2115 = vld [vmem:[#allocation2 + $0xa8] sm:$0xff]
      %v2116 = vld [vmem:[#allocation2 + $0xb0] sm:$0xff]
      %v2117 = vld [vmem:[#allocation2 + $0xc0] sm:$0xff]
      %v2118 = vld [vmem:[#allocation2 + $0xc8] sm:$0xff]
      %v2119 = vld [vmem:[#allocation2 + $0xd8] sm:$0xff]
      %v2120 = vld [vmem:[#allocation2 + $0xe0] sm:$0xff]
      %v2121 = vld [vmem:[#allocation2 + $0xf0] sm:$0xff]
      %v2122 = vld [vmem:[#allocation2 + $0xf8] sm:$0xff]
      %v2123 = vld [vmem:[#allocation2 + $0x108] sm:$0xff]
      %v2124 = vld [vmem:[#allocation2 + $0x110] sm:$0xff]
      %v2125 = vld [vmem:[#allocation2 + $0x120] sm:$0xff]
      %v2126 = vld [vmem:[#allocation2 + $0x128] sm:$0xff]
      %v2127 = vld [vmem:[#allocation2 + $0x138] sm:$0xff]
      %v2128 = vld [vmem:[#allocation2 + $0x140] sm:$0xff]
      %v2129 = vld [vmem:[#allocation2 + $0x150] sm:$0xff]
      %v2130 = vld [vmem:[#allocation2 + $0x158] sm:$0xff]
      %v2131 = vld [vmem:[#allocation2 + $0x168] sm:$0xff]
      %v2132 = vld [vmem:[#allocation2 + $0x170] sm:$0xff]
      %v2133 = vld [vmem:[#allocation2 + $0x1] sm:$0xff]
      %v2134 = vld [vmem:[#allocation2 + $0x9] sm:$0xff]
      %v2135 = vld [vmem:[#allocation2 + $0x19] sm:$0xff]
      %v2136 = vld [vmem:[#allocation2 + $0x21] sm:$0xff]
      %v2137 = vld [vmem:[#allocation2 + $0x31] sm:$0xff]
      %v2138 = vld [vmem:[#allocation2 + $0x39] sm:$0xff]
      %v2139 = vld [vmem:[#allocation2 + $0x49] sm:$0xff]
      %v2140 = vld [vmem:[#allocation2 + $0x51] sm:$0xff]
      %v2141 = vld [vmem:[#allocation2 + $0x61] sm:$0xff]
      %v2142 = vld [vmem:[#allocation2 + $0x69] sm:$0xff]
      %v2143 = vld [vmem:[#allocation2 + $0x79] sm:$0xff]
      %v2144 = vld [vmem:[#allocation2 + $0x81] sm:$0xff]
      %v2145 = vld [vmem:[#allocation2 + $0x91] sm:$0xff]
      %v2146 = vld [vmem:[#allocation2 + $0x99] sm:$0xff]
      %v2147 = vld [vmem:[#allocation2 + $0xa9] sm:$0xff]
      %v2148 = vld [vmem:[#allocation2 + $0xb1] sm:$0xff]
      %v2149 = vld [vmem:[#allocation2 + $0xc1] sm:$0xff]
      %v2150 = vld [vmem:[#allocation2 + $0xc9] sm:$0xff]
      %v2151 = vld [vmem:[#allocation2 + $0xd9] sm:$0xff]
      %v2152 = vld [vmem:[#allocation2 + $0xe1] sm:$0xff]
      %v2153 = vld [vmem:[#allocation2 + $0xf1] sm:$0xff]
      %v2154 = vld [vmem:[#allocation2 + $0xf9] sm:$0xff]
      %v2155 = vld [vmem:[#allocation2 + $0x109] sm:$0xff]
      %v2156 = vld [vmem:[#allocation2 + $0x111] sm:$0xff]
      %v2157 = vld [vmem:[#allocation2 + $0x121] sm:$0xff]
      %v2158 = vld [vmem:[#allocation2 + $0x129] sm:$0xff]
      %v2159 = vld [vmem:[#allocation2 + $0x139] sm:$0xff]
      %v2160 = vld [vmem:[#allocation2 + $0x141] sm:$0xff]
      %v2161 = vld [vmem:[#allocation2 + $0x151] sm:$0xff]
      %v2162 = vld [vmem:[#allocation2 + $0x159] sm:$0xff]
      %v2163 = vld [vmem:[#allocation2 + $0x169] sm:$0xff]
      %v2164 = vld [vmem:[#allocation2 + $0x171] sm:$0xff]
      %v2165 = vld [vmem:[#allocation2 + $0x2] sm:$0xff]
      %v2166 = vld [vmem:[#allocation2 + $0xa] sm:$0xff]
      %v2167 = vld [vmem:[#allocation2 + $0x1a] sm:$0xff]
      %v2168 = vld [vmem:[#allocation2 + $0x22] sm:$0xff]
      %v2169 = vld [vmem:[#allocation2 + $0x32] sm:$0xff]
      %v2170 = vld [vmem:[#allocation2 + $0x3a] sm:$0xff]
      %v2171 = vld [vmem:[#allocation2 + $0x4a] sm:$0xff]
      %v2172 = vld [vmem:[#allocation2 + $0x52] sm:$0xff]
      %v2173 = vld [vmem:[#allocation2 + $0x62] sm:$0xff]
      %v2174 = vld [vmem:[#allocation2 + $0x6a] sm:$0xff]
      %v2175 = vld [vmem:[#allocation2 + $0x7a] sm:$0xff]
      %v2176 = vld [vmem:[#allocation2 + $0x82] sm:$0xff]
      %v2177 = vld [vmem:[#allocation2 + $0x92] sm:$0xff]
      %v2178 = vld [vmem:[#allocation2 + $0x9a] sm:$0xff]
      %v2179 = vld [vmem:[#allocation2 + $0xaa] sm:$0xff]
      %v2180 = vld [vmem:[#allocation2 + $0xb2] sm:$0xff]
      %v2181 = vld [vmem:[#allocation2 + $0xc2] sm:$0xff]
      %v2182 = vld [vmem:[#allocation2 + $0xca] sm:$0xff]
      %v2183 = vld [vmem:[#allocation2 + $0xda] sm:$0xff]
      %v2184 = vld [vmem:[#allocation2 + $0xe2] sm:$0xff]
      %v2185 = vld [vmem:[#allocation2 + $0xf2] sm:$0xff]
      %v2186 = vld [vmem:[#allocation2 + $0xfa] sm:$0xff]
      %v2187 = vld [vmem:[#allocation2 + $0x10a] sm:$0xff]
      %v2188 = vld [vmem:[#allocation2 + $0x112] sm:$0xff]
      %v2189 = vld [vmem:[#allocation2 + $0x122] sm:$0xff]
      %v2190 = vld [vmem:[#allocation2 + $0x12a] sm:$0xff]
      %v2191 = vld [vmem:[#allocation2 + $0x13a] sm:$0xff]
      %v2192 = vld [vmem:[#allocation2 + $0x142] sm:$0xff]
      %v2193 = vld [vmem:[#allocation2 + $0x152] sm:$0xff]
      %v2194 = vld [vmem:[#allocation2 + $0x15a] sm:$0xff]
      %v2195 = vld [vmem:[#allocation2 + $0x16a] sm:$0xff]
      %v2196 = vld [vmem:[#allocation2 + $0x172] sm:$0xff]
      %v2197 = vld [vmem:[%s2068] sm:$0xff]
      %v2198 = vld [vmem:[%s2068 + $0x8] sm:$0xff]
      %v2199 = vld [vmem:[%s2068 + $0x18] sm:$0xff]
      %v2200 = vld [vmem:[%s2068 + $0x20] sm:$0xff]
      %v2201 = vld [vmem:[%s2068 + $0x30] sm:$0xff]
      %v2202 = vld [vmem:[%s2068 + $0x38] sm:$0xff]
      %v2203 = vld [vmem:[%s2068 + $0x48] sm:$0xff]
      %v2204 = vld [vmem:[%s2068 + $0x50] sm:$0xff]
      %v2205 = vld [vmem:[%s2068 + $0x60] sm:$0xff]
      %v2206 = vld [vmem:[%s2068 + $0x68] sm:$0xff]
      %v2207 = vld [vmem:[%s2068 + $0x78] sm:$0xff]
      %v2208 = vld [vmem:[%s2068 + $0x80] sm:$0xff]
      %v2209 = vld [vmem:[%s2068 + $0x90] sm:$0xff]
      %v2210 = vld [vmem:[%s2068 + $0x98] sm:$0xff]
      %v2211 = vld [vmem:[%s2068 + $0xa8] sm:$0xff]
      %v2212 = vld [vmem:[%s2068 + $0xb0] sm:$0xff]
      %v2213 = vld [vmem:[%s2068 + $0xc0] sm:$0xff]
      %v2214 = vld [vmem:[%s2068 + $0xc8] sm:$0xff]
      %v2215 = vld [vmem:[%s2068 + $0xd8] sm:$0xff]
      %v2216 = vld [vmem:[%s2068 + $0xe0] sm:$0xff]
      %v2217 = vld [vmem:[%s2068 + $0xf0] sm:$0xff]
      %v2218 = vld [vmem:[%s2068 + $0xf8] sm:$0xff]
      %v2219 = vld [vmem:[%s2068 + $0x108] sm:$0xff]
      %v2220 = vld [vmem:[%s2068 + $0x110] sm:$0xff]
      %v2221 = vld [vmem:[%s2068 + $0x120] sm:$0xff]
      %v2222 = vld [vmem:[%s2068 + $0x128] sm:$0xff]
      %v2223 = vld [vmem:[%s2068 + $0x138] sm:$0xff]
      %v2224 = vld [vmem:[%s2068 + $0x140] sm:$0xff]
      %v2225 = vld [vmem:[%s2068 + $0x150] sm:$0xff]
      %v2226 = vld [vmem:[%s2068 + $0x158] sm:$0xff]
      %v2227 = vld [vmem:[%s2068 + $0x168] sm:$0xff]
      %v2228 = vld [vmem:[%s2068 + $0x170] sm:$0xff]
      %v2229 = vld [vmem:[%s2068 + $0x1] sm:$0xff]
      %v2230 = vld [vmem:[%s2068 + $0x9] sm:$0xff]
      %v2231 = vld [vmem:[%s2068 + $0x19] sm:$0xff]
      %v2232 = vld [vmem:[%s2068 + $0x21] sm:$0xff]
      %v2233 = vld [vmem:[%s2068 + $0x31] sm:$0xff]
      %v2234 = vld [vmem:[%s2068 + $0x39] sm:$0xff]
      %v2235 = vld [vmem:[%s2068 + $0x49] sm:$0xff]
      %v2236 = vld [vmem:[%s2068 + $0x51] sm:$0xff]
      %v2237 = vld [vmem:[%s2068 + $0x61] sm:$0xff]
      %v2238 = vld [vmem:[%s2068 + $0x69] sm:$0xff]
      %v2239 = vld [vmem:[%s2068 + $0x79] sm:$0xff]
      %v2240 = vld [vmem:[%s2068 + $0x81] sm:$0xff]
      %v2241 = vld [vmem:[%s2068 + $0x91] sm:$0xff]
      %v2242 = vld [vmem:[%s2068 + $0x99] sm:$0xff]
      %v2243 = vld [vmem:[%s2068 + $0xa9] sm:$0xff]
      %v2244 = vld [vmem:[%s2068 + $0xb1] sm:$0xff]
      %v2245 = vld [vmem:[%s2068 + $0xc1] sm:$0xff]
      %v2246 = vld [vmem:[%s2068 + $0xc9] sm:$0xff]
      %v2247 = vld [vmem:[%s2068 + $0xd9] sm:$0xff]
      %v2248 = vld [vmem:[%s2068 + $0xe1] sm:$0xff]
      %v2249 = vld [vmem:[%s2068 + $0xf1] sm:$0xff]
      %v2250 = vld [vmem:[%s2068 + $0xf9] sm:$0xff]
      %v2251 = vld [vmem:[%s2068 + $0x109] sm:$0xff]
      %v2252 = vld [vmem:[%s2068 + $0x111] sm:$0xff]
      %v2253 = vld [vmem:[%s2068 + $0x121] sm:$0xff]
      %v2254 = vld [vmem:[%s2068 + $0x129] sm:$0xff]
      %v2255 = vld [vmem:[%s2068 + $0x139] sm:$0xff]
      %v2256 = vld [vmem:[%s2068 + $0x141] sm:$0xff]
      %v2257 = vld [vmem:[%s2068 + $0x151] sm:$0xff]
      %v2258 = vld [vmem:[%s2068 + $0x159] sm:$0xff]
      %v2259 = vld [vmem:[%s2068 + $0x169] sm:$0xff]
      %v2260 = vld [vmem:[%s2068 + $0x171] sm:$0xff]
      %v2261 = vld [vmem:[%s2068 + $0x2] sm:$0xff]
      %v2262 = vld [vmem:[%s2068 + $0xa] sm:$0xff]
      %v2263 = vld [vmem:[%s2068 + $0x1a] sm:$0xff]
      %v2264 = vld [vmem:[%s2068 + $0x22] sm:$0xff]
      %v2265 = vld [vmem:[%s2068 + $0x32] sm:$0xff]
      %v2266 = vld [vmem:[%s2068 + $0x3a] sm:$0xff]
      %v2267 = vld [vmem:[%s2068 + $0x4a] sm:$0xff]
      %v2268 = vld [vmem:[%s2068 + $0x52] sm:$0xff]
      %v2269 = vld [vmem:[%s2068 + $0x62] sm:$0xff]
      %v2270 = vld [vmem:[%s2068 + $0x6a] sm:$0xff]
      %v2271 = vld [vmem:[%s2068 + $0x7a] sm:$0xff]
      %v2272 = vld [vmem:[%s2068 + $0x82] sm:$0xff]
      %v2273 = vld [vmem:[%s2068 + $0x92] sm:$0xff]
      %v2274 = vld [vmem:[%s2068 + $0x9a] sm:$0xff]
      %v2275 = vld [vmem:[%s2068 + $0xaa] sm:$0xff]
      %v2276 = vld [vmem:[%s2068 + $0xb2] sm:$0xff]
      %v2277 = vld [vmem:[%s2068 + $0xc2] sm:$0xff]
      %v2278 = vld [vmem:[%s2068 + $0xca] sm:$0xff]
      %v2279 = vld [vmem:[%s2068 + $0xda] sm:$0xff]
      %v2280 = vld [vmem:[%s2068 + $0xe2] sm:$0xff]
      %v2281 = vld [vmem:[%s2068 + $0xf2] sm:$0xff]
      %v2282 = vld [vmem:[%s2068 + $0xfa] sm:$0xff]
      %v2283 = vld [vmem:[%s2068 + $0x10a] sm:$0xff]
      %v2284 = vld [vmem:[%s2068 + $0x112] sm:$0xff]
      %v2285 = vld [vmem:[%s2068 + $0x122] sm:$0xff]
      %v2286 = vld [vmem:[%s2068 + $0x12a] sm:$0xff]
      %v2287 = vld [vmem:[%s2068 + $0x13a] sm:$0xff]
      %v2288 = vld [vmem:[%s2068 + $0x142] sm:$0xff]
      %v2289 = vld [vmem:[%s2068 + $0x152] sm:$0xff]
      %v2290 = vld [vmem:[%s2068 + $0x15a] sm:$0xff]
      %v2291 = vld [vmem:[%s2068 + $0x16a] sm:$0xff]
      %v2292 = vld [vmem:[%s2068 + $0x172] sm:$0xff]
      %s2293 = scalar_lea.vmem [#allocation2], 48
      %v2294 = vld [vmem:[%s2293] sm:$0xff]
      %v2295 = vld [vmem:[%s2293 + $0x8] sm:$0xff]
      %v2296 = vld [vmem:[%s2293 + $0x18] sm:$0xff]
      %v2297 = vld [vmem:[%s2293 + $0x20] sm:$0xff]
      %v2298 = vld [vmem:[%s2293 + $0x30] sm:$0xff]
      %v2299 = vld [vmem:[%s2293 + $0x38] sm:$0xff]
      %v2300 = vld [vmem:[%s2293 + $0x48] sm:$0xff]
      %v2301 = vld [vmem:[%s2293 + $0x50] sm:$0xff]
      %v2302 = vld [vmem:[%s2293 + $0x60] sm:$0xff]
      %v2303 = vld [vmem:[%s2293 + $0x68] sm:$0xff]
      %v2304 = vld [vmem:[%s2293 + $0x78] sm:$0xff]
      %v2305 = vld [vmem:[%s2293 + $0x80] sm:$0xff]
      %v2306 = vld [vmem:[%s2293 + $0x90] sm:$0xff]
      %v2307 = vld [vmem:[%s2293 + $0x98] sm:$0xff]
      %v2308 = vld [vmem:[%s2293 + $0xa8] sm:$0xff]
      %v2309 = vld [vmem:[%s2293 + $0xb0] sm:$0xff]
      %v2310 = vld [vmem:[%s2293 + $0xc0] sm:$0xff]
      %v2311 = vld [vmem:[%s2293 + $0xc8] sm:$0xff]
      %v2312 = vld [vmem:[%s2293 + $0xd8] sm:$0xff]
      %v2313 = vld [vmem:[%s2293 + $0xe0] sm:$0xff]
      %v2314 = vld [vmem:[%s2293 + $0xf0] sm:$0xff]
      %v2315 = vld [vmem:[%s2293 + $0xf8] sm:$0xff]
      %v2316 = vld [vmem:[%s2293 + $0x108] sm:$0xff]
      %v2317 = vld [vmem:[%s2293 + $0x110] sm:$0xff]
      %v2318 = vld [vmem:[%s2293 + $0x120] sm:$0xff]
      %v2319 = vld [vmem:[%s2293 + $0x128] sm:$0xff]
      %v2320 = vld [vmem:[%s2293 + $0x138] sm:$0xff]
      %v2321 = vld [vmem:[%s2293 + $0x140] sm:$0xff]
      %v2322 = vld [vmem:[%s2293 + $0x150] sm:$0xff]
      %v2323 = vld [vmem:[%s2293 + $0x158] sm:$0xff]
      %v2324 = vld [vmem:[%s2293 + $0x168] sm:$0xff]
      %v2325 = vld [vmem:[%s2293 + $0x170] sm:$0xff]
      %v2326 = vld [vmem:[%s2293 + $0x1] sm:$0xff]
      %v2327 = vld [vmem:[%s2293 + $0x9] sm:$0xff]
      %v2328 = vld [vmem:[%s2293 + $0x19] sm:$0xff]
      %v2329 = vld [vmem:[%s2293 + $0x21] sm:$0xff]
      %v2330 = vld [vmem:[%s2293 + $0x31] sm:$0xff]
      %v2331 = vld [vmem:[%s2293 + $0x39] sm:$0xff]
      %v2332 = vld [vmem:[%s2293 + $0x49] sm:$0xff]
      %v2333 = vld [vmem:[%s2293 + $0x51] sm:$0xff]
      %v2334 = vld [vmem:[%s2293 + $0x61] sm:$0xff]
      %v2335 = vld [vmem:[%s2293 + $0x69] sm:$0xff]
      %v2336 = vld [vmem:[%s2293 + $0x79] sm:$0xff]
      %v2337 = vld [vmem:[%s2293 + $0x81] sm:$0xff]
      %v2338 = vld [vmem:[%s2293 + $0x91] sm:$0xff]
      %v2339 = vld [vmem:[%s2293 + $0x99] sm:$0xff]
      %v2340 = vld [vmem:[%s2293 + $0xa9] sm:$0xff]
      %v2341 = vld [vmem:[%s2293 + $0xb1] sm:$0xff]
      %v2342 = vld [vmem:[%s2293 + $0xc1] sm:$0xff]
      %v2343 = vld [vmem:[%s2293 + $0xc9] sm:$0xff]
      %v2344 = vld [vmem:[%s2293 + $0xd9] sm:$0xff]
      %v2345 = vld [vmem:[%s2293 + $0xe1] sm:$0xff]
      %v2346 = vld [vmem:[%s2293 + $0xf1] sm:$0xff]
      %v2347 = vld [vmem:[%s2293 + $0xf9] sm:$0xff]
      %v2348 = vld [vmem:[%s2293 + $0x109] sm:$0xff]
      %v2349 = vld [vmem:[%s2293 + $0x111] sm:$0xff]
      %v2350 = vld [vmem:[%s2293 + $0x121] sm:$0xff]
      %v2351 = vld [vmem:[%s2293 + $0x129] sm:$0xff]
      %v2352 = vld [vmem:[%s2293 + $0x139] sm:$0xff]
      %v2353 = vld [vmem:[%s2293 + $0x141] sm:$0xff]
      %v2354 = vld [vmem:[%s2293 + $0x151] sm:$0xff]
      %v2355 = vld [vmem:[%s2293 + $0x159] sm:$0xff]
      %v2356 = vld [vmem:[%s2293 + $0x169] sm:$0xff]
      %v2357 = vld [vmem:[%s2293 + $0x171] sm:$0xff]
      %v2358 = vld [vmem:[%s2293 + $0x2] sm:$0xff]
      %v2359 = vld [vmem:[%s2293 + $0xa] sm:$0xff]
      %v2360 = vld [vmem:[%s2293 + $0x1a] sm:$0xff]
      %v2361 = vld [vmem:[%s2293 + $0x22] sm:$0xff]
      %v2362 = vld [vmem:[%s2293 + $0x32] sm:$0xff]
      %v2363 = vld [vmem:[%s2293 + $0x3a] sm:$0xff]
      %v2364 = vld [vmem:[%s2293 + $0x4a] sm:$0xff]
      %v2365 = vld [vmem:[%s2293 + $0x52] sm:$0xff]
      %v2366 = vld [vmem:[%s2293 + $0x62] sm:$0xff]
      %v2367 = vld [vmem:[%s2293 + $0x6a] sm:$0xff]
      %v2368 = vld [vmem:[%s2293 + $0x7a] sm:$0xff]
      %v2369 = vld [vmem:[%s2293 + $0x82] sm:$0xff]
      %v2370 = vld [vmem:[%s2293 + $0x92] sm:$0xff]
      %v2371 = vld [vmem:[%s2293 + $0x9a] sm:$0xff]
      %v2372 = vld [vmem:[%s2293 + $0xaa] sm:$0xff]
      %v2373 = vld [vmem:[%s2293 + $0xb2] sm:$0xff]
      %v2374 = vld [vmem:[%s2293 + $0xc2] sm:$0xff]
      %v2375 = vld [vmem:[%s2293 + $0xca] sm:$0xff]
      %v2376 = vld [vmem:[%s2293 + $0xda] sm:$0xff]
      %v2377 = vld [vmem:[%s2293 + $0xe2] sm:$0xff]
      %v2378 = vld [vmem:[%s2293 + $0xf2] sm:$0xff]
      %v2379 = vld [vmem:[%s2293 + $0xfa] sm:$0xff]
      %v2380 = vld [vmem:[%s2293 + $0x10a] sm:$0xff]
      %v2381 = vld [vmem:[%s2293 + $0x112] sm:$0xff]
      %v2382 = vld [vmem:[%s2293 + $0x122] sm:$0xff]
      %v2383 = vld [vmem:[%s2293 + $0x12a] sm:$0xff]
      %v2384 = vld [vmem:[%s2293 + $0x13a] sm:$0xff]
      %v2385 = vld [vmem:[%s2293 + $0x142] sm:$0xff]
      %v2386 = vld [vmem:[%s2293 + $0x152] sm:$0xff]
      %v2387 = vld [vmem:[%s2293 + $0x15a] sm:$0xff]
      %v2388 = vld [vmem:[%s2293 + $0x16a] sm:$0xff]
      %v2389 = vld [vmem:[%s2293 + $0x172] sm:$0xff]
      %2422 = vrot.lane.b32.xlu0 %v2133, 4
      %v2423 = vpop.permute.xlu0 %2422
      %2424 = vrot.lane.b32.xlu0 %v2134, 4
      %v2425 = vpop.permute.xlu0 %2424
      %2426 = vrot.lane.b32.xlu0 %v2135, 4
      %v2427 = vpop.permute.xlu0 %2426
      %2428 = vrot.lane.b32.xlu0 %v2136, 4
      %v2429 = vpop.permute.xlu0 %2428
      %2430 = vrot.lane.b32.xlu0 %v2137, 4
      %v2431 = vpop.permute.xlu0 %2430
      %2432 = vrot.lane.b32.xlu0 %v2138, 4
      %v2433 = vpop.permute.xlu0 %2432
      %2434 = vrot.lane.b32.xlu0 %v2139, 4
      %v2435 = vpop.permute.xlu0 %2434
      %2436 = vrot.lane.b32.xlu0 %v2140, 4
      %v2437 = vpop.permute.xlu0 %2436
      %2438 = vrot.lane.b32.xlu0 %v2141, 4
      %v2439 = vpop.permute.xlu0 %2438
      %2440 = vrot.lane.b32.xlu0 %v2142, 4
      %v2441 = vpop.permute.xlu0 %2440
      %2442 = vrot.lane.b32.xlu0 %v2143, 4
      %v2443 = vpop.permute.xlu0 %2442
      %2444 = vrot.lane.b32.xlu0 %v2144, 4
      %v2445 = vpop.permute.xlu0 %2444
      %2446 = vrot.lane.b32.xlu0 %v2145, 4
      %v2447 = vpop.permute.xlu0 %2446
      %2448 = vrot.lane.b32.xlu0 %v2146, 4
      %v2449 = vpop.permute.xlu0 %2448
      %2450 = vrot.lane.b32.xlu0 %v2147, 4
      %v2451 = vpop.permute.xlu0 %2450
      %2452 = vrot.lane.b32.xlu0 %v2148, 4
      %v2453 = vpop.permute.xlu0 %2452
      %2454 = vrot.lane.b32.xlu0 %v2149, 4
      %v2455 = vpop.permute.xlu0 %2454
      %2456 = vrot.lane.b32.xlu0 %v2150, 4
      %v2457 = vpop.permute.xlu0 %2456
      %2458 = vrot.lane.b32.xlu0 %v2151, 4
      %v2459 = vpop.permute.xlu0 %2458
      %2460 = vrot.lane.b32.xlu0 %v2152, 4
      %v2461 = vpop.permute.xlu0 %2460
      %2462 = vrot.lane.b32.xlu0 %v2153, 4
      %v2463 = vpop.permute.xlu0 %2462
      %2464 = vrot.lane.b32.xlu0 %v2154, 4
      %v2465 = vpop.permute.xlu0 %2464
      %2466 = vrot.lane.b32.xlu0 %v2155, 4
      %v2467 = vpop.permute.xlu0 %2466
      %2468 = vrot.lane.b32.xlu0 %v2156, 4
      %v2469 = vpop.permute.xlu0 %2468
      %2470 = vrot.lane.b32.xlu0 %v2157, 4
      %v2471 = vpop.permute.xlu0 %2470
      %2472 = vrot.lane.b32.xlu0 %v2158, 4
      %v2473 = vpop.permute.xlu0 %2472
      %2474 = vrot.lane.b32.xlu0 %v2159, 4
      %v2475 = vpop.permute.xlu0 %2474
      %2476 = vrot.lane.b32.xlu0 %v2160, 4
      %v2477 = vpop.permute.xlu0 %2476
      %2478 = vrot.lane.b32.xlu0 %v2161, 4
      %v2479 = vpop.permute.xlu0 %2478
      %2480 = vrot.lane.b32.xlu0 %v2162, 4
      %v2481 = vpop.permute.xlu0 %2480
      %2482 = vrot.lane.b32.xlu0 %v2163, 4
      %v2483 = vpop.permute.xlu0 %2482
      %2484 = vrot.lane.b32.xlu0 %v2164, 4
      %v2485 = vpop.permute.xlu0 %2484
      %2550 = vrot.lane.b32.xlu0 %v2165, 8
      %v2551 = vpop.permute.xlu0 %2550
      %2552 = vrot.lane.b32.xlu0 %v2166, 8
      %v2553 = vpop.permute.xlu0 %2552
      %2554 = vrot.lane.b32.xlu0 %v2167, 8
      %v2555 = vpop.permute.xlu0 %2554
      %2556 = vrot.lane.b32.xlu0 %v2168, 8
      %v2557 = vpop.permute.xlu0 %2556
      %2558 = vrot.lane.b32.xlu0 %v2169, 8
      %v2559 = vpop.permute.xlu0 %2558
      %2560 = vrot.lane.b32.xlu0 %v2170, 8
      %v2561 = vpop.permute.xlu0 %2560
      %2562 = vrot.lane.b32.xlu0 %v2171, 8
      %v2563 = vpop.permute.xlu0 %2562
      %2564 = vrot.lane.b32.xlu0 %v2172, 8
      %v2565 = vpop.permute.xlu0 %2564
      %2566 = vrot.lane.b32.xlu0 %v2173, 8
      %v2567 = vpop.permute.xlu0 %2566
      %2568 = vrot.lane.b32.xlu0 %v2174, 8
      %v2569 = vpop.permute.xlu0 %2568
      %2570 = vrot.lane.b32.xlu0 %v2175, 8
      %v2571 = vpop.permute.xlu0 %2570
      %2572 = vrot.lane.b32.xlu0 %v2176, 8
      %v2573 = vpop.permute.xlu0 %2572
      %2574 = vrot.lane.b32.xlu0 %v2177, 8
      %v2575 = vpop.permute.xlu0 %2574
      %2576 = vrot.lane.b32.xlu0 %v2178, 8
      %v2577 = vpop.permute.xlu0 %2576
      %2578 = vrot.lane.b32.xlu0 %v2179, 8
      %v2579 = vpop.permute.xlu0 %2578
      %2580 = vrot.lane.b32.xlu0 %v2180, 8
      %v2581 = vpop.permute.xlu0 %2580
      %2582 = vrot.lane.b32.xlu0 %v2181, 8
      %v2583 = vpop.permute.xlu0 %2582
      %2584 = vrot.lane.b32.xlu0 %v2182, 8
      %v2585 = vpop.permute.xlu0 %2584
      %2586 = vrot.lane.b32.xlu0 %v2183, 8
      %v2587 = vpop.permute.xlu0 %2586
      %2588 = vrot.lane.b32.xlu0 %v2184, 8
      %v2589 = vpop.permute.xlu0 %2588
      %2590 = vrot.lane.b32.xlu0 %v2185, 8
      %v2591 = vpop.permute.xlu0 %2590
      %2592 = vrot.lane.b32.xlu0 %v2186, 8
      %v2593 = vpop.permute.xlu0 %2592
      %2594 = vrot.lane.b32.xlu0 %v2187, 8
      %v2595 = vpop.permute.xlu0 %2594
      %2596 = vrot.lane.b32.xlu0 %v2188, 8
      %v2597 = vpop.permute.xlu0 %2596
      %2598 = vrot.lane.b32.xlu0 %v2189, 8
      %v2599 = vpop.permute.xlu0 %2598
      %2600 = vrot.lane.b32.xlu0 %v2190, 8
      %v2601 = vpop.permute.xlu0 %2600
      %2602 = vrot.lane.b32.xlu0 %v2191, 8
      %v2603 = vpop.permute.xlu0 %2602
      %2604 = vrot.lane.b32.xlu0 %v2192, 8
      %v2605 = vpop.permute.xlu0 %2604
      %2606 = vrot.lane.b32.xlu0 %v2193, 8
      %v2607 = vpop.permute.xlu0 %2606
      %2608 = vrot.lane.b32.xlu0 %v2194, 8
      %v2609 = vpop.permute.xlu0 %2608
      %2610 = vrot.lane.b32.xlu0 %v2195, 8
      %v2611 = vpop.permute.xlu0 %2610
      %2612 = vrot.lane.b32.xlu0 %v2196, 8
      %v2613 = vpop.permute.xlu0 %2612
      %2678 = vrot.lane.b32.xlu0 %v2197, 12
      %v2679 = vpop.permute.xlu0 %2678
      %2680 = vrot.lane.b32.xlu0 %v2198, 12
      %v2681 = vpop.permute.xlu0 %2680
      %2682 = vrot.lane.b32.xlu0 %v2199, 12
      %v2683 = vpop.permute.xlu0 %2682
      %2684 = vrot.lane.b32.xlu0 %v2200, 12
      %v2685 = vpop.permute.xlu0 %2684
      %2686 = vrot.lane.b32.xlu0 %v2201, 12
      %v2687 = vpop.permute.xlu0 %2686
      %2688 = vrot.lane.b32.xlu0 %v2202, 12
      %v2689 = vpop.permute.xlu0 %2688
      %2690 = vrot.lane.b32.xlu0 %v2203, 12
      %v2691 = vpop.permute.xlu0 %2690
      %2692 = vrot.lane.b32.xlu0 %v2204, 12
      %v2693 = vpop.permute.xlu0 %2692
      %2694 = vrot.lane.b32.xlu0 %v2205, 12
      %v2695 = vpop.permute.xlu0 %2694
      %2696 = vrot.lane.b32.xlu0 %v2206, 12
      %v2697 = vpop.permute.xlu0 %2696
      %2698 = vrot.lane.b32.xlu0 %v2207, 12
      %v2699 = vpop.permute.xlu0 %2698
      %2700 = vrot.lane.b32.xlu0 %v2208, 12
      %v2701 = vpop.permute.xlu0 %2700
      %2702 = vrot.lane.b32.xlu0 %v2209, 12
      %v2703 = vpop.permute.xlu0 %2702
      %2704 = vrot.lane.b32.xlu0 %v2210, 12
      %v2705 = vpop.permute.xlu0 %2704
      %2706 = vrot.lane.b32.xlu0 %v2211, 12
      %v2707 = vpop.permute.xlu0 %2706
      %2708 = vrot.lane.b32.xlu0 %v2212, 12
      %v2709 = vpop.permute.xlu0 %2708
      %2710 = vrot.lane.b32.xlu0 %v2213, 12
      %v2711 = vpop.permute.xlu0 %2710
      %2712 = vrot.lane.b32.xlu0 %v2214, 12
      %v2713 = vpop.permute.xlu0 %2712
      %2714 = vrot.lane.b32.xlu0 %v2215, 12
      %v2715 = vpop.permute.xlu0 %2714
      %2716 = vrot.lane.b32.xlu0 %v2216, 12
      %v2717 = vpop.permute.xlu0 %2716
      %2718 = vrot.lane.b32.xlu0 %v2217, 12
      %v2719 = vpop.permute.xlu0 %2718
      %2720 = vrot.lane.b32.xlu0 %v2218, 12
      %v2721 = vpop.permute.xlu0 %2720
      %2722 = vrot.lane.b32.xlu0 %v2219, 12
      %v2723 = vpop.permute.xlu0 %2722
      %2724 = vrot.lane.b32.xlu0 %v2220, 12
      %v2725 = vpop.permute.xlu0 %2724
      %2726 = vrot.lane.b32.xlu0 %v2221, 12
      %v2727 = vpop.permute.xlu0 %2726
      %2728 = vrot.lane.b32.xlu0 %v2222, 12
      %v2729 = vpop.permute.xlu0 %2728
      %2730 = vrot.lane.b32.xlu0 %v2223, 12
      %v2731 = vpop.permute.xlu0 %2730
      %2732 = vrot.lane.b32.xlu0 %v2224, 12
      %v2733 = vpop.permute.xlu0 %2732
      %2734 = vrot.lane.b32.xlu0 %v2225, 12
      %v2735 = vpop.permute.xlu0 %2734
      %2736 = vrot.lane.b32.xlu0 %v2226, 12
      %v2737 = vpop.permute.xlu0 %2736
      %2738 = vrot.lane.b32.xlu0 %v2227, 12
      %v2739 = vpop.permute.xlu0 %2738
      %2740 = vrot.lane.b32.xlu0 %v2228, 12
      %v2741 = vpop.permute.xlu0 %2740
      %2806 = vrot.lane.b32.xlu0 %v2229, 16
      %v2807 = vpop.permute.xlu0 %2806
      %2808 = vrot.lane.b32.xlu0 %v2230, 16
      %v2809 = vpop.permute.xlu0 %2808
      %2810 = vrot.lane.b32.xlu0 %v2231, 16
      %v2811 = vpop.permute.xlu0 %2810
      %2812 = vrot.lane.b32.xlu0 %v2232, 16
      %v2813 = vpop.permute.xlu0 %2812
      %2814 = vrot.lane.b32.xlu0 %v2233, 16
      %v2815 = vpop.permute.xlu0 %2814
      %2816 = vrot.lane.b32.xlu0 %v2234, 16
      %v2817 = vpop.permute.xlu0 %2816
      %2818 = vrot.lane.b32.xlu0 %v2235, 16
      %v2819 = vpop.permute.xlu0 %2818
      %2820 = vrot.lane.b32.xlu0 %v2236, 16
      %v2821 = vpop.permute.xlu0 %2820
      %2822 = vrot.lane.b32.xlu0 %v2237, 16
      %v2823 = vpop.permute.xlu0 %2822
      %2824 = vrot.lane.b32.xlu0 %v2238, 16
      %v2825 = vpop.permute.xlu0 %2824
      %2826 = vrot.lane.b32.xlu0 %v2239, 16
      %v2827 = vpop.permute.xlu0 %2826
      %2828 = vrot.lane.b32.xlu0 %v2240, 16
      %v2829 = vpop.permute.xlu0 %2828
      %2830 = vrot.lane.b32.xlu0 %v2241, 16
      %v2831 = vpop.permute.xlu0 %2830
      %2832 = vrot.lane.b32.xlu0 %v2242, 16
      %v2833 = vpop.permute.xlu0 %2832
      %2834 = vrot.lane.b32.xlu0 %v2243, 16
      %v2835 = vpop.permute.xlu0 %2834
      %2836 = vrot.lane.b32.xlu0 %v2244, 16
      %v2837 = vpop.permute.xlu0 %2836
      %2838 = vrot.lane.b32.xlu0 %v2245, 16
      %v2839 = vpop.permute.xlu0 %2838
      %2840 = vrot.lane.b32.xlu0 %v2246, 16
      %v2841 = vpop.permute.xlu0 %2840
      %2842 = vrot.lane.b32.xlu0 %v2247, 16
      %v2843 = vpop.permute.xlu0 %2842
      %2844 = vrot.lane.b32.xlu0 %v2248, 16
      %v2845 = vpop.permute.xlu0 %2844
      %2846 = vrot.lane.b32.xlu0 %v2249, 16
      %v2847 = vpop.permute.xlu0 %2846
      %2848 = vrot.lane.b32.xlu0 %v2250, 16
      %v2849 = vpop.permute.xlu0 %2848
      %2850 = vrot.lane.b32.xlu0 %v2251, 16
      %v2851 = vpop.permute.xlu0 %2850
      %2852 = vrot.lane.b32.xlu0 %v2252, 16
      %v2853 = vpop.permute.xlu0 %2852
      %2854 = vrot.lane.b32.xlu0 %v2253, 16
      %v2855 = vpop.permute.xlu0 %2854
      %2856 = vrot.lane.b32.xlu0 %v2254, 16
      %v2857 = vpop.permute.xlu0 %2856
      %2858 = vrot.lane.b32.xlu0 %v2255, 16
      %v2859 = vpop.permute.xlu0 %2858
      %2860 = vrot.lane.b32.xlu0 %v2256, 16
      %v2861 = vpop.permute.xlu0 %2860
      %2862 = vrot.lane.b32.xlu0 %v2257, 16
      %v2863 = vpop.permute.xlu0 %2862
      %2864 = vrot.lane.b32.xlu0 %v2258, 16
      %v2865 = vpop.permute.xlu0 %2864
      %2866 = vrot.lane.b32.xlu0 %v2259, 16
      %v2867 = vpop.permute.xlu0 %2866
      %2868 = vrot.lane.b32.xlu0 %v2260, 16
      %v2869 = vpop.permute.xlu0 %2868
      %2934 = vrot.lane.b32.xlu0 %v2261, 20
      %v2935 = vpop.permute.xlu0 %2934
      %2936 = vrot.lane.b32.xlu0 %v2262, 20
      %v2937 = vpop.permute.xlu0 %2936
      %2938 = vrot.lane.b32.xlu0 %v2263, 20
      %v2939 = vpop.permute.xlu0 %2938
      %2940 = vrot.lane.b32.xlu0 %v2264, 20
      %v2941 = vpop.permute.xlu0 %2940
      %2942 = vrot.lane.b32.xlu0 %v2265, 20
      %v2943 = vpop.permute.xlu0 %2942
      %2944 = vrot.lane.b32.xlu0 %v2266, 20
      %v2945 = vpop.permute.xlu0 %2944
      %2946 = vrot.lane.b32.xlu0 %v2267, 20
      %v2947 = vpop.permute.xlu0 %2946
      %2948 = vrot.lane.b32.xlu0 %v2268, 20
      %v2949 = vpop.permute.xlu0 %2948
      %2950 = vrot.lane.b32.xlu0 %v2269, 20
      %v2951 = vpop.permute.xlu0 %2950
      %2952 = vrot.lane.b32.xlu0 %v2270, 20
      %v2953 = vpop.permute.xlu0 %2952
      %2954 = vrot.lane.b32.xlu0 %v2271, 20
      %v2955 = vpop.permute.xlu0 %2954
      %2956 = vrot.lane.b32.xlu0 %v2272, 20
      %v2957 = vpop.permute.xlu0 %2956
      %2958 = vrot.lane.b32.xlu0 %v2273, 20
      %v2959 = vpop.permute.xlu0 %2958
      %2960 = vrot.lane.b32.xlu0 %v2274, 20
      %v2961 = vpop.permute.xlu0 %2960
      %2962 = vrot.lane.b32.xlu0 %v2275, 20
      %v2963 = vpop.permute.xlu0 %2962
      %2964 = vrot.lane.b32.xlu0 %v2276, 20
      %v2965 = vpop.permute.xlu0 %2964
      %2966 = vrot.lane.b32.xlu0 %v2277, 20
      %v2967 = vpop.permute.xlu0 %2966
      %2968 = vrot.lane.b32.xlu0 %v2278, 20
      %v2969 = vpop.permute.xlu0 %2968
      %2970 = vrot.lane.b32.xlu0 %v2279, 20
      %v2971 = vpop.permute.xlu0 %2970
      %2972 = vrot.lane.b32.xlu0 %v2280, 20
      %v2973 = vpop.permute.xlu0 %2972
      %2974 = vrot.lane.b32.xlu0 %v2281, 20
      %v2975 = vpop.permute.xlu0 %2974
      %2976 = vrot.lane.b32.xlu0 %v2282, 20
      %v2977 = vpop.permute.xlu0 %2976
      %2978 = vrot.lane.b32.xlu0 %v2283, 20
      %v2979 = vpop.permute.xlu0 %2978
      %2980 = vrot.lane.b32.xlu0 %v2284, 20
      %v2981 = vpop.permute.xlu0 %2980
      %2982 = vrot.lane.b32.xlu0 %v2285, 20
      %v2983 = vpop.permute.xlu0 %2982
      %2984 = vrot.lane.b32.xlu0 %v2286, 20
      %v2985 = vpop.permute.xlu0 %2984
      %2986 = vrot.lane.b32.xlu0 %v2287, 20
      %v2987 = vpop.permute.xlu0 %2986
      %2988 = vrot.lane.b32.xlu0 %v2288, 20
      %v2989 = vpop.permute.xlu0 %2988
      %2990 = vrot.lane.b32.xlu0 %v2289, 20
      %v2991 = vpop.permute.xlu0 %2990
      %2992 = vrot.lane.b32.xlu0 %v2290, 20
      %v2993 = vpop.permute.xlu0 %2992
      %2994 = vrot.lane.b32.xlu0 %v2291, 20
      %v2995 = vpop.permute.xlu0 %2994
      %2996 = vrot.lane.b32.xlu0 %v2292, 20
      %v2997 = vpop.permute.xlu0 %2996
      %3062 = vrot.lane.b32.xlu0 %v2294, 24
      %v3063 = vpop.permute.xlu0 %3062
      %3064 = vrot.lane.b32.xlu0 %v2295, 24
      %v3065 = vpop.permute.xlu0 %3064
      %3066 = vrot.lane.b32.xlu0 %v2296, 24
      %v3067 = vpop.permute.xlu0 %3066
      %3068 = vrot.lane.b32.xlu0 %v2297, 24
      %v3069 = vpop.permute.xlu0 %3068
      %3070 = vrot.lane.b32.xlu0 %v2298, 24
      %v3071 = vpop.permute.xlu0 %3070
      %3072 = vrot.lane.b32.xlu0 %v2299, 24
      %v3073 = vpop.permute.xlu0 %3072
      %3074 = vrot.lane.b32.xlu0 %v2300, 24
      %v3075 = vpop.permute.xlu0 %3074
      %3076 = vrot.lane.b32.xlu0 %v2301, 24
      %v3077 = vpop.permute.xlu0 %3076
      %3078 = vrot.lane.b32.xlu0 %v2302, 24
      %v3079 = vpop.permute.xlu0 %3078
      %3080 = vrot.lane.b32.xlu0 %v2303, 24
      %v3081 = vpop.permute.xlu0 %3080
      %3082 = vrot.lane.b32.xlu0 %v2304, 24
      %v3083 = vpop.permute.xlu0 %3082
      %3084 = vrot.lane.b32.xlu0 %v2305, 24
      %v3085 = vpop.permute.xlu0 %3084
      %3086 = vrot.lane.b32.xlu0 %v2306, 24
      %v3087 = vpop.permute.xlu0 %3086
      %3088 = vrot.lane.b32.xlu0 %v2307, 24
      %v3089 = vpop.permute.xlu0 %3088
      %3090 = vrot.lane.b32.xlu0 %v2308, 24
      %v3091 = vpop.permute.xlu0 %3090
      %3092 = vrot.lane.b32.xlu0 %v2309, 24
      %v3093 = vpop.permute.xlu0 %3092
      %3094 = vrot.lane.b32.xlu0 %v2310, 24
      %v3095 = vpop.permute.xlu0 %3094
      %3096 = vrot.lane.b32.xlu0 %v2311, 24
      %v3097 = vpop.permute.xlu0 %3096
      %3098 = vrot.lane.b32.xlu0 %v2312, 24
      %v3099 = vpop.permute.xlu0 %3098
      %3100 = vrot.lane.b32.xlu0 %v2313, 24
      %v3101 = vpop.permute.xlu0 %3100
      %3102 = vrot.lane.b32.xlu0 %v2314, 24
      %v3103 = vpop.permute.xlu0 %3102
      %3104 = vrot.lane.b32.xlu0 %v2315, 24
      %v3105 = vpop.permute.xlu0 %3104
      %3106 = vrot.lane.b32.xlu0 %v2316, 24
      %v3107 = vpop.permute.xlu0 %3106
      %3108 = vrot.lane.b32.xlu0 %v2317, 24
      %v3109 = vpop.permute.xlu0 %3108
      %3110 = vrot.lane.b32.xlu0 %v2318, 24
      %v3111 = vpop.permute.xlu0 %3110
      %3112 = vrot.lane.b32.xlu0 %v2319, 24
      %v3113 = vpop.permute.xlu0 %3112
      %3114 = vrot.lane.b32.xlu0 %v2320, 24
      %v3115 = vpop.permute.xlu0 %3114
      %3116 = vrot.lane.b32.xlu0 %v2321, 24
      %v3117 = vpop.permute.xlu0 %3116
      %3118 = vrot.lane.b32.xlu0 %v2322, 24
      %v3119 = vpop.permute.xlu0 %3118
      %3120 = vrot.lane.b32.xlu0 %v2323, 24
      %v3121 = vpop.permute.xlu0 %3120
      %3122 = vrot.lane.b32.xlu0 %v2324, 24
      %v3123 = vpop.permute.xlu0 %3122
      %3124 = vrot.lane.b32.xlu0 %v2325, 24
      %v3125 = vpop.permute.xlu0 %3124
      %3190 = vrot.lane.b32.xlu0 %v2326, 28
      %v3191 = vpop.permute.xlu0 %3190
      %3192 = vrot.lane.b32.xlu0 %v2327, 28
      %v3193 = vpop.permute.xlu0 %3192
      %3194 = vrot.lane.b32.xlu0 %v2328, 28
      %v3195 = vpop.permute.xlu0 %3194
      %3196 = vrot.lane.b32.xlu0 %v2329, 28
      %v3197 = vpop.permute.xlu0 %3196
      %3198 = vrot.lane.b32.xlu0 %v2330, 28
      %v3199 = vpop.permute.xlu0 %3198
      %3200 = vrot.lane.b32.xlu0 %v2331, 28
      %v3201 = vpop.permute.xlu0 %3200
      %3202 = vrot.lane.b32.xlu0 %v2332, 28
      %v3203 = vpop.permute.xlu0 %3202
      %3204 = vrot.lane.b32.xlu0 %v2333, 28
      %v3205 = vpop.permute.xlu0 %3204
      %3206 = vrot.lane.b32.xlu0 %v2334, 28
      %v3207 = vpop.permute.xlu0 %3206
      %3208 = vrot.lane.b32.xlu0 %v2335, 28
      %v3209 = vpop.permute.xlu0 %3208
      %3210 = vrot.lane.b32.xlu0 %v2336, 28
      %v3211 = vpop.permute.xlu0 %3210
      %3212 = vrot.lane.b32.xlu0 %v2337, 28
      %v3213 = vpop.permute.xlu0 %3212
      %3214 = vrot.lane.b32.xlu0 %v2338, 28
      %v3215 = vpop.permute.xlu0 %3214
      %3216 = vrot.lane.b32.xlu0 %v2339, 28
      %v3217 = vpop.permute.xlu0 %3216
      %3218 = vrot.lane.b32.xlu0 %v2340, 28
      %v3219 = vpop.permute.xlu0 %3218
      %3220 = vrot.lane.b32.xlu0 %v2341, 28
      %v3221 = vpop.permute.xlu0 %3220
      %3222 = vrot.lane.b32.xlu0 %v2342, 28
      %v3223 = vpop.permute.xlu0 %3222
      %3224 = vrot.lane.b32.xlu0 %v2343, 28
      %v3225 = vpop.permute.xlu0 %3224
      %3226 = vrot.lane.b32.xlu0 %v2344, 28
      %v3227 = vpop.permute.xlu0 %3226
      %3228 = vrot.lane.b32.xlu0 %v2345, 28
      %v3229 = vpop.permute.xlu0 %3228
      %3230 = vrot.lane.b32.xlu0 %v2346, 28
      %v3231 = vpop.permute.xlu0 %3230
      %3232 = vrot.lane.b32.xlu0 %v2347, 28
      %v3233 = vpop.permute.xlu0 %3232
      %3234 = vrot.lane.b32.xlu0 %v2348, 28
      %v3235 = vpop.permute.xlu0 %3234
      %3236 = vrot.lane.b32.xlu0 %v2349, 28
      %v3237 = vpop.permute.xlu0 %3236
      %3238 = vrot.lane.b32.xlu0 %v2350, 28
      %v3239 = vpop.permute.xlu0 %3238
      %3240 = vrot.lane.b32.xlu0 %v2351, 28
      %v3241 = vpop.permute.xlu0 %3240
      %3242 = vrot.lane.b32.xlu0 %v2352, 28
      %v3243 = vpop.permute.xlu0 %3242
      %3244 = vrot.lane.b32.xlu0 %v2353, 28
      %v3245 = vpop.permute.xlu0 %3244
      %3246 = vrot.lane.b32.xlu0 %v2354, 28
      %v3247 = vpop.permute.xlu0 %3246
      %3248 = vrot.lane.b32.xlu0 %v2355, 28
      %v3249 = vpop.permute.xlu0 %3248
      %3250 = vrot.lane.b32.xlu0 %v2356, 28
      %v3251 = vpop.permute.xlu0 %3250
      %3252 = vrot.lane.b32.xlu0 %v2357, 28
      %v3253 = vpop.permute.xlu0 %3252
      %3318 = vrot.lane.b32.xlu0 %v2358, 32
      %v3319 = vpop.permute.xlu0 %3318
      %3320 = vrot.lane.b32.xlu0 %v2359, 32
      %v3321 = vpop.permute.xlu0 %3320
      %3322 = vrot.lane.b32.xlu0 %v2360, 32
      %v3323 = vpop.permute.xlu0 %3322
      %3324 = vrot.lane.b32.xlu0 %v2361, 32
      %v3325 = vpop.permute.xlu0 %3324
      %3326 = vrot.lane.b32.xlu0 %v2362, 32
      %v3327 = vpop.permute.xlu0 %3326
      %3328 = vrot.lane.b32.xlu0 %v2363, 32
      %v3329 = vpop.permute.xlu0 %3328
      %3330 = vrot.lane.b32.xlu0 %v2364, 32
      %v3331 = vpop.permute.xlu0 %3330
      %3332 = vrot.lane.b32.xlu0 %v2365, 32
      %v3333 = vpop.permute.xlu0 %3332
      %3334 = vrot.lane.b32.xlu0 %v2366, 32
      %v3335 = vpop.permute.xlu0 %3334
      %3336 = vrot.lane.b32.xlu0 %v2367, 32
      %v3337 = vpop.permute.xlu0 %3336
      %3338 = vrot.lane.b32.xlu0 %v2368, 32
      %v3339 = vpop.permute.xlu0 %3338
      %3340 = vrot.lane.b32.xlu0 %v2369, 32
      %v3341 = vpop.permute.xlu0 %3340
      %3342 = vrot.lane.b32.xlu0 %v2370, 32
      %v3343 = vpop.permute.xlu0 %3342
      %3344 = vrot.lane.b32.xlu0 %v2371, 32
      %v3345 = vpop.permute.xlu0 %3344
      %3346 = vrot.lane.b32.xlu0 %v2372, 32
      %v3347 = vpop.permute.xlu0 %3346
      %3348 = vrot.lane.b32.xlu0 %v2373, 32
      %v3349 = vpop.permute.xlu0 %3348
      %3350 = vrot.lane.b32.xlu0 %v2374, 32
      %v3351 = vpop.permute.xlu0 %3350
      %3352 = vrot.lane.b32.xlu0 %v2375, 32
      %v3353 = vpop.permute.xlu0 %3352
      %3354 = vrot.lane.b32.xlu0 %v2376, 32
      %v3355 = vpop.permute.xlu0 %3354
      %3356 = vrot.lane.b32.xlu0 %v2377, 32
      %v3357 = vpop.permute.xlu0 %3356
      %3358 = vrot.lane.b32.xlu0 %v2378, 32
      %v3359 = vpop.permute.xlu0 %3358
      %3360 = vrot.lane.b32.xlu0 %v2379, 32
      %v3361 = vpop.permute.xlu0 %3360
      %3362 = vrot.lane.b32.xlu0 %v2380, 32
      %v3363 = vpop.permute.xlu0 %3362
      %3364 = vrot.lane.b32.xlu0 %v2381, 32
      %v3365 = vpop.permute.xlu0 %3364
      %3366 = vrot.lane.b32.xlu0 %v2382, 32
      %v3367 = vpop.permute.xlu0 %3366
      %3368 = vrot.lane.b32.xlu0 %v2383, 32
      %v3369 = vpop.permute.xlu0 %3368
      %3370 = vrot.lane.b32.xlu0 %v2384, 32
      %v3371 = vpop.permute.xlu0 %3370
      %3372 = vrot.lane.b32.xlu0 %v2385, 32
      %v3373 = vpop.permute.xlu0 %3372
      %3374 = vrot.lane.b32.xlu0 %v2386, 32
      %v3375 = vpop.permute.xlu0 %3374
      %3376 = vrot.lane.b32.xlu0 %v2387, 32
      %v3377 = vpop.permute.xlu0 %3376
      %3378 = vrot.lane.b32.xlu0 %v2388, 32
      %v3379 = vpop.permute.xlu0 %3378
      %3380 = vrot.lane.b32.xlu0 %v2389, 32
      %v3381 = vpop.permute.xlu0 %3380
      %v3414 = vsel %vm2012, %v2101, %v2423
      %v3415 = vsel %vm2012, %v2102, %v2425
      %v3416 = vsel %vm2012, %v2103, %v2427
      %v3417 = vsel %vm2012, %v2104, %v2429
      %v3418 = vsel %vm2012, %v2105, %v2431
      %v3419 = vsel %vm2012, %v2106, %v2433
      %v3420 = vsel %vm2012, %v2107, %v2435
      %v3421 = vsel %vm2012, %v2108, %v2437
      %v3422 = vsel %vm2012, %v2109, %v2439
      %v3423 = vsel %vm2012, %v2110, %v2441
      %v3424 = vsel %vm2012, %v2111, %v2443
      %v3425 = vsel %vm2012, %v2112, %v2445
      %v3426 = vsel %vm2012, %v2113, %v2447
      %v3427 = vsel %vm2012, %v2114, %v2449
      %v3428 = vsel %vm2012, %v2115, %v2451
      %v3429 = vsel %vm2012, %v2116, %v2453
      %v3430 = vsel %vm2012, %v2117, %v2455
      %v3431 = vsel %vm2012, %v2118, %v2457
      %v3432 = vsel %vm2012, %v2119, %v2459
      %v3433 = vsel %vm2012, %v2120, %v2461
      %v3434 = vsel %vm2012, %v2121, %v2463
      %v3435 = vsel %vm2012, %v2122, %v2465
      %v3436 = vsel %vm2012, %v2123, %v2467
      %v3437 = vsel %vm2012, %v2124, %v2469
      %v3438 = vsel %vm2012, %v2125, %v2471
      %v3439 = vsel %vm2012, %v2126, %v2473
      %v3440 = vsel %vm2012, %v2127, %v2475
      %v3441 = vsel %vm2012, %v2128, %v2477
      %v3442 = vsel %vm2012, %v2129, %v2479
      %v3443 = vsel %vm2012, %v2130, %v2481
      %v3444 = vsel %vm2012, %v2131, %v2483
      %v3445 = vsel %vm2012, %v2132, %v2485
      %v3446 = vsel %vm1540, %v3414, %v2551
      %v3447 = vsel %vm1540, %v3415, %v2553
      %v3448 = vsel %vm1540, %v3416, %v2555
      %v3449 = vsel %vm1540, %v3417, %v2557
      %v3450 = vsel %vm1540, %v3418, %v2559
      %v3451 = vsel %vm1540, %v3419, %v2561
      %v3452 = vsel %vm1540, %v3420, %v2563
      %v3453 = vsel %vm1540, %v3421, %v2565
      %v3454 = vsel %vm1540, %v3422, %v2567
      %v3455 = vsel %vm1540, %v3423, %v2569
      %v3456 = vsel %vm1540, %v3424, %v2571
      %v3457 = vsel %vm1540, %v3425, %v2573
      %v3458 = vsel %vm1540, %v3426, %v2575
      %v3459 = vsel %vm1540, %v3427, %v2577
      %v3460 = vsel %vm1540, %v3428, %v2579
      %v3461 = vsel %vm1540, %v3429, %v2581
      %v3462 = vsel %vm1540, %v3430, %v2583
      %v3463 = vsel %vm1540, %v3431, %v2585
      %v3464 = vsel %vm1540, %v3432, %v2587
      %v3465 = vsel %vm1540, %v3433, %v2589
      %v3466 = vsel %vm1540, %v3434, %v2591
      %v3467 = vsel %vm1540, %v3435, %v2593
      %v3468 = vsel %vm1540, %v3436, %v2595
      %v3469 = vsel %vm1540, %v3437, %v2597
      %v3470 = vsel %vm1540, %v3438, %v2599
      %v3471 = vsel %vm1540, %v3439, %v2601
      %v3472 = vsel %vm1540, %v3440, %v2603
      %v3473 = vsel %vm1540, %v3441, %v2605
      %v3474 = vsel %vm1540, %v3442, %v2607
      %v3475 = vsel %vm1540, %v3443, %v2609
      %v3476 = vsel %vm1540, %v3444, %v2611
      %v3477 = vsel %vm1540, %v3445, %v2613
      %vm3478 = vcmask 97280
      %v3479 = vsel %vm3478, %v3446, %v2679
      %v3480 = vsel %vm3478, %v3447, %v2681
      %v3481 = vsel %vm3478, %v3448, %v2683
      %v3482 = vsel %vm3478, %v3449, %v2685
      %v3483 = vsel %vm3478, %v3450, %v2687
      %v3484 = vsel %vm3478, %v3451, %v2689
      %v3485 = vsel %vm3478, %v3452, %v2691
      %v3486 = vsel %vm3478, %v3453, %v2693
      %v3487 = vsel %vm3478, %v3454, %v2695
      %v3488 = vsel %vm3478, %v3455, %v2697
      %v3489 = vsel %vm3478, %v3456, %v2699
      %v3490 = vsel %vm3478, %v3457, %v2701
      %v3491 = vsel %vm3478, %v3458, %v2703
      %v3492 = vsel %vm3478, %v3459, %v2705
      %v3493 = vsel %vm3478, %v3460, %v2707
      %v3494 = vsel %vm3478, %v3461, %v2709
      %v3495 = vsel %vm3478, %v3462, %v2711
      %v3496 = vsel %vm3478, %v3463, %v2713
      %v3497 = vsel %vm3478, %v3464, %v2715
      %v3498 = vsel %vm3478, %v3465, %v2717
      %v3499 = vsel %vm3478, %v3466, %v2719
      %v3500 = vsel %vm3478, %v3467, %v2721
      %v3501 = vsel %vm3478, %v3468, %v2723
      %v3502 = vsel %vm3478, %v3469, %v2725
      %v3503 = vsel %vm3478, %v3470, %v2727
      %v3504 = vsel %vm3478, %v3471, %v2729
      %v3505 = vsel %vm3478, %v3472, %v2731
      %v3506 = vsel %vm3478, %v3473, %v2733
      %v3507 = vsel %vm3478, %v3474, %v2735
      %v3508 = vsel %vm3478, %v3475, %v2737
      %v3509 = vsel %vm3478, %v3476, %v2739
      %v3510 = vsel %vm3478, %v3477, %v2741
      %v3511 = vsel %vm1573, %v3479, %v2807
      %v3512 = vsel %vm1573, %v3480, %v2809
      %v3513 = vsel %vm1573, %v3481, %v2811
      %v3514 = vsel %vm1573, %v3482, %v2813
      %v3515 = vsel %vm1573, %v3483, %v2815
      %v3516 = vsel %vm1573, %v3484, %v2817
      %v3517 = vsel %vm1573, %v3485, %v2819
      %v3518 = vsel %vm1573, %v3486, %v2821
      %v3519 = vsel %vm1573, %v3487, %v2823
      %v3520 = vsel %vm1573, %v3488, %v2825
      %v3521 = vsel %vm1573, %v3489, %v2827
      %v3522 = vsel %vm1573, %v3490, %v2829
      %v3523 = vsel %vm1573, %v3491, %v2831
      %v3524 = vsel %vm1573, %v3492, %v2833
      %v3525 = vsel %vm1573, %v3493, %v2835
      %v3526 = vsel %vm1573, %v3494, %v2837
      %v3527 = vsel %vm1573, %v3495, %v2839
      %v3528 = vsel %vm1573, %v3496, %v2841
      %v3529 = vsel %vm1573, %v3497, %v2843
      %v3530 = vsel %vm1573, %v3498, %v2845
      %v3531 = vsel %vm1573, %v3499, %v2847
      %v3532 = vsel %vm1573, %v3500, %v2849
      %v3533 = vsel %vm1573, %v3501, %v2851
      %v3534 = vsel %vm1573, %v3502, %v2853
      %v3535 = vsel %vm1573, %v3503, %v2855
      %v3536 = vsel %vm1573, %v3504, %v2857
      %v3537 = vsel %vm1573, %v3505, %v2859
      %v3538 = vsel %vm1573, %v3506, %v2861
      %v3539 = vsel %vm1573, %v3507, %v2863
      %v3540 = vsel %vm1573, %v3508, %v2865
      %v3541 = vsel %vm1573, %v3509, %v2867
      %v3542 = vsel %vm1573, %v3510, %v2869
      %vm3543 = vcmask 162816
      %v3544 = vsel %vm3543, %v3511, %v2935
      %v3545 = vsel %vm3543, %v3512, %v2937
      %v3546 = vsel %vm3543, %v3513, %v2939
      %v3547 = vsel %vm3543, %v3514, %v2941
      %v3548 = vsel %vm3543, %v3515, %v2943
      %v3549 = vsel %vm3543, %v3516, %v2945
      %v3550 = vsel %vm3543, %v3517, %v2947
      %v3551 = vsel %vm3543, %v3518, %v2949
      %v3552 = vsel %vm3543, %v3519, %v2951
      %v3553 = vsel %vm3543, %v3520, %v2953
      %v3554 = vsel %vm3543, %v3521, %v2955
      %v3555 = vsel %vm3543, %v3522, %v2957
      %v3556 = vsel %vm3543, %v3523, %v2959
      %v3557 = vsel %vm3543, %v3524, %v2961
      %v3558 = vsel %vm3543, %v3525, %v2963
      %v3559 = vsel %vm3543, %v3526, %v2965
      %v3560 = vsel %vm3543, %v3527, %v2967
      %v3561 = vsel %vm3543, %v3528, %v2969
      %v3562 = vsel %vm3543, %v3529, %v2971
      %v3563 = vsel %vm3543, %v3530, %v2973
      %v3564 = vsel %vm3543, %v3531, %v2975
      %v3565 = vsel %vm3543, %v3532, %v2977
      %v3566 = vsel %vm3543, %v3533, %v2979
      %v3567 = vsel %vm3543, %v3534, %v2981
      %v3568 = vsel %vm3543, %v3535, %v2983
      %v3569 = vsel %vm3543, %v3536, %v2985
      %v3570 = vsel %vm3543, %v3537, %v2987
      %v3571 = vsel %vm3543, %v3538, %v2989
      %v3572 = vsel %vm3543, %v3539, %v2991
      %v3573 = vsel %vm3543, %v3540, %v2993
      %v3574 = vsel %vm3543, %v3541, %v2995
      %v3575 = vsel %vm3543, %v3542, %v2997
      %v3576 = vsel %vm1606, %v3544, %v3063
      %v3577 = vsel %vm1606, %v3545, %v3065
      %v3578 = vsel %vm1606, %v3546, %v3067
      %v3579 = vsel %vm1606, %v3547, %v3069
      %v3580 = vsel %vm1606, %v3548, %v3071
      %v3581 = vsel %vm1606, %v3549, %v3073
      %v3582 = vsel %vm1606, %v3550, %v3075
      %v3583 = vsel %vm1606, %v3551, %v3077
      %v3584 = vsel %vm1606, %v3552, %v3079
      %v3585 = vsel %vm1606, %v3553, %v3081
      %v3586 = vsel %vm1606, %v3554, %v3083
      %v3587 = vsel %vm1606, %v3555, %v3085
      %v3588 = vsel %vm1606, %v3556, %v3087
      %v3589 = vsel %vm1606, %v3557, %v3089
      %v3590 = vsel %vm1606, %v3558, %v3091
      %v3591 = vsel %vm1606, %v3559, %v3093
      %v3592 = vsel %vm1606, %v3560, %v3095
      %v3593 = vsel %vm1606, %v3561, %v3097
      %v3594 = vsel %vm1606, %v3562, %v3099
      %v3595 = vsel %vm1606, %v3563, %v3101
      %v3596 = vsel %vm1606, %v3564, %v3103
      %v3597 = vsel %vm1606, %v3565, %v3105
      %v3598 = vsel %vm1606, %v3566, %v3107
      %v3599 = vsel %vm1606, %v3567, %v3109
      %v3600 = vsel %vm1606, %v3568, %v3111
      %v3601 = vsel %vm1606, %v3569, %v3113
      %v3602 = vsel %vm1606, %v3570, %v3115
      %v3603 = vsel %vm1606, %v3571, %v3117
      %v3604 = vsel %vm1606, %v3572, %v3119
      %v3605 = vsel %vm1606, %v3573, %v3121
      %v3606 = vsel %vm1606, %v3574, %v3123
      %v3607 = vsel %vm1606, %v3575, %v3125
      %vm3608 = vcmask 228352
      %v3609 = vsel %vm3608, %v3576, %v3191
      %v3610 = vsel %vm3608, %v3577, %v3193
      %v3611 = vsel %vm3608, %v3578, %v3195
      %v3612 = vsel %vm3608, %v3579, %v3197
      %v3613 = vsel %vm3608, %v3580, %v3199
      %v3614 = vsel %vm3608, %v3581, %v3201
      %v3615 = vsel %vm3608, %v3582, %v3203
      %v3616 = vsel %vm3608, %v3583, %v3205
      %v3617 = vsel %vm3608, %v3584, %v3207
      %v3618 = vsel %vm3608, %v3585, %v3209
      %v3619 = vsel %vm3608, %v3586, %v3211
      %v3620 = vsel %vm3608, %v3587, %v3213
      %v3621 = vsel %vm3608, %v3588, %v3215
      %v3622 = vsel %vm3608, %v3589, %v3217
      %v3623 = vsel %vm3608, %v3590, %v3219
      %v3624 = vsel %vm3608, %v3591, %v3221
      %v3625 = vsel %vm3608, %v3592, %v3223
      %v3626 = vsel %vm3608, %v3593, %v3225
      %v3627 = vsel %vm3608, %v3594, %v3227
      %v3628 = vsel %vm3608, %v3595, %v3229
      %v3629 = vsel %vm3608, %v3596, %v3231
      %v3630 = vsel %vm3608, %v3597, %v3233
      %v3631 = vsel %vm3608, %v3598, %v3235
      %v3632 = vsel %vm3608, %v3599, %v3237
      %v3633 = vsel %vm3608, %v3600, %v3239
      %v3634 = vsel %vm3608, %v3601, %v3241
      %v3635 = vsel %vm3608, %v3602, %v3243
      %v3636 = vsel %vm3608, %v3603, %v3245
      %v3637 = vsel %vm3608, %v3604, %v3247
      %v3638 = vsel %vm3608, %v3605, %v3249
      %v3639 = vsel %vm3608, %v3606, %v3251
      %v3640 = vsel %vm3608, %v3607, %v3253
      %v3641 = vsel %vm1639, %v3609, %v3319
      %v3642 = vsel %vm1639, %v3610, %v3321
      %v3643 = vsel %vm1639, %v3611, %v3323
      %v3644 = vsel %vm1639, %v3612, %v3325
      %v3645 = vsel %vm1639, %v3613, %v3327
      %v3646 = vsel %vm1639, %v3614, %v3329
      %v3647 = vsel %vm1639, %v3615, %v3331
      %v3648 = vsel %vm1639, %v3616, %v3333
      %v3649 = vsel %vm1639, %v3617, %v3335
      %v3650 = vsel %vm1639, %v3618, %v3337
      %v3651 = vsel %vm1639, %v3619, %v3339
      %v3652 = vsel %vm1639, %v3620, %v3341
      %v3653 = vsel %vm1639, %v3621, %v3343
      %v3654 = vsel %vm1639, %v3622, %v3345
      %v3655 = vsel %vm1639, %v3623, %v3347
      %v3656 = vsel %vm1639, %v3624, %v3349
      %v3657 = vsel %vm1639, %v3625, %v3351
      %v3658 = vsel %vm1639, %v3626, %v3353
      %v3659 = vsel %vm1639, %v3627, %v3355
      %v3660 = vsel %vm1639, %v3628, %v3357
      %v3661 = vsel %vm1639, %v3629, %v3359
      %v3662 = vsel %vm1639, %v3630, %v3361
      %v3663 = vsel %vm1639, %v3631, %v3363
      %v3664 = vsel %vm1639, %v3632, %v3365
      %v3665 = vsel %vm1639, %v3633, %v3367
      %v3666 = vsel %vm1639, %v3634, %v3369
      %v3667 = vsel %vm1639, %v3635, %v3371
      %v3668 = vsel %vm1639, %v3636, %v3373
      %v3669 = vsel %vm1639, %v3637, %v3375
      %v3670 = vsel %vm1639, %v3638, %v3377
      %v3671 = vsel %vm1639, %v3639, %v3379
      %v3672 = vsel %vm1639, %v3640, %v3381
      %v3673 = vpack.c.bf16 %v3642, %v3641
      %v3674 = vpack.c.bf16 %v3644, %v3643
      %v3675 = vpack.c.bf16 %v3646, %v3645
      %v3676 = vpack.c.bf16 %v3648, %v3647
      %v3677 = vpack.c.bf16 %v3650, %v3649
      %v3678 = vpack.c.bf16 %v3652, %v3651
      %v3679 = vpack.c.bf16 %v3654, %v3653
      %v3680 = vpack.c.bf16 %v3656, %v3655
      %v3681 = vpack.c.bf16 %v3658, %v3657
      %v3682 = vpack.c.bf16 %v3660, %v3659
      %v3683 = vpack.c.bf16 %v3662, %v3661
      %v3684 = vpack.c.bf16 %v3664, %v3663
      %v3685 = vpack.c.bf16 %v3666, %v3665
      %v3686 = vpack.c.bf16 %v3668, %v3667
      %v3687 = vpack.c.bf16 %v3670, %v3669
      %v3688 = vpack.c.bf16 %v3672, %v3671
      %v3689 = vld [vmem:[%s3] sm:$0xff]
      %v3690 = vld [vmem:[%s3 + $0x8] sm:$0xff]
      %v3691 = vld [vmem:[%s3 + $0x10] sm:$0xff]
      %v3692 = vld [vmem:[%s3 + $0x18] sm:$0xff]
      %v3693 = vld [vmem:[%s3 + $0x20] sm:$0xf]
      %v3694 = vpack.c.bf16 %v3690, %v3689
      %v3695 = vpack.c.bf16 %v3692, %v3691
      %v3696 = vpack.c.bf16 %v3693, %v3693
      %v3697 = vld [vmem:[%s4] sm:$0x1]
      %v3699 = vperm.slane %v3697, 0
      %vm3701 = vcmask 293888
      %v3703 = vsel %vm3701, %v3673, 0
      %v3706 = vsel %vm3701, %v3674, 0
      %v3709 = vsel %vm3701, %v3675, 0
      %v3712 = vsel %vm3701, %v3676, 0
      %v3715 = vsel %vm3701, %v3677, 0
      %v3718 = vsel %vm3701, %v3678, 0
      %v3721 = vsel %vm3701, %v3679, 0
      %v3724 = vsel %vm3701, %v3680, 0
      %v3727 = vsel %vm3701, %v3681, 0
      %v3730 = vsel %vm3701, %v3682, 0
      %v3733 = vsel %vm3701, %v3683, 0
      %v3736 = vsel %vm3701, %v3684, 0
      %v3739 = vsel %vm3701, %v3685, 0
      %v3742 = vsel %vm3701, %v3686, 0
      %v3745 = vsel %vm3701, %v3687, 0
      %v3748 = vsel %vm3701, %v3688, 0
      %vm3750 = vcmask 1041408
      %v3752 = vsel %vm3750, %v3696, 0
      %3754 = vmatpush.bf16.msra.mxu0 0
      %3755 = vmatpush.bf16.msra.mxu0 0
      %3756 = vmatpush.bf16.msra.mxu0 0
      %3757 = vmatpush.bf16.msra.mxu0 0
      %3758 = vmatpush.bf16.msra.mxu0 0
      %3759 = vmatpush.bf16.msra.mxu0 %v3752
      %3760 = vmatpush.bf16.msra.mxu0 %v3695
      %3761 = vmatpush.bf16.msra.mxu0 %v3694
      %3762 = vmatmul.bf16.gmra.mxu0 %v3703
      %v3763 = vpop.f32.mrf.mxu0
      %v3764 = vadd.f32 %v3699, %v3763
      %v3765 = vpop.f32.mrf.mxu0
      %v3766 = vadd.f32 %v3699, %v3765
      %3767 = vmatmul.bf16.gmra.mxu0 %v3706
      %v3768 = vpop.f32.mrf.mxu0
      %v3769 = vadd.f32 %v3699, %v3768
      %v3770 = vpop.f32.mrf.mxu0
      %v3771 = vadd.f32 %v3699, %v3770
      %3772 = vmatmul.bf16.gmra.mxu0 %v3709
      %v3773 = vpop.f32.mrf.mxu0
      %v3774 = vadd.f32 %v3699, %v3773
      %v3775 = vpop.f32.mrf.mxu0
      %v3776 = vadd.f32 %v3699, %v3775
      %3777 = vmatmul.bf16.gmra.mxu0 %v3712
      %v3778 = vpop.f32.mrf.mxu0
      %v3779 = vadd.f32 %v3699, %v3778
      %v3780 = vpop.f32.mrf.mxu0
      %v3781 = vadd.f32 %v3699, %v3780
      %3782 = vmatmul.bf16.gmra.mxu0 %v3715
      %v3783 = vpop.f32.mrf.mxu0
      %v3784 = vadd.f32 %v3699, %v3783
      %v3785 = vpop.f32.mrf.mxu0
      %v3786 = vadd.f32 %v3699, %v3785
      %3787 = vmatmul.bf16.gmra.mxu0 %v3718
      %v3788 = vpop.f32.mrf.mxu0
      %v3789 = vadd.f32 %v3699, %v3788
      %v3790 = vpop.f32.mrf.mxu0
      %v3791 = vadd.f32 %v3699, %v3790
      %3792 = vmatmul.bf16.gmra.mxu0 %v3721
      %v3793 = vpop.f32.mrf.mxu0
      %v3794 = vadd.f32 %v3699, %v3793
      %v3795 = vpop.f32.mrf.mxu0
      %v3796 = vadd.f32 %v3699, %v3795
      %3797 = vmatmul.bf16.gmra.mxu0 %v3724
      %v3798 = vpop.f32.mrf.mxu0
      %v3799 = vadd.f32 %v3699, %v3798
      %v3800 = vpop.f32.mrf.mxu0
      %v3801 = vadd.f32 %v3699, %v3800
      %3802 = vmatmul.bf16.gmra.mxu0 %v3727
      %v3803 = vpop.f32.mrf.mxu0
      %v3804 = vadd.f32 %v3699, %v3803
      %v3805 = vpop.f32.mrf.mxu0
      %v3806 = vadd.f32 %v3699, %v3805
      %3807 = vmatmul.bf16.gmra.mxu0 %v3730
      %v3808 = vpop.f32.mrf.mxu0
      %v3809 = vadd.f32 %v3699, %v3808
      %v3810 = vpop.f32.mrf.mxu0
      %v3811 = vadd.f32 %v3699, %v3810
      %3812 = vmatmul.bf16.gmra.mxu0 %v3733
      %v3813 = vpop.f32.mrf.mxu0
      %v3814 = vadd.f32 %v3699, %v3813
      %v3815 = vpop.f32.mrf.mxu0
      %v3816 = vadd.f32 %v3699, %v3815
      %3817 = vmatmul.bf16.gmra.mxu0 %v3736
      %v3818 = vpop.f32.mrf.mxu0
      %v3819 = vadd.f32 %v3699, %v3818
      %v3820 = vpop.f32.mrf.mxu0
      %v3821 = vadd.f32 %v3699, %v3820
      %3822 = vmatmul.bf16.gmra.mxu0 %v3739
      %v3823 = vpop.f32.mrf.mxu0
      %v3824 = vadd.f32 %v3699, %v3823
      %v3825 = vpop.f32.mrf.mxu0
      %v3826 = vadd.f32 %v3699, %v3825
      %3827 = vmatmul.bf16.gmra.mxu0 %v3742
      %v3828 = vpop.f32.mrf.mxu0
      %v3829 = vadd.f32 %v3699, %v3828
      %v3830 = vpop.f32.mrf.mxu0
      %v3831 = vadd.f32 %v3699, %v3830
      %3832 = vmatmul.bf16.gmra.mxu0 %v3745
      %v3833 = vpop.f32.mrf.mxu0
      %v3834 = vadd.f32 %v3699, %v3833
      %v3835 = vpop.f32.mrf.mxu0
      %v3836 = vadd.f32 %v3699, %v3835
      %3837 = vmatmul.bf16.gmra.mxu0 %v3748
      %v3838 = vpop.f32.mrf.mxu0
      %v3839 = vadd.f32 %v3699, %v3838
      %v3840 = vpop.f32.mrf.mxu0
      %v3841 = vadd.f32 %v3699, %v3840
      %3842 = vdwg.mxu0
      %v3843 = vmax.f32 %v3764, 0.0
      %v3844 = vmax.f32 %v3766, 0.0
      %v3845 = vmax.f32 %v3769, 0.0
      %v3846 = vmax.f32 %v3771, 0.0
      %v3847 = vmax.f32 %v3774, 0.0
      %v3848 = vmax.f32 %v3776, 0.0
      %v3849 = vmax.f32 %v3779, 0.0
      %v3850 = vmax.f32 %v3781, 0.0
      %v3851 = vmax.f32 %v3784, 0.0
      %v3852 = vmax.f32 %v3786, 0.0
      %v3853 = vmax.f32 %v3789, 0.0
      %v3854 = vmax.f32 %v3791, 0.0
      %v3855 = vmax.f32 %v3794, 0.0
      %v3856 = vmax.f32 %v3796, 0.0
      %v3857 = vmax.f32 %v3799, 0.0
      %v3858 = vmax.f32 %v3801, 0.0
      %v3859 = vmax.f32 %v3804, 0.0
      %v3860 = vmax.f32 %v3806, 0.0
      %v3861 = vmax.f32 %v3809, 0.0
      %v3862 = vmax.f32 %v3811, 0.0
      %v3863 = vmax.f32 %v3814, 0.0
      %v3864 = vmax.f32 %v3816, 0.0
      %v3865 = vmax.f32 %v3819, 0.0
      %v3866 = vmax.f32 %v3821, 0.0
      %v3867 = vmax.f32 %v3824, 0.0
      %v3868 = vmax.f32 %v3826, 0.0
      %v3869 = vmax.f32 %v3829, 0.0
      %v3870 = vmax.f32 %v3831, 0.0
      %v3871 = vmax.f32 %v3834, 0.0
      %v3872 = vmax.f32 %v3836, 0.0
      %v3873 = vmax.f32 %v3839, 0.0
      %v3874 = vmax.f32 %v3841, 0.0
      %3875 = vxpose.xlu0.b32.start [1/16] %v3843, 128
      %3876 = vxpose.xlu0.b32.cont [2/16] %v3844, 128
      %3877 = vxpose.xlu0.b32.cont [3/16] %v3845, 128
      %3878 = vxpose.xlu0.b32.cont [4/16] %v3846, 128
      %3879 = vxpose.xlu0.b32.cont [5/16] %v3847, 128
      %3880 = vxpose.xlu0.b32.cont [6/16] %v3848, 128
      %3881 = vxpose.xlu0.b32.cont [7/16] %v3849, 128
      %3882 = vxpose.xlu0.b32.cont [8/16] %v3850, 128
      %3883 = vxpose.xlu0.b32.cont [9/16] %v3851, 128
      %3884 = vxpose.xlu0.b32.cont [10/16] %v3852, 128
      %3885 = vxpose.xlu0.b32.cont [11/16] %v3853, 128
      %3886 = vxpose.xlu0.b32.cont [12/16] %v3854, 128
      %3887 = vxpose.xlu0.b32.cont [13/16] %v3855, 128
      %3888 = vxpose.xlu0.b32.cont [14/16] %v3856, 128
      %3889 = vxpose.xlu0.b32.cont [15/16] %v3857, 128
      %3890 = vxpose.xlu0.b32.end [16/16] %v3858, 128
      %v3891 = vpop.trf.xlu0
      %v3892 = vpop.trf.xlu0
      %v3893 = vpop.trf.xlu0
      %v3894 = vpop.trf.xlu0
      %v3895 = vpop.trf.xlu0
      %v3896 = vpop.trf.xlu0
      %v3897 = vpop.trf.xlu0
      %v3898 = vpop.trf.xlu0
      %v3899 = vpop.trf.xlu0
      %v3900 = vpop.trf.xlu0
      %v3901 = vpop.trf.xlu0
      %v3902 = vpop.trf.xlu0
      %v3903 = vpop.trf.xlu0
      %v3904 = vpop.trf.xlu0
      %v3905 = vpop.trf.xlu0
      %v3906 = vpop.trf.xlu0
      %3907 = vxpose.xlu0.b32.start [1/16] %v3859, 128
      %3908 = vxpose.xlu0.b32.cont [2/16] %v3860, 128
      %3909 = vxpose.xlu0.b32.cont [3/16] %v3861, 128
      %3910 = vxpose.xlu0.b32.cont [4/16] %v3862, 128
      %3911 = vxpose.xlu0.b32.cont [5/16] %v3863, 128
      %3912 = vxpose.xlu0.b32.cont [6/16] %v3864, 128
      %3913 = vxpose.xlu0.b32.cont [7/16] %v3865, 128
      %3914 = vxpose.xlu0.b32.cont [8/16] %v3866, 128
      %3915 = vxpose.xlu0.b32.cont [9/16] %v3867, 128
      %3916 = vxpose.xlu0.b32.cont [10/16] %v3868, 128
      %3917 = vxpose.xlu0.b32.cont [11/16] %v3869, 128
      %3918 = vxpose.xlu0.b32.cont [12/16] %v3870, 128
      %3919 = vxpose.xlu0.b32.cont [13/16] %v3871, 128
      %3920 = vxpose.xlu0.b32.cont [14/16] %v3872, 128
      %3921 = vxpose.xlu0.b32.cont [15/16] %v3873, 128
      %3922 = vxpose.xlu0.b32.end [16/16] %v3874, 128
      %v3923 = vpop.trf.xlu0
      %v3924 = vpop.trf.xlu0
      %v3925 = vpop.trf.xlu0
      %v3926 = vpop.trf.xlu0
      %v3927 = vpop.trf.xlu0
      %v3928 = vpop.trf.xlu0
      %v3929 = vpop.trf.xlu0
      %v3930 = vpop.trf.xlu0
      %v3931 = vpop.trf.xlu0
      %v3932 = vpop.trf.xlu0
      %v3933 = vpop.trf.xlu0
      %v3934 = vpop.trf.xlu0
      %v3935 = vpop.trf.xlu0
      %v3936 = vpop.trf.xlu0
      %v3937 = vpop.trf.xlu0
      %v3938 = vpop.trf.xlu0
      %v3941 = vrot.slane %v3923, 4
      %v3942 = vsel %vm1887, %v3891, %v3941
      %3944 = vst [vmem:[%s224] sm:$0xff] %v3942
      %p3945 = scmp.lt.s32.totalorder %s16, 1
      %s3946 = scalar_select %p3945, %s16, 1
      %s3947 = smul.addr %s3946, 2
      %s3948 = smul.addr %s3947, 4
      %s3949 = scalar_lea.vmem %s5, %s3948
      // Predicated region
      $region41: #{upblock_forward.5} parent=39 // pred_check
        %p3950 = pneg %p144
      $region42: #{upblock_forward.5} parent=39 // pred_check_branch
        %3952 = sbr.rel (%p3950) target = $region44
      $region43: #{upblock_forward.5} parent=39 // pred_region
        _
      $region44: #{upblock_forward.5} parent=39 // pred_fallthru
        _
    $region40: #{upblock_forward.5} parent=5 // pred_fallthru
      _
    %p3953 = scmp.le.s32.totalorder 2, %s11
    // Predicated region
    $region45: #{upblock_forward.5} parent=5 // pred_check
      %p3954 = pneg %p3953
    $region46: #{upblock_forward.5} parent=5 // pred_check_branch
      %3956 = sbr.rel (%p3954) target = $region48
    $region47: #{upblock_forward.5} parent=5 // pred_region
      %s3957 = ssub.s32 %s11, 2
      // Predicated region
      $region49: #{upblock_forward.5} parent=47 // pred_check
        %p3958 = pneg %p150
      $region50: #{upblock_forward.5} parent=47 // pred_check_branch
        %3960 = sbr.rel (%p3958) target = $region52
      $region51: #{upblock_forward.5} parent=47 // pred_region
        %p3961 = scmp.lt.s32.totalorder %s17, 1
        %s3962 = scalar_select %p3961, %s17, 1
        %s3963 = smul.addr %s3962, 2
        %s3964 = smul.addr %s3963, 4
        %s3965 = scalar_lea.vmem %s5, %s3964
      $region52: #{upblock_forward.5} parent=47 // pred_fallthru
        _
    $region48: #{upblock_forward.5} parent=5 // pred_fallthru
      _
  $region6: #{upblock_forward.5} parent=0 // loop_footer
    %s15 = sadd.s32 1, %s11
  $region7: #{upblock_forward.5} parent=0 // loop_footer_branch
    %10 = sbr.rel target = $region3
  $region8: #{upblock_forward.5} parent=0 // loop_exit
    _

</llo_original>
